<compile_context>
chip_gen: v7x
topology: tpu7x:2x2x1
jax: 0.10.0
libtpu: 0.0.40
codegen_flags: <defaults>
</compile_context>

<pallas_src>
import jax
import jax.numpy as jnp
from jax.experimental import pallas as pl
from jax.experimental.pallas import tpu as pltpu

# ----------------------------- configuration -----------------------------
BATCH = 2
IN_CHANNELS = 4
IN_PATCH = 16

# backbone (CNN) params
BB_N_FILTERS = [8, 8]
BB_KERNELS = [3, 3]
BB_PADDINGS = [1, 1]
BB_POOLS = [2, 2]

# spatial block params (two branches, one conv stage each, stride 1)
SB_OUT_CHANNELS = 8
SB_N_LINEAR = 2
SB_OUT_SIZE = 8
SB_KERNELS = [[2], [3]]
SB_STRIDES = [[1], [1]]
SB_POOLS = [[1], [2]]

TARGET_SIZE = 8          # final Linear(out_size * n_branches, target_size)
BN_EPS = 1e-5

# ----------------------------- derived geometry ---------------------------
F1, F2 = BB_N_FILTERS
K1, K2 = BB_KERNELS
P1, P2 = BB_PADDINGS
PL1, PL2 = BB_POOLS

H1 = W1 = IN_PATCH
C1 = IN_CHANNELS
HP1, WP1 = H1 + 2 * P1, W1 + 2 * P1          # 18, 18
HO1, WO1 = HP1 - K1 + 1, WP1 - K1 + 1        # 16, 16 (conv out)
H2, W2, C2 = HO1 // PL1, WO1 // PL1, F1      # 8, 8, 8
HP2, WP2 = H2 + 2 * P2, W2 + 2 * P2          # 10, 10
HO2, WO2 = HP2 - K2 + 1, WP2 - K2 + 1        # 8, 8
H3, W3, C3 = HO2 // PL2, WO2 // PL2, F2      # 4, 4, 8  (backbone output)

SBF = SB_OUT_CHANNELS
B0K = SB_KERNELS[0][0]
B0HO, B0WO = H3 - B0K + 1, W3 - B0K + 1      # 3, 3
B1K = SB_KERNELS[1][0]
B1HO, B1WO = H3 - B1K + 1, W3 - B1K + 1      # 2, 2

# The fused kernel below is specialized to this exact configuration.
assert (B0HO, B0WO, SB_POOLS[0][0]) == (3, 3, 1)
assert (B1HO, B1WO, SB_POOLS[1][0]) == (2, 2, 2)
assert SB_N_LINEAR == 2 and PL1 == 2 and PL2 == 2 and len(SB_KERNELS) == 2
# TODO(synk): generalize branch conv strides > 1 and other pool sizes if the
# module is ever instantiated with a different spatial_block_params config.


# ----------------------------- in-kernel helpers ---------------------------
def _dot(a, b):
    return jnp.dot(a, b, preferred_element_type=jnp.float32)


def _conv_packed_from_ref(pad_ref, b, w_ref, k, ho, wo, c):
    """Stride-1 conv in the packed (H, W*C) layout: K*K shifted-slice + MXU-dot
    accumulations against block-diagonal tap weights (in-kernel im2col)."""
    acc = None
    t = 0
    for di in range(k):
        for dj in range(k):
            lhs = pad_ref[b, di:di + ho, dj * c:dj * c + wo * c]
            y = _dot(lhs, w_ref[t])
            acc = y if acc is None else acc + y
            t += 1
    return acc


def _conv_packed_from_val(x2d, w_ref, k, ho, wo, c):
    acc = None
    t = 0
    for di in range(k):
        for dj in range(k):
            lhs = x2d[di:di + ho, dj * c:dj * c + wo * c]
            y = _dot(lhs, w_ref[t])
            acc = y if acc is None else acc + y
            t += 1
    return acc


def _maxpool_packed(z, rsel_ref, csel_ref):
    """MaxPool2d(2, 2) in the packed layout via exact 0/1 selection matmuls
    (uses the otherwise idle MXU, avoids strided loads entirely)."""
    r = jnp.maximum(_dot(rsel_ref[0], z), _dot(rsel_ref[1], z))
    return jnp.maximum(_dot(r, csel_ref[0]), _dot(r, csel_ref[1]))


def _bn_scale_shift(ys, g_ref, gt_ref, gamma_ref, beta_ref, n_elems):
    """Train-mode BatchNorm2d batch stats (biased var, eps=1e-5), one pass
    (E[y^2]-E[y]^2) over the packed conv outputs of all batch elements."""
    cols = ys[0].shape[1]
    colsum = jnp.zeros((1, cols), jnp.float32)
    colsq = jnp.zeros((1, cols), jnp.float32)
    for y in ys:
        colsum = colsum + jnp.sum(y, axis=0, keepdims=True)
        colsq = colsq + jnp.sum(y * y, axis=0, keepdims=True)
    csum = _dot(colsum, g_ref[...])            # (1, F) per-channel sums
    csq = _dot(colsq, g_ref[...])
    mean = csum / n_elems
    var = jnp.maximum(csq / n_elems - mean * mean, 0.0)
    scale = gamma_ref[...] * jax.lax.rsqrt(var + BN_EPS)
    shift = beta_ref[...] - mean * scale
    # broadcast per-channel scale/shift back to the packed (W*C) columns
    return _dot(scale, gt_ref[...]), _dot(shift, gt_ref[...])


# ----------------------------- fused kernel --------------------------------
def _fused_forward_kernel(
        x_ref,
        w1_ref, g1_ref, g1t_ref, gamma1_ref, beta1_ref, rsel1_ref, csel1_ref,
        w2_ref, g2_ref, g2t_ref, gamma2_ref, beta2_ref, rsel2_ref, csel2_ref,
        wb0_ref, bb0_ref, wb1_ref, bb1_ref,
        wlin_ref, blin_ref, wfl_ref, wfr_ref, bf_ref,
        out_ref,
        pad1_ref, pad2_ref):
    B = out_ref.shape[0]

    # ---- backbone layer 1: Conv3x3(pad=1) -> BN -> ReLU -> MaxPool2 ----
    pad1_ref[...] = jnp.zeros_like(pad1_ref)
    for b in range(B):
        pad1_ref[b, P1:P1 + H1, P1 * C1:P1 * C1 + W1 * C1] = x_ref[b]
    # NOTE: the Conv2d bias is exactly cancelled by the train-mode BN mean
    # subtraction that immediately follows, so it is not applied (review note).
    y1 = [_conv_packed_from_ref(pad1_ref, b, w1_ref, K1, HO1, WO1, C1)
          for b in range(B)]
    sc1, sh1 = _bn_scale_shift(y1, g1_ref, g1t_ref, gamma1_ref, beta1_ref,
                               float(B * HO1 * WO1))
    pad2_ref[...] = jnp.zeros_like(pad2_ref)
    for b in range(B):
        z = jnp.maximum(y1[b] * sc1 + sh1, 0.0)
        p = _maxpool_packed(z, rsel1_ref, csel1_ref)          # (H2, W2*C2)
        pad2_ref[b, P2:P2 + H2, P2 * C2:P2 * C2 + W2 * C2] = p

    # ---- backbone layer 2: Conv3x3(pad=1) -> BN -> ReLU -> MaxPool2 ----
    y2 = [_conv_packed_from_ref(pad2_ref, b, w2_ref, K2, HO2, WO2, C2)
          for b in range(B)]
    sc2, sh2 = _bn_scale_shift(y2, g2_ref, g2t_ref, gamma2_ref, beta2_ref,
                               float(B * HO2 * WO2))
    feats = []
    for b in range(B):
        z = jnp.maximum(y2[b] * sc2 + sh2, 0.0)
        feats.append(_maxpool_packed(z, rsel2_ref, csel2_ref))  # (H3, W3*C3)

    # ---- spatial branches + linear heads + final linear (all in VMEM) ----
    ci0 = int(round((B0HO - 1) / 2.0))        # torchvision CenterCrop(1) offset
    cj0 = int(round((B0WO - 1) / 2.0))
    for b in range(B):
        xb = feats[b]                                           # (4, 32)

        # branch 0: Conv2x2 -> ReLU -> MaxPool(1) (no-op) -> CenterCrop(1)
        y0 = _conv_packed_from_val(xb, wb0_ref, B0K, B0HO, B0WO, C3) + bb0_ref[...]
        y0 = jnp.maximum(y0, 0.0)                               # (3, 24)
        v0 = y0[ci0:ci0 + 1, cj0 * SBF:(cj0 + 1) * SBF]         # (1, 8)

        # branch 1: Conv3x3 -> ReLU -> MaxPool(2) -> 1x1 (crop is a no-op)
        y1b = _conv_packed_from_val(xb, wb1_ref, B1K, B1HO, B1WO, C3) + bb1_ref[...]
        y1b = jnp.maximum(y1b, 0.0)                             # (2, 16)
        v1 = jnp.maximum(
            jnp.maximum(y1b[0:1, 0:SBF], y1b[0:1, SBF:2 * SBF]),
            jnp.maximum(y1b[1:2, 0:SBF], y1b[1:2, SBF:2 * SBF]))  # (1, 8)

        # per-branch Linear->ReLU stacks (every Linear in spatialBlock has ReLU)
        h0, h1 = v0, v1
        for l in range(SB_N_LINEAR):
            h0 = jnp.maximum(_dot(h0, wlin_ref[l]) + blin_ref[l], 0.0)
            h1 = jnp.maximum(_dot(h1, wlin_ref[SB_N_LINEAR + l])
                             + blin_ref[SB_N_LINEAR + l], 0.0)

        # cat([branch0, branch1], dim=1) followed by the final Linear (no ReLU),
        # expressed with the final weight split per branch (avoids a concat).
        out_b = _dot(h0, wfl_ref[...]) + _dot(h1, wfr_ref[...]) + bf_ref[...]
        out_ref[b:b + 1, :] = out_b


# ----------------------------- host-side packing ---------------------------
def pack_params(p):
    """One-time repacking of PyTorch-layout parameters into the operands the
    fused kernel consumes (block-diag conv taps, pooling/BN selection mats)."""
    f32 = jnp.float32

    def conv_taps(w, wo):
        # torch conv weight (F, C, K, K) -> (K*K, wo*C, wo*F) block-diagonal
        # tap matrices matching the packed (H, W*C) activation layout.
        K = w.shape[-1]
        eye = jnp.eye(wo, dtype=f32)
        mats = [jnp.kron(eye, jnp.transpose(w[:, :, di, dj]).astype(f32))
                for di in range(K) for dj in range(K)]
        return jnp.stack(mats, axis=0)

    def row_sel(n, pool):
        outs = []
        for ii in range(pool):
            m = jnp.zeros((n // pool, n), f32)
            m = m.at[jnp.arange(n // pool), jnp.arange(n // pool) * pool + ii].set(1.0)
            outs.append(m)
        return jnp.stack(outs, axis=0)                 # (pool, n//pool, n)

    def col_sel(wo, f, pool):
        s = row_sel(wo, pool)
        return jnp.stack(
            [jnp.kron(jnp.transpose(s[j]), jnp.eye(f, dtype=f32)) for j in range(pool)],
            axis=0)                                    # (pool, wo*f, (wo//pool)*f)

    def group_mats(wo, f):
        g = jnp.tile(jnp.eye(f, dtype=f32), (wo, 1))   # (wo*f, f): per-channel sum
        return g, jnp.transpose(g)                     # and (f, wo*f): broadcast

    lay1, lay2 = p['bb']
    g1, g1t = group_mats(WO1, F1)
    g2, g2t = group_mats(WO2, F2)

    br0, br1 = p['br']
    wb0 = conv_taps(br0['convs'][0]['w'], B0WO)
    bb0 = jnp.tile(br0['convs'][0]['b'], (1, B0WO))    # packed (1, B0WO*F)
    wb1 = conv_taps(br1['convs'][0]['w'], B1WO)
    bb1 = jnp.tile(br1['convs'][0]['b'], (1, B1WO))

    wlin = jnp.stack([jnp.transpose(br0['lins'][0]['w']),
                      jnp.transpose(br0['lins'][1]['w']),
                      jnp.transpose(br1['lins'][0]['w']),
                      jnp.transpose(br1['lins'][1]['w'])], axis=0)   # (4, 8, 8)
    blin = jnp.stack([br0['lins'][0]['b'], br0['lins'][1]['b'],
                      br1['lins'][0]['b'], br1['lins'][1]['b']], axis=0)  # (4, 1, 8)

    wf = jnp.transpose(p['final']['w'])                # (2*out_size, target)
    wfl, wfr = wf[:SB_OUT_SIZE, :], wf[SB_OUT_SIZE:, :]
    bf = p['final']['b']

    return (conv_taps(lay1['w'], WO1), g1, g1t, lay1['gamma'], lay1['beta'],
            row_sel(HO1, PL1), col_sel(WO1, F1, PL1),
            conv_taps(lay2['w'], WO2), g2, g2t, lay2['gamma'], lay2['beta'],
            row_sel(HO2, PL2), col_sel(WO2, F2, PL2),
            wb0, bb0, wb1, bb1,
            wlin, blin, wfl, wfr, bf)


# ----------------------------- parameters ----------------------------------
def init_params(key):
    def nrm(k, shape, scale=0.1):
        return scale * jax.random.normal(k, shape, jnp.float32)

    keys = iter(jax.random.split(key, 64))
    p = {'bb': [], 'br': []}

    cin = IN_CHANNELS
    for f, k in zip(BB_N_FILTERS, BB_KERNELS):
        # Conv2d bias omitted: it has provably zero effect before a train-mode
        # BatchNorm2d (mean subtraction removes it).
        p['bb'].append(dict(
            w=nrm(next(keys), (f, cin, k, k)),
            gamma=1.0 + nrm(next(keys), (1, f)),
            beta=nrm(next(keys), (1, f)),
        ))
        cin = f

    for kk in SB_KERNELS:
        k = kk[0]
        branch = dict(
            convs=[dict(w=nrm(next(keys), (SB_OUT_CHANNELS, cin, k, k)),
                        b=nrm(next(keys), (1, SB_OUT_CHANNELS)))],
            lins=[])
        for _ in range(SB_N_LINEAR - 1):
            branch['lins'].append(dict(w=nrm(next(keys), (SB_OUT_CHANNELS, SB_OUT_CHANNELS)),
                                       b=nrm(next(keys), (1, SB_OUT_CHANNELS))))
        branch['lins'].append(dict(w=nrm(next(keys), (SB_OUT_SIZE, SB_OUT_CHANNELS)),
                                   b=nrm(next(keys), (1, SB_OUT_SIZE))))
        p['br'].append(branch)

    p['final'] = dict(
        w=nrm(next(keys), (TARGET_SIZE, SB_OUT_SIZE * len(SB_KERNELS))),
        b=nrm(next(keys), (1, TARGET_SIZE)))
    return p


# ----------------------------- forward --------------------------------------
def _vmem_spec():
    return pl.BlockSpec(memory_space=pltpu.MemorySpace.VMEM)


@jax.jit
def forward(packed, x_nchw):
    # NCHW -> NHWC -> packed (B, H, W*C); these touch the 2 KiB input once,
    # everything else runs inside the single fused Pallas kernel below.
    x = jnp.transpose(x_nchw, (0, 2, 3, 1)).astype(jnp.float32)
    x2d = x.reshape(BATCH, H1, W1 * C1)
    return pl.pallas_call(
        _fused_forward_kernel,
        out_shape=jax.ShapeDtypeStruct((BATCH, TARGET_SIZE), jnp.float32),
        in_specs=[_vmem_spec()] * (1 + len(packed)),
        out_specs=_vmem_spec(),
        scratch_shapes=[
            pltpu.VMEM((BATCH, HP1, WP1 * C1), jnp.float32),   # padded layer-1 input
            pltpu.VMEM((BATCH, HP2, WP2 * C2), jnp.float32),   # padded layer-2 input
        ],
        compiler_params=pltpu.CompilerParams(
            vmem_limit_bytes=32 * 1024 * 1024),   # explicit budget (v7x-safe)
    )(x2d, *packed)


# ----------------------------- main ------------------------------------------
if __name__ == "__main__":
    key = jax.random.PRNGKey(0)
    pkey, xkey = jax.random.split(key)
    params = init_params(pkey)
    packed = pack_params(params)        # one-time host-side weight repacking
    x = jax.random.normal(xkey, (BATCH, IN_CHANNELS, IN_PATCH, IN_PATCH), jnp.float32)

    out = forward(packed, x)
    out = jax.block_until_ready(out)
    assert out.shape == (BATCH, TARGET_SIZE), out.shape
    assert bool(jnp.all(jnp.isfinite(out)))
    print("KERNEL_OK")
</pallas_src>

<mosaic_0001>
module attributes {stable_mosaic.version = 11 : i64} {
  func.func @_fused_forward_kernel(%arg0: memref<2x16x64xf32, #tpu.memory_space<vmem>>, %arg1: memref<9x64x128xf32, #tpu.memory_space<vmem>>, %arg2: memref<128x8xf32, #tpu.memory_space<vmem>>, %arg3: memref<8x128xf32, #tpu.memory_space<vmem>>, %arg4: memref<1x8xf32, #tpu.memory_space<vmem>>, %arg5: memref<1x8xf32, #tpu.memory_space<vmem>>, %arg6: memref<2x8x16xf32, #tpu.memory_space<vmem>>, %arg7: memref<2x128x64xf32, #tpu.memory_space<vmem>>, %arg8: memref<9x64x64xf32, #tpu.memory_space<vmem>>, %arg9: memref<64x8xf32, #tpu.memory_space<vmem>>, %arg10: memref<8x64xf32, #tpu.memory_space<vmem>>, %arg11: memref<1x8xf32, #tpu.memory_space<vmem>>, %arg12: memref<1x8xf32, #tpu.memory_space<vmem>>, %arg13: memref<2x4x8xf32, #tpu.memory_space<vmem>>, %arg14: memref<2x64x32xf32, #tpu.memory_space<vmem>>, %arg15: memref<4x24x24xf32, #tpu.memory_space<vmem>>, %arg16: memref<1x24xf32, #tpu.memory_space<vmem>>, %arg17: memref<9x16x16xf32, #tpu.memory_space<vmem>>, %arg18: memref<1x16xf32, #tpu.memory_space<vmem>>, %arg19: memref<4x8x8xf32, #tpu.memory_space<vmem>>, %arg20: memref<4x1x8xf32, #tpu.memory_space<vmem>>, %arg21: memref<8x8xf32, #tpu.memory_space<vmem>>, %arg22: memref<8x8xf32, #tpu.memory_space<vmem>>, %arg23: memref<1x8xf32, #tpu.memory_space<vmem>>, %arg24: memref<2x8xf32, #tpu.memory_space<vmem>>, %arg25: memref<2x18x72xf32, #tpu.memory_space<vmem>>, %arg26: memref<2x10x80xf32, #tpu.memory_space<vmem>>) attributes {dimension_semantics = [], scalar_prefetch = 0 : i64, scratch_operands = 2 : i64, tpu.core_type = #tpu.core_type<tc>} {
    %cst = arith.constant 0.000000e+00 : f32
    %0 = vector.broadcast %cst : f32 to vector<2x18x72xf32>
    %c0 = arith.constant 0 : index
    %c0_0 = arith.constant 0 : index
    %c0_1 = arith.constant 0 : index
    %1 = vector.load %arg25[%c0, %c0_0, %c0_1] : memref<2x18x72xf32, #tpu.memory_space<vmem>>, vector<2x18x72xf32>
    tpu.vector_store %arg25[%c0, %c0_0, %c0_1], %0 {strides = array<i32>} : memref<2x18x72xf32, #tpu.memory_space<vmem>>, vector<2x18x72xf32>,
    %c0_2 = arith.constant 0 : index
    %c0_3 = arith.constant 0 : index
    %c0_4 = arith.constant 0 : index
    %2 = vector.load %arg0[%c0_2, %c0_3, %c0_4] : memref<2x16x64xf32, #tpu.memory_space<vmem>>, vector<1x16x64xf32>
    %3 = vector.shape_cast %2 : vector<1x16x64xf32> to vector<16x64xf32>
    %c0_5 = arith.constant 0 : index
    %c1 = arith.constant 1 : index
    %c4 = arith.constant 4 : index
    %4 = vector.load %arg25[%c0_5, %c1, %c4] : memref<2x18x72xf32, #tpu.memory_space<vmem>>, vector<1x16x64xf32>
    %5 = vector.shape_cast %4 : vector<1x16x64xf32> to vector<16x64xf32>
    %6 = vector.shape_cast %3 : vector<16x64xf32> to vector<1x16x64xf32>
    tpu.vector_store %arg25[%c0_5, %c1, %c4], %6 {strides = array<i32>} : memref<2x18x72xf32, #tpu.memory_space<vmem>>, vector<1x16x64xf32>,
    %c1_6 = arith.constant 1 : index
    %c0_7 = arith.constant 0 : index
    %c0_8 = arith.constant 0 : index
    %7 = vector.load %arg0[%c1_6, %c0_7, %c0_8] : memref<2x16x64xf32, #tpu.memory_space<vmem>>, vector<1x16x64xf32>
    %8 = vector.shape_cast %7 : vector<1x16x64xf32> to vector<16x64xf32>
    %c1_9 = arith.constant 1 : index
    %c1_10 = arith.constant 1 : index
    %c4_11 = arith.constant 4 : index
    %9 = vector.load %arg25[%c1_9, %c1_10, %c4_11] : memref<2x18x72xf32, #tpu.memory_space<vmem>>, vector<1x16x64xf32>
    %10 = vector.shape_cast %9 : vector<1x16x64xf32> to vector<16x64xf32>
    %11 = vector.shape_cast %8 : vector<16x64xf32> to vector<1x16x64xf32>
    tpu.vector_store %arg25[%c1_9, %c1_10, %c4_11], %11 {strides = array<i32>} : memref<2x18x72xf32, #tpu.memory_space<vmem>>, vector<1x16x64xf32>,
    %c0_12 = arith.constant 0 : index
    %c0_13 = arith.constant 0 : index
    %c0_14 = arith.constant 0 : index
    %12 = vector.load %arg25[%c0_12, %c0_13, %c0_14] : memref<2x18x72xf32, #tpu.memory_space<vmem>>, vector<1x16x64xf32>
    %13 = vector.shape_cast %12 : vector<1x16x64xf32> to vector<16x64xf32>
    %c0_15 = arith.constant 0 : index
    %c0_16 = arith.constant 0 : index
    %c0_17 = arith.constant 0 : index
    %14 = vector.load %arg1[%c0_15, %c0_16, %c0_17] : memref<9x64x128xf32, #tpu.memory_space<vmem>>, vector<1x64x128xf32>
    %15 = vector.shape_cast %14 : vector<1x64x128xf32> to vector<64x128xf32>
    %cst_18 = arith.constant dense<0.000000e+00> : vector<16x128xf32>
    %16 = tpu.matmul %13, %15, %cst_18 {dimension_numbers = #tpu.dot_dimension_numbers<[1], [0], [0], [1], [0, 0, 1, 1], [], []>} : vector<16x64xf32>, vector<64x128xf32>, vector<16x128xf32> -> vector<16x128xf32>
    %c0_19 = arith.constant 0 : index
    %c0_20 = arith.constant 0 : index
    %c4_21 = arith.constant 4 : index
    %17 = vector.load %arg25[%c0_19, %c0_20, %c4_21] : memref<2x18x72xf32, #tpu.memory_space<vmem>>, vector<1x16x64xf32>
    %18 = vector.shape_cast %17 : vector<1x16x64xf32> to vector<16x64xf32>
    %c1_22 = arith.constant 1 : index
    %c0_23 = arith.constant 0 : index
    %c0_24 = arith.constant 0 : index
    %19 = vector.load %arg1[%c1_22, %c0_23, %c0_24] : memref<9x64x128xf32, #tpu.memory_space<vmem>>, vector<1x64x128xf32>
    %20 = vector.shape_cast %19 : vector<1x64x128xf32> to vector<64x128xf32>
    %cst_25 = arith.constant dense<0.000000e+00> : vector<16x128xf32>
    %21 = tpu.matmul %18, %20, %cst_25 {dimension_numbers = #tpu.dot_dimension_numbers<[1], [0], [0], [1], [0, 0, 1, 1], [], []>} : vector<16x64xf32>, vector<64x128xf32>, vector<16x128xf32> -> vector<16x128xf32>
    %22 = arith.addf %16, %21 : vector<16x128xf32>
    %c0_26 = arith.constant 0 : index
    %c0_27 = arith.constant 0 : index
    %c8 = arith.constant 8 : index
    %23 = vector.load %arg25[%c0_26, %c0_27, %c8] : memref<2x18x72xf32, #tpu.memory_space<vmem>>, vector<1x16x64xf32>
    %24 = vector.shape_cast %23 : vector<1x16x64xf32> to vector<16x64xf32>
    %c2 = arith.constant 2 : index
    %c0_28 = arith.constant 0 : index
    %c0_29 = arith.constant 0 : index
    %25 = vector.load %arg1[%c2, %c0_28, %c0_29] : memref<9x64x128xf32, #tpu.memory_space<vmem>>, vector<1x64x128xf32>
    %26 = vector.shape_cast %25 : vector<1x64x128xf32> to vector<64x128xf32>
    %cst_30 = arith.constant dense<0.000000e+00> : vector<16x128xf32>
    %27 = tpu.matmul %24, %26, %cst_30 {dimension_numbers = #tpu.dot_dimension_numbers<[1], [0], [0], [1], [0, 0, 1, 1], [], []>} : vector<16x64xf32>, vector<64x128xf32>, vector<16x128xf32> -> vector<16x128xf32>
    %28 = arith.addf %22, %27 : vector<16x128xf32>
    %c0_31 = arith.constant 0 : index
    %c1_32 = arith.constant 1 : index
    %c0_33 = arith.constant 0 : index
    %29 = vector.load %arg25[%c0_31, %c1_32, %c0_33] : memref<2x18x72xf32, #tpu.memory_space<vmem>>, vector<1x16x64xf32>
    %30 = vector.shape_cast %29 : vector<1x16x64xf32> to vector<16x64xf32>
    %c3 = arith.constant 3 : index
    %c0_34 = arith.constant 0 : index
    %c0_35 = arith.constant 0 : index
    %31 = vector.load %arg1[%c3, %c0_34, %c0_35] : memref<9x64x128xf32, #tpu.memory_space<vmem>>, vector<1x64x128xf32>
    %32 = vector.shape_cast %31 : vector<1x64x128xf32> to vector<64x128xf32>
    %cst_36 = arith.constant dense<0.000000e+00> : vector<16x128xf32>
    %33 = tpu.matmul %30, %32, %cst_36 {dimension_numbers = #tpu.dot_dimension_numbers<[1], [0], [0], [1], [0, 0, 1, 1], [], []>} : vector<16x64xf32>, vector<64x128xf32>, vector<16x128xf32> -> vector<16x128xf32>
    %34 = arith.addf %28, %33 : vector<16x128xf32>
    %c0_37 = arith.constant 0 : index
    %c1_38 = arith.constant 1 : index
    %c4_39 = arith.constant 4 : index
    %35 = vector.load %arg25[%c0_37, %c1_38, %c4_39] : memref<2x18x72xf32, #tpu.memory_space<vmem>>, vector<1x16x64xf32>
    %36 = vector.shape_cast %35 : vector<1x16x64xf32> to vector<16x64xf32>
    %c4_40 = arith.constant 4 : index
    %c0_41 = arith.constant 0 : index
    %c0_42 = arith.constant 0 : index
    %37 = vector.load %arg1[%c4_40, %c0_41, %c0_42] : memref<9x64x128xf32, #tpu.memory_space<vmem>>, vector<1x64x128xf32>
    %38 = vector.shape_cast %37 : vector<1x64x128xf32> to vector<64x128xf32>
    %cst_43 = arith.constant dense<0.000000e+00> : vector<16x128xf32>
    %39 = tpu.matmul %36, %38, %cst_43 {dimension_numbers = #tpu.dot_dimension_numbers<[1], [0], [0], [1], [0, 0, 1, 1], [], []>} : vector<16x64xf32>, vector<64x128xf32>, vector<16x128xf32> -> vector<16x128xf32>
    %40 = arith.addf %34, %39 : vector<16x128xf32>
    %c0_44 = arith.constant 0 : index
    %c1_45 = arith.constant 1 : index
    %c8_46 = arith.constant 8 : index
    %41 = vector.load %arg25[%c0_44, %c1_45, %c8_46] : memref<2x18x72xf32, #tpu.memory_space<vmem>>, vector<1x16x64xf32>
    %42 = vector.shape_cast %41 : vector<1x16x64xf32> to vector<16x64xf32>
    %c5 = arith.constant 5 : index
    %c0_47 = arith.constant 0 : index
    %c0_48 = arith.constant 0 : index
    %43 = vector.load %arg1[%c5, %c0_47, %c0_48] : memref<9x64x128xf32, #tpu.memory_space<vmem>>, vector<1x64x128xf32>
    %44 = vector.shape_cast %43 : vector<1x64x128xf32> to vector<64x128xf32>
    %cst_49 = arith.constant dense<0.000000e+00> : vector<16x128xf32>
    %45 = tpu.matmul %42, %44, %cst_49 {dimension_numbers = #tpu.dot_dimension_numbers<[1], [0], [0], [1], [0, 0, 1, 1], [], []>} : vector<16x64xf32>, vector<64x128xf32>, vector<16x128xf32> -> vector<16x128xf32>
    %46 = arith.addf %40, %45 : vector<16x128xf32>
    %c0_50 = arith.constant 0 : index
    %c2_51 = arith.constant 2 : index
    %c0_52 = arith.constant 0 : index
    %47 = vector.load %arg25[%c0_50, %c2_51, %c0_52] : memref<2x18x72xf32, #tpu.memory_space<vmem>>, vector<1x16x64xf32>
    %48 = vector.shape_cast %47 : vector<1x16x64xf32> to vector<16x64xf32>
    %c6 = arith.constant 6 : index
    %c0_53 = arith.constant 0 : index
    %c0_54 = arith.constant 0 : index
    %49 = vector.load %arg1[%c6, %c0_53, %c0_54] : memref<9x64x128xf32, #tpu.memory_space<vmem>>, vector<1x64x128xf32>
    %50 = vector.shape_cast %49 : vector<1x64x128xf32> to vector<64x128xf32>
    %cst_55 = arith.constant dense<0.000000e+00> : vector<16x128xf32>
    %51 = tpu.matmul %48, %50, %cst_55 {dimension_numbers = #tpu.dot_dimension_numbers<[1], [0], [0], [1], [0, 0, 1, 1], [], []>} : vector<16x64xf32>, vector<64x128xf32>, vector<16x128xf32> -> vector<16x128xf32>
    %52 = arith.addf %46, %51 : vector<16x128xf32>
    %c0_56 = arith.constant 0 : index
    %c2_57 = arith.constant 2 : index
    %c4_58 = arith.constant 4 : index
    %53 = vector.load %arg25[%c0_56, %c2_57, %c4_58] : memref<2x18x72xf32, #tpu.memory_space<vmem>>, vector<1x16x64xf32>
    %54 = vector.shape_cast %53 : vector<1x16x64xf32> to vector<16x64xf32>
    %c7 = arith.constant 7 : index
    %c0_59 = arith.constant 0 : index
    %c0_60 = arith.constant 0 : index
    %55 = vector.load %arg1[%c7, %c0_59, %c0_60] : memref<9x64x128xf32, #tpu.memory_space<vmem>>, vector<1x64x128xf32>
    %56 = vector.shape_cast %55 : vector<1x64x128xf32> to vector<64x128xf32>
    %cst_61 = arith.constant dense<0.000000e+00> : vector<16x128xf32>
    %57 = tpu.matmul %54, %56, %cst_61 {dimension_numbers = #tpu.dot_dimension_numbers<[1], [0], [0], [1], [0, 0, 1, 1], [], []>} : vector<16x64xf32>, vector<64x128xf32>, vector<16x128xf32> -> vector<16x128xf32>
    %58 = arith.addf %52, %57 : vector<16x128xf32>
    %c0_62 = arith.constant 0 : index
    %c2_63 = arith.constant 2 : index
    %c8_64 = arith.constant 8 : index
    %59 = vector.load %arg25[%c0_62, %c2_63, %c8_64] : memref<2x18x72xf32, #tpu.memory_space<vmem>>, vector<1x16x64xf32>
    %60 = vector.shape_cast %59 : vector<1x16x64xf32> to vector<16x64xf32>
    %c8_65 = arith.constant 8 : index
    %c0_66 = arith.constant 0 : index
    %c0_67 = arith.constant 0 : index
    %61 = vector.load %arg1[%c8_65, %c0_66, %c0_67] : memref<9x64x128xf32, #tpu.memory_space<vmem>>, vector<1x64x128xf32>
    %62 = vector.shape_cast %61 : vector<1x64x128xf32> to vector<64x128xf32>
    %cst_68 = arith.constant dense<0.000000e+00> : vector<16x128xf32>
    %63 = tpu.matmul %60, %62, %cst_68 {dimension_numbers = #tpu.dot_dimension_numbers<[1], [0], [0], [1], [0, 0, 1, 1], [], []>} : vector<16x64xf32>, vector<64x128xf32>, vector<16x128xf32> -> vector<16x128xf32>
    %64 = arith.addf %58, %63 : vector<16x128xf32>
    %c1_69 = arith.constant 1 : index
    %c0_70 = arith.constant 0 : index
    %c0_71 = arith.constant 0 : index
    %65 = vector.load %arg25[%c1_69, %c0_70, %c0_71] : memref<2x18x72xf32, #tpu.memory_space<vmem>>, vector<1x16x64xf32>
    %66 = vector.shape_cast %65 : vector<1x16x64xf32> to vector<16x64xf32>
    %c0_72 = arith.constant 0 : index
    %c0_73 = arith.constant 0 : index
    %c0_74 = arith.constant 0 : index
    %67 = vector.load %arg1[%c0_72, %c0_73, %c0_74] : memref<9x64x128xf32, #tpu.memory_space<vmem>>, vector<1x64x128xf32>
    %68 = vector.shape_cast %67 : vector<1x64x128xf32> to vector<64x128xf32>
    %cst_75 = arith.constant dense<0.000000e+00> : vector<16x128xf32>
    %69 = tpu.matmul %66, %68, %cst_75 {dimension_numbers = #tpu.dot_dimension_numbers<[1], [0], [0], [1], [0, 0, 1, 1], [], []>} : vector<16x64xf32>, vector<64x128xf32>, vector<16x128xf32> -> vector<16x128xf32>
    %c1_76 = arith.constant 1 : index
    %c0_77 = arith.constant 0 : index
    %c4_78 = arith.constant 4 : index
    %70 = vector.load %arg25[%c1_76, %c0_77, %c4_78] : memref<2x18x72xf32, #tpu.memory_space<vmem>>, vector<1x16x64xf32>
    %71 = vector.shape_cast %70 : vector<1x16x64xf32> to vector<16x64xf32>
    %c1_79 = arith.constant 1 : index
    %c0_80 = arith.constant 0 : index
    %c0_81 = arith.constant 0 : index
    %72 = vector.load %arg1[%c1_79, %c0_80, %c0_81] : memref<9x64x128xf32, #tpu.memory_space<vmem>>, vector<1x64x128xf32>
    %73 = vector.shape_cast %72 : vector<1x64x128xf32> to vector<64x128xf32>
    %cst_82 = arith.constant dense<0.000000e+00> : vector<16x128xf32>
    %74 = tpu.matmul %71, %73, %cst_82 {dimension_numbers = #tpu.dot_dimension_numbers<[1], [0], [0], [1], [0, 0, 1, 1], [], []>} : vector<16x64xf32>, vector<64x128xf32>, vector<16x128xf32> -> vector<16x128xf32>
    %75 = arith.addf %69, %74 : vector<16x128xf32>
    %c1_83 = arith.constant 1 : index
    %c0_84 = arith.constant 0 : index
    %c8_85 = arith.constant 8 : index
    %76 = vector.load %arg25[%c1_83, %c0_84, %c8_85] : memref<2x18x72xf32, #tpu.memory_space<vmem>>, vector<1x16x64xf32>
    %77 = vector.shape_cast %76 : vector<1x16x64xf32> to vector<16x64xf32>
    %c2_86 = arith.constant 2 : index
    %c0_87 = arith.constant 0 : index
    %c0_88 = arith.constant 0 : index
    %78 = vector.load %arg1[%c2_86, %c0_87, %c0_88] : memref<9x64x128xf32, #tpu.memory_space<vmem>>, vector<1x64x128xf32>
    %79 = vector.shape_cast %78 : vector<1x64x128xf32> to vector<64x128xf32>
    %cst_89 = arith.constant dense<0.000000e+00> : vector<16x128xf32>
    %80 = tpu.matmul %77, %79, %cst_89 {dimension_numbers = #tpu.dot_dimension_numbers<[1], [0], [0], [1], [0, 0, 1, 1], [], []>} : vector<16x64xf32>, vector<64x128xf32>, vector<16x128xf32> -> vector<16x128xf32>
    %81 = arith.addf %75, %80 : vector<16x128xf32>
    %c1_90 = arith.constant 1 : index
    %c1_91 = arith.constant 1 : index
    %c0_92 = arith.constant 0 : index
    %82 = vector.load %arg25[%c1_90, %c1_91, %c0_92] : memref<2x18x72xf32, #tpu.memory_space<vmem>>, vector<1x16x64xf32>
    %83 = vector.shape_cast %82 : vector<1x16x64xf32> to vector<16x64xf32>
    %c3_93 = arith.constant 3 : index
    %c0_94 = arith.constant 0 : index
    %c0_95 = arith.constant 0 : index
    %84 = vector.load %arg1[%c3_93, %c0_94, %c0_95] : memref<9x64x128xf32, #tpu.memory_space<vmem>>, vector<1x64x128xf32>
    %85 = vector.shape_cast %84 : vector<1x64x128xf32> to vector<64x128xf32>
    %cst_96 = arith.constant dense<0.000000e+00> : vector<16x128xf32>
    %86 = tpu.matmul %83, %85, %cst_96 {dimension_numbers = #tpu.dot_dimension_numbers<[1], [0], [0], [1], [0, 0, 1, 1], [], []>} : vector<16x64xf32>, vector<64x128xf32>, vector<16x128xf32> -> vector<16x128xf32>
    %87 = arith.addf %81, %86 : vector<16x128xf32>
    %c1_97 = arith.constant 1 : index
    %c1_98 = arith.constant 1 : index
    %c4_99 = arith.constant 4 : index
    %88 = vector.load %arg25[%c1_97, %c1_98, %c4_99] : memref<2x18x72xf32, #tpu.memory_space<vmem>>, vector<1x16x64xf32>
    %89 = vector.shape_cast %88 : vector<1x16x64xf32> to vector<16x64xf32>
    %c4_100 = arith.constant 4 : index
    %c0_101 = arith.constant 0 : index
    %c0_102 = arith.constant 0 : index
    %90 = vector.load %arg1[%c4_100, %c0_101, %c0_102] : memref<9x64x128xf32, #tpu.memory_space<vmem>>, vector<1x64x128xf32>
    %91 = vector.shape_cast %90 : vector<1x64x128xf32> to vector<64x128xf32>
    %cst_103 = arith.constant dense<0.000000e+00> : vector<16x128xf32>
    %92 = tpu.matmul %89, %91, %cst_103 {dimension_numbers = #tpu.dot_dimension_numbers<[1], [0], [0], [1], [0, 0, 1, 1], [], []>} : vector<16x64xf32>, vector<64x128xf32>, vector<16x128xf32> -> vector<16x128xf32>
    %93 = arith.addf %87, %92 : vector<16x128xf32>
    %c1_104 = arith.constant 1 : index
    %c1_105 = arith.constant 1 : index
    %c8_106 = arith.constant 8 : index
    %94 = vector.load %arg25[%c1_104, %c1_105, %c8_106] : memref<2x18x72xf32, #tpu.memory_space<vmem>>, vector<1x16x64xf32>
    %95 = vector.shape_cast %94 : vector<1x16x64xf32> to vector<16x64xf32>
    %c5_107 = arith.constant 5 : index
    %c0_108 = arith.constant 0 : index
    %c0_109 = arith.constant 0 : index
    %96 = vector.load %arg1[%c5_107, %c0_108, %c0_109] : memref<9x64x128xf32, #tpu.memory_space<vmem>>, vector<1x64x128xf32>
    %97 = vector.shape_cast %96 : vector<1x64x128xf32> to vector<64x128xf32>
    %cst_110 = arith.constant dense<0.000000e+00> : vector<16x128xf32>
    %98 = tpu.matmul %95, %97, %cst_110 {dimension_numbers = #tpu.dot_dimension_numbers<[1], [0], [0], [1], [0, 0, 1, 1], [], []>} : vector<16x64xf32>, vector<64x128xf32>, vector<16x128xf32> -> vector<16x128xf32>
    %99 = arith.addf %93, %98 : vector<16x128xf32>
    %c1_111 = arith.constant 1 : index
    %c2_112 = arith.constant 2 : index
    %c0_113 = arith.constant 0 : index
    %100 = vector.load %arg25[%c1_111, %c2_112, %c0_113] : memref<2x18x72xf32, #tpu.memory_space<vmem>>, vector<1x16x64xf32>
    %101 = vector.shape_cast %100 : vector<1x16x64xf32> to vector<16x64xf32>
    %c6_114 = arith.constant 6 : index
    %c0_115 = arith.constant 0 : index
    %c0_116 = arith.constant 0 : index
    %102 = vector.load %arg1[%c6_114, %c0_115, %c0_116] : memref<9x64x128xf32, #tpu.memory_space<vmem>>, vector<1x64x128xf32>
    %103 = vector.shape_cast %102 : vector<1x64x128xf32> to vector<64x128xf32>
    %cst_117 = arith.constant dense<0.000000e+00> : vector<16x128xf32>
    %104 = tpu.matmul %101, %103, %cst_117 {dimension_numbers = #tpu.dot_dimension_numbers<[1], [0], [0], [1], [0, 0, 1, 1], [], []>} : vector<16x64xf32>, vector<64x128xf32>, vector<16x128xf32> -> vector<16x128xf32>
    %105 = arith.addf %99, %104 : vector<16x128xf32>
    %c1_118 = arith.constant 1 : index
    %c2_119 = arith.constant 2 : index
    %c4_120 = arith.constant 4 : index
    %106 = vector.load %arg25[%c1_118, %c2_119, %c4_120] : memref<2x18x72xf32, #tpu.memory_space<vmem>>, vector<1x16x64xf32>
    %107 = vector.shape_cast %106 : vector<1x16x64xf32> to vector<16x64xf32>
    %c7_121 = arith.constant 7 : index
    %c0_122 = arith.constant 0 : index
    %c0_123 = arith.constant 0 : index
    %108 = vector.load %arg1[%c7_121, %c0_122, %c0_123] : memref<9x64x128xf32, #tpu.memory_space<vmem>>, vector<1x64x128xf32>
    %109 = vector.shape_cast %108 : vector<1x64x128xf32> to vector<64x128xf32>
    %cst_124 = arith.constant dense<0.000000e+00> : vector<16x128xf32>
    %110 = tpu.matmul %107, %109, %cst_124 {dimension_numbers = #tpu.dot_dimension_numbers<[1], [0], [0], [1], [0, 0, 1, 1], [], []>} : vector<16x64xf32>, vector<64x128xf32>, vector<16x128xf32> -> vector<16x128xf32>
    %111 = arith.addf %105, %110 : vector<16x128xf32>
    %c1_125 = arith.constant 1 : index
    %c2_126 = arith.constant 2 : index
    %c8_127 = arith.constant 8 : index
    %112 = vector.load %arg25[%c1_125, %c2_126, %c8_127] : memref<2x18x72xf32, #tpu.memory_space<vmem>>, vector<1x16x64xf32>
    %113 = vector.shape_cast %112 : vector<1x16x64xf32> to vector<16x64xf32>
    %c8_128 = arith.constant 8 : index
    %c0_129 = arith.constant 0 : index
    %c0_130 = arith.constant 0 : index
    %114 = vector.load %arg1[%c8_128, %c0_129, %c0_130] : memref<9x64x128xf32, #tpu.memory_space<vmem>>, vector<1x64x128xf32>
    %115 = vector.shape_cast %114 : vector<1x64x128xf32> to vector<64x128xf32>
    %cst_131 = arith.constant dense<0.000000e+00> : vector<16x128xf32>
    %116 = tpu.matmul %113, %115, %cst_131 {dimension_numbers = #tpu.dot_dimension_numbers<[1], [0], [0], [1], [0, 0, 1, 1], [], []>} : vector<16x64xf32>, vector<64x128xf32>, vector<16x128xf32> -> vector<16x128xf32>
    %117 = arith.addf %111, %116 : vector<16x128xf32>
    %cst_132 = arith.constant 0.000000e+00 : f32
    %118 = vector.broadcast %cst_132 : f32 to vector<1x128xf32>
    %cst_133 = arith.constant 0.000000e+00 : f32
    %119 = vector.broadcast %cst_133 : f32 to vector<1x128xf32>
    %cst_134 = arith.constant dense<0.000000e+00> : vector<128xf32>
    %120 = vector.multi_reduction <add>, %64, %cst_134 [0] : vector<16x128xf32> to vector<128xf32>
    %121 = vector.shape_cast %120 : vector<128xf32> to vector<1x128xf32>
    %122 = arith.addf %118, %121 : vector<1x128xf32>
    %123 = arith.mulf %64, %64 : vector<16x128xf32>
    %cst_135 = arith.constant dense<0.000000e+00> : vector<128xf32>
    %124 = vector.multi_reduction <add>, %123, %cst_135 [0] : vector<16x128xf32> to vector<128xf32>
    %125 = vector.shape_cast %124 : vector<128xf32> to vector<1x128xf32>
    %126 = arith.addf %119, %125 : vector<1x128xf32>
    %cst_136 = arith.constant dense<0.000000e+00> : vector<128xf32>
    %127 = vector.multi_reduction <add>, %117, %cst_136 [0] : vector<16x128xf32> to vector<128xf32>
    %128 = vector.shape_cast %127 : vector<128xf32> to vector<1x128xf32>
    %129 = arith.addf %122, %128 : vector<1x128xf32>
    %130 = arith.mulf %117, %117 : vector<16x128xf32>
    %cst_137 = arith.constant dense<0.000000e+00> : vector<128xf32>
    %131 = vector.multi_reduction <add>, %130, %cst_137 [0] : vector<16x128xf32> to vector<128xf32>
    %132 = vector.shape_cast %131 : vector<128xf32> to vector<1x128xf32>
    %133 = arith.addf %126, %132 : vector<1x128xf32>
    %c0_138 = arith.constant 0 : index
    %c0_139 = arith.constant 0 : index
    %134 = vector.load %arg2[%c0_138, %c0_139] : memref<128x8xf32, #tpu.memory_space<vmem>>, vector<128x8xf32>
    %cst_140 = arith.constant dense<0.000000e+00> : vector<1x8xf32>
    %135 = tpu.matmul %129, %134, %cst_140 {dimension_numbers = #tpu.dot_dimension_numbers<[1], [0], [0], [1], [0, 0, 1, 1], [], []>} : vector<1x128xf32>, vector<128x8xf32>, vector<1x8xf32> -> vector<1x8xf32>
    %c0_141 = arith.constant 0 : index
    %c0_142 = arith.constant 0 : index
    %136 = vector.load %arg2[%c0_141, %c0_142] : memref<128x8xf32, #tpu.memory_space<vmem>>, vector<128x8xf32>
    %cst_143 = arith.constant dense<0.000000e+00> : vector<1x8xf32>
    %137 = tpu.matmul %133, %136, %cst_143 {dimension_numbers = #tpu.dot_dimension_numbers<[1], [0], [0], [1], [0, 0, 1, 1], [], []>} : vector<1x128xf32>, vector<128x8xf32>, vector<1x8xf32> -> vector<1x8xf32>
    %cst_144 = arith.constant 5.120000e+02 : f32
    %138 = vector.broadcast %cst_144 : f32 to vector<1x8xf32>
    %139 = arith.divf %135, %138 : vector<1x8xf32>
    %cst_145 = arith.constant 5.120000e+02 : f32
    %140 = vector.broadcast %cst_145 : f32 to vector<1x8xf32>
    %141 = arith.divf %137, %140 : vector<1x8xf32>
    %142 = arith.mulf %139, %139 : vector<1x8xf32>
    %143 = arith.subf %141, %142 : vector<1x8xf32>
    %cst_146 = arith.constant 0.000000e+00 : f32
    %144 = vector.broadcast %cst_146 : f32 to vector<1x8xf32>
    %145 = arith.maximumf %143, %144 : vector<1x8xf32>
    %c0_147 = arith.constant 0 : index
    %c0_148 = arith.constant 0 : index
    %146 = vector.load %arg4[%c0_147, %c0_148] : memref<1x8xf32, #tpu.memory_space<vmem>>, vector<1x8xf32>
    %cst_149 = arith.constant 9.99999974E-6 : f32
    %147 = vector.broadcast %cst_149 : f32 to vector<1x8xf32>
    %148 = arith.addf %145, %147 : vector<1x8xf32>
    %149 = math.rsqrt %148 : vector<1x8xf32>
    %150 = arith.mulf %146, %149 : vector<1x8xf32>
    %c0_150 = arith.constant 0 : index
    %c0_151 = arith.constant 0 : index
    %151 = vector.load %arg5[%c0_150, %c0_151] : memref<1x8xf32, #tpu.memory_space<vmem>>, vector<1x8xf32>
    %152 = arith.mulf %139, %150 : vector<1x8xf32>
    %153 = arith.subf %151, %152 : vector<1x8xf32>
    %c0_152 = arith.constant 0 : index
    %c0_153 = arith.constant 0 : index
    %154 = vector.load %arg3[%c0_152, %c0_153] : memref<8x128xf32, #tpu.memory_space<vmem>>, vector<8x128xf32>
    %cst_154 = arith.constant dense<0.000000e+00> : vector<1x128xf32>
    %155 = tpu.matmul %150, %154, %cst_154 {dimension_numbers = #tpu.dot_dimension_numbers<[1], [0], [0], [1], [0, 0, 1, 1], [], []>} : vector<1x8xf32>, vector<8x128xf32>, vector<1x128xf32> -> vector<1x128xf32>
    %c0_155 = arith.constant 0 : index
    %c0_156 = arith.constant 0 : index
    %156 = vector.load %arg3[%c0_155, %c0_156] : memref<8x128xf32, #tpu.memory_space<vmem>>, vector<8x128xf32>
    %cst_157 = arith.constant dense<0.000000e+00> : vector<1x128xf32>
    %157 = tpu.matmul %153, %156, %cst_157 {dimension_numbers = #tpu.dot_dimension_numbers<[1], [0], [0], [1], [0, 0, 1, 1], [], []>} : vector<1x8xf32>, vector<8x128xf32>, vector<1x128xf32> -> vector<1x128xf32>
    %cst_158 = arith.constant 0.000000e+00 : f32
    %158 = vector.broadcast %cst_158 : f32 to vector<2x10x80xf32>
    %c0_159 = arith.constant 0 : index
    %c0_160 = arith.constant 0 : index
    %c0_161 = arith.constant 0 : index
    %159 = vector.load %arg26[%c0_159, %c0_160, %c0_161] : memref<2x10x80xf32, #tpu.memory_space<vmem>>, vector<2x10x80xf32>
    tpu.vector_store %arg26[%c0_159, %c0_160, %c0_161], %158 {strides = array<i32>} : memref<2x10x80xf32, #tpu.memory_space<vmem>>, vector<2x10x80xf32>,
    %160 = vector.broadcast %155 : vector<1x128xf32> to vector<16x128xf32>
    %161 = arith.mulf %64, %160 : vector<16x128xf32>
    %162 = vector.broadcast %157 : vector<1x128xf32> to vector<16x128xf32>
    %163 = arith.addf %161, %162 : vector<16x128xf32>
    %cst_162 = arith.constant 0.000000e+00 : f32
    %164 = vector.broadcast %cst_162 : f32 to vector<16x128xf32>
    %165 = arith.maximumf %163, %164 : vector<16x128xf32>
    %c0_163 = arith.constant 0 : index
    %c0_164 = arith.constant 0 : index
    %c0_165 = arith.constant 0 : index
    %166 = vector.load %arg6[%c0_163, %c0_164, %c0_165] : memref<2x8x16xf32, #tpu.memory_space<vmem>>, vector<1x8x16xf32>
    %167 = vector.shape_cast %166 : vector<1x8x16xf32> to vector<8x16xf32>
    %cst_166 = arith.constant dense<0.000000e+00> : vector<8x128xf32>
    %168 = tpu.matmul %167, %165, %cst_166 {dimension_numbers = #tpu.dot_dimension_numbers<[1], [0], [0], [1], [0, 0, 1, 1], [], []>} : vector<8x16xf32>, vector<16x128xf32>, vector<8x128xf32> -> vector<8x128xf32>
    %c1_167 = arith.constant 1 : index
    %c0_168 = arith.constant 0 : index
    %c0_169 = arith.constant 0 : index
    %169 = vector.load %arg6[%c1_167, %c0_168, %c0_169] : memref<2x8x16xf32, #tpu.memory_space<vmem>>, vector<1x8x16xf32>
    %170 = vector.shape_cast %169 : vector<1x8x16xf32> to vector<8x16xf32>
    %cst_170 = arith.constant dense<0.000000e+00> : vector<8x128xf32>
    %171 = tpu.matmul %170, %165, %cst_170 {dimension_numbers = #tpu.dot_dimension_numbers<[1], [0], [0], [1], [0, 0, 1, 1], [], []>} : vector<8x16xf32>, vector<16x128xf32>, vector<8x128xf32> -> vector<8x128xf32>
    %172 = arith.maximumf %168, %171 : vector<8x128xf32>
    %c0_171 = arith.constant 0 : index
    %c0_172 = arith.constant 0 : index
    %c0_173 = arith.constant 0 : index
    %173 = vector.load %arg7[%c0_171, %c0_172, %c0_173] : memref<2x128x64xf32, #tpu.memory_space<vmem>>, vector<1x128x64xf32>
    %174 = vector.shape_cast %173 : vector<1x128x64xf32> to vector<128x64xf32>
    %cst_174 = arith.constant dense<0.000000e+00> : vector<8x64xf32>
    %175 = tpu.matmul %172, %174, %cst_174 {dimension_numbers = #tpu.dot_dimension_numbers<[1], [0], [0], [1], [0, 0, 1, 1], [], []>} : vector<8x128xf32>, vector<128x64xf32>, vector<8x64xf32> -> vector<8x64xf32>
    %c1_175 = arith.constant 1 : index
    %c0_176 = arith.constant 0 : index
    %c0_177 = arith.constant 0 : index
    %176 = vector.load %arg7[%c1_175, %c0_176, %c0_177] : memref<2x128x64xf32, #tpu.memory_space<vmem>>, vector<1x128x64xf32>
    %177 = vector.shape_cast %176 : vector<1x128x64xf32> to vector<128x64xf32>
    %cst_178 = arith.constant dense<0.000000e+00> : vector<8x64xf32>
    %178 = tpu.matmul %172, %177, %cst_178 {dimension_numbers = #tpu.dot_dimension_numbers<[1], [0], [0], [1], [0, 0, 1, 1], [], []>} : vector<8x128xf32>, vector<128x64xf32>, vector<8x64xf32> -> vector<8x64xf32>
    %179 = arith.maximumf %175, %178 : vector<8x64xf32>
    %c0_179 = arith.constant 0 : index
    %c1_180 = arith.constant 1 : index
    %c8_181 = arith.constant 8 : index
    %180 = vector.load %arg26[%c0_179, %c1_180, %c8_181] : memref<2x10x80xf32, #tpu.memory_space<vmem>>, vector<1x8x64xf32>
    %181 = vector.shape_cast %180 : vector<1x8x64xf32> to vector<8x64xf32>
    %182 = vector.shape_cast %179 : vector<8x64xf32> to vector<1x8x64xf32>
    tpu.vector_store %arg26[%c0_179, %c1_180, %c8_181], %182 {strides = array<i32>} : memref<2x10x80xf32, #tpu.memory_space<vmem>>, vector<1x8x64xf32>,
    %183 = vector.broadcast %155 : vector<1x128xf32> to vector<16x128xf32>
    %184 = arith.mulf %117, %183 : vector<16x128xf32>
    %185 = vector.broadcast %157 : vector<1x128xf32> to vector<16x128xf32>
    %186 = arith.addf %184, %185 : vector<16x128xf32>
    %cst_182 = arith.constant 0.000000e+00 : f32
    %187 = vector.broadcast %cst_182 : f32 to vector<16x128xf32>
    %188 = arith.maximumf %186, %187 : vector<16x128xf32>
    %c0_183 = arith.constant 0 : index
    %c0_184 = arith.constant 0 : index
    %c0_185 = arith.constant 0 : index
    %189 = vector.load %arg6[%c0_183, %c0_184, %c0_185] : memref<2x8x16xf32, #tpu.memory_space<vmem>>, vector<1x8x16xf32>
    %190 = vector.shape_cast %189 : vector<1x8x16xf32> to vector<8x16xf32>
    %cst_186 = arith.constant dense<0.000000e+00> : vector<8x128xf32>
    %191 = tpu.matmul %190, %188, %cst_186 {dimension_numbers = #tpu.dot_dimension_numbers<[1], [0], [0], [1], [0, 0, 1, 1], [], []>} : vector<8x16xf32>, vector<16x128xf32>, vector<8x128xf32> -> vector<8x128xf32>
    %c1_187 = arith.constant 1 : index
    %c0_188 = arith.constant 0 : index
    %c0_189 = arith.constant 0 : index
    %192 = vector.load %arg6[%c1_187, %c0_188, %c0_189] : memref<2x8x16xf32, #tpu.memory_space<vmem>>, vector<1x8x16xf32>
    %193 = vector.shape_cast %192 : vector<1x8x16xf32> to vector<8x16xf32>
    %cst_190 = arith.constant dense<0.000000e+00> : vector<8x128xf32>
    %194 = tpu.matmul %193, %188, %cst_190 {dimension_numbers = #tpu.dot_dimension_numbers<[1], [0], [0], [1], [0, 0, 1, 1], [], []>} : vector<8x16xf32>, vector<16x128xf32>, vector<8x128xf32> -> vector<8x128xf32>
    %195 = arith.maximumf %191, %194 : vector<8x128xf32>
    %c0_191 = arith.constant 0 : index
    %c0_192 = arith.constant 0 : index
    %c0_193 = arith.constant 0 : index
    %196 = vector.load %arg7[%c0_191, %c0_192, %c0_193] : memref<2x128x64xf32, #tpu.memory_space<vmem>>, vector<1x128x64xf32>
    %197 = vector.shape_cast %196 : vector<1x128x64xf32> to vector<128x64xf32>
    %cst_194 = arith.constant dense<0.000000e+00> : vector<8x64xf32>
    %198 = tpu.matmul %195, %197, %cst_194 {dimension_numbers = #tpu.dot_dimension_numbers<[1], [0], [0], [1], [0, 0, 1, 1], [], []>} : vector<8x128xf32>, vector<128x64xf32>, vector<8x64xf32> -> vector<8x64xf32>
    %c1_195 = arith.constant 1 : index
    %c0_196 = arith.constant 0 : index
    %c0_197 = arith.constant 0 : index
    %199 = vector.load %arg7[%c1_195, %c0_196, %c0_197] : memref<2x128x64xf32, #tpu.memory_space<vmem>>, vector<1x128x64xf32>
    %200 = vector.shape_cast %199 : vector<1x128x64xf32> to vector<128x64xf32>
    %cst_198 = arith.constant dense<0.000000e+00> : vector<8x64xf32>
    %201 = tpu.matmul %195, %200, %cst_198 {dimension_numbers = #tpu.dot_dimension_numbers<[1], [0], [0], [1], [0, 0, 1, 1], [], []>} : vector<8x128xf32>, vector<128x64xf32>, vector<8x64xf32> -> vector<8x64xf32>
    %202 = arith.maximumf %198, %201 : vector<8x64xf32>
    %c1_199 = arith.constant 1 : index
    %c1_200 = arith.constant 1 : index
    %c8_201 = arith.constant 8 : index
    %203 = vector.load %arg26[%c1_199, %c1_200, %c8_201] : memref<2x10x80xf32, #tpu.memory_space<vmem>>, vector<1x8x64xf32>
    %204 = vector.shape_cast %203 : vector<1x8x64xf32> to vector<8x64xf32>
    %205 = vector.shape_cast %202 : vector<8x64xf32> to vector<1x8x64xf32>
    tpu.vector_store %arg26[%c1_199, %c1_200, %c8_201], %205 {strides = array<i32>} : memref<2x10x80xf32, #tpu.memory_space<vmem>>, vector<1x8x64xf32>,
    %c0_202 = arith.constant 0 : index
    %c0_203 = arith.constant 0 : index
    %c0_204 = arith.constant 0 : index
    %206 = vector.load %arg26[%c0_202, %c0_203, %c0_204] : memref<2x10x80xf32, #tpu.memory_space<vmem>>, vector<1x8x64xf32>
    %207 = vector.shape_cast %206 : vector<1x8x64xf32> to vector<8x64xf32>
    %c0_205 = arith.constant 0 : index
    %c0_206 = arith.constant 0 : index
    %c0_207 = arith.constant 0 : index
    %208 = vector.load %arg8[%c0_205, %c0_206, %c0_207] : memref<9x64x64xf32, #tpu.memory_space<vmem>>, vector<1x64x64xf32>
    %209 = vector.shape_cast %208 : vector<1x64x64xf32> to vector<64x64xf32>
    %cst_208 = arith.constant dense<0.000000e+00> : vector<8x64xf32>
    %210 = tpu.matmul %207, %209, %cst_208 {dimension_numbers = #tpu.dot_dimension_numbers<[1], [0], [0], [1], [0, 0, 1, 1], [], []>} : vector<8x64xf32>, vector<64x64xf32>, vector<8x64xf32> -> vector<8x64xf32>
    %c0_209 = arith.constant 0 : index
    %c0_210 = arith.constant 0 : index
    %c8_211 = arith.constant 8 : index
    %211 = vector.load %arg26[%c0_209, %c0_210, %c8_211] : memref<2x10x80xf32, #tpu.memory_space<vmem>>, vector<1x8x64xf32>
    %212 = vector.shape_cast %211 : vector<1x8x64xf32> to vector<8x64xf32>
    %c1_212 = arith.constant 1 : index
    %c0_213 = arith.constant 0 : index
    %c0_214 = arith.constant 0 : index
    %213 = vector.load %arg8[%c1_212, %c0_213, %c0_214] : memref<9x64x64xf32, #tpu.memory_space<vmem>>, vector<1x64x64xf32>
    %214 = vector.shape_cast %213 : vector<1x64x64xf32> to vector<64x64xf32>
    %cst_215 = arith.constant dense<0.000000e+00> : vector<8x64xf32>
    %215 = tpu.matmul %212, %214, %cst_215 {dimension_numbers = #tpu.dot_dimension_numbers<[1], [0], [0], [1], [0, 0, 1, 1], [], []>} : vector<8x64xf32>, vector<64x64xf32>, vector<8x64xf32> -> vector<8x64xf32>
    %216 = arith.addf %210, %215 : vector<8x64xf32>
    %c0_216 = arith.constant 0 : index
    %c0_217 = arith.constant 0 : index
    %c16 = arith.constant 16 : index
    %217 = vector.load %arg26[%c0_216, %c0_217, %c16] : memref<2x10x80xf32, #tpu.memory_space<vmem>>, vector<1x8x64xf32>
    %218 = vector.shape_cast %217 : vector<1x8x64xf32> to vector<8x64xf32>
    %c2_218 = arith.constant 2 : index
    %c0_219 = arith.constant 0 : index
    %c0_220 = arith.constant 0 : index
    %219 = vector.load %arg8[%c2_218, %c0_219, %c0_220] : memref<9x64x64xf32, #tpu.memory_space<vmem>>, vector<1x64x64xf32>
    %220 = vector.shape_cast %219 : vector<1x64x64xf32> to vector<64x64xf32>
    %cst_221 = arith.constant dense<0.000000e+00> : vector<8x64xf32>
    %221 = tpu.matmul %218, %220, %cst_221 {dimension_numbers = #tpu.dot_dimension_numbers<[1], [0], [0], [1], [0, 0, 1, 1], [], []>} : vector<8x64xf32>, vector<64x64xf32>, vector<8x64xf32> -> vector<8x64xf32>
    %222 = arith.addf %216, %221 : vector<8x64xf32>
    %c0_222 = arith.constant 0 : index
    %c1_223 = arith.constant 1 : index
    %c0_224 = arith.constant 0 : index
    %223 = vector.load %arg26[%c0_222, %c1_223, %c0_224] : memref<2x10x80xf32, #tpu.memory_space<vmem>>, vector<1x8x64xf32>
    %224 = vector.shape_cast %223 : vector<1x8x64xf32> to vector<8x64xf32>
    %c3_225 = arith.constant 3 : index
    %c0_226 = arith.constant 0 : index
    %c0_227 = arith.constant 0 : index
    %225 = vector.load %arg8[%c3_225, %c0_226, %c0_227] : memref<9x64x64xf32, #tpu.memory_space<vmem>>, vector<1x64x64xf32>
    %226 = vector.shape_cast %225 : vector<1x64x64xf32> to vector<64x64xf32>
    %cst_228 = arith.constant dense<0.000000e+00> : vector<8x64xf32>
    %227 = tpu.matmul %224, %226, %cst_228 {dimension_numbers = #tpu.dot_dimension_numbers<[1], [0], [0], [1], [0, 0, 1, 1], [], []>} : vector<8x64xf32>, vector<64x64xf32>, vector<8x64xf32> -> vector<8x64xf32>
    %228 = arith.addf %222, %227 : vector<8x64xf32>
    %c0_229 = arith.constant 0 : index
    %c1_230 = arith.constant 1 : index
    %c8_231 = arith.constant 8 : index
    %229 = vector.load %arg26[%c0_229, %c1_230, %c8_231] : memref<2x10x80xf32, #tpu.memory_space<vmem>>, vector<1x8x64xf32>
    %230 = vector.shape_cast %229 : vector<1x8x64xf32> to vector<8x64xf32>
    %c4_232 = arith.constant 4 : index
    %c0_233 = arith.constant 0 : index
    %c0_234 = arith.constant 0 : index
    %231 = vector.load %arg8[%c4_232, %c0_233, %c0_234] : memref<9x64x64xf32, #tpu.memory_space<vmem>>, vector<1x64x64xf32>
    %232 = vector.shape_cast %231 : vector<1x64x64xf32> to vector<64x64xf32>
    %cst_235 = arith.constant dense<0.000000e+00> : vector<8x64xf32>
    %233 = tpu.matmul %230, %232, %cst_235 {dimension_numbers = #tpu.dot_dimension_numbers<[1], [0], [0], [1], [0, 0, 1, 1], [], []>} : vector<8x64xf32>, vector<64x64xf32>, vector<8x64xf32> -> vector<8x64xf32>
    %234 = arith.addf %228, %233 : vector<8x64xf32>
    %c0_236 = arith.constant 0 : index
    %c1_237 = arith.constant 1 : index
    %c16_238 = arith.constant 16 : index
    %235 = vector.load %arg26[%c0_236, %c1_237, %c16_238] : memref<2x10x80xf32, #tpu.memory_space<vmem>>, vector<1x8x64xf32>
    %236 = vector.shape_cast %235 : vector<1x8x64xf32> to vector<8x64xf32>
    %c5_239 = arith.constant 5 : index
    %c0_240 = arith.constant 0 : index
    %c0_241 = arith.constant 0 : index
    %237 = vector.load %arg8[%c5_239, %c0_240, %c0_241] : memref<9x64x64xf32, #tpu.memory_space<vmem>>, vector<1x64x64xf32>
    %238 = vector.shape_cast %237 : vector<1x64x64xf32> to vector<64x64xf32>
    %cst_242 = arith.constant dense<0.000000e+00> : vector<8x64xf32>
    %239 = tpu.matmul %236, %238, %cst_242 {dimension_numbers = #tpu.dot_dimension_numbers<[1], [0], [0], [1], [0, 0, 1, 1], [], []>} : vector<8x64xf32>, vector<64x64xf32>, vector<8x64xf32> -> vector<8x64xf32>
    %240 = arith.addf %234, %239 : vector<8x64xf32>
    %c0_243 = arith.constant 0 : index
    %c2_244 = arith.constant 2 : index
    %c0_245 = arith.constant 0 : index
    %241 = vector.load %arg26[%c0_243, %c2_244, %c0_245] : memref<2x10x80xf32, #tpu.memory_space<vmem>>, vector<1x8x64xf32>
    %242 = vector.shape_cast %241 : vector<1x8x64xf32> to vector<8x64xf32>
    %c6_246 = arith.constant 6 : index
    %c0_247 = arith.constant 0 : index
    %c0_248 = arith.constant 0 : index
    %243 = vector.load %arg8[%c6_246, %c0_247, %c0_248] : memref<9x64x64xf32, #tpu.memory_space<vmem>>, vector<1x64x64xf32>
    %244 = vector.shape_cast %243 : vector<1x64x64xf32> to vector<64x64xf32>
    %cst_249 = arith.constant dense<0.000000e+00> : vector<8x64xf32>
    %245 = tpu.matmul %242, %244, %cst_249 {dimension_numbers = #tpu.dot_dimension_numbers<[1], [0], [0], [1], [0, 0, 1, 1], [], []>} : vector<8x64xf32>, vector<64x64xf32>, vector<8x64xf32> -> vector<8x64xf32>
    %246 = arith.addf %240, %245 : vector<8x64xf32>
    %c0_250 = arith.constant 0 : index
    %c2_251 = arith.constant 2 : index
    %c8_252 = arith.constant 8 : index
    %247 = vector.load %arg26[%c0_250, %c2_251, %c8_252] : memref<2x10x80xf32, #tpu.memory_space<vmem>>, vector<1x8x64xf32>
    %248 = vector.shape_cast %247 : vector<1x8x64xf32> to vector<8x64xf32>
    %c7_253 = arith.constant 7 : index
    %c0_254 = arith.constant 0 : index
    %c0_255 = arith.constant 0 : index
    %249 = vector.load %arg8[%c7_253, %c0_254, %c0_255] : memref<9x64x64xf32, #tpu.memory_space<vmem>>, vector<1x64x64xf32>
    %250 = vector.shape_cast %249 : vector<1x64x64xf32> to vector<64x64xf32>
    %cst_256 = arith.constant dense<0.000000e+00> : vector<8x64xf32>
    %251 = tpu.matmul %248, %250, %cst_256 {dimension_numbers = #tpu.dot_dimension_numbers<[1], [0], [0], [1], [0, 0, 1, 1], [], []>} : vector<8x64xf32>, vector<64x64xf32>, vector<8x64xf32> -> vector<8x64xf32>
    %252 = arith.addf %246, %251 : vector<8x64xf32>
    %c0_257 = arith.constant 0 : index
    %c2_258 = arith.constant 2 : index
    %c16_259 = arith.constant 16 : index
    %253 = vector.load %arg26[%c0_257, %c2_258, %c16_259] : memref<2x10x80xf32, #tpu.memory_space<vmem>>, vector<1x8x64xf32>
    %254 = vector.shape_cast %253 : vector<1x8x64xf32> to vector<8x64xf32>
    %c8_260 = arith.constant 8 : index
    %c0_261 = arith.constant 0 : index
    %c0_262 = arith.constant 0 : index
    %255 = vector.load %arg8[%c8_260, %c0_261, %c0_262] : memref<9x64x64xf32, #tpu.memory_space<vmem>>, vector<1x64x64xf32>
    %256 = vector.shape_cast %255 : vector<1x64x64xf32> to vector<64x64xf32>
    %cst_263 = arith.constant dense<0.000000e+00> : vector<8x64xf32>
    %257 = tpu.matmul %254, %256, %cst_263 {dimension_numbers = #tpu.dot_dimension_numbers<[1], [0], [0], [1], [0, 0, 1, 1], [], []>} : vector<8x64xf32>, vector<64x64xf32>, vector<8x64xf32> -> vector<8x64xf32>
    %258 = arith.addf %252, %257 : vector<8x64xf32>
    %c1_264 = arith.constant 1 : index
    %c0_265 = arith.constant 0 : index
    %c0_266 = arith.constant 0 : index
    %259 = vector.load %arg26[%c1_264, %c0_265, %c0_266] : memref<2x10x80xf32, #tpu.memory_space<vmem>>, vector<1x8x64xf32>
    %260 = vector.shape_cast %259 : vector<1x8x64xf32> to vector<8x64xf32>
    %c0_267 = arith.constant 0 : index
    %c0_268 = arith.constant 0 : index
    %c0_269 = arith.constant 0 : index
    %261 = vector.load %arg8[%c0_267, %c0_268, %c0_269] : memref<9x64x64xf32, #tpu.memory_space<vmem>>, vector<1x64x64xf32>
    %262 = vector.shape_cast %261 : vector<1x64x64xf32> to vector<64x64xf32>
    %cst_270 = arith.constant dense<0.000000e+00> : vector<8x64xf32>
    %263 = tpu.matmul %260, %262, %cst_270 {dimension_numbers = #tpu.dot_dimension_numbers<[1], [0], [0], [1], [0, 0, 1, 1], [], []>} : vector<8x64xf32>, vector<64x64xf32>, vector<8x64xf32> -> vector<8x64xf32>
    %c1_271 = arith.constant 1 : index
    %c0_272 = arith.constant 0 : index
    %c8_273 = arith.constant 8 : index
    %264 = vector.load %arg26[%c1_271, %c0_272, %c8_273] : memref<2x10x80xf32, #tpu.memory_space<vmem>>, vector<1x8x64xf32>
    %265 = vector.shape_cast %264 : vector<1x8x64xf32> to vector<8x64xf32>
    %c1_274 = arith.constant 1 : index
    %c0_275 = arith.constant 0 : index
    %c0_276 = arith.constant 0 : index
    %266 = vector.load %arg8[%c1_274, %c0_275, %c0_276] : memref<9x64x64xf32, #tpu.memory_space<vmem>>, vector<1x64x64xf32>
    %267 = vector.shape_cast %266 : vector<1x64x64xf32> to vector<64x64xf32>
    %cst_277 = arith.constant dense<0.000000e+00> : vector<8x64xf32>
    %268 = tpu.matmul %265, %267, %cst_277 {dimension_numbers = #tpu.dot_dimension_numbers<[1], [0], [0], [1], [0, 0, 1, 1], [], []>} : vector<8x64xf32>, vector<64x64xf32>, vector<8x64xf32> -> vector<8x64xf32>
    %269 = arith.addf %263, %268 : vector<8x64xf32>
    %c1_278 = arith.constant 1 : index
    %c0_279 = arith.constant 0 : index
    %c16_280 = arith.constant 16 : index
    %270 = vector.load %arg26[%c1_278, %c0_279, %c16_280] : memref<2x10x80xf32, #tpu.memory_space<vmem>>, vector<1x8x64xf32>
    %271 = vector.shape_cast %270 : vector<1x8x64xf32> to vector<8x64xf32>
    %c2_281 = arith.constant 2 : index
    %c0_282 = arith.constant 0 : index
    %c0_283 = arith.constant 0 : index
    %272 = vector.load %arg8[%c2_281, %c0_282, %c0_283] : memref<9x64x64xf32, #tpu.memory_space<vmem>>, vector<1x64x64xf32>
    %273 = vector.shape_cast %272 : vector<1x64x64xf32> to vector<64x64xf32>
    %cst_284 = arith.constant dense<0.000000e+00> : vector<8x64xf32>
    %274 = tpu.matmul %271, %273, %cst_284 {dimension_numbers = #tpu.dot_dimension_numbers<[1], [0], [0], [1], [0, 0, 1, 1], [], []>} : vector<8x64xf32>, vector<64x64xf32>, vector<8x64xf32> -> vector<8x64xf32>
    %275 = arith.addf %269, %274 : vector<8x64xf32>
    %c1_285 = arith.constant 1 : index
    %c1_286 = arith.constant 1 : index
    %c0_287 = arith.constant 0 : index
    %276 = vector.load %arg26[%c1_285, %c1_286, %c0_287] : memref<2x10x80xf32, #tpu.memory_space<vmem>>, vector<1x8x64xf32>
    %277 = vector.shape_cast %276 : vector<1x8x64xf32> to vector<8x64xf32>
    %c3_288 = arith.constant 3 : index
    %c0_289 = arith.constant 0 : index
    %c0_290 = arith.constant 0 : index
    %278 = vector.load %arg8[%c3_288, %c0_289, %c0_290] : memref<9x64x64xf32, #tpu.memory_space<vmem>>, vector<1x64x64xf32>
    %279 = vector.shape_cast %278 : vector<1x64x64xf32> to vector<64x64xf32>
    %cst_291 = arith.constant dense<0.000000e+00> : vector<8x64xf32>
    %280 = tpu.matmul %277, %279, %cst_291 {dimension_numbers = #tpu.dot_dimension_numbers<[1], [0], [0], [1], [0, 0, 1, 1], [], []>} : vector<8x64xf32>, vector<64x64xf32>, vector<8x64xf32> -> vector<8x64xf32>
    %281 = arith.addf %275, %280 : vector<8x64xf32>
    %c1_292 = arith.constant 1 : index
    %c1_293 = arith.constant 1 : index
    %c8_294 = arith.constant 8 : index
    %282 = vector.load %arg26[%c1_292, %c1_293, %c8_294] : memref<2x10x80xf32, #tpu.memory_space<vmem>>, vector<1x8x64xf32>
    %283 = vector.shape_cast %282 : vector<1x8x64xf32> to vector<8x64xf32>
    %c4_295 = arith.constant 4 : index
    %c0_296 = arith.constant 0 : index
    %c0_297 = arith.constant 0 : index
    %284 = vector.load %arg8[%c4_295, %c0_296, %c0_297] : memref<9x64x64xf32, #tpu.memory_space<vmem>>, vector<1x64x64xf32>
    %285 = vector.shape_cast %284 : vector<1x64x64xf32> to vector<64x64xf32>
    %cst_298 = arith.constant dense<0.000000e+00> : vector<8x64xf32>
    %286 = tpu.matmul %283, %285, %cst_298 {dimension_numbers = #tpu.dot_dimension_numbers<[1], [0], [0], [1], [0, 0, 1, 1], [], []>} : vector<8x64xf32>, vector<64x64xf32>, vector<8x64xf32> -> vector<8x64xf32>
    %287 = arith.addf %281, %286 : vector<8x64xf32>
    %c1_299 = arith.constant 1 : index
    %c1_300 = arith.constant 1 : index
    %c16_301 = arith.constant 16 : index
    %288 = vector.load %arg26[%c1_299, %c1_300, %c16_301] : memref<2x10x80xf32, #tpu.memory_space<vmem>>, vector<1x8x64xf32>
    %289 = vector.shape_cast %288 : vector<1x8x64xf32> to vector<8x64xf32>
    %c5_302 = arith.constant 5 : index
    %c0_303 = arith.constant 0 : index
    %c0_304 = arith.constant 0 : index
    %290 = vector.load %arg8[%c5_302, %c0_303, %c0_304] : memref<9x64x64xf32, #tpu.memory_space<vmem>>, vector<1x64x64xf32>
    %291 = vector.shape_cast %290 : vector<1x64x64xf32> to vector<64x64xf32>
    %cst_305 = arith.constant dense<0.000000e+00> : vector<8x64xf32>
    %292 = tpu.matmul %289, %291, %cst_305 {dimension_numbers = #tpu.dot_dimension_numbers<[1], [0], [0], [1], [0, 0, 1, 1], [], []>} : vector<8x64xf32>, vector<64x64xf32>, vector<8x64xf32> -> vector<8x64xf32>
    %293 = arith.addf %287, %292 : vector<8x64xf32>
    %c1_306 = arith.constant 1 : index
    %c2_307 = arith.constant 2 : index
    %c0_308 = arith.constant 0 : index
    %294 = vector.load %arg26[%c1_306, %c2_307, %c0_308] : memref<2x10x80xf32, #tpu.memory_space<vmem>>, vector<1x8x64xf32>
    %295 = vector.shape_cast %294 : vector<1x8x64xf32> to vector<8x64xf32>
    %c6_309 = arith.constant 6 : index
    %c0_310 = arith.constant 0 : index
    %c0_311 = arith.constant 0 : index
    %296 = vector.load %arg8[%c6_309, %c0_310, %c0_311] : memref<9x64x64xf32, #tpu.memory_space<vmem>>, vector<1x64x64xf32>
    %297 = vector.shape_cast %296 : vector<1x64x64xf32> to vector<64x64xf32>
    %cst_312 = arith.constant dense<0.000000e+00> : vector<8x64xf32>
    %298 = tpu.matmul %295, %297, %cst_312 {dimension_numbers = #tpu.dot_dimension_numbers<[1], [0], [0], [1], [0, 0, 1, 1], [], []>} : vector<8x64xf32>, vector<64x64xf32>, vector<8x64xf32> -> vector<8x64xf32>
    %299 = arith.addf %293, %298 : vector<8x64xf32>
    %c1_313 = arith.constant 1 : index
    %c2_314 = arith.constant 2 : index
    %c8_315 = arith.constant 8 : index
    %300 = vector.load %arg26[%c1_313, %c2_314, %c8_315] : memref<2x10x80xf32, #tpu.memory_space<vmem>>, vector<1x8x64xf32>
    %301 = vector.shape_cast %300 : vector<1x8x64xf32> to vector<8x64xf32>
    %c7_316 = arith.constant 7 : index
    %c0_317 = arith.constant 0 : index
    %c0_318 = arith.constant 0 : index
    %302 = vector.load %arg8[%c7_316, %c0_317, %c0_318] : memref<9x64x64xf32, #tpu.memory_space<vmem>>, vector<1x64x64xf32>
    %303 = vector.shape_cast %302 : vector<1x64x64xf32> to vector<64x64xf32>
    %cst_319 = arith.constant dense<0.000000e+00> : vector<8x64xf32>
    %304 = tpu.matmul %301, %303, %cst_319 {dimension_numbers = #tpu.dot_dimension_numbers<[1], [0], [0], [1], [0, 0, 1, 1], [], []>} : vector<8x64xf32>, vector<64x64xf32>, vector<8x64xf32> -> vector<8x64xf32>
    %305 = arith.addf %299, %304 : vector<8x64xf32>
    %c1_320 = arith.constant 1 : index
    %c2_321 = arith.constant 2 : index
    %c16_322 = arith.constant 16 : index
    %306 = vector.load %arg26[%c1_320, %c2_321, %c16_322] : memref<2x10x80xf32, #tpu.memory_space<vmem>>, vector<1x8x64xf32>
    %307 = vector.shape_cast %306 : vector<1x8x64xf32> to vector<8x64xf32>
    %c8_323 = arith.constant 8 : index
    %c0_324 = arith.constant 0 : index
    %c0_325 = arith.constant 0 : index
    %308 = vector.load %arg8[%c8_323, %c0_324, %c0_325] : memref<9x64x64xf32, #tpu.memory_space<vmem>>, vector<1x64x64xf32>
    %309 = vector.shape_cast %308 : vector<1x64x64xf32> to vector<64x64xf32>
    %cst_326 = arith.constant dense<0.000000e+00> : vector<8x64xf32>
    %310 = tpu.matmul %307, %309, %cst_326 {dimension_numbers = #tpu.dot_dimension_numbers<[1], [0], [0], [1], [0, 0, 1, 1], [], []>} : vector<8x64xf32>, vector<64x64xf32>, vector<8x64xf32> -> vector<8x64xf32>
    %311 = arith.addf %305, %310 : vector<8x64xf32>
    %cst_327 = arith.constant 0.000000e+00 : f32
    %312 = vector.broadcast %cst_327 : f32 to vector<1x64xf32>
    %cst_328 = arith.constant 0.000000e+00 : f32
    %313 = vector.broadcast %cst_328 : f32 to vector<1x64xf32>
    %cst_329 = arith.constant dense<0.000000e+00> : vector<64xf32>
    %314 = vector.multi_reduction <add>, %258, %cst_329 [0] : vector<8x64xf32> to vector<64xf32>
    %315 = vector.shape_cast %314 : vector<64xf32> to vector<1x64xf32>
    %316 = arith.addf %312, %315 : vector<1x64xf32>
    %317 = arith.mulf %258, %258 : vector<8x64xf32>
    %cst_330 = arith.constant dense<0.000000e+00> : vector<64xf32>
    %318 = vector.multi_reduction <add>, %317, %cst_330 [0] : vector<8x64xf32> to vector<64xf32>
    %319 = vector.shape_cast %318 : vector<64xf32> to vector<1x64xf32>
    %320 = arith.addf %313, %319 : vector<1x64xf32>
    %cst_331 = arith.constant dense<0.000000e+00> : vector<64xf32>
    %321 = vector.multi_reduction <add>, %311, %cst_331 [0] : vector<8x64xf32> to vector<64xf32>
    %322 = vector.shape_cast %321 : vector<64xf32> to vector<1x64xf32>
    %323 = arith.addf %316, %322 : vector<1x64xf32>
    %324 = arith.mulf %311, %311 : vector<8x64xf32>
    %cst_332 = arith.constant dense<0.000000e+00> : vector<64xf32>
    %325 = vector.multi_reduction <add>, %324, %cst_332 [0] : vector<8x64xf32> to vector<64xf32>
    %326 = vector.shape_cast %325 : vector<64xf32> to vector<1x64xf32>
    %327 = arith.addf %320, %326 : vector<1x64xf32>
    %c0_333 = arith.constant 0 : index
    %c0_334 = arith.constant 0 : index
    %328 = vector.load %arg9[%c0_333, %c0_334] : memref<64x8xf32, #tpu.memory_space<vmem>>, vector<64x8xf32>
    %cst_335 = arith.constant dense<0.000000e+00> : vector<1x8xf32>
    %329 = tpu.matmul %323, %328, %cst_335 {dimension_numbers = #tpu.dot_dimension_numbers<[1], [0], [0], [1], [0, 0, 1, 1], [], []>} : vector<1x64xf32>, vector<64x8xf32>, vector<1x8xf32> -> vector<1x8xf32>
    %c0_336 = arith.constant 0 : index
    %c0_337 = arith.constant 0 : index
    %330 = vector.load %arg9[%c0_336, %c0_337] : memref<64x8xf32, #tpu.memory_space<vmem>>, vector<64x8xf32>
    %cst_338 = arith.constant dense<0.000000e+00> : vector<1x8xf32>
    %331 = tpu.matmul %327, %330, %cst_338 {dimension_numbers = #tpu.dot_dimension_numbers<[1], [0], [0], [1], [0, 0, 1, 1], [], []>} : vector<1x64xf32>, vector<64x8xf32>, vector<1x8xf32> -> vector<1x8xf32>
    %cst_339 = arith.constant 1.280000e+02 : f32
    %332 = vector.broadcast %cst_339 : f32 to vector<1x8xf32>
    %333 = arith.divf %329, %332 : vector<1x8xf32>
    %cst_340 = arith.constant 1.280000e+02 : f32
    %334 = vector.broadcast %cst_340 : f32 to vector<1x8xf32>
    %335 = arith.divf %331, %334 : vector<1x8xf32>
    %336 = arith.mulf %333, %333 : vector<1x8xf32>
    %337 = arith.subf %335, %336 : vector<1x8xf32>
    %cst_341 = arith.constant 0.000000e+00 : f32
    %338 = vector.broadcast %cst_341 : f32 to vector<1x8xf32>
    %339 = arith.maximumf %337, %338 : vector<1x8xf32>
    %c0_342 = arith.constant 0 : index
    %c0_343 = arith.constant 0 : index
    %340 = vector.load %arg11[%c0_342, %c0_343] : memref<1x8xf32, #tpu.memory_space<vmem>>, vector<1x8xf32>
    %cst_344 = arith.constant 9.99999974E-6 : f32
    %341 = vector.broadcast %cst_344 : f32 to vector<1x8xf32>
    %342 = arith.addf %339, %341 : vector<1x8xf32>
    %343 = math.rsqrt %342 : vector<1x8xf32>
    %344 = arith.mulf %340, %343 : vector<1x8xf32>
    %c0_345 = arith.constant 0 : index
    %c0_346 = arith.constant 0 : index
    %345 = vector.load %arg12[%c0_345, %c0_346] : memref<1x8xf32, #tpu.memory_space<vmem>>, vector<1x8xf32>
    %346 = arith.mulf %333, %344 : vector<1x8xf32>
    %347 = arith.subf %345, %346 : vector<1x8xf32>
    %c0_347 = arith.constant 0 : index
    %c0_348 = arith.constant 0 : index
    %348 = vector.load %arg10[%c0_347, %c0_348] : memref<8x64xf32, #tpu.memory_space<vmem>>, vector<8x64xf32>
    %cst_349 = arith.constant dense<0.000000e+00> : vector<1x64xf32>
    %349 = tpu.matmul %344, %348, %cst_349 {dimension_numbers = #tpu.dot_dimension_numbers<[1], [0], [0], [1], [0, 0, 1, 1], [], []>} : vector<1x8xf32>, vector<8x64xf32>, vector<1x64xf32> -> vector<1x64xf32>
    %c0_350 = arith.constant 0 : index
    %c0_351 = arith.constant 0 : index
    %350 = vector.load %arg10[%c0_350, %c0_351] : memref<8x64xf32, #tpu.memory_space<vmem>>, vector<8x64xf32>
    %cst_352 = arith.constant dense<0.000000e+00> : vector<1x64xf32>
    %351 = tpu.matmul %347, %350, %cst_352 {dimension_numbers = #tpu.dot_dimension_numbers<[1], [0], [0], [1], [0, 0, 1, 1], [], []>} : vector<1x8xf32>, vector<8x64xf32>, vector<1x64xf32> -> vector<1x64xf32>
    %352 = vector.broadcast %349 : vector<1x64xf32> to vector<8x64xf32>
    %353 = arith.mulf %258, %352 : vector<8x64xf32>
    %354 = vector.broadcast %351 : vector<1x64xf32> to vector<8x64xf32>
    %355 = arith.addf %353, %354 : vector<8x64xf32>
    %cst_353 = arith.constant 0.000000e+00 : f32
    %356 = vector.broadcast %cst_353 : f32 to vector<8x64xf32>
    %357 = arith.maximumf %355, %356 : vector<8x64xf32>
    %c0_354 = arith.constant 0 : index
    %c0_355 = arith.constant 0 : index
    %c0_356 = arith.constant 0 : index
    %358 = vector.load %arg13[%c0_354, %c0_355, %c0_356] : memref<2x4x8xf32, #tpu.memory_space<vmem>>, vector<1x4x8xf32>
    %359 = vector.shape_cast %358 : vector<1x4x8xf32> to vector<4x8xf32>
    %cst_357 = arith.constant dense<0.000000e+00> : vector<4x64xf32>
    %360 = tpu.matmul %359, %357, %cst_357 {dimension_numbers = #tpu.dot_dimension_numbers<[1], [0], [0], [1], [0, 0, 1, 1], [], []>} : vector<4x8xf32>, vector<8x64xf32>, vector<4x64xf32> -> vector<4x64xf32>
    %c1_358 = arith.constant 1 : index
    %c0_359 = arith.constant 0 : index
    %c0_360 = arith.constant 0 : index
    %361 = vector.load %arg13[%c1_358, %c0_359, %c0_360] : memref<2x4x8xf32, #tpu.memory_space<vmem>>, vector<1x4x8xf32>
    %362 = vector.shape_cast %361 : vector<1x4x8xf32> to vector<4x8xf32>
    %cst_361 = arith.constant dense<0.000000e+00> : vector<4x64xf32>
    %363 = tpu.matmul %362, %357, %cst_361 {dimension_numbers = #tpu.dot_dimension_numbers<[1], [0], [0], [1], [0, 0, 1, 1], [], []>} : vector<4x8xf32>, vector<8x64xf32>, vector<4x64xf32> -> vector<4x64xf32>
    %364 = arith.maximumf %360, %363 : vector<4x64xf32>
    %c0_362 = arith.constant 0 : index
    %c0_363 = arith.constant 0 : index
    %c0_364 = arith.constant 0 : index
    %365 = vector.load %arg14[%c0_362, %c0_363, %c0_364] : memref<2x64x32xf32, #tpu.memory_space<vmem>>, vector<1x64x32xf32>
    %366 = vector.shape_cast %365 : vector<1x64x32xf32> to vector<64x32xf32>
    %cst_365 = arith.constant dense<0.000000e+00> : vector<4x32xf32>
    %367 = tpu.matmul %364, %366, %cst_365 {dimension_numbers = #tpu.dot_dimension_numbers<[1], [0], [0], [1], [0, 0, 1, 1], [], []>} : vector<4x64xf32>, vector<64x32xf32>, vector<4x32xf32> -> vector<4x32xf32>
    %c1_366 = arith.constant 1 : index
    %c0_367 = arith.constant 0 : index
    %c0_368 = arith.constant 0 : index
    %368 = vector.load %arg14[%c1_366, %c0_367, %c0_368] : memref<2x64x32xf32, #tpu.memory_space<vmem>>, vector<1x64x32xf32>
    %369 = vector.shape_cast %368 : vector<1x64x32xf32> to vector<64x32xf32>
    %cst_369 = arith.constant dense<0.000000e+00> : vector<4x32xf32>
    %370 = tpu.matmul %364, %369, %cst_369 {dimension_numbers = #tpu.dot_dimension_numbers<[1], [0], [0], [1], [0, 0, 1, 1], [], []>} : vector<4x64xf32>, vector<64x32xf32>, vector<4x32xf32> -> vector<4x32xf32>
    %371 = arith.maximumf %367, %370 : vector<4x32xf32>
    %372 = vector.broadcast %349 : vector<1x64xf32> to vector<8x64xf32>
    %373 = arith.mulf %311, %372 : vector<8x64xf32>
    %374 = vector.broadcast %351 : vector<1x64xf32> to vector<8x64xf32>
    %375 = arith.addf %373, %374 : vector<8x64xf32>
    %cst_370 = arith.constant 0.000000e+00 : f32
    %376 = vector.broadcast %cst_370 : f32 to vector<8x64xf32>
    %377 = arith.maximumf %375, %376 : vector<8x64xf32>
    %c0_371 = arith.constant 0 : index
    %c0_372 = arith.constant 0 : index
    %c0_373 = arith.constant 0 : index
    %378 = vector.load %arg13[%c0_371, %c0_372, %c0_373] : memref<2x4x8xf32, #tpu.memory_space<vmem>>, vector<1x4x8xf32>
    %379 = vector.shape_cast %378 : vector<1x4x8xf32> to vector<4x8xf32>
    %cst_374 = arith.constant dense<0.000000e+00> : vector<4x64xf32>
    %380 = tpu.matmul %379, %377, %cst_374 {dimension_numbers = #tpu.dot_dimension_numbers<[1], [0], [0], [1], [0, 0, 1, 1], [], []>} : vector<4x8xf32>, vector<8x64xf32>, vector<4x64xf32> -> vector<4x64xf32>
    %c1_375 = arith.constant 1 : index
    %c0_376 = arith.constant 0 : index
    %c0_377 = arith.constant 0 : index
    %381 = vector.load %arg13[%c1_375, %c0_376, %c0_377] : memref<2x4x8xf32, #tpu.memory_space<vmem>>, vector<1x4x8xf32>
    %382 = vector.shape_cast %381 : vector<1x4x8xf32> to vector<4x8xf32>
    %cst_378 = arith.constant dense<0.000000e+00> : vector<4x64xf32>
    %383 = tpu.matmul %382, %377, %cst_378 {dimension_numbers = #tpu.dot_dimension_numbers<[1], [0], [0], [1], [0, 0, 1, 1], [], []>} : vector<4x8xf32>, vector<8x64xf32>, vector<4x64xf32> -> vector<4x64xf32>
    %384 = arith.maximumf %380, %383 : vector<4x64xf32>
    %c0_379 = arith.constant 0 : index
    %c0_380 = arith.constant 0 : index
    %c0_381 = arith.constant 0 : index
    %385 = vector.load %arg14[%c0_379, %c0_380, %c0_381] : memref<2x64x32xf32, #tpu.memory_space<vmem>>, vector<1x64x32xf32>
    %386 = vector.shape_cast %385 : vector<1x64x32xf32> to vector<64x32xf32>
    %cst_382 = arith.constant dense<0.000000e+00> : vector<4x32xf32>
    %387 = tpu.matmul %384, %386, %cst_382 {dimension_numbers = #tpu.dot_dimension_numbers<[1], [0], [0], [1], [0, 0, 1, 1], [], []>} : vector<4x64xf32>, vector<64x32xf32>, vector<4x32xf32> -> vector<4x32xf32>
    %c1_383 = arith.constant 1 : index
    %c0_384 = arith.constant 0 : index
    %c0_385 = arith.constant 0 : index
    %388 = vector.load %arg14[%c1_383, %c0_384, %c0_385] : memref<2x64x32xf32, #tpu.memory_space<vmem>>, vector<1x64x32xf32>
    %389 = vector.shape_cast %388 : vector<1x64x32xf32> to vector<64x32xf32>
    %cst_386 = arith.constant dense<0.000000e+00> : vector<4x32xf32>
    %390 = tpu.matmul %384, %389, %cst_386 {dimension_numbers = #tpu.dot_dimension_numbers<[1], [0], [0], [1], [0, 0, 1, 1], [], []>} : vector<4x64xf32>, vector<64x32xf32>, vector<4x32xf32> -> vector<4x32xf32>
    %391 = arith.maximumf %387, %390 : vector<4x32xf32>
    %392 = vector.extract_strided_slice %371 {offsets = [0, 0], sizes = [3, 24], strides = [1, 1]} : vector<4x32xf32> to vector<3x24xf32>
    %c0_387 = arith.constant 0 : index
    %c0_388 = arith.constant 0 : index
    %c0_389 = arith.constant 0 : index
    %393 = vector.load %arg15[%c0_387, %c0_388, %c0_389] : memref<4x24x24xf32, #tpu.memory_space<vmem>>, vector<1x24x24xf32>
    %394 = vector.shape_cast %393 : vector<1x24x24xf32> to vector<24x24xf32>
    %cst_390 = arith.constant dense<0.000000e+00> : vector<3x24xf32>
    %395 = tpu.matmul %392, %394, %cst_390 {dimension_numbers = #tpu.dot_dimension_numbers<[1], [0], [0], [1], [0, 0, 1, 1], [], []>} : vector<3x24xf32>, vector<24x24xf32>, vector<3x24xf32> -> vector<3x24xf32>
    %396 = vector.extract_strided_slice %371 {offsets = [0, 8], sizes = [3, 24], strides = [1, 1]} : vector<4x32xf32> to vector<3x24xf32>
    %c1_391 = arith.constant 1 : index
    %c0_392 = arith.constant 0 : index
    %c0_393 = arith.constant 0 : index
    %397 = vector.load %arg15[%c1_391, %c0_392, %c0_393] : memref<4x24x24xf32, #tpu.memory_space<vmem>>, vector<1x24x24xf32>
    %398 = vector.shape_cast %397 : vector<1x24x24xf32> to vector<24x24xf32>
    %cst_394 = arith.constant dense<0.000000e+00> : vector<3x24xf32>
    %399 = tpu.matmul %396, %398, %cst_394 {dimension_numbers = #tpu.dot_dimension_numbers<[1], [0], [0], [1], [0, 0, 1, 1], [], []>} : vector<3x24xf32>, vector<24x24xf32>, vector<3x24xf32> -> vector<3x24xf32>
    %400 = arith.addf %395, %399 : vector<3x24xf32>
    %401 = vector.extract_strided_slice %371 {offsets = [1, 0], sizes = [3, 24], strides = [1, 1]} : vector<4x32xf32> to vector<3x24xf32>
    %c2_395 = arith.constant 2 : index
    %c0_396 = arith.constant 0 : index
    %c0_397 = arith.constant 0 : index
    %402 = vector.load %arg15[%c2_395, %c0_396, %c0_397] : memref<4x24x24xf32, #tpu.memory_space<vmem>>, vector<1x24x24xf32>
    %403 = vector.shape_cast %402 : vector<1x24x24xf32> to vector<24x24xf32>
    %cst_398 = arith.constant dense<0.000000e+00> : vector<3x24xf32>
    %404 = tpu.matmul %401, %403, %cst_398 {dimension_numbers = #tpu.dot_dimension_numbers<[1], [0], [0], [1], [0, 0, 1, 1], [], []>} : vector<3x24xf32>, vector<24x24xf32>, vector<3x24xf32> -> vector<3x24xf32>
    %405 = arith.addf %400, %404 : vector<3x24xf32>
    %406 = vector.extract_strided_slice %371 {offsets = [1, 8], sizes = [3, 24], strides = [1, 1]} : vector<4x32xf32> to vector<3x24xf32>
    %c3_399 = arith.constant 3 : index
    %c0_400 = arith.constant 0 : index
    %c0_401 = arith.constant 0 : index
    %407 = vector.load %arg15[%c3_399, %c0_400, %c0_401] : memref<4x24x24xf32, #tpu.memory_space<vmem>>, vector<1x24x24xf32>
    %408 = vector.shape_cast %407 : vector<1x24x24xf32> to vector<24x24xf32>
    %cst_402 = arith.constant dense<0.000000e+00> : vector<3x24xf32>
    %409 = tpu.matmul %406, %408, %cst_402 {dimension_numbers = #tpu.dot_dimension_numbers<[1], [0], [0], [1], [0, 0, 1, 1], [], []>} : vector<3x24xf32>, vector<24x24xf32>, vector<3x24xf32> -> vector<3x24xf32>
    %410 = arith.addf %405, %409 : vector<3x24xf32>
    %c0_403 = arith.constant 0 : index
    %c0_404 = arith.constant 0 : index
    %411 = vector.load %arg16[%c0_403, %c0_404] : memref<1x24xf32, #tpu.memory_space<vmem>>, vector<1x24xf32>
    %412 = vector.broadcast %411 : vector<1x24xf32> to vector<3x24xf32>
    %413 = arith.addf %410, %412 : vector<3x24xf32>
    %cst_405 = arith.constant 0.000000e+00 : f32
    %414 = vector.broadcast %cst_405 : f32 to vector<3x24xf32>
    %415 = arith.maximumf %413, %414 : vector<3x24xf32>
    %416 = vector.extract_strided_slice %415 {offsets = [1, 8], sizes = [1, 8], strides = [1, 1]} : vector<3x24xf32> to vector<1x8xf32>
    %417 = vector.extract_strided_slice %371 {offsets = [0, 0], sizes = [2, 16], strides = [1, 1]} : vector<4x32xf32> to vector<2x16xf32>
    %c0_406 = arith.constant 0 : index
    %c0_407 = arith.constant 0 : index
    %c0_408 = arith.constant 0 : index
    %418 = vector.load %arg17[%c0_406, %c0_407, %c0_408] : memref<9x16x16xf32, #tpu.memory_space<vmem>>, vector<1x16x16xf32>
    %419 = vector.shape_cast %418 : vector<1x16x16xf32> to vector<16x16xf32>
    %cst_409 = arith.constant dense<0.000000e+00> : vector<2x16xf32>
    %420 = tpu.matmul %417, %419, %cst_409 {dimension_numbers = #tpu.dot_dimension_numbers<[1], [0], [0], [1], [0, 0, 1, 1], [], []>} : vector<2x16xf32>, vector<16x16xf32>, vector<2x16xf32> -> vector<2x16xf32>
    %421 = vector.extract_strided_slice %371 {offsets = [0, 8], sizes = [2, 16], strides = [1, 1]} : vector<4x32xf32> to vector<2x16xf32>
    %c1_410 = arith.constant 1 : index
    %c0_411 = arith.constant 0 : index
    %c0_412 = arith.constant 0 : index
    %422 = vector.load %arg17[%c1_410, %c0_411, %c0_412] : memref<9x16x16xf32, #tpu.memory_space<vmem>>, vector<1x16x16xf32>
    %423 = vector.shape_cast %422 : vector<1x16x16xf32> to vector<16x16xf32>
    %cst_413 = arith.constant dense<0.000000e+00> : vector<2x16xf32>
    %424 = tpu.matmul %421, %423, %cst_413 {dimension_numbers = #tpu.dot_dimension_numbers<[1], [0], [0], [1], [0, 0, 1, 1], [], []>} : vector<2x16xf32>, vector<16x16xf32>, vector<2x16xf32> -> vector<2x16xf32>
    %425 = arith.addf %420, %424 : vector<2x16xf32>
    %426 = vector.extract_strided_slice %371 {offsets = [0, 16], sizes = [2, 16], strides = [1, 1]} : vector<4x32xf32> to vector<2x16xf32>
    %c2_414 = arith.constant 2 : index
    %c0_415 = arith.constant 0 : index
    %c0_416 = arith.constant 0 : index
    %427 = vector.load %arg17[%c2_414, %c0_415, %c0_416] : memref<9x16x16xf32, #tpu.memory_space<vmem>>, vector<1x16x16xf32>
    %428 = vector.shape_cast %427 : vector<1x16x16xf32> to vector<16x16xf32>
    %cst_417 = arith.constant dense<0.000000e+00> : vector<2x16xf32>
    %429 = tpu.matmul %426, %428, %cst_417 {dimension_numbers = #tpu.dot_dimension_numbers<[1], [0], [0], [1], [0, 0, 1, 1], [], []>} : vector<2x16xf32>, vector<16x16xf32>, vector<2x16xf32> -> vector<2x16xf32>
    %430 = arith.addf %425, %429 : vector<2x16xf32>
    %431 = vector.extract_strided_slice %371 {offsets = [1, 0], sizes = [2, 16], strides = [1, 1]} : vector<4x32xf32> to vector<2x16xf32>
    %c3_418 = arith.constant 3 : index
    %c0_419 = arith.constant 0 : index
    %c0_420 = arith.constant 0 : index
    %432 = vector.load %arg17[%c3_418, %c0_419, %c0_420] : memref<9x16x16xf32, #tpu.memory_space<vmem>>, vector<1x16x16xf32>
    %433 = vector.shape_cast %432 : vector<1x16x16xf32> to vector<16x16xf32>
    %cst_421 = arith.constant dense<0.000000e+00> : vector<2x16xf32>
    %434 = tpu.matmul %431, %433, %cst_421 {dimension_numbers = #tpu.dot_dimension_numbers<[1], [0], [0], [1], [0, 0, 1, 1], [], []>} : vector<2x16xf32>, vector<16x16xf32>, vector<2x16xf32> -> vector<2x16xf32>
    %435 = arith.addf %430, %434 : vector<2x16xf32>
    %436 = vector.extract_strided_slice %371 {offsets = [1, 8], sizes = [2, 16], strides = [1, 1]} : vector<4x32xf32> to vector<2x16xf32>
    %c4_422 = arith.constant 4 : index
    %c0_423 = arith.constant 0 : index
    %c0_424 = arith.constant 0 : index
    %437 = vector.load %arg17[%c4_422, %c0_423, %c0_424] : memref<9x16x16xf32, #tpu.memory_space<vmem>>, vector<1x16x16xf32>
    %438 = vector.shape_cast %437 : vector<1x16x16xf32> to vector<16x16xf32>
    %cst_425 = arith.constant dense<0.000000e+00> : vector<2x16xf32>
    %439 = tpu.matmul %436, %438, %cst_425 {dimension_numbers = #tpu.dot_dimension_numbers<[1], [0], [0], [1], [0, 0, 1, 1], [], []>} : vector<2x16xf32>, vector<16x16xf32>, vector<2x16xf32> -> vector<2x16xf32>
    %440 = arith.addf %435, %439 : vector<2x16xf32>
    %441 = vector.extract_strided_slice %371 {offsets = [1, 16], sizes = [2, 16], strides = [1, 1]} : vector<4x32xf32> to vector<2x16xf32>
    %c5_426 = arith.constant 5 : index
    %c0_427 = arith.constant 0 : index
    %c0_428 = arith.constant 0 : index
    %442 = vector.load %arg17[%c5_426, %c0_427, %c0_428] : memref<9x16x16xf32, #tpu.memory_space<vmem>>, vector<1x16x16xf32>
    %443 = vector.shape_cast %442 : vector<1x16x16xf32> to vector<16x16xf32>
    %cst_429 = arith.constant dense<0.000000e+00> : vector<2x16xf32>
    %444 = tpu.matmul %441, %443, %cst_429 {dimension_numbers = #tpu.dot_dimension_numbers<[1], [0], [0], [1], [0, 0, 1, 1], [], []>} : vector<2x16xf32>, vector<16x16xf32>, vector<2x16xf32> -> vector<2x16xf32>
    %445 = arith.addf %440, %444 : vector<2x16xf32>
    %446 = vector.extract_strided_slice %371 {offsets = [2, 0], sizes = [2, 16], strides = [1, 1]} : vector<4x32xf32> to vector<2x16xf32>
    %c6_430 = arith.constant 6 : index
    %c0_431 = arith.constant 0 : index
    %c0_432 = arith.constant 0 : index
    %447 = vector.load %arg17[%c6_430, %c0_431, %c0_432] : memref<9x16x16xf32, #tpu.memory_space<vmem>>, vector<1x16x16xf32>
    %448 = vector.shape_cast %447 : vector<1x16x16xf32> to vector<16x16xf32>
    %cst_433 = arith.constant dense<0.000000e+00> : vector<2x16xf32>
    %449 = tpu.matmul %446, %448, %cst_433 {dimension_numbers = #tpu.dot_dimension_numbers<[1], [0], [0], [1], [0, 0, 1, 1], [], []>} : vector<2x16xf32>, vector<16x16xf32>, vector<2x16xf32> -> vector<2x16xf32>
    %450 = arith.addf %445, %449 : vector<2x16xf32>
    %451 = vector.extract_strided_slice %371 {offsets = [2, 8], sizes = [2, 16], strides = [1, 1]} : vector<4x32xf32> to vector<2x16xf32>
    %c7_434 = arith.constant 7 : index
    %c0_435 = arith.constant 0 : index
    %c0_436 = arith.constant 0 : index
    %452 = vector.load %arg17[%c7_434, %c0_435, %c0_436] : memref<9x16x16xf32, #tpu.memory_space<vmem>>, vector<1x16x16xf32>
    %453 = vector.shape_cast %452 : vector<1x16x16xf32> to vector<16x16xf32>
    %cst_437 = arith.constant dense<0.000000e+00> : vector<2x16xf32>
    %454 = tpu.matmul %451, %453, %cst_437 {dimension_numbers = #tpu.dot_dimension_numbers<[1], [0], [0], [1], [0, 0, 1, 1], [], []>} : vector<2x16xf32>, vector<16x16xf32>, vector<2x16xf32> -> vector<2x16xf32>
    %455 = arith.addf %450, %454 : vector<2x16xf32>
    %456 = vector.extract_strided_slice %371 {offsets = [2, 16], sizes = [2, 16], strides = [1, 1]} : vector<4x32xf32> to vector<2x16xf32>
    %c8_438 = arith.constant 8 : index
    %c0_439 = arith.constant 0 : index
    %c0_440 = arith.constant 0 : index
    %457 = vector.load %arg17[%c8_438, %c0_439, %c0_440] : memref<9x16x16xf32, #tpu.memory_space<vmem>>, vector<1x16x16xf32>
    %458 = vector.shape_cast %457 : vector<1x16x16xf32> to vector<16x16xf32>
    %cst_441 = arith.constant dense<0.000000e+00> : vector<2x16xf32>
    %459 = tpu.matmul %456, %458, %cst_441 {dimension_numbers = #tpu.dot_dimension_numbers<[1], [0], [0], [1], [0, 0, 1, 1], [], []>} : vector<2x16xf32>, vector<16x16xf32>, vector<2x16xf32> -> vector<2x16xf32>
    %460 = arith.addf %455, %459 : vector<2x16xf32>
    %c0_442 = arith.constant 0 : index
    %c0_443 = arith.constant 0 : index
    %461 = vector.load %arg18[%c0_442, %c0_443] : memref<1x16xf32, #tpu.memory_space<vmem>>, vector<1x16xf32>
    %462 = vector.broadcast %461 : vector<1x16xf32> to vector<2x16xf32>
    %463 = arith.addf %460, %462 : vector<2x16xf32>
    %cst_444 = arith.constant 0.000000e+00 : f32
    %464 = vector.broadcast %cst_444 : f32 to vector<2x16xf32>
    %465 = arith.maximumf %463, %464 : vector<2x16xf32>
    %466 = vector.extract_strided_slice %465 {offsets = [0, 0], sizes = [1, 8], strides = [1, 1]} : vector<2x16xf32> to vector<1x8xf32>
    %467 = vector.extract_strided_slice %465 {offsets = [0, 8], sizes = [1, 8], strides = [1, 1]} : vector<2x16xf32> to vector<1x8xf32>
    %468 = arith.maximumf %466, %467 : vector<1x8xf32>
    %469 = vector.extract_strided_slice %465 {offsets = [1, 0], sizes = [1, 8], strides = [1, 1]} : vector<2x16xf32> to vector<1x8xf32>
    %470 = vector.extract_strided_slice %465 {offsets = [1, 8], sizes = [1, 8], strides = [1, 1]} : vector<2x16xf32> to vector<1x8xf32>
    %471 = arith.maximumf %469, %470 : vector<1x8xf32>
    %472 = arith.maximumf %468, %471 : vector<1x8xf32>
    %c0_445 = arith.constant 0 : index
    %c0_446 = arith.constant 0 : index
    %c0_447 = arith.constant 0 : index
    %473 = vector.load %arg19[%c0_445, %c0_446, %c0_447] : memref<4x8x8xf32, #tpu.memory_space<vmem>>, vector<1x8x8xf32>
    %474 = vector.shape_cast %473 : vector<1x8x8xf32> to vector<8x8xf32>
    %cst_448 = arith.constant dense<0.000000e+00> : vector<1x8xf32>
    %475 = tpu.matmul %416, %474, %cst_448 {dimension_numbers = #tpu.dot_dimension_numbers<[1], [0], [0], [1], [0, 0, 1, 1], [], []>} : vector<1x8xf32>, vector<8x8xf32>, vector<1x8xf32> -> vector<1x8xf32>
    %c0_449 = arith.constant 0 : index
    %c0_450 = arith.constant 0 : index
    %c0_451 = arith.constant 0 : index
    %476 = vector.load %arg20[%c0_449, %c0_450, %c0_451] : memref<4x1x8xf32, #tpu.memory_space<vmem>>, vector<1x1x8xf32>
    %477 = vector.shape_cast %476 : vector<1x1x8xf32> to vector<1x8xf32>
    %478 = arith.addf %475, %477 : vector<1x8xf32>
    %cst_452 = arith.constant 0.000000e+00 : f32
    %479 = vector.broadcast %cst_452 : f32 to vector<1x8xf32>
    %480 = arith.maximumf %478, %479 : vector<1x8xf32>
    %c2_453 = arith.constant 2 : index
    %c0_454 = arith.constant 0 : index
    %c0_455 = arith.constant 0 : index
    %481 = vector.load %arg19[%c2_453, %c0_454, %c0_455] : memref<4x8x8xf32, #tpu.memory_space<vmem>>, vector<1x8x8xf32>
    %482 = vector.shape_cast %481 : vector<1x8x8xf32> to vector<8x8xf32>
    %cst_456 = arith.constant dense<0.000000e+00> : vector<1x8xf32>
    %483 = tpu.matmul %472, %482, %cst_456 {dimension_numbers = #tpu.dot_dimension_numbers<[1], [0], [0], [1], [0, 0, 1, 1], [], []>} : vector<1x8xf32>, vector<8x8xf32>, vector<1x8xf32> -> vector<1x8xf32>
    %c2_457 = arith.constant 2 : index
    %c0_458 = arith.constant 0 : index
    %c0_459 = arith.constant 0 : index
    %484 = vector.load %arg20[%c2_457, %c0_458, %c0_459] : memref<4x1x8xf32, #tpu.memory_space<vmem>>, vector<1x1x8xf32>
    %485 = vector.shape_cast %484 : vector<1x1x8xf32> to vector<1x8xf32>
    %486 = arith.addf %483, %485 : vector<1x8xf32>
    %cst_460 = arith.constant 0.000000e+00 : f32
    %487 = vector.broadcast %cst_460 : f32 to vector<1x8xf32>
    %488 = arith.maximumf %486, %487 : vector<1x8xf32>
    %c1_461 = arith.constant 1 : index
    %c0_462 = arith.constant 0 : index
    %c0_463 = arith.constant 0 : index
    %489 = vector.load %arg19[%c1_461, %c0_462, %c0_463] : memref<4x8x8xf32, #tpu.memory_space<vmem>>, vector<1x8x8xf32>
    %490 = vector.shape_cast %489 : vector<1x8x8xf32> to vector<8x8xf32>
    %cst_464 = arith.constant dense<0.000000e+00> : vector<1x8xf32>
    %491 = tpu.matmul %480, %490, %cst_464 {dimension_numbers = #tpu.dot_dimension_numbers<[1], [0], [0], [1], [0, 0, 1, 1], [], []>} : vector<1x8xf32>, vector<8x8xf32>, vector<1x8xf32> -> vector<1x8xf32>
    %c1_465 = arith.constant 1 : index
    %c0_466 = arith.constant 0 : index
    %c0_467 = arith.constant 0 : index
    %492 = vector.load %arg20[%c1_465, %c0_466, %c0_467] : memref<4x1x8xf32, #tpu.memory_space<vmem>>, vector<1x1x8xf32>
    %493 = vector.shape_cast %492 : vector<1x1x8xf32> to vector<1x8xf32>
    %494 = arith.addf %491, %493 : vector<1x8xf32>
    %cst_468 = arith.constant 0.000000e+00 : f32
    %495 = vector.broadcast %cst_468 : f32 to vector<1x8xf32>
    %496 = arith.maximumf %494, %495 : vector<1x8xf32>
    %c3_469 = arith.constant 3 : index
    %c0_470 = arith.constant 0 : index
    %c0_471 = arith.constant 0 : index
    %497 = vector.load %arg19[%c3_469, %c0_470, %c0_471] : memref<4x8x8xf32, #tpu.memory_space<vmem>>, vector<1x8x8xf32>
    %498 = vector.shape_cast %497 : vector<1x8x8xf32> to vector<8x8xf32>
    %cst_472 = arith.constant dense<0.000000e+00> : vector<1x8xf32>
    %499 = tpu.matmul %488, %498, %cst_472 {dimension_numbers = #tpu.dot_dimension_numbers<[1], [0], [0], [1], [0, 0, 1, 1], [], []>} : vector<1x8xf32>, vector<8x8xf32>, vector<1x8xf32> -> vector<1x8xf32>
    %c3_473 = arith.constant 3 : index
    %c0_474 = arith.constant 0 : index
    %c0_475 = arith.constant 0 : index
    %500 = vector.load %arg20[%c3_473, %c0_474, %c0_475] : memref<4x1x8xf32, #tpu.memory_space<vmem>>, vector<1x1x8xf32>
    %501 = vector.shape_cast %500 : vector<1x1x8xf32> to vector<1x8xf32>
    %502 = arith.addf %499, %501 : vector<1x8xf32>
    %cst_476 = arith.constant 0.000000e+00 : f32
    %503 = vector.broadcast %cst_476 : f32 to vector<1x8xf32>
    %504 = arith.maximumf %502, %503 : vector<1x8xf32>
    %c0_477 = arith.constant 0 : index
    %c0_478 = arith.constant 0 : index
    %505 = vector.load %arg21[%c0_477, %c0_478] : memref<8x8xf32, #tpu.memory_space<vmem>>, vector<8x8xf32>
    %cst_479 = arith.constant dense<0.000000e+00> : vector<1x8xf32>
    %506 = tpu.matmul %496, %505, %cst_479 {dimension_numbers = #tpu.dot_dimension_numbers<[1], [0], [0], [1], [0, 0, 1, 1], [], []>} : vector<1x8xf32>, vector<8x8xf32>, vector<1x8xf32> -> vector<1x8xf32>
    %c0_480 = arith.constant 0 : index
    %c0_481 = arith.constant 0 : index
    %507 = vector.load %arg22[%c0_480, %c0_481] : memref<8x8xf32, #tpu.memory_space<vmem>>, vector<8x8xf32>
    %cst_482 = arith.constant dense<0.000000e+00> : vector<1x8xf32>
    %508 = tpu.matmul %504, %507, %cst_482 {dimension_numbers = #tpu.dot_dimension_numbers<[1], [0], [0], [1], [0, 0, 1, 1], [], []>} : vector<1x8xf32>, vector<8x8xf32>, vector<1x8xf32> -> vector<1x8xf32>
    %509 = arith.addf %506, %508 : vector<1x8xf32>
    %c0_483 = arith.constant 0 : index
    %c0_484 = arith.constant 0 : index
    %510 = vector.load %arg23[%c0_483, %c0_484] : memref<1x8xf32, #tpu.memory_space<vmem>>, vector<1x8xf32>
    %511 = arith.addf %509, %510 : vector<1x8xf32>
    %c0_485 = arith.constant 0 : index
    %c0_486 = arith.constant 0 : index
    %512 = vector.load %arg24[%c0_485, %c0_486] : memref<2x8xf32, #tpu.memory_space<vmem>>, vector<1x8xf32>
    tpu.vector_store %arg24[%c0_485, %c0_486], %511 {strides = array<i32>} : memref<2x8xf32, #tpu.memory_space<vmem>>, vector<1x8xf32>,
    %513 = vector.extract_strided_slice %391 {offsets = [0, 0], sizes = [3, 24], strides = [1, 1]} : vector<4x32xf32> to vector<3x24xf32>
    %c0_487 = arith.constant 0 : index
    %c0_488 = arith.constant 0 : index
    %c0_489 = arith.constant 0 : index
    %514 = vector.load %arg15[%c0_487, %c0_488, %c0_489] : memref<4x24x24xf32, #tpu.memory_space<vmem>>, vector<1x24x24xf32>
    %515 = vector.shape_cast %514 : vector<1x24x24xf32> to vector<24x24xf32>
    %cst_490 = arith.constant dense<0.000000e+00> : vector<3x24xf32>
    %516 = tpu.matmul %513, %515, %cst_490 {dimension_numbers = #tpu.dot_dimension_numbers<[1], [0], [0], [1], [0, 0, 1, 1], [], []>} : vector<3x24xf32>, vector<24x24xf32>, vector<3x24xf32> -> vector<3x24xf32>
    %517 = vector.extract_strided_slice %391 {offsets = [0, 8], sizes = [3, 24], strides = [1, 1]} : vector<4x32xf32> to vector<3x24xf32>
    %c1_491 = arith.constant 1 : index
    %c0_492 = arith.constant 0 : index
    %c0_493 = arith.constant 0 : index
    %518 = vector.load %arg15[%c1_491, %c0_492, %c0_493] : memref<4x24x24xf32, #tpu.memory_space<vmem>>, vector<1x24x24xf32>
    %519 = vector.shape_cast %518 : vector<1x24x24xf32> to vector<24x24xf32>
    %cst_494 = arith.constant dense<0.000000e+00> : vector<3x24xf32>
    %520 = tpu.matmul %517, %519, %cst_494 {dimension_numbers = #tpu.dot_dimension_numbers<[1], [0], [0], [1], [0, 0, 1, 1], [], []>} : vector<3x24xf32>, vector<24x24xf32>, vector<3x24xf32> -> vector<3x24xf32>
    %521 = arith.addf %516, %520 : vector<3x24xf32>
    %522 = vector.extract_strided_slice %391 {offsets = [1, 0], sizes = [3, 24], strides = [1, 1]} : vector<4x32xf32> to vector<3x24xf32>
    %c2_495 = arith.constant 2 : index
    %c0_496 = arith.constant 0 : index
    %c0_497 = arith.constant 0 : index
    %523 = vector.load %arg15[%c2_495, %c0_496, %c0_497] : memref<4x24x24xf32, #tpu.memory_space<vmem>>, vector<1x24x24xf32>
    %524 = vector.shape_cast %523 : vector<1x24x24xf32> to vector<24x24xf32>
    %cst_498 = arith.constant dense<0.000000e+00> : vector<3x24xf32>
    %525 = tpu.matmul %522, %524, %cst_498 {dimension_numbers = #tpu.dot_dimension_numbers<[1], [0], [0], [1], [0, 0, 1, 1], [], []>} : vector<3x24xf32>, vector<24x24xf32>, vector<3x24xf32> -> vector<3x24xf32>
    %526 = arith.addf %521, %525 : vector<3x24xf32>
    %527 = vector.extract_strided_slice %391 {offsets = [1, 8], sizes = [3, 24], strides = [1, 1]} : vector<4x32xf32> to vector<3x24xf32>
    %c3_499 = arith.constant 3 : index
    %c0_500 = arith.constant 0 : index
    %c0_501 = arith.constant 0 : index
    %528 = vector.load %arg15[%c3_499, %c0_500, %c0_501] : memref<4x24x24xf32, #tpu.memory_space<vmem>>, vector<1x24x24xf32>
    %529 = vector.shape_cast %528 : vector<1x24x24xf32> to vector<24x24xf32>
    %cst_502 = arith.constant dense<0.000000e+00> : vector<3x24xf32>
    %530 = tpu.matmul %527, %529, %cst_502 {dimension_numbers = #tpu.dot_dimension_numbers<[1], [0], [0], [1], [0, 0, 1, 1], [], []>} : vector<3x24xf32>, vector<24x24xf32>, vector<3x24xf32> -> vector<3x24xf32>
    %531 = arith.addf %526, %530 : vector<3x24xf32>
    %c0_503 = arith.constant 0 : index
    %c0_504 = arith.constant 0 : index
    %532 = vector.load %arg16[%c0_503, %c0_504] : memref<1x24xf32, #tpu.memory_space<vmem>>, vector<1x24xf32>
    %533 = vector.broadcast %532 : vector<1x24xf32> to vector<3x24xf32>
    %534 = arith.addf %531, %533 : vector<3x24xf32>
    %cst_505 = arith.constant 0.000000e+00 : f32
    %535 = vector.broadcast %cst_505 : f32 to vector<3x24xf32>
    %536 = arith.maximumf %534, %535 : vector<3x24xf32>
    %537 = vector.extract_strided_slice %536 {offsets = [1, 8], sizes = [1, 8], strides = [1, 1]} : vector<3x24xf32> to vector<1x8xf32>
    %538 = vector.extract_strided_slice %391 {offsets = [0, 0], sizes = [2, 16], strides = [1, 1]} : vector<4x32xf32> to vector<2x16xf32>
    %c0_506 = arith.constant 0 : index
    %c0_507 = arith.constant 0 : index
    %c0_508 = arith.constant 0 : index
    %539 = vector.load %arg17[%c0_506, %c0_507, %c0_508] : memref<9x16x16xf32, #tpu.memory_space<vmem>>, vector<1x16x16xf32>
    %540 = vector.shape_cast %539 : vector<1x16x16xf32> to vector<16x16xf32>
    %cst_509 = arith.constant dense<0.000000e+00> : vector<2x16xf32>
    %541 = tpu.matmul %538, %540, %cst_509 {dimension_numbers = #tpu.dot_dimension_numbers<[1], [0], [0], [1], [0, 0, 1, 1], [], []>} : vector<2x16xf32>, vector<16x16xf32>, vector<2x16xf32> -> vector<2x16xf32>
    %542 = vector.extract_strided_slice %391 {offsets = [0, 8], sizes = [2, 16], strides = [1, 1]} : vector<4x32xf32> to vector<2x16xf32>
    %c1_510 = arith.constant 1 : index
    %c0_511 = arith.constant 0 : index
    %c0_512 = arith.constant 0 : index
    %543 = vector.load %arg17[%c1_510, %c0_511, %c0_512] : memref<9x16x16xf32, #tpu.memory_space<vmem>>, vector<1x16x16xf32>
    %544 = vector.shape_cast %543 : vector<1x16x16xf32> to vector<16x16xf32>
    %cst_513 = arith.constant dense<0.000000e+00> : vector<2x16xf32>
    %545 = tpu.matmul %542, %544, %cst_513 {dimension_numbers = #tpu.dot_dimension_numbers<[1], [0], [0], [1], [0, 0, 1, 1], [], []>} : vector<2x16xf32>, vector<16x16xf32>, vector<2x16xf32> -> vector<2x16xf32>
    %546 = arith.addf %541, %545 : vector<2x16xf32>
    %547 = vector.extract_strided_slice %391 {offsets = [0, 16], sizes = [2, 16], strides = [1, 1]} : vector<4x32xf32> to vector<2x16xf32>
    %c2_514 = arith.constant 2 : index
    %c0_515 = arith.constant 0 : index
    %c0_516 = arith.constant 0 : index
    %548 = vector.load %arg17[%c2_514, %c0_515, %c0_516] : memref<9x16x16xf32, #tpu.memory_space<vmem>>, vector<1x16x16xf32>
    %549 = vector.shape_cast %548 : vector<1x16x16xf32> to vector<16x16xf32>
    %cst_517 = arith.constant dense<0.000000e+00> : vector<2x16xf32>
    %550 = tpu.matmul %547, %549, %cst_517 {dimension_numbers = #tpu.dot_dimension_numbers<[1], [0], [0], [1], [0, 0, 1, 1], [], []>} : vector<2x16xf32>, vector<16x16xf32>, vector<2x16xf32> -> vector<2x16xf32>
    %551 = arith.addf %546, %550 : vector<2x16xf32>
    %552 = vector.extract_strided_slice %391 {offsets = [1, 0], sizes = [2, 16], strides = [1, 1]} : vector<4x32xf32> to vector<2x16xf32>
    %c3_518 = arith.constant 3 : index
    %c0_519 = arith.constant 0 : index
    %c0_520 = arith.constant 0 : index
    %553 = vector.load %arg17[%c3_518, %c0_519, %c0_520] : memref<9x16x16xf32, #tpu.memory_space<vmem>>, vector<1x16x16xf32>
    %554 = vector.shape_cast %553 : vector<1x16x16xf32> to vector<16x16xf32>
    %cst_521 = arith.constant dense<0.000000e+00> : vector<2x16xf32>
    %555 = tpu.matmul %552, %554, %cst_521 {dimension_numbers = #tpu.dot_dimension_numbers<[1], [0], [0], [1], [0, 0, 1, 1], [], []>} : vector<2x16xf32>, vector<16x16xf32>, vector<2x16xf32> -> vector<2x16xf32>
    %556 = arith.addf %551, %555 : vector<2x16xf32>
    %557 = vector.extract_strided_slice %391 {offsets = [1, 8], sizes = [2, 16], strides = [1, 1]} : vector<4x32xf32> to vector<2x16xf32>
    %c4_522 = arith.constant 4 : index
    %c0_523 = arith.constant 0 : index
    %c0_524 = arith.constant 0 : index
    %558 = vector.load %arg17[%c4_522, %c0_523, %c0_524] : memref<9x16x16xf32, #tpu.memory_space<vmem>>, vector<1x16x16xf32>
    %559 = vector.shape_cast %558 : vector<1x16x16xf32> to vector<16x16xf32>
    %cst_525 = arith.constant dense<0.000000e+00> : vector<2x16xf32>
    %560 = tpu.matmul %557, %559, %cst_525 {dimension_numbers = #tpu.dot_dimension_numbers<[1], [0], [0], [1], [0, 0, 1, 1], [], []>} : vector<2x16xf32>, vector<16x16xf32>, vector<2x16xf32> -> vector<2x16xf32>
    %561 = arith.addf %556, %560 : vector<2x16xf32>
    %562 = vector.extract_strided_slice %391 {offsets = [1, 16], sizes = [2, 16], strides = [1, 1]} : vector<4x32xf32> to vector<2x16xf32>
    %c5_526 = arith.constant 5 : index
    %c0_527 = arith.constant 0 : index
    %c0_528 = arith.constant 0 : index
    %563 = vector.load %arg17[%c5_526, %c0_527, %c0_528] : memref<9x16x16xf32, #tpu.memory_space<vmem>>, vector<1x16x16xf32>
    %564 = vector.shape_cast %563 : vector<1x16x16xf32> to vector<16x16xf32>
    %cst_529 = arith.constant dense<0.000000e+00> : vector<2x16xf32>
    %565 = tpu.matmul %562, %564, %cst_529 {dimension_numbers = #tpu.dot_dimension_numbers<[1], [0], [0], [1], [0, 0, 1, 1], [], []>} : vector<2x16xf32>, vector<16x16xf32>, vector<2x16xf32> -> vector<2x16xf32>
    %566 = arith.addf %561, %565 : vector<2x16xf32>
    %567 = vector.extract_strided_slice %391 {offsets = [2, 0], sizes = [2, 16], strides = [1, 1]} : vector<4x32xf32> to vector<2x16xf32>
    %c6_530 = arith.constant 6 : index
    %c0_531 = arith.constant 0 : index
    %c0_532 = arith.constant 0 : index
    %568 = vector.load %arg17[%c6_530, %c0_531, %c0_532] : memref<9x16x16xf32, #tpu.memory_space<vmem>>, vector<1x16x16xf32>
    %569 = vector.shape_cast %568 : vector<1x16x16xf32> to vector<16x16xf32>
    %cst_533 = arith.constant dense<0.000000e+00> : vector<2x16xf32>
    %570 = tpu.matmul %567, %569, %cst_533 {dimension_numbers = #tpu.dot_dimension_numbers<[1], [0], [0], [1], [0, 0, 1, 1], [], []>} : vector<2x16xf32>, vector<16x16xf32>, vector<2x16xf32> -> vector<2x16xf32>
    %571 = arith.addf %566, %570 : vector<2x16xf32>
    %572 = vector.extract_strided_slice %391 {offsets = [2, 8], sizes = [2, 16], strides = [1, 1]} : vector<4x32xf32> to vector<2x16xf32>
    %c7_534 = arith.constant 7 : index
    %c0_535 = arith.constant 0 : index
    %c0_536 = arith.constant 0 : index
    %573 = vector.load %arg17[%c7_534, %c0_535, %c0_536] : memref<9x16x16xf32, #tpu.memory_space<vmem>>, vector<1x16x16xf32>
    %574 = vector.shape_cast %573 : vector<1x16x16xf32> to vector<16x16xf32>
    %cst_537 = arith.constant dense<0.000000e+00> : vector<2x16xf32>
    %575 = tpu.matmul %572, %574, %cst_537 {dimension_numbers = #tpu.dot_dimension_numbers<[1], [0], [0], [1], [0, 0, 1, 1], [], []>} : vector<2x16xf32>, vector<16x16xf32>, vector<2x16xf32> -> vector<2x16xf32>
    %576 = arith.addf %571, %575 : vector<2x16xf32>
    %577 = vector.extract_strided_slice %391 {offsets = [2, 16], sizes = [2, 16], strides = [1, 1]} : vector<4x32xf32> to vector<2x16xf32>
    %c8_538 = arith.constant 8 : index
    %c0_539 = arith.constant 0 : index
    %c0_540 = arith.constant 0 : index
    %578 = vector.load %arg17[%c8_538, %c0_539, %c0_540] : memref<9x16x16xf32, #tpu.memory_space<vmem>>, vector<1x16x16xf32>
    %579 = vector.shape_cast %578 : vector<1x16x16xf32> to vector<16x16xf32>
    %cst_541 = arith.constant dense<0.000000e+00> : vector<2x16xf32>
    %580 = tpu.matmul %577, %579, %cst_541 {dimension_numbers = #tpu.dot_dimension_numbers<[1], [0], [0], [1], [0, 0, 1, 1], [], []>} : vector<2x16xf32>, vector<16x16xf32>, vector<2x16xf32> -> vector<2x16xf32>
    %581 = arith.addf %576, %580 : vector<2x16xf32>
    %c0_542 = arith.constant 0 : index
    %c0_543 = arith.constant 0 : index
    %582 = vector.load %arg18[%c0_542, %c0_543] : memref<1x16xf32, #tpu.memory_space<vmem>>, vector<1x16xf32>
    %583 = vector.broadcast %582 : vector<1x16xf32> to vector<2x16xf32>
    %584 = arith.addf %581, %583 : vector<2x16xf32>
    %cst_544 = arith.constant 0.000000e+00 : f32
    %585 = vector.broadcast %cst_544 : f32 to vector<2x16xf32>
    %586 = arith.maximumf %584, %585 : vector<2x16xf32>
    %587 = vector.extract_strided_slice %586 {offsets = [0, 0], sizes = [1, 8], strides = [1, 1]} : vector<2x16xf32> to vector<1x8xf32>
    %588 = vector.extract_strided_slice %586 {offsets = [0, 8], sizes = [1, 8], strides = [1, 1]} : vector<2x16xf32> to vector<1x8xf32>
    %589 = arith.maximumf %587, %588 : vector<1x8xf32>
    %590 = vector.extract_strided_slice %586 {offsets = [1, 0], sizes = [1, 8], strides = [1, 1]} : vector<2x16xf32> to vector<1x8xf32>
    %591 = vector.extract_strided_slice %586 {offsets = [1, 8], sizes = [1, 8], strides = [1, 1]} : vector<2x16xf32> to vector<1x8xf32>
    %592 = arith.maximumf %590, %591 : vector<1x8xf32>
    %593 = arith.maximumf %589, %592 : vector<1x8xf32>
    %c0_545 = arith.constant 0 : index
    %c0_546 = arith.constant 0 : index
    %c0_547 = arith.constant 0 : index
    %594 = vector.load %arg19[%c0_545, %c0_546, %c0_547] : memref<4x8x8xf32, #tpu.memory_space<vmem>>, vector<1x8x8xf32>
    %595 = vector.shape_cast %594 : vector<1x8x8xf32> to vector<8x8xf32>
    %cst_548 = arith.constant dense<0.000000e+00> : vector<1x8xf32>
    %596 = tpu.matmul %537, %595, %cst_548 {dimension_numbers = #tpu.dot_dimension_numbers<[1], [0], [0], [1], [0, 0, 1, 1], [], []>} : vector<1x8xf32>, vector<8x8xf32>, vector<1x8xf32> -> vector<1x8xf32>
    %c0_549 = arith.constant 0 : index
    %c0_550 = arith.constant 0 : index
    %c0_551 = arith.constant 0 : index
    %597 = vector.load %arg20[%c0_549, %c0_550, %c0_551] : memref<4x1x8xf32, #tpu.memory_space<vmem>>, vector<1x1x8xf32>
    %598 = vector.shape_cast %597 : vector<1x1x8xf32> to vector<1x8xf32>
    %599 = arith.addf %596, %598 : vector<1x8xf32>
    %cst_552 = arith.constant 0.000000e+00 : f32
    %600 = vector.broadcast %cst_552 : f32 to vector<1x8xf32>
    %601 = arith.maximumf %599, %600 : vector<1x8xf32>
    %c2_553 = arith.constant 2 : index
    %c0_554 = arith.constant 0 : index
    %c0_555 = arith.constant 0 : index
    %602 = vector.load %arg19[%c2_553, %c0_554, %c0_555] : memref<4x8x8xf32, #tpu.memory_space<vmem>>, vector<1x8x8xf32>
    %603 = vector.shape_cast %602 : vector<1x8x8xf32> to vector<8x8xf32>
    %cst_556 = arith.constant dense<0.000000e+00> : vector<1x8xf32>
    %604 = tpu.matmul %593, %603, %cst_556 {dimension_numbers = #tpu.dot_dimension_numbers<[1], [0], [0], [1], [0, 0, 1, 1], [], []>} : vector<1x8xf32>, vector<8x8xf32>, vector<1x8xf32> -> vector<1x8xf32>
    %c2_557 = arith.constant 2 : index
    %c0_558 = arith.constant 0 : index
    %c0_559 = arith.constant 0 : index
    %605 = vector.load %arg20[%c2_557, %c0_558, %c0_559] : memref<4x1x8xf32, #tpu.memory_space<vmem>>, vector<1x1x8xf32>
    %606 = vector.shape_cast %605 : vector<1x1x8xf32> to vector<1x8xf32>
    %607 = arith.addf %604, %606 : vector<1x8xf32>
    %cst_560 = arith.constant 0.000000e+00 : f32
    %608 = vector.broadcast %cst_560 : f32 to vector<1x8xf32>
    %609 = arith.maximumf %607, %608 : vector<1x8xf32>
    %c1_561 = arith.constant 1 : index
    %c0_562 = arith.constant 0 : index
    %c0_563 = arith.constant 0 : index
    %610 = vector.load %arg19[%c1_561, %c0_562, %c0_563] : memref<4x8x8xf32, #tpu.memory_space<vmem>>, vector<1x8x8xf32>
    %611 = vector.shape_cast %610 : vector<1x8x8xf32> to vector<8x8xf32>
    %cst_564 = arith.constant dense<0.000000e+00> : vector<1x8xf32>
    %612 = tpu.matmul %601, %611, %cst_564 {dimension_numbers = #tpu.dot_dimension_numbers<[1], [0], [0], [1], [0, 0, 1, 1], [], []>} : vector<1x8xf32>, vector<8x8xf32>, vector<1x8xf32> -> vector<1x8xf32>
    %c1_565 = arith.constant 1 : index
    %c0_566 = arith.constant 0 : index
    %c0_567 = arith.constant 0 : index
    %613 = vector.load %arg20[%c1_565, %c0_566, %c0_567] : memref<4x1x8xf32, #tpu.memory_space<vmem>>, vector<1x1x8xf32>
    %614 = vector.shape_cast %613 : vector<1x1x8xf32> to vector<1x8xf32>
    %615 = arith.addf %612, %614 : vector<1x8xf32>
    %cst_568 = arith.constant 0.000000e+00 : f32
    %616 = vector.broadcast %cst_568 : f32 to vector<1x8xf32>
    %617 = arith.maximumf %615, %616 : vector<1x8xf32>
    %c3_569 = arith.constant 3 : index
    %c0_570 = arith.constant 0 : index
    %c0_571 = arith.constant 0 : index
    %618 = vector.load %arg19[%c3_569, %c0_570, %c0_571] : memref<4x8x8xf32, #tpu.memory_space<vmem>>, vector<1x8x8xf32>
    %619 = vector.shape_cast %618 : vector<1x8x8xf32> to vector<8x8xf32>
    %cst_572 = arith.constant dense<0.000000e+00> : vector<1x8xf32>
    %620 = tpu.matmul %609, %619, %cst_572 {dimension_numbers = #tpu.dot_dimension_numbers<[1], [0], [0], [1], [0, 0, 1, 1], [], []>} : vector<1x8xf32>, vector<8x8xf32>, vector<1x8xf32> -> vector<1x8xf32>
    %c3_573 = arith.constant 3 : index
    %c0_574 = arith.constant 0 : index
    %c0_575 = arith.constant 0 : index
    %621 = vector.load %arg20[%c3_573, %c0_574, %c0_575] : memref<4x1x8xf32, #tpu.memory_space<vmem>>, vector<1x1x8xf32>
    %622 = vector.shape_cast %621 : vector<1x1x8xf32> to vector<1x8xf32>
    %623 = arith.addf %620, %622 : vector<1x8xf32>
    %cst_576 = arith.constant 0.000000e+00 : f32
    %624 = vector.broadcast %cst_576 : f32 to vector<1x8xf32>
    %625 = arith.maximumf %623, %624 : vector<1x8xf32>
    %c0_577 = arith.constant 0 : index
    %c0_578 = arith.constant 0 : index
    %626 = vector.load %arg21[%c0_577, %c0_578] : memref<8x8xf32, #tpu.memory_space<vmem>>, vector<8x8xf32>
    %cst_579 = arith.constant dense<0.000000e+00> : vector<1x8xf32>
    %627 = tpu.matmul %617, %626, %cst_579 {dimension_numbers = #tpu.dot_dimension_numbers<[1], [0], [0], [1], [0, 0, 1, 1], [], []>} : vector<1x8xf32>, vector<8x8xf32>, vector<1x8xf32> -> vector<1x8xf32>
    %c0_580 = arith.constant 0 : index
    %c0_581 = arith.constant 0 : index
    %628 = vector.load %arg22[%c0_580, %c0_581] : memref<8x8xf32, #tpu.memory_space<vmem>>, vector<8x8xf32>
    %cst_582 = arith.constant dense<0.000000e+00> : vector<1x8xf32>
    %629 = tpu.matmul %625, %628, %cst_582 {dimension_numbers = #tpu.dot_dimension_numbers<[1], [0], [0], [1], [0, 0, 1, 1], [], []>} : vector<1x8xf32>, vector<8x8xf32>, vector<1x8xf32> -> vector<1x8xf32>
    %630 = arith.addf %627, %629 : vector<1x8xf32>
    %c0_583 = arith.constant 0 : index
    %c0_584 = arith.constant 0 : index
    %631 = vector.load %arg23[%c0_583, %c0_584] : memref<1x8xf32, #tpu.memory_space<vmem>>, vector<1x8xf32>
    %632 = arith.addf %630, %631 : vector<1x8xf32>
    %c1_585 = arith.constant 1 : index
    %c0_586 = arith.constant 0 : index
    %633 = vector.load %arg24[%c1_585, %c0_586] : memref<2x8xf32, #tpu.memory_space<vmem>>, vector<1x8xf32>
    tpu.vector_store %arg24[%c1_585, %c0_586], %632 {strides = array<i32>} : memref<2x8xf32, #tpu.memory_space<vmem>>, vector<1x8xf32>,
    return
  }
}

</mosaic_0001>

<llo_original>
// kernel: forward.1
$region0: #{forward.1}
  #allocation0 [shape = 'u32[]', space=smem, size = 0x4, offset = 0x4, fixed_abs, tag = 'smem constant byte address 0x4 - core index']
  #allocation1 [shape = 'u32[144,128]{1,0:T(1,128)}', space=vmem, size = 0x12000, scoped, tag = 'internal scratch']
  #allocation2 [shape = 'f32[2,18,72]{2,1,0:T(8,128)}', space=vmem, size = 0x6000, scoped, tag = 'scratch operand']
  #allocation3 [shape = 'f32[2,10,80]{2,1,0:T(8,128)}', space=vmem, size = 0x4000, scoped, tag = 'scratch operand']
  %s0 = inlined_call_operand.vmem [shape: f32[2,16,64], index: 0, kind: input, shape index: {}]
  %s1 = inlined_call_operand.vmem [shape: f32[9,64,128], index: 1, kind: input, shape index: {}]
  %s2 = inlined_call_operand.vmem [shape: f32[128,8], index: 2, kind: input, shape index: {}]
  %s3 = inlined_call_operand.hbm [shape: f32[8,128], index: 3, kind: input, shape index: {}]
  %s4 = inlined_call_operand.vmem [shape: f32[1,8], index: 4, kind: input, shape index: {}]
  %s5 = inlined_call_operand.vmem [shape: f32[1,8], index: 5, kind: input, shape index: {}]
  %s6 = inlined_call_operand.hbm [shape: f32[2,8,16], index: 6, kind: input, shape index: {}]
  %s7 = inlined_call_operand.vmem [shape: f32[2,128,64], index: 7, kind: input, shape index: {}]
  %s8 = inlined_call_operand.vmem [shape: f32[9,64,64], index: 8, kind: input, shape index: {}]
  %s9 = inlined_call_operand.vmem [shape: f32[64,8], index: 9, kind: input, shape index: {}]
  %s10 = inlined_call_operand.hbm [shape: f32[8,64], index: 10, kind: input, shape index: {}]
  %s11 = inlined_call_operand.vmem [shape: f32[1,8], index: 11, kind: input, shape index: {}]
  %s12 = inlined_call_operand.hbm [shape: f32[1,8], index: 12, kind: input, shape index: {}]
  %s13 = inlined_call_operand.hbm [shape: f32[2,4,8], index: 13, kind: input, shape index: {}]
  %s14 = inlined_call_operand.vmem [shape: f32[2,64,32], index: 14, kind: input, shape index: {}]
  %s15 = inlined_call_operand.hbm [shape: f32[4,24,24], index: 15, kind: input, shape index: {}]
  %s16 = inlined_call_operand.hbm [shape: f32[1,24], index: 16, kind: input, shape index: {}]
  %s17 = inlined_call_operand.hbm [shape: f32[9,16,16], index: 17, kind: input, shape index: {}]
  %s18 = inlined_call_operand.hbm [shape: f32[1,16], index: 18, kind: input, shape index: {}]
  %s19 = inlined_call_operand.hbm [shape: f32[4,8,8], index: 19, kind: input, shape index: {}]
  %s20 = inlined_call_operand.vmem [shape: f32[4,1,8], index: 20, kind: input, shape index: {}]
  %s21 = inlined_call_operand.hbm [shape: f32[8,8], index: 21, kind: input, shape index: {}]
  %s22 = inlined_call_operand.hbm [shape: f32[8,8], index: 22, kind: input, shape index: {}]
  %s23 = inlined_call_operand.hbm [shape: f32[1,8], index: 23, kind: input, shape index: {}]
  %s24 = inlined_call_operand.hbm [shape: f32[2,8], index: 24, kind: output, shape index: {}]
  %s25 = sld [smem:[#allocation0]]
  $region158: #{forward.1} parent=0
    _
  %s27 = ssub.s32 1, %s25
  %s28 = scalar_select 0, %s27, %s25
  $region1: #{forward.1} parent=0
    #allocation4 [shape = 'u8[4096]{0}', space=vmem, size = 0x1000, scoped, tag = 'input window, operand 3, single buffered']
    #allocation5 [shape = 's32[1]{0}', space=sflag, size = 0x4, scoped, tag = 'scoped memory for forward.1']
    #allocation6 [shape = 's32[1]{0}', space=sflag, size = 0x4, scoped, tag = 'scoped memory for forward.1']
    #allocation7 [shape = 'u8[8192]{0}', space=vmem, size = 0x2000, scoped, tag = 'input window, operand 6, single buffered']
    #allocation8 [shape = 's32[1]{0}', space=sflag, size = 0x4, scoped, tag = 'scoped memory for forward.1']
    #allocation9 [shape = 'u8[4096]{0}', space=vmem, size = 0x1000, scoped, tag = 'input window, operand 10, single buffered']
    #allocation10 [shape = 'u8[512]{0}', space=vmem, size = 0x400, scoped, tag = 'input window, operand 12, single buffered']
    #allocation11 [shape = 's32[1]{0}', space=sflag, size = 0x4, scoped, tag = 'scoped memory for forward.1']
    #allocation12 [shape = 'u8[4096]{0}', space=vmem, size = 0x1000, scoped, tag = 'input window, operand 13, single buffered']
    #allocation13 [shape = 'u8[49152]{0}', space=vmem, size = 0xc000, scoped, tag = 'input window, operand 15, single buffered']
    #allocation14 [shape = 's32[1]{0}', space=sflag, size = 0x4, scoped, tag = 'scoped memory for forward.1']
    #allocation15 [shape = 'u8[512]{0}', space=vmem, size = 0x400, scoped, tag = 'input window, operand 16, single buffered']
    #allocation16 [shape = 'u8[73728]{0}', space=vmem, size = 0x12000, scoped, tag = 'input window, operand 17, single buffered']
    #allocation17 [shape = 's32[1]{0}', space=sflag, size = 0x4, scoped, tag = 'scoped memory for forward.1']
    #allocation18 [shape = 'u8[512]{0}', space=vmem, size = 0x400, scoped, tag = 'input window, operand 18, single buffered']
    #allocation19 [shape = 'u8[16384]{0}', space=vmem, size = 0x4000, scoped, tag = 'input window, operand 19, single buffered']
    #allocation20 [shape = 's32[1]{0}', space=sflag, size = 0x4, scoped, tag = 'scoped memory for forward.1']
    #allocation21 [shape = 'u8[4096]{0}', space=vmem, size = 0x1000, scoped, tag = 'input window, operand 21, single buffered']
    #allocation22 [shape = 'u8[4096]{0}', space=vmem, size = 0x1000, scoped, tag = 'input window, operand 22, single buffered']
    #allocation23 [shape = 's32[1]{0}', space=sflag, size = 0x4, scoped, tag = 'scoped memory for forward.1']
    #allocation24 [shape = 'u8[512]{0}', space=vmem, size = 0x400, scoped, tag = 'input window, operand 23, single buffered']
    #allocation25 [shape = 'u8[1024]{0}', space=vmem, size = 0x400, scoped, tag = 'output window, operand 0, single buffered']
    %29 = vsyncpa [#allocation5], 0
    %30 = vsyncpa [#allocation8], 0
    %31 = vsyncpa [#allocation11], 0
    %32 = vsyncpa [#allocation14], 0
    %33 = vsyncpa [#allocation17], 0
    %34 = vsyncpa [#allocation20], 0
    %35 = vsyncpa [#allocation23], 0
    %36 = vsyncpa [#allocation6], 0
    // Predicated region
    $region2: #{forward.1} parent=1 // pred_check
      _
    $region3: #{forward.1} parent=1 // pred_check_branch
      %38 = sbr.rel (0) target = $region5
    $region4: #{forward.1} parent=1 // pred_region
      _
    $region5: #{forward.1} parent=1 // pred_fallthru
      _
    // Predicated region
    $region6: #{forward.1} parent=1 // pred_check
      _
    $region7: #{forward.1} parent=1 // pred_check_branch
      %40 = sbr.rel (0) target = $region9
    $region8: #{forward.1} parent=1 // pred_region
      _
    $region9: #{forward.1} parent=1 // pred_fallthru
      _
    // Predicated region
    $region10: #{forward.1} parent=1 // pred_check
      _
    $region11: #{forward.1} parent=1 // pred_check_branch
      %42 = sbr.rel (0) target = $region13
    $region12: #{forward.1} parent=1 // pred_region
      _
    $region13: #{forward.1} parent=1 // pred_fallthru
      _
    // Predicated region
    $region14: #{forward.1} parent=1 // pred_check
      _
    $region15: #{forward.1} parent=1 // pred_check_branch
      %44 = sbr.rel (0) target = $region17
    $region16: #{forward.1} parent=1 // pred_region
      %s46 = ssub.s32 128, 128
      %47 = vsyncadd [#allocation5], %s46
      %s49 = sshll.u32 [#allocation4], 4
      %s50 = int_to_ptr.vmem [resolvable:$true] %s49
      %52 = dma.hbm_to_vmem [thread:$0]  %s3, 128, %s50, [#allocation5]
    $region17: #{forward.1} parent=1 // pred_fallthru
      _
    // Predicated region
    $region18: #{forward.1} parent=1 // pred_check
      _
    $region19: #{forward.1} parent=1 // pred_check_branch
      %54 = sbr.rel (0) target = $region21
    $region20: #{forward.1} parent=1 // pred_region
      _
    $region21: #{forward.1} parent=1 // pred_fallthru
      _
    // Predicated region
    $region22: #{forward.1} parent=1 // pred_check
      _
    $region23: #{forward.1} parent=1 // pred_check_branch
      %56 = sbr.rel (0) target = $region25
    $region24: #{forward.1} parent=1 // pred_region
      _
    $region25: #{forward.1} parent=1 // pred_fallthru
      _
    // Predicated region
    $region26: #{forward.1} parent=1 // pred_check
      _
    $region27: #{forward.1} parent=1 // pred_check_branch
      %58 = sbr.rel (0) target = $region29
    $region28: #{forward.1} parent=1 // pred_region
      %s60 = ssub.s32 256, 256
      %61 = vsyncadd [#allocation8], %s60
      %s62 = sshll.u32 [#allocation7], 4
      %s63 = int_to_ptr.vmem [resolvable:$true] %s62
      %68 = dma.hbm_to_vmem [thread:$0]  %s6, 256, %s63, [#allocation8], 128, 128, 8
    $region29: #{forward.1} parent=1 // pred_fallthru
      _
    // Predicated region
    $region30: #{forward.1} parent=1 // pred_check
      _
    $region31: #{forward.1} parent=1 // pred_check_branch
      %70 = sbr.rel (0) target = $region33
    $region32: #{forward.1} parent=1 // pred_region
      _
    $region33: #{forward.1} parent=1 // pred_fallthru
      _
    // Predicated region
    $region34: #{forward.1} parent=1 // pred_check
      _
    $region35: #{forward.1} parent=1 // pred_check_branch
      %72 = sbr.rel (0) target = $region37
    $region36: #{forward.1} parent=1 // pred_region
      _
    $region37: #{forward.1} parent=1 // pred_fallthru
      _
    // Predicated region
    $region38: #{forward.1} parent=1 // pred_check
      _
    $region39: #{forward.1} parent=1 // pred_check_branch
      %74 = sbr.rel (0) target = $region41
    $region40: #{forward.1} parent=1 // pred_region
      _
    $region41: #{forward.1} parent=1 // pred_fallthru
      _
    // Predicated region
    $region42: #{forward.1} parent=1 // pred_check
      _
    $region43: #{forward.1} parent=1 // pred_check_branch
      %76 = sbr.rel (0) target = $region45
    $region44: #{forward.1} parent=1 // pred_region
      %s78 = ssub.s32 128, 128
      %79 = vsyncadd [#allocation8], %s78
      %s81 = sshll.u32 [#allocation9], 4
      %s82 = int_to_ptr.vmem [resolvable:$true] %s81
      %84 = dma.hbm_to_vmem [thread:$0]  %s10, 128, %s82, [#allocation8]
    $region45: #{forward.1} parent=1 // pred_fallthru
      _
    // Predicated region
    $region46: #{forward.1} parent=1 // pred_check
      _
    $region47: #{forward.1} parent=1 // pred_check_branch
      %86 = sbr.rel (0) target = $region49
    $region48: #{forward.1} parent=1 // pred_region
      _
    $region49: #{forward.1} parent=1 // pred_fallthru
      _
    // Predicated region
    $region50: #{forward.1} parent=1 // pred_check
      _
    $region51: #{forward.1} parent=1 // pred_check_branch
      %88 = sbr.rel (0) target = $region53
    $region52: #{forward.1} parent=1 // pred_region
      %s90 = ssub.s32 16, 16
      %91 = vsyncadd [#allocation11], %s90
      %s93 = sshll.u32 [#allocation10], 4
      %s94 = int_to_ptr.vmem [resolvable:$true] %s93
      %96 = dma.hbm_to_vmem [thread:$0]  %s12, 16, %s94, [#allocation11]
    $region53: #{forward.1} parent=1 // pred_fallthru
      _
    // Predicated region
    $region54: #{forward.1} parent=1 // pred_check
      _
    $region55: #{forward.1} parent=1 // pred_check_branch
      %98 = sbr.rel (0) target = $region57
    $region56: #{forward.1} parent=1 // pred_region
      %s100 = ssub.s32 128, 128
      %101 = vsyncadd [#allocation11], %s100
      %s102 = sshll.u32 [#allocation12], 4
      %s103 = int_to_ptr.vmem [resolvable:$true] %s102
      %108 = dma.hbm_to_vmem [thread:$0]  %s13, 128, %s103, [#allocation11], 64, 64, 4
    $region57: #{forward.1} parent=1 // pred_fallthru
      _
    // Predicated region
    $region58: #{forward.1} parent=1 // pred_check
      _
    $region59: #{forward.1} parent=1 // pred_check_branch
      %110 = sbr.rel (0) target = $region61
    $region60: #{forward.1} parent=1 // pred_region
      _
    $region61: #{forward.1} parent=1 // pred_fallthru
      _
    // Predicated region
    $region62: #{forward.1} parent=1 // pred_check
      _
    $region63: #{forward.1} parent=1 // pred_check_branch
      %112 = sbr.rel (0) target = $region65
    $region64: #{forward.1} parent=1 // pred_region
      %s114 = ssub.s32 1536, 1536
      %115 = vsyncadd [#allocation14], %s114
      %s116 = sshll.u32 [#allocation13], 4
      %s117 = int_to_ptr.vmem [resolvable:$true] %s116
      %122 = dma.hbm_to_vmem [thread:$0]  %s15, 1536, %s117, [#allocation14], 128, 128, 8
    $region65: #{forward.1} parent=1 // pred_fallthru
      _
    // Predicated region
    $region66: #{forward.1} parent=1 // pred_check
      _
    $region67: #{forward.1} parent=1 // pred_check_branch
      %124 = sbr.rel (0) target = $region69
    $region68: #{forward.1} parent=1 // pred_region
      %s126 = ssub.s32 16, 16
      %127 = vsyncadd [#allocation14], %s126
      %s129 = sshll.u32 [#allocation15], 4
      %s130 = int_to_ptr.vmem [resolvable:$true] %s129
      %132 = dma.hbm_to_vmem [thread:$0]  %s16, 16, %s130, [#allocation14]
    $region69: #{forward.1} parent=1 // pred_fallthru
      _
    // Predicated region
    $region70: #{forward.1} parent=1 // pred_check
      _
    $region71: #{forward.1} parent=1 // pred_check_branch
      %134 = sbr.rel (0) target = $region73
    $region72: #{forward.1} parent=1 // pred_region
      %s136 = ssub.s32 2304, 2304
      %137 = vsyncadd [#allocation17], %s136
      %s138 = sshll.u32 [#allocation16], 4
      %s139 = int_to_ptr.vmem [resolvable:$true] %s138
      %144 = dma.hbm_to_vmem [thread:$0]  %s17, 2304, %s139, [#allocation17], 128, 128, 8
    $region73: #{forward.1} parent=1 // pred_fallthru
      _
    // Predicated region
    $region74: #{forward.1} parent=1 // pred_check
      _
    $region75: #{forward.1} parent=1 // pred_check_branch
      %146 = sbr.rel (0) target = $region77
    $region76: #{forward.1} parent=1 // pred_region
      %s148 = ssub.s32 16, 16
      %149 = vsyncadd [#allocation17], %s148
      %s151 = sshll.u32 [#allocation18], 4
      %s152 = int_to_ptr.vmem [resolvable:$true] %s151
      %154 = dma.hbm_to_vmem [thread:$0]  %s18, 16, %s152, [#allocation17]
    $region77: #{forward.1} parent=1 // pred_fallthru
      _
    // Predicated region
    $region78: #{forward.1} parent=1 // pred_check
      _
    $region79: #{forward.1} parent=1 // pred_check_branch
      %156 = sbr.rel (0) target = $region81
    $region80: #{forward.1} parent=1 // pred_region
      %s158 = ssub.s32 512, 512
      %159 = vsyncadd [#allocation20], %s158
      %s160 = sshll.u32 [#allocation19], 4
      %s161 = int_to_ptr.vmem [resolvable:$true] %s160
      %166 = dma.hbm_to_vmem [thread:$0]  %s19, 512, %s161, [#allocation20], 128, 128, 8
    $region81: #{forward.1} parent=1 // pred_fallthru
      _
    // Predicated region
    $region82: #{forward.1} parent=1 // pred_check
      _
    $region83: #{forward.1} parent=1 // pred_check_branch
      %168 = sbr.rel (0) target = $region85
    $region84: #{forward.1} parent=1 // pred_region
      _
    $region85: #{forward.1} parent=1 // pred_fallthru
      _
    // Predicated region
    $region86: #{forward.1} parent=1 // pred_check
      _
    $region87: #{forward.1} parent=1 // pred_check_branch
      %170 = sbr.rel (0) target = $region89
    $region88: #{forward.1} parent=1 // pred_region
      %s172 = ssub.s32 128, 128
      %173 = vsyncadd [#allocation20], %s172
      %s175 = sshll.u32 [#allocation21], 4
      %s176 = int_to_ptr.vmem [resolvable:$true] %s175
      %178 = dma.hbm_to_vmem [thread:$0]  %s21, 128, %s176, [#allocation20]
    $region89: #{forward.1} parent=1 // pred_fallthru
      _
    // Predicated region
    $region90: #{forward.1} parent=1 // pred_check
      _
    $region91: #{forward.1} parent=1 // pred_check_branch
      %180 = sbr.rel (0) target = $region93
    $region92: #{forward.1} parent=1 // pred_region
      %s182 = ssub.s32 128, 128
      %183 = vsyncadd [#allocation23], %s182
      %s185 = sshll.u32 [#allocation22], 4
      %s186 = int_to_ptr.vmem [resolvable:$true] %s185
      %188 = dma.hbm_to_vmem [thread:$0]  %s22, 128, %s186, [#allocation23]
    $region93: #{forward.1} parent=1 // pred_fallthru
      _
    // Predicated region
    $region94: #{forward.1} parent=1 // pred_check
      _
    $region95: #{forward.1} parent=1 // pred_check_branch
      %190 = sbr.rel (0) target = $region97
    $region96: #{forward.1} parent=1 // pred_region
      %s192 = ssub.s32 16, 16
      %193 = vsyncadd [#allocation23], %s192
      %s195 = sshll.u32 [#allocation24], 4
      %s196 = int_to_ptr.vmem [resolvable:$true] %s195
      %198 = dma.hbm_to_vmem [thread:$0]  %s23, 16, %s196, [#allocation23]
    $region97: #{forward.1} parent=1 // pred_fallthru
      _
    // Predicated region
    $region98: #{forward.1} parent=1 // pred_check
      _
    $region99: #{forward.1} parent=1 // pred_check_branch
      %200 = sbr.rel (0) target = $region101
    $region100: #{forward.1} parent=1 // pred_region
      %201 = dma.done [#allocation5], 128
    $region101: #{forward.1} parent=1 // pred_fallthru
      _
    // Predicated region
    $region102: #{forward.1} parent=1 // pred_check
      _
    $region103: #{forward.1} parent=1 // pred_check_branch
      %203 = sbr.rel (0) target = $region105
    $region104: #{forward.1} parent=1 // pred_region
      %204 = dma.done [#allocation8], 256
    $region105: #{forward.1} parent=1 // pred_fallthru
      _
    // Predicated region
    $region106: #{forward.1} parent=1 // pred_check
      _
    $region107: #{forward.1} parent=1 // pred_check_branch
      %206 = sbr.rel (0) target = $region109
    $region108: #{forward.1} parent=1 // pred_region
      %207 = dma.done [#allocation8], 128
    $region109: #{forward.1} parent=1 // pred_fallthru
      _
    // Predicated region
    $region110: #{forward.1} parent=1 // pred_check
      _
    $region111: #{forward.1} parent=1 // pred_check_branch
      %209 = sbr.rel (0) target = $region113
    $region112: #{forward.1} parent=1 // pred_region
      %210 = dma.done [#allocation11], 16
    $region113: #{forward.1} parent=1 // pred_fallthru
      _
    // Predicated region
    $region114: #{forward.1} parent=1 // pred_check
      _
    $region115: #{forward.1} parent=1 // pred_check_branch
      %212 = sbr.rel (0) target = $region117
    $region116: #{forward.1} parent=1 // pred_region
      %213 = dma.done [#allocation11], 128
    $region117: #{forward.1} parent=1 // pred_fallthru
      _
    // Predicated region
    $region118: #{forward.1} parent=1 // pred_check
      _
    $region119: #{forward.1} parent=1 // pred_check_branch
      %215 = sbr.rel (0) target = $region121
    $region120: #{forward.1} parent=1 // pred_region
      %216 = dma.done [#allocation14], 1536
    $region121: #{forward.1} parent=1 // pred_fallthru
      _
    // Predicated region
    $region122: #{forward.1} parent=1 // pred_check
      _
    $region123: #{forward.1} parent=1 // pred_check_branch
      %218 = sbr.rel (0) target = $region125
    $region124: #{forward.1} parent=1 // pred_region
      %219 = dma.done [#allocation14], 16
    $region125: #{forward.1} parent=1 // pred_fallthru
      _
    // Predicated region
    $region126: #{forward.1} parent=1 // pred_check
      _
    $region127: #{forward.1} parent=1 // pred_check_branch
      %221 = sbr.rel (0) target = $region129
    $region128: #{forward.1} parent=1 // pred_region
      %222 = dma.done [#allocation17], 2304
    $region129: #{forward.1} parent=1 // pred_fallthru
      _
    // Predicated region
    $region130: #{forward.1} parent=1 // pred_check
      _
    $region131: #{forward.1} parent=1 // pred_check_branch
      %224 = sbr.rel (0) target = $region133
    $region132: #{forward.1} parent=1 // pred_region
      %225 = dma.done [#allocation17], 16
    $region133: #{forward.1} parent=1 // pred_fallthru
      _
    // Predicated region
    $region134: #{forward.1} parent=1 // pred_check
      _
    $region135: #{forward.1} parent=1 // pred_check_branch
      %227 = sbr.rel (0) target = $region137
    $region136: #{forward.1} parent=1 // pred_region
      %228 = dma.done [#allocation20], 512
    $region137: #{forward.1} parent=1 // pred_fallthru
      _
    // Predicated region
    $region138: #{forward.1} parent=1 // pred_check
      _
    $region139: #{forward.1} parent=1 // pred_check_branch
      %230 = sbr.rel (0) target = $region141
    $region140: #{forward.1} parent=1 // pred_region
      %231 = dma.done [#allocation20], 128
    $region141: #{forward.1} parent=1 // pred_fallthru
      _
    // Predicated region
    $region142: #{forward.1} parent=1 // pred_check
      _
    $region143: #{forward.1} parent=1 // pred_check_branch
      %233 = sbr.rel (0) target = $region145
    $region144: #{forward.1} parent=1 // pred_region
      %234 = dma.done [#allocation23], 128
    $region145: #{forward.1} parent=1 // pred_fallthru
      _
    // Predicated region
    $region146: #{forward.1} parent=1 // pred_check
      _
    $region147: #{forward.1} parent=1 // pred_check_branch
      %236 = sbr.rel (0) target = $region149
    $region148: #{forward.1} parent=1 // pred_region
      %237 = dma.done [#allocation23], 16
    $region149: #{forward.1} parent=1 // pred_fallthru
      _
    %vm238 = vcmask 588800
    %239 = vst.msk [vmem:[#allocation2] sm:$0xff] %vm238, 0.0
    %240 = vst.msk [vmem:[#allocation2 + $0x8] sm:$0xff] %vm238, 0.0
    %vm241 = vcmask 582656
    %242 = vst.msk [vmem:[#allocation2 + $0x10] sm:$0x3] %vm241, 0.0
    %243 = vst.msk [vmem:[#allocation2 + $0x18] sm:$0xff] %vm238, 0.0
    %244 = vst.msk [vmem:[#allocation2 + $0x20] sm:$0xff] %vm238, 0.0
    %245 = vst.msk [vmem:[#allocation2 + $0x28] sm:$0x3] %vm241, 0.0
    %v246 = vld [vmem:[%s0] sm:$0xff]
    %v247 = vld [vmem:[%s0 + $0x8] sm:$0xff]
    %250 = vrot.lane.b32.xlu0 %v246, 4
    %v251 = vpop.permute.xlu0 %250
    %252 = vrot.lane.b32.xlu0 %v247, 4
    %v253 = vpop.permute.xlu0 %252
    %vm256 = vcmask 556064
    %257 = vst.msk [vmem:[#allocation2 + $0x1] sm:$0xff] %vm256, %v251
    %258 = vst.msk [vmem:[#allocation2 + $0x9] sm:$0xff] %vm256, %v253
    %s259 = scalar_lea.vmem %s0, 16
    %v260 = vld [vmem:[%s259] sm:$0xff]
    %v261 = vld [vmem:[%s259 + $0x8] sm:$0xff]
    %264 = vrot.lane.b32.xlu0 %v260, 4
    %v265 = vpop.permute.xlu0 %264
    %266 = vrot.lane.b32.xlu0 %v261, 4
    %v267 = vpop.permute.xlu0 %266
    %s270 = scalar_lea.vmem [#allocation2], 24
    %271 = vst.msk [vmem:[%s270 + $0x1] sm:$0xff] %vm256, %v265
    %272 = vst.msk [vmem:[%s270 + $0x9] sm:$0xff] %vm256, %v267
    %v273 = vld [vmem:[#allocation2] sm:$0xff]
    %v274 = vld [vmem:[#allocation2 + $0x8] sm:$0xff]
    %v275 = vld [vmem:[%s1] sm:$0xff]
    %v276 = vld [vmem:[%s1 + $0x8] sm:$0xff]
    %v277 = vld [vmem:[%s1 + $0x10] sm:$0xff]
    %v278 = vld [vmem:[%s1 + $0x18] sm:$0xff]
    %v279 = vld [vmem:[%s1 + $0x20] sm:$0xff]
    %v280 = vld [vmem:[%s1 + $0x28] sm:$0xff]
    %v281 = vld [vmem:[%s1 + $0x30] sm:$0xff]
    %v282 = vld [vmem:[%s1 + $0x38] sm:$0xff]
    %s283 = scalar_lea.vmem %s1, 64
    %v284 = vld [vmem:[%s283] sm:$0xff]
    %v285 = vld [vmem:[%s283 + $0x8] sm:$0xff]
    %v286 = vld [vmem:[%s283 + $0x10] sm:$0xff]
    %v287 = vld [vmem:[%s283 + $0x18] sm:$0xff]
    %v288 = vld [vmem:[%s283 + $0x20] sm:$0xff]
    %v289 = vld [vmem:[%s283 + $0x28] sm:$0xff]
    %v290 = vld [vmem:[%s283 + $0x30] sm:$0xff]
    %v291 = vld [vmem:[%s283 + $0x38] sm:$0xff]
    %294 = vrot.lane.b32.xlu0 %v273, 124
    %v295 = vpop.permute.xlu0 %294
    %296 = vrot.lane.b32.xlu0 %v274, 124
    %v297 = vpop.permute.xlu0 %296
    %vm298 = vcmask 523264
    %v299 = vsel %vm298, %v295, 0
    %v301 = vsel %vm298, %v297, 0
    %303 = vmatprep.subr.mxu0 0.0
    %304 = vmatpush1.msra.mxu0 %v284
    %305 = vmatprep.subr.mxu0 0.0
    %306 = vmatpush1.msra.mxu0 %v285
    %307 = vmatprep.subr.mxu0 0.0
    %308 = vmatpush1.msra.mxu0 %v286
    %309 = vmatprep.subr.mxu0 0.0
    %310 = vmatpush1.msra.mxu0 %v287
    %311 = vmatprep.subr.mxu0 0.0
    %312 = vmatpush1.msra.mxu0 %v288
    %313 = vmatprep.subr.mxu0 0.0
    %314 = vmatpush1.msra.mxu0 %v289
    %315 = vmatprep.subr.mxu0 0.0
    %316 = vmatpush1.msra.mxu0 %v290
    %317 = vmatprep.subr.mxu0 0.0
    %318 = vmatpush1.msra.mxu0 %v291
    %319 = vmatprep.subr.mxu0 0.0
    %320 = vmatpush1.msra.mxu0 0.0
    %321 = vmatprep.subr.mxu0 0.0
    %322 = vmatpush1.msra.mxu0 0.0
    %323 = vmatprep.subr.mxu0 0.0
    %324 = vmatpush1.msra.mxu0 0.0
    %325 = vmatprep.subr.mxu0 0.0
    %326 = vmatpush1.msra.mxu0 0.0
    %327 = vmatprep.subr.mxu0 0.0
    %328 = vmatpush1.msra.mxu0 0.0
    %329 = vmatprep.subr.mxu0 0.0
    %330 = vmatpush1.msra.mxu0 0.0
    %331 = vmatprep.subr.mxu0 0.0
    %332 = vmatpush1.msra.mxu0 0.0
    %333 = vmatprep.subr.mxu0 0.0
    %334 = vmatpush1.msra.mxu0 0.0
    %335 = vmatprep.subr.mxu0 0.0
    %336 = vmatpush1.msra.mxu0 0.0
    %337 = vmatprep.subr.mxu0 0.0
    %338 = vmatpush1.msra.mxu0 0.0
    %339 = vmatprep.subr.mxu0 0.0
    %340 = vmatpush1.msra.mxu0 0.0
    %341 = vmatprep.subr.mxu0 0.0
    %342 = vmatpush1.msra.mxu0 0.0
    %343 = vmatprep.subr.mxu0 0.0
    %344 = vmatpush1.msra.mxu0 0.0
    %345 = vmatprep.subr.mxu0 0.0
    %346 = vmatpush1.msra.mxu0 0.0
    %347 = vmatprep.subr.mxu0 0.0
    %348 = vmatpush1.msra.mxu0 0.0
    %349 = vmatprep.subr.mxu0 0.0
    %350 = vmatpush1.msra.mxu0 0.0
    %351 = vmatprep.subr.mxu0 0.0
    %352 = vmatpush1.msra.mxu0 0.0
    %353 = vmatprep.subr.mxu0 0.0
    %354 = vmatpush1.msra.mxu0 0.0
    %355 = vmatprep.subr.mxu0 0.0
    %356 = vmatpush1.msra.mxu0 0.0
    %357 = vmatprep.subr.mxu0 0.0
    %358 = vmatpush1.msra.mxu0 0.0
    %359 = vmatprep.subr.mxu0 0.0
    %360 = vmatpush1.msra.mxu0 0.0
    %361 = vmatprep.subr.mxu0 0.0
    %362 = vmatpush1.msra.mxu0 0.0
    %363 = vmatprep.subr.mxu0 0.0
    %364 = vmatpush1.msra.mxu0 0.0
    %365 = vmatprep.subr.mxu0 0.0
    %366 = vmatpush1.msra.mxu0 0.0
    %367 = vmatprep.mubr.f32.mxu0 0.0
    %368 = vmatmul.mubr.f32.gmra.mrb[0].mxu0 %v299
    %v369 = vpop.f32.mrb[0].mxu0
    %v370 = vadd.f32 0.0, %v369
    %v371 = vpop.f32.mrb[0].mxu0
    %372 = vmatprep.mubr.f32.mxu0 0.0
    %373 = vmatmul.mubr.f32.gmra.mrb[0].mxu0 %v301
    %v374 = vpop.f32.mrb[0].mxu0
    %v375 = vadd.f32 0.0, %v374
    %v376 = vpop.f32.mrb[0].mxu0
    %377 = vdwg.mxu0
    %v378 = vsel %vm298, %v273, 0
    %v380 = vsel %vm298, %v274, 0
    %382 = vmatprep.subr.mxu0 0.0
    %383 = vmatpush1.msra.mxu0 %v275
    %384 = vmatprep.subr.mxu0 0.0
    %385 = vmatpush1.msra.mxu0 %v276
    %386 = vmatprep.subr.mxu0 0.0
    %387 = vmatpush1.msra.mxu0 %v277
    %388 = vmatprep.subr.mxu0 0.0
    %389 = vmatpush1.msra.mxu0 %v278
    %390 = vmatprep.subr.mxu0 0.0
    %391 = vmatpush1.msra.mxu0 %v279
    %392 = vmatprep.subr.mxu0 0.0
    %393 = vmatpush1.msra.mxu0 %v280
    %394 = vmatprep.subr.mxu0 0.0
    %395 = vmatpush1.msra.mxu0 %v281
    %396 = vmatprep.subr.mxu0 0.0
    %397 = vmatpush1.msra.mxu0 %v282
    %398 = vmatprep.subr.mxu0 0.0
    %399 = vmatpush1.msra.mxu0 0.0
    %400 = vmatprep.subr.mxu0 0.0
    %401 = vmatpush1.msra.mxu0 0.0
    %402 = vmatprep.subr.mxu0 0.0
    %403 = vmatpush1.msra.mxu0 0.0
    %404 = vmatprep.subr.mxu0 0.0
    %405 = vmatpush1.msra.mxu0 0.0
    %406 = vmatprep.subr.mxu0 0.0
    %407 = vmatpush1.msra.mxu0 0.0
    %408 = vmatprep.subr.mxu0 0.0
    %409 = vmatpush1.msra.mxu0 0.0
    %410 = vmatprep.subr.mxu0 0.0
    %411 = vmatpush1.msra.mxu0 0.0
    %412 = vmatprep.subr.mxu0 0.0
    %413 = vmatpush1.msra.mxu0 0.0
    %414 = vmatprep.subr.mxu0 0.0
    %415 = vmatpush1.msra.mxu0 0.0
    %416 = vmatprep.subr.mxu0 0.0
    %417 = vmatpush1.msra.mxu0 0.0
    %418 = vmatprep.subr.mxu0 0.0
    %419 = vmatpush1.msra.mxu0 0.0
    %420 = vmatprep.subr.mxu0 0.0
    %421 = vmatpush1.msra.mxu0 0.0
    %422 = vmatprep.subr.mxu0 0.0
    %423 = vmatpush1.msra.mxu0 0.0
    %424 = vmatprep.subr.mxu0 0.0
    %425 = vmatpush1.msra.mxu0 0.0
    %426 = vmatprep.subr.mxu0 0.0
    %427 = vmatpush1.msra.mxu0 0.0
    %428 = vmatprep.subr.mxu0 0.0
    %429 = vmatpush1.msra.mxu0 0.0
    %430 = vmatprep.subr.mxu0 0.0
    %431 = vmatpush1.msra.mxu0 0.0
    %432 = vmatprep.subr.mxu0 0.0
    %433 = vmatpush1.msra.mxu0 0.0
    %434 = vmatprep.subr.mxu0 0.0
    %435 = vmatpush1.msra.mxu0 0.0
    %436 = vmatprep.subr.mxu0 0.0
    %437 = vmatpush1.msra.mxu0 0.0
    %438 = vmatprep.subr.mxu0 0.0
    %439 = vmatpush1.msra.mxu0 0.0
    %440 = vmatprep.subr.mxu0 0.0
    %441 = vmatpush1.msra.mxu0 0.0
    %442 = vmatprep.subr.mxu0 0.0
    %443 = vmatpush1.msra.mxu0 0.0
    %444 = vmatprep.subr.mxu0 0.0
    %445 = vmatpush1.msra.mxu0 0.0
    %446 = vmatprep.mubr.f32.mxu0 0.0
    %447 = vmatmul.mubr.f32.gmra.mrb[0].mxu0 %v378
    %v448 = vpop.f32.mrb[0].mxu0
    %v449 = vadd.f32 %v370, %v448
    %v450 = vpop.f32.mrb[0].mxu0
    %451 = vmatprep.mubr.f32.mxu0 0.0
    %452 = vmatmul.mubr.f32.gmra.mrb[0].mxu0 %v380
    %v453 = vpop.f32.mrb[0].mxu0
    %v454 = vadd.f32 %v375, %v453
    %v455 = vpop.f32.mrb[0].mxu0
    %456 = vdwg.mxu0
    %s457 = scalar_lea.vmem %s1, 128
    %v458 = vld [vmem:[%s457] sm:$0xff]
    %v459 = vld [vmem:[%s457 + $0x8] sm:$0xff]
    %v460 = vld [vmem:[%s457 + $0x10] sm:$0xff]
    %v461 = vld [vmem:[%s457 + $0x18] sm:$0xff]
    %v462 = vld [vmem:[%s457 + $0x20] sm:$0xff]
    %v463 = vld [vmem:[%s457 + $0x28] sm:$0xff]
    %v464 = vld [vmem:[%s457 + $0x30] sm:$0xff]
    %v465 = vld [vmem:[%s457 + $0x38] sm:$0xff]
    %466 = vrot.lane.b32.xlu0 %v273, 120
    %v467 = vpop.permute.xlu0 %466
    %468 = vrot.lane.b32.xlu0 %v274, 120
    %v469 = vpop.permute.xlu0 %468
    %v470 = vsel %vm298, %v467, 0
    %v472 = vsel %vm298, %v469, 0
    %474 = vmatprep.subr.mxu0 0.0
    %475 = vmatpush1.msra.mxu0 %v458
    %476 = vmatprep.subr.mxu0 0.0
    %477 = vmatpush1.msra.mxu0 %v459
    %478 = vmatprep.subr.mxu0 0.0
    %479 = vmatpush1.msra.mxu0 %v460
    %480 = vmatprep.subr.mxu0 0.0
    %481 = vmatpush1.msra.mxu0 %v461
    %482 = vmatprep.subr.mxu0 0.0
    %483 = vmatpush1.msra.mxu0 %v462
    %484 = vmatprep.subr.mxu0 0.0
    %485 = vmatpush1.msra.mxu0 %v463
    %486 = vmatprep.subr.mxu0 0.0
    %487 = vmatpush1.msra.mxu0 %v464
    %488 = vmatprep.subr.mxu0 0.0
    %489 = vmatpush1.msra.mxu0 %v465
    %490 = vmatprep.subr.mxu0 0.0
    %491 = vmatpush1.msra.mxu0 0.0
    %492 = vmatprep.subr.mxu0 0.0
    %493 = vmatpush1.msra.mxu0 0.0
    %494 = vmatprep.subr.mxu0 0.0
    %495 = vmatpush1.msra.mxu0 0.0
    %496 = vmatprep.subr.mxu0 0.0
    %497 = vmatpush1.msra.mxu0 0.0
    %498 = vmatprep.subr.mxu0 0.0
    %499 = vmatpush1.msra.mxu0 0.0
    %500 = vmatprep.subr.mxu0 0.0
    %501 = vmatpush1.msra.mxu0 0.0
    %502 = vmatprep.subr.mxu0 0.0
    %503 = vmatpush1.msra.mxu0 0.0
    %504 = vmatprep.subr.mxu0 0.0
    %505 = vmatpush1.msra.mxu0 0.0
    %506 = vmatprep.subr.mxu0 0.0
    %507 = vmatpush1.msra.mxu0 0.0
    %508 = vmatprep.subr.mxu0 0.0
    %509 = vmatpush1.msra.mxu0 0.0
    %510 = vmatprep.subr.mxu0 0.0
    %511 = vmatpush1.msra.mxu0 0.0
    %512 = vmatprep.subr.mxu0 0.0
    %513 = vmatpush1.msra.mxu0 0.0
    %514 = vmatprep.subr.mxu0 0.0
    %515 = vmatpush1.msra.mxu0 0.0
    %516 = vmatprep.subr.mxu0 0.0
    %517 = vmatpush1.msra.mxu0 0.0
    %518 = vmatprep.subr.mxu0 0.0
    %519 = vmatpush1.msra.mxu0 0.0
    %520 = vmatprep.subr.mxu0 0.0
    %521 = vmatpush1.msra.mxu0 0.0
    %522 = vmatprep.subr.mxu0 0.0
    %523 = vmatpush1.msra.mxu0 0.0
    %524 = vmatprep.subr.mxu0 0.0
    %525 = vmatpush1.msra.mxu0 0.0
    %526 = vmatprep.subr.mxu0 0.0
    %527 = vmatpush1.msra.mxu0 0.0
    %528 = vmatprep.subr.mxu0 0.0
    %529 = vmatpush1.msra.mxu0 0.0
    %530 = vmatprep.subr.mxu0 0.0
    %531 = vmatpush1.msra.mxu0 0.0
    %532 = vmatprep.subr.mxu0 0.0
    %533 = vmatpush1.msra.mxu0 0.0
    %534 = vmatprep.subr.mxu0 0.0
    %535 = vmatpush1.msra.mxu0 0.0
    %536 = vmatprep.subr.mxu0 0.0
    %537 = vmatpush1.msra.mxu0 0.0
    %538 = vmatprep.mubr.f32.mxu0 0.0
    %539 = vmatmul.mubr.f32.gmra.mrb[0].mxu0 %v470
    %v540 = vpop.f32.mrb[0].mxu0
    %v541 = vadd.f32 0.0, %v540
    %v542 = vpop.f32.mrb[0].mxu0
    %543 = vmatprep.mubr.f32.mxu0 0.0
    %544 = vmatmul.mubr.f32.gmra.mrb[0].mxu0 %v472
    %v545 = vpop.f32.mrb[0].mxu0
    %v546 = vadd.f32 0.0, %v545
    %v547 = vpop.f32.mrb[0].mxu0
    %548 = vdwg.mxu0
    %v549 = vadd.f32 %v449, %v541
    %v550 = vadd.f32 %v454, %v546
    %v551 = vld [vmem:[#allocation2 + $0x1] sm:$0xff]
    %v552 = vld [vmem:[#allocation2 + $0x9] sm:$0xff]
    %s553 = scalar_lea.vmem %s1, 192
    %v554 = vld [vmem:[%s553] sm:$0xff]
    %v555 = vld [vmem:[%s553 + $0x8] sm:$0xff]
    %v556 = vld [vmem:[%s553 + $0x10] sm:$0xff]
    %v557 = vld [vmem:[%s553 + $0x18] sm:$0xff]
    %v558 = vld [vmem:[%s553 + $0x20] sm:$0xff]
    %v559 = vld [vmem:[%s553 + $0x28] sm:$0xff]
    %v560 = vld [vmem:[%s553 + $0x30] sm:$0xff]
    %v561 = vld [vmem:[%s553 + $0x38] sm:$0xff]
    %v563 = vsel %vm298, %v551, 0
    %v566 = vsel %vm298, %v552, 0
    %568 = vmatprep.subr.mxu0 0.0
    %569 = vmatpush1.msra.mxu0 %v554
    %570 = vmatprep.subr.mxu0 0.0
    %571 = vmatpush1.msra.mxu0 %v555
    %572 = vmatprep.subr.mxu0 0.0
    %573 = vmatpush1.msra.mxu0 %v556
    %574 = vmatprep.subr.mxu0 0.0
    %575 = vmatpush1.msra.mxu0 %v557
    %576 = vmatprep.subr.mxu0 0.0
    %577 = vmatpush1.msra.mxu0 %v558
    %578 = vmatprep.subr.mxu0 0.0
    %579 = vmatpush1.msra.mxu0 %v559
    %580 = vmatprep.subr.mxu0 0.0
    %581 = vmatpush1.msra.mxu0 %v560
    %582 = vmatprep.subr.mxu0 0.0
    %583 = vmatpush1.msra.mxu0 %v561
    %584 = vmatprep.subr.mxu0 0.0
    %585 = vmatpush1.msra.mxu0 0.0
    %586 = vmatprep.subr.mxu0 0.0
    %587 = vmatpush1.msra.mxu0 0.0
    %588 = vmatprep.subr.mxu0 0.0
    %589 = vmatpush1.msra.mxu0 0.0
    %590 = vmatprep.subr.mxu0 0.0
    %591 = vmatpush1.msra.mxu0 0.0
    %592 = vmatprep.subr.mxu0 0.0
    %593 = vmatpush1.msra.mxu0 0.0
    %594 = vmatprep.subr.mxu0 0.0
    %595 = vmatpush1.msra.mxu0 0.0
    %596 = vmatprep.subr.mxu0 0.0
    %597 = vmatpush1.msra.mxu0 0.0
    %598 = vmatprep.subr.mxu0 0.0
    %599 = vmatpush1.msra.mxu0 0.0
    %600 = vmatprep.subr.mxu0 0.0
    %601 = vmatpush1.msra.mxu0 0.0
    %602 = vmatprep.subr.mxu0 0.0
    %603 = vmatpush1.msra.mxu0 0.0
    %604 = vmatprep.subr.mxu0 0.0
    %605 = vmatpush1.msra.mxu0 0.0
    %606 = vmatprep.subr.mxu0 0.0
    %607 = vmatpush1.msra.mxu0 0.0
    %608 = vmatprep.subr.mxu0 0.0
    %609 = vmatpush1.msra.mxu0 0.0
    %610 = vmatprep.subr.mxu0 0.0
    %611 = vmatpush1.msra.mxu0 0.0
    %612 = vmatprep.subr.mxu0 0.0
    %613 = vmatpush1.msra.mxu0 0.0
    %614 = vmatprep.subr.mxu0 0.0
    %615 = vmatpush1.msra.mxu0 0.0
    %616 = vmatprep.subr.mxu0 0.0
    %617 = vmatpush1.msra.mxu0 0.0
    %618 = vmatprep.subr.mxu0 0.0
    %619 = vmatpush1.msra.mxu0 0.0
    %620 = vmatprep.subr.mxu0 0.0
    %621 = vmatpush1.msra.mxu0 0.0
    %622 = vmatprep.subr.mxu0 0.0
    %623 = vmatpush1.msra.mxu0 0.0
    %624 = vmatprep.subr.mxu0 0.0
    %625 = vmatpush1.msra.mxu0 0.0
    %626 = vmatprep.subr.mxu0 0.0
    %627 = vmatpush1.msra.mxu0 0.0
    %628 = vmatprep.subr.mxu0 0.0
    %629 = vmatpush1.msra.mxu0 0.0
    %630 = vmatprep.subr.mxu0 0.0
    %631 = vmatpush1.msra.mxu0 0.0
    %632 = vmatprep.mubr.f32.mxu0 0.0
    %633 = vmatmul.mubr.f32.gmra.mrb[0].mxu0 %v563
    %v634 = vpop.f32.mrb[0].mxu0
    %v635 = vadd.f32 0.0, %v634
    %v636 = vpop.f32.mrb[0].mxu0
    %637 = vmatprep.mubr.f32.mxu0 0.0
    %638 = vmatmul.mubr.f32.gmra.mrb[0].mxu0 %v566
    %v639 = vpop.f32.mrb[0].mxu0
    %v640 = vadd.f32 0.0, %v639
    %v641 = vpop.f32.mrb[0].mxu0
    %642 = vdwg.mxu0
    %v643 = vadd.f32 %v549, %v635
    %v644 = vadd.f32 %v550, %v640
    %s645 = scalar_lea.vmem %s1, 256
    %v646 = vld [vmem:[%s645] sm:$0xff]
    %v647 = vld [vmem:[%s645 + $0x8] sm:$0xff]
    %v648 = vld [vmem:[%s645 + $0x10] sm:$0xff]
    %v649 = vld [vmem:[%s645 + $0x18] sm:$0xff]
    %v650 = vld [vmem:[%s645 + $0x20] sm:$0xff]
    %v651 = vld [vmem:[%s645 + $0x28] sm:$0xff]
    %v652 = vld [vmem:[%s645 + $0x30] sm:$0xff]
    %v653 = vld [vmem:[%s645 + $0x38] sm:$0xff]
    %654 = vrot.lane.b32.xlu0 %v551, 124
    %v655 = vpop.permute.xlu0 %654
    %656 = vrot.lane.b32.xlu0 %v552, 124
    %v657 = vpop.permute.xlu0 %656
    %v658 = vsel %vm298, %v655, 0
    %v660 = vsel %vm298, %v657, 0
    %662 = vmatprep.subr.mxu0 0.0
    %663 = vmatpush1.msra.mxu0 %v646
    %664 = vmatprep.subr.mxu0 0.0
    %665 = vmatpush1.msra.mxu0 %v647
    %666 = vmatprep.subr.mxu0 0.0
    %667 = vmatpush1.msra.mxu0 %v648
    %668 = vmatprep.subr.mxu0 0.0
    %669 = vmatpush1.msra.mxu0 %v649
    %670 = vmatprep.subr.mxu0 0.0
    %671 = vmatpush1.msra.mxu0 %v650
    %672 = vmatprep.subr.mxu0 0.0
    %673 = vmatpush1.msra.mxu0 %v651
    %674 = vmatprep.subr.mxu0 0.0
    %675 = vmatpush1.msra.mxu0 %v652
    %676 = vmatprep.subr.mxu0 0.0
    %677 = vmatpush1.msra.mxu0 %v653
    %678 = vmatprep.subr.mxu0 0.0
    %679 = vmatpush1.msra.mxu0 0.0
    %680 = vmatprep.subr.mxu0 0.0
    %681 = vmatpush1.msra.mxu0 0.0
    %682 = vmatprep.subr.mxu0 0.0
    %683 = vmatpush1.msra.mxu0 0.0
    %684 = vmatprep.subr.mxu0 0.0
    %685 = vmatpush1.msra.mxu0 0.0
    %686 = vmatprep.subr.mxu0 0.0
    %687 = vmatpush1.msra.mxu0 0.0
    %688 = vmatprep.subr.mxu0 0.0
    %689 = vmatpush1.msra.mxu0 0.0
    %690 = vmatprep.subr.mxu0 0.0
    %691 = vmatpush1.msra.mxu0 0.0
    %692 = vmatprep.subr.mxu0 0.0
    %693 = vmatpush1.msra.mxu0 0.0
    %694 = vmatprep.subr.mxu0 0.0
    %695 = vmatpush1.msra.mxu0 0.0
    %696 = vmatprep.subr.mxu0 0.0
    %697 = vmatpush1.msra.mxu0 0.0
    %698 = vmatprep.subr.mxu0 0.0
    %699 = vmatpush1.msra.mxu0 0.0
    %700 = vmatprep.subr.mxu0 0.0
    %701 = vmatpush1.msra.mxu0 0.0
    %702 = vmatprep.subr.mxu0 0.0
    %703 = vmatpush1.msra.mxu0 0.0
    %704 = vmatprep.subr.mxu0 0.0
    %705 = vmatpush1.msra.mxu0 0.0
    %706 = vmatprep.subr.mxu0 0.0
    %707 = vmatpush1.msra.mxu0 0.0
    %708 = vmatprep.subr.mxu0 0.0
    %709 = vmatpush1.msra.mxu0 0.0
    %710 = vmatprep.subr.mxu0 0.0
    %711 = vmatpush1.msra.mxu0 0.0
    %712 = vmatprep.subr.mxu0 0.0
    %713 = vmatpush1.msra.mxu0 0.0
    %714 = vmatprep.subr.mxu0 0.0
    %715 = vmatpush1.msra.mxu0 0.0
    %716 = vmatprep.subr.mxu0 0.0
    %717 = vmatpush1.msra.mxu0 0.0
    %718 = vmatprep.subr.mxu0 0.0
    %719 = vmatpush1.msra.mxu0 0.0
    %720 = vmatprep.subr.mxu0 0.0
    %721 = vmatpush1.msra.mxu0 0.0
    %722 = vmatprep.subr.mxu0 0.0
    %723 = vmatpush1.msra.mxu0 0.0
    %724 = vmatprep.subr.mxu0 0.0
    %725 = vmatpush1.msra.mxu0 0.0
    %726 = vmatprep.mubr.f32.mxu0 0.0
    %727 = vmatmul.mubr.f32.gmra.mrb[0].mxu0 %v658
    %v728 = vpop.f32.mrb[0].mxu0
    %v729 = vadd.f32 0.0, %v728
    %v730 = vpop.f32.mrb[0].mxu0
    %731 = vmatprep.mubr.f32.mxu0 0.0
    %732 = vmatmul.mubr.f32.gmra.mrb[0].mxu0 %v660
    %v733 = vpop.f32.mrb[0].mxu0
    %v734 = vadd.f32 0.0, %v733
    %v735 = vpop.f32.mrb[0].mxu0
    %736 = vdwg.mxu0
    %v737 = vadd.f32 %v643, %v729
    %v738 = vadd.f32 %v644, %v734
    %s739 = scalar_lea.vmem %s1, 320
    %v740 = vld [vmem:[%s739] sm:$0xff]
    %v741 = vld [vmem:[%s739 + $0x8] sm:$0xff]
    %v742 = vld [vmem:[%s739 + $0x10] sm:$0xff]
    %v743 = vld [vmem:[%s739 + $0x18] sm:$0xff]
    %v744 = vld [vmem:[%s739 + $0x20] sm:$0xff]
    %v745 = vld [vmem:[%s739 + $0x28] sm:$0xff]
    %v746 = vld [vmem:[%s739 + $0x30] sm:$0xff]
    %v747 = vld [vmem:[%s739 + $0x38] sm:$0xff]
    %748 = vrot.lane.b32.xlu0 %v551, 120
    %v749 = vpop.permute.xlu0 %748
    %750 = vrot.lane.b32.xlu0 %v552, 120
    %v751 = vpop.permute.xlu0 %750
    %v752 = vsel %vm298, %v749, 0
    %v754 = vsel %vm298, %v751, 0
    %756 = vmatprep.subr.mxu0 0.0
    %757 = vmatpush1.msra.mxu0 %v740
    %758 = vmatprep.subr.mxu0 0.0
    %759 = vmatpush1.msra.mxu0 %v741
    %760 = vmatprep.subr.mxu0 0.0
    %761 = vmatpush1.msra.mxu0 %v742
    %762 = vmatprep.subr.mxu0 0.0
    %763 = vmatpush1.msra.mxu0 %v743
    %764 = vmatprep.subr.mxu0 0.0
    %765 = vmatpush1.msra.mxu0 %v744
    %766 = vmatprep.subr.mxu0 0.0
    %767 = vmatpush1.msra.mxu0 %v745
    %768 = vmatprep.subr.mxu0 0.0
    %769 = vmatpush1.msra.mxu0 %v746
    %770 = vmatprep.subr.mxu0 0.0
    %771 = vmatpush1.msra.mxu0 %v747
    %772 = vmatprep.subr.mxu0 0.0
    %773 = vmatpush1.msra.mxu0 0.0
    %774 = vmatprep.subr.mxu0 0.0
    %775 = vmatpush1.msra.mxu0 0.0
    %776 = vmatprep.subr.mxu0 0.0
    %777 = vmatpush1.msra.mxu0 0.0
    %778 = vmatprep.subr.mxu0 0.0
    %779 = vmatpush1.msra.mxu0 0.0
    %780 = vmatprep.subr.mxu0 0.0
    %781 = vmatpush1.msra.mxu0 0.0
    %782 = vmatprep.subr.mxu0 0.0
    %783 = vmatpush1.msra.mxu0 0.0
    %784 = vmatprep.subr.mxu0 0.0
    %785 = vmatpush1.msra.mxu0 0.0
    %786 = vmatprep.subr.mxu0 0.0
    %787 = vmatpush1.msra.mxu0 0.0
    %788 = vmatprep.subr.mxu0 0.0
    %789 = vmatpush1.msra.mxu0 0.0
    %790 = vmatprep.subr.mxu0 0.0
    %791 = vmatpush1.msra.mxu0 0.0
    %792 = vmatprep.subr.mxu0 0.0
    %793 = vmatpush1.msra.mxu0 0.0
    %794 = vmatprep.subr.mxu0 0.0
    %795 = vmatpush1.msra.mxu0 0.0
    %796 = vmatprep.subr.mxu0 0.0
    %797 = vmatpush1.msra.mxu0 0.0
    %798 = vmatprep.subr.mxu0 0.0
    %799 = vmatpush1.msra.mxu0 0.0
    %800 = vmatprep.subr.mxu0 0.0
    %801 = vmatpush1.msra.mxu0 0.0
    %802 = vmatprep.subr.mxu0 0.0
    %803 = vmatpush1.msra.mxu0 0.0
    %804 = vmatprep.subr.mxu0 0.0
    %805 = vmatpush1.msra.mxu0 0.0
    %806 = vmatprep.subr.mxu0 0.0
    %807 = vmatpush1.msra.mxu0 0.0
    %808 = vmatprep.subr.mxu0 0.0
    %809 = vmatpush1.msra.mxu0 0.0
    %810 = vmatprep.subr.mxu0 0.0
    %811 = vmatpush1.msra.mxu0 0.0
    %812 = vmatprep.subr.mxu0 0.0
    %813 = vmatpush1.msra.mxu0 0.0
    %814 = vmatprep.subr.mxu0 0.0
    %815 = vmatpush1.msra.mxu0 0.0
    %816 = vmatprep.subr.mxu0 0.0
    %817 = vmatpush1.msra.mxu0 0.0
    %818 = vmatprep.subr.mxu0 0.0
    %819 = vmatpush1.msra.mxu0 0.0
    %820 = vmatprep.mubr.f32.mxu0 0.0
    %821 = vmatmul.mubr.f32.gmra.mrb[0].mxu0 %v752
    %v822 = vpop.f32.mrb[0].mxu0
    %v823 = vadd.f32 0.0, %v822
    %v824 = vpop.f32.mrb[0].mxu0
    %825 = vmatprep.mubr.f32.mxu0 0.0
    %826 = vmatmul.mubr.f32.gmra.mrb[0].mxu0 %v754
    %v827 = vpop.f32.mrb[0].mxu0
    %v828 = vadd.f32 0.0, %v827
    %v829 = vpop.f32.mrb[0].mxu0
    %830 = vdwg.mxu0
    %v831 = vadd.f32 %v737, %v823
    %v832 = vadd.f32 %v738, %v828
    %v833 = vld [vmem:[#allocation2 + $0x2] sm:$0xff]
    %v834 = vld [vmem:[#allocation2 + $0xa] sm:$0xff]
    %s835 = scalar_lea.vmem %s1, 384
    %v836 = vld [vmem:[%s835] sm:$0xff]
    %v837 = vld [vmem:[%s835 + $0x8] sm:$0xff]
    %v838 = vld [vmem:[%s835 + $0x10] sm:$0xff]
    %v839 = vld [vmem:[%s835 + $0x18] sm:$0xff]
    %v840 = vld [vmem:[%s835 + $0x20] sm:$0xff]
    %v841 = vld [vmem:[%s835 + $0x28] sm:$0xff]
    %v842 = vld [vmem:[%s835 + $0x30] sm:$0xff]
    %v843 = vld [vmem:[%s835 + $0x38] sm:$0xff]
    %v845 = vsel %vm298, %v833, 0
    %v848 = vsel %vm298, %v834, 0
    %850 = vmatprep.subr.mxu0 0.0
    %851 = vmatpush1.msra.mxu0 %v836
    %852 = vmatprep.subr.mxu0 0.0
    %853 = vmatpush1.msra.mxu0 %v837
    %854 = vmatprep.subr.mxu0 0.0
    %855 = vmatpush1.msra.mxu0 %v838
    %856 = vmatprep.subr.mxu0 0.0
    %857 = vmatpush1.msra.mxu0 %v839
    %858 = vmatprep.subr.mxu0 0.0
    %859 = vmatpush1.msra.mxu0 %v840
    %860 = vmatprep.subr.mxu0 0.0
    %861 = vmatpush1.msra.mxu0 %v841
    %862 = vmatprep.subr.mxu0 0.0
    %863 = vmatpush1.msra.mxu0 %v842
    %864 = vmatprep.subr.mxu0 0.0
    %865 = vmatpush1.msra.mxu0 %v843
    %866 = vmatprep.subr.mxu0 0.0
    %867 = vmatpush1.msra.mxu0 0.0
    %868 = vmatprep.subr.mxu0 0.0
    %869 = vmatpush1.msra.mxu0 0.0
    %870 = vmatprep.subr.mxu0 0.0
    %871 = vmatpush1.msra.mxu0 0.0
    %872 = vmatprep.subr.mxu0 0.0
    %873 = vmatpush1.msra.mxu0 0.0
    %874 = vmatprep.subr.mxu0 0.0
    %875 = vmatpush1.msra.mxu0 0.0
    %876 = vmatprep.subr.mxu0 0.0
    %877 = vmatpush1.msra.mxu0 0.0
    %878 = vmatprep.subr.mxu0 0.0
    %879 = vmatpush1.msra.mxu0 0.0
    %880 = vmatprep.subr.mxu0 0.0
    %881 = vmatpush1.msra.mxu0 0.0
    %882 = vmatprep.subr.mxu0 0.0
    %883 = vmatpush1.msra.mxu0 0.0
    %884 = vmatprep.subr.mxu0 0.0
    %885 = vmatpush1.msra.mxu0 0.0
    %886 = vmatprep.subr.mxu0 0.0
    %887 = vmatpush1.msra.mxu0 0.0
    %888 = vmatprep.subr.mxu0 0.0
    %889 = vmatpush1.msra.mxu0 0.0
    %890 = vmatprep.subr.mxu0 0.0
    %891 = vmatpush1.msra.mxu0 0.0
    %892 = vmatprep.subr.mxu0 0.0
    %893 = vmatpush1.msra.mxu0 0.0
    %894 = vmatprep.subr.mxu0 0.0
    %895 = vmatpush1.msra.mxu0 0.0
    %896 = vmatprep.subr.mxu0 0.0
    %897 = vmatpush1.msra.mxu0 0.0
    %898 = vmatprep.subr.mxu0 0.0
    %899 = vmatpush1.msra.mxu0 0.0
    %900 = vmatprep.subr.mxu0 0.0
    %901 = vmatpush1.msra.mxu0 0.0
    %902 = vmatprep.subr.mxu0 0.0
    %903 = vmatpush1.msra.mxu0 0.0
    %904 = vmatprep.subr.mxu0 0.0
    %905 = vmatpush1.msra.mxu0 0.0
    %906 = vmatprep.subr.mxu0 0.0
    %907 = vmatpush1.msra.mxu0 0.0
    %908 = vmatprep.subr.mxu0 0.0
    %909 = vmatpush1.msra.mxu0 0.0
    %910 = vmatprep.subr.mxu0 0.0
    %911 = vmatpush1.msra.mxu0 0.0
    %912 = vmatprep.subr.mxu0 0.0
    %913 = vmatpush1.msra.mxu0 0.0
    %914 = vmatprep.mubr.f32.mxu0 0.0
    %915 = vmatmul.mubr.f32.gmra.mrb[0].mxu0 %v845
    %v916 = vpop.f32.mrb[0].mxu0
    %v917 = vadd.f32 0.0, %v916
    %v918 = vpop.f32.mrb[0].mxu0
    %919 = vmatprep.mubr.f32.mxu0 0.0
    %920 = vmatmul.mubr.f32.gmra.mrb[0].mxu0 %v848
    %v921 = vpop.f32.mrb[0].mxu0
    %v922 = vadd.f32 0.0, %v921
    %v923 = vpop.f32.mrb[0].mxu0
    %924 = vdwg.mxu0
    %v925 = vadd.f32 %v831, %v917
    %v926 = vadd.f32 %v832, %v922
    %s927 = scalar_lea.vmem %s1, 448
    %v928 = vld [vmem:[%s927] sm:$0xff]
    %v929 = vld [vmem:[%s927 + $0x8] sm:$0xff]
    %v930 = vld [vmem:[%s927 + $0x10] sm:$0xff]
    %v931 = vld [vmem:[%s927 + $0x18] sm:$0xff]
    %v932 = vld [vmem:[%s927 + $0x20] sm:$0xff]
    %v933 = vld [vmem:[%s927 + $0x28] sm:$0xff]
    %v934 = vld [vmem:[%s927 + $0x30] sm:$0xff]
    %v935 = vld [vmem:[%s927 + $0x38] sm:$0xff]
    %936 = vrot.lane.b32.xlu0 %v833, 124
    %v937 = vpop.permute.xlu0 %936
    %938 = vrot.lane.b32.xlu0 %v834, 124
    %v939 = vpop.permute.xlu0 %938
    %v940 = vsel %vm298, %v937, 0
    %v942 = vsel %vm298, %v939, 0
    %944 = vmatprep.subr.mxu0 0.0
    %945 = vmatpush1.msra.mxu0 %v928
    %946 = vmatprep.subr.mxu0 0.0
    %947 = vmatpush1.msra.mxu0 %v929
    %948 = vmatprep.subr.mxu0 0.0
    %949 = vmatpush1.msra.mxu0 %v930
    %950 = vmatprep.subr.mxu0 0.0
    %951 = vmatpush1.msra.mxu0 %v931
    %952 = vmatprep.subr.mxu0 0.0
    %953 = vmatpush1.msra.mxu0 %v932
    %954 = vmatprep.subr.mxu0 0.0
    %955 = vmatpush1.msra.mxu0 %v933
    %956 = vmatprep.subr.mxu0 0.0
    %957 = vmatpush1.msra.mxu0 %v934
    %958 = vmatprep.subr.mxu0 0.0
    %959 = vmatpush1.msra.mxu0 %v935
    %960 = vmatprep.subr.mxu0 0.0
    %961 = vmatpush1.msra.mxu0 0.0
    %962 = vmatprep.subr.mxu0 0.0
    %963 = vmatpush1.msra.mxu0 0.0
    %964 = vmatprep.subr.mxu0 0.0
    %965 = vmatpush1.msra.mxu0 0.0
    %966 = vmatprep.subr.mxu0 0.0
    %967 = vmatpush1.msra.mxu0 0.0
    %968 = vmatprep.subr.mxu0 0.0
    %969 = vmatpush1.msra.mxu0 0.0
    %970 = vmatprep.subr.mxu0 0.0
    %971 = vmatpush1.msra.mxu0 0.0
    %972 = vmatprep.subr.mxu0 0.0
    %973 = vmatpush1.msra.mxu0 0.0
    %974 = vmatprep.subr.mxu0 0.0
    %975 = vmatpush1.msra.mxu0 0.0
    %976 = vmatprep.subr.mxu0 0.0
    %977 = vmatpush1.msra.mxu0 0.0
    %978 = vmatprep.subr.mxu0 0.0
    %979 = vmatpush1.msra.mxu0 0.0
    %980 = vmatprep.subr.mxu0 0.0
    %981 = vmatpush1.msra.mxu0 0.0
    %982 = vmatprep.subr.mxu0 0.0
    %983 = vmatpush1.msra.mxu0 0.0
    %984 = vmatprep.subr.mxu0 0.0
    %985 = vmatpush1.msra.mxu0 0.0
    %986 = vmatprep.subr.mxu0 0.0
    %987 = vmatpush1.msra.mxu0 0.0
    %988 = vmatprep.subr.mxu0 0.0
    %989 = vmatpush1.msra.mxu0 0.0
    %990 = vmatprep.subr.mxu0 0.0
    %991 = vmatpush1.msra.mxu0 0.0
    %992 = vmatprep.subr.mxu0 0.0
    %993 = vmatpush1.msra.mxu0 0.0
    %994 = vmatprep.subr.mxu0 0.0
    %995 = vmatpush1.msra.mxu0 0.0
    %996 = vmatprep.subr.mxu0 0.0
    %997 = vmatpush1.msra.mxu0 0.0
    %998 = vmatprep.subr.mxu0 0.0
    %999 = vmatpush1.msra.mxu0 0.0
    %1000 = vmatprep.subr.mxu0 0.0
    %1001 = vmatpush1.msra.mxu0 0.0
    %1002 = vmatprep.subr.mxu0 0.0
    %1003 = vmatpush1.msra.mxu0 0.0
    %1004 = vmatprep.subr.mxu0 0.0
    %1005 = vmatpush1.msra.mxu0 0.0
    %1006 = vmatprep.subr.mxu0 0.0
    %1007 = vmatpush1.msra.mxu0 0.0
    %1008 = vmatprep.mubr.f32.mxu0 0.0
    %1009 = vmatmul.mubr.f32.gmra.mrb[0].mxu0 %v940
    %v1010 = vpop.f32.mrb[0].mxu0
    %v1011 = vadd.f32 0.0, %v1010
    %v1012 = vpop.f32.mrb[0].mxu0
    %1013 = vmatprep.mubr.f32.mxu0 0.0
    %1014 = vmatmul.mubr.f32.gmra.mrb[0].mxu0 %v942
    %v1015 = vpop.f32.mrb[0].mxu0
    %v1016 = vadd.f32 0.0, %v1015
    %v1017 = vpop.f32.mrb[0].mxu0
    %1018 = vdwg.mxu0
    %v1019 = vadd.f32 %v925, %v1011
    %v1020 = vadd.f32 %v926, %v1016
    %s1021 = scalar_lea.vmem %s1, 512
    %v1022 = vld [vmem:[%s1021] sm:$0xff]
    %v1023 = vld [vmem:[%s1021 + $0x8] sm:$0xff]
    %v1024 = vld [vmem:[%s1021 + $0x10] sm:$0xff]
    %v1025 = vld [vmem:[%s1021 + $0x18] sm:$0xff]
    %v1026 = vld [vmem:[%s1021 + $0x20] sm:$0xff]
    %v1027 = vld [vmem:[%s1021 + $0x28] sm:$0xff]
    %v1028 = vld [vmem:[%s1021 + $0x30] sm:$0xff]
    %v1029 = vld [vmem:[%s1021 + $0x38] sm:$0xff]
    %1030 = vrot.lane.b32.xlu0 %v833, 120
    %v1031 = vpop.permute.xlu0 %1030
    %1032 = vrot.lane.b32.xlu0 %v834, 120
    %v1033 = vpop.permute.xlu0 %1032
    %v1034 = vsel %vm298, %v1031, 0
    %v1036 = vsel %vm298, %v1033, 0
    %1038 = vmatprep.subr.mxu0 0.0
    %1039 = vmatpush1.msra.mxu0 %v1022
    %1040 = vmatprep.subr.mxu0 0.0
    %1041 = vmatpush1.msra.mxu0 %v1023
    %1042 = vmatprep.subr.mxu0 0.0
    %1043 = vmatpush1.msra.mxu0 %v1024
    %1044 = vmatprep.subr.mxu0 0.0
    %1045 = vmatpush1.msra.mxu0 %v1025
    %1046 = vmatprep.subr.mxu0 0.0
    %1047 = vmatpush1.msra.mxu0 %v1026
    %1048 = vmatprep.subr.mxu0 0.0
    %1049 = vmatpush1.msra.mxu0 %v1027
    %1050 = vmatprep.subr.mxu0 0.0
    %1051 = vmatpush1.msra.mxu0 %v1028
    %1052 = vmatprep.subr.mxu0 0.0
    %1053 = vmatpush1.msra.mxu0 %v1029
    %1054 = vmatprep.subr.mxu0 0.0
    %1055 = vmatpush1.msra.mxu0 0.0
    %1056 = vmatprep.subr.mxu0 0.0
    %1057 = vmatpush1.msra.mxu0 0.0
    %1058 = vmatprep.subr.mxu0 0.0
    %1059 = vmatpush1.msra.mxu0 0.0
    %1060 = vmatprep.subr.mxu0 0.0
    %1061 = vmatpush1.msra.mxu0 0.0
    %1062 = vmatprep.subr.mxu0 0.0
    %1063 = vmatpush1.msra.mxu0 0.0
    %1064 = vmatprep.subr.mxu0 0.0
    %1065 = vmatpush1.msra.mxu0 0.0
    %1066 = vmatprep.subr.mxu0 0.0
    %1067 = vmatpush1.msra.mxu0 0.0
    %1068 = vmatprep.subr.mxu0 0.0
    %1069 = vmatpush1.msra.mxu0 0.0
    %1070 = vmatprep.subr.mxu0 0.0
    %1071 = vmatpush1.msra.mxu0 0.0
    %1072 = vmatprep.subr.mxu0 0.0
    %1073 = vmatpush1.msra.mxu0 0.0
    %1074 = vmatprep.subr.mxu0 0.0
    %1075 = vmatpush1.msra.mxu0 0.0
    %1076 = vmatprep.subr.mxu0 0.0
    %1077 = vmatpush1.msra.mxu0 0.0
    %1078 = vmatprep.subr.mxu0 0.0
    %1079 = vmatpush1.msra.mxu0 0.0
    %1080 = vmatprep.subr.mxu0 0.0
    %1081 = vmatpush1.msra.mxu0 0.0
    %1082 = vmatprep.subr.mxu0 0.0
    %1083 = vmatpush1.msra.mxu0 0.0
    %1084 = vmatprep.subr.mxu0 0.0
    %1085 = vmatpush1.msra.mxu0 0.0
    %1086 = vmatprep.subr.mxu0 0.0
    %1087 = vmatpush1.msra.mxu0 0.0
    %1088 = vmatprep.subr.mxu0 0.0
    %1089 = vmatpush1.msra.mxu0 0.0
    %1090 = vmatprep.subr.mxu0 0.0
    %1091 = vmatpush1.msra.mxu0 0.0
    %1092 = vmatprep.subr.mxu0 0.0
    %1093 = vmatpush1.msra.mxu0 0.0
    %1094 = vmatprep.subr.mxu0 0.0
    %1095 = vmatpush1.msra.mxu0 0.0
    %1096 = vmatprep.subr.mxu0 0.0
    %1097 = vmatpush1.msra.mxu0 0.0
    %1098 = vmatprep.subr.mxu0 0.0
    %1099 = vmatpush1.msra.mxu0 0.0
    %1100 = vmatprep.subr.mxu0 0.0
    %1101 = vmatpush1.msra.mxu0 0.0
    %1102 = vmatprep.mubr.f32.mxu0 0.0
    %1103 = vmatmul.mubr.f32.gmra.mrb[0].mxu0 %v1034
    %v1104 = vpop.f32.mrb[0].mxu0
    %v1105 = vadd.f32 0.0, %v1104
    %v1106 = vpop.f32.mrb[0].mxu0
    %1107 = vmatprep.mubr.f32.mxu0 0.0
    %1108 = vmatmul.mubr.f32.gmra.mrb[0].mxu0 %v1036
    %v1109 = vpop.f32.mrb[0].mxu0
    %v1110 = vadd.f32 0.0, %v1109
    %v1111 = vpop.f32.mrb[0].mxu0
    %1112 = vdwg.mxu0
    %v1113 = vadd.f32 %v1019, %v1105
    %v1114 = vadd.f32 %v1020, %v1110
    %v1115 = vld [vmem:[%s270] sm:$0xff]
    %v1116 = vld [vmem:[%s270 + $0x8] sm:$0xff]
    %1119 = vrot.lane.b32.xlu0 %v1115, 124
    %v1120 = vpop.permute.xlu0 %1119
    %1121 = vrot.lane.b32.xlu0 %v1116, 124
    %v1122 = vpop.permute.xlu0 %1121
    %v1123 = vsel %vm298, %v1120, 0
    %v1125 = vsel %vm298, %v1122, 0
    %1127 = vmatprep.subr.mxu0 0.0
    %1128 = vmatpush1.msra.mxu0 %v284
    %1129 = vmatprep.subr.mxu0 0.0
    %1130 = vmatpush1.msra.mxu0 %v285
    %1131 = vmatprep.subr.mxu0 0.0
    %1132 = vmatpush1.msra.mxu0 %v286
    %1133 = vmatprep.subr.mxu0 0.0
    %1134 = vmatpush1.msra.mxu0 %v287
    %1135 = vmatprep.subr.mxu0 0.0
    %1136 = vmatpush1.msra.mxu0 %v288
    %1137 = vmatprep.subr.mxu0 0.0
    %1138 = vmatpush1.msra.mxu0 %v289
    %1139 = vmatprep.subr.mxu0 0.0
    %1140 = vmatpush1.msra.mxu0 %v290
    %1141 = vmatprep.subr.mxu0 0.0
    %1142 = vmatpush1.msra.mxu0 %v291
    %1143 = vmatprep.subr.mxu0 0.0
    %1144 = vmatpush1.msra.mxu0 0.0
    %1145 = vmatprep.subr.mxu0 0.0
    %1146 = vmatpush1.msra.mxu0 0.0
    %1147 = vmatprep.subr.mxu0 0.0
    %1148 = vmatpush1.msra.mxu0 0.0
    %1149 = vmatprep.subr.mxu0 0.0
    %1150 = vmatpush1.msra.mxu0 0.0
    %1151 = vmatprep.subr.mxu0 0.0
    %1152 = vmatpush1.msra.mxu0 0.0
    %1153 = vmatprep.subr.mxu0 0.0
    %1154 = vmatpush1.msra.mxu0 0.0
    %1155 = vmatprep.subr.mxu0 0.0
    %1156 = vmatpush1.msra.mxu0 0.0
    %1157 = vmatprep.subr.mxu0 0.0
    %1158 = vmatpush1.msra.mxu0 0.0
    %1159 = vmatprep.subr.mxu0 0.0
    %1160 = vmatpush1.msra.mxu0 0.0
    %1161 = vmatprep.subr.mxu0 0.0
    %1162 = vmatpush1.msra.mxu0 0.0
    %1163 = vmatprep.subr.mxu0 0.0
    %1164 = vmatpush1.msra.mxu0 0.0
    %1165 = vmatprep.subr.mxu0 0.0
    %1166 = vmatpush1.msra.mxu0 0.0
    %1167 = vmatprep.subr.mxu0 0.0
    %1168 = vmatpush1.msra.mxu0 0.0
    %1169 = vmatprep.subr.mxu0 0.0
    %1170 = vmatpush1.msra.mxu0 0.0
    %1171 = vmatprep.subr.mxu0 0.0
    %1172 = vmatpush1.msra.mxu0 0.0
    %1173 = vmatprep.subr.mxu0 0.0
    %1174 = vmatpush1.msra.mxu0 0.0
    %1175 = vmatprep.subr.mxu0 0.0
    %1176 = vmatpush1.msra.mxu0 0.0
    %1177 = vmatprep.subr.mxu0 0.0
    %1178 = vmatpush1.msra.mxu0 0.0
    %1179 = vmatprep.subr.mxu0 0.0
    %1180 = vmatpush1.msra.mxu0 0.0
    %1181 = vmatprep.subr.mxu0 0.0
    %1182 = vmatpush1.msra.mxu0 0.0
    %1183 = vmatprep.subr.mxu0 0.0
    %1184 = vmatpush1.msra.mxu0 0.0
    %1185 = vmatprep.subr.mxu0 0.0
    %1186 = vmatpush1.msra.mxu0 0.0
    %1187 = vmatprep.subr.mxu0 0.0
    %1188 = vmatpush1.msra.mxu0 0.0
    %1189 = vmatprep.subr.mxu0 0.0
    %1190 = vmatpush1.msra.mxu0 0.0
    %1191 = vmatprep.mubr.f32.mxu0 0.0
    %1192 = vmatmul.mubr.f32.gmra.mrb[0].mxu0 %v1123
    %v1193 = vpop.f32.mrb[0].mxu0
    %v1194 = vadd.f32 0.0, %v1193
    %v1195 = vpop.f32.mrb[0].mxu0
    %1196 = vmatprep.mubr.f32.mxu0 0.0
    %1197 = vmatmul.mubr.f32.gmra.mrb[0].mxu0 %v1125
    %v1198 = vpop.f32.mrb[0].mxu0
    %v1199 = vadd.f32 0.0, %v1198
    %v1200 = vpop.f32.mrb[0].mxu0
    %1201 = vdwg.mxu0
    %v1202 = vsel %vm298, %v1115, 0
    %v1204 = vsel %vm298, %v1116, 0
    %1206 = vmatprep.subr.mxu0 0.0
    %1207 = vmatpush1.msra.mxu0 %v275
    %1208 = vmatprep.subr.mxu0 0.0
    %1209 = vmatpush1.msra.mxu0 %v276
    %1210 = vmatprep.subr.mxu0 0.0
    %1211 = vmatpush1.msra.mxu0 %v277
    %1212 = vmatprep.subr.mxu0 0.0
    %1213 = vmatpush1.msra.mxu0 %v278
    %1214 = vmatprep.subr.mxu0 0.0
    %1215 = vmatpush1.msra.mxu0 %v279
    %1216 = vmatprep.subr.mxu0 0.0
    %1217 = vmatpush1.msra.mxu0 %v280
    %1218 = vmatprep.subr.mxu0 0.0
    %1219 = vmatpush1.msra.mxu0 %v281
    %1220 = vmatprep.subr.mxu0 0.0
    %1221 = vmatpush1.msra.mxu0 %v282
    %1222 = vmatprep.subr.mxu0 0.0
    %1223 = vmatpush1.msra.mxu0 0.0
    %1224 = vmatprep.subr.mxu0 0.0
    %1225 = vmatpush1.msra.mxu0 0.0
    %1226 = vmatprep.subr.mxu0 0.0
    %1227 = vmatpush1.msra.mxu0 0.0
    %1228 = vmatprep.subr.mxu0 0.0
    %1229 = vmatpush1.msra.mxu0 0.0
    %1230 = vmatprep.subr.mxu0 0.0
    %1231 = vmatpush1.msra.mxu0 0.0
    %1232 = vmatprep.subr.mxu0 0.0
    %1233 = vmatpush1.msra.mxu0 0.0
    %1234 = vmatprep.subr.mxu0 0.0
    %1235 = vmatpush1.msra.mxu0 0.0
    %1236 = vmatprep.subr.mxu0 0.0
    %1237 = vmatpush1.msra.mxu0 0.0
    %1238 = vmatprep.subr.mxu0 0.0
    %1239 = vmatpush1.msra.mxu0 0.0
    %1240 = vmatprep.subr.mxu0 0.0
    %1241 = vmatpush1.msra.mxu0 0.0
    %1242 = vmatprep.subr.mxu0 0.0
    %1243 = vmatpush1.msra.mxu0 0.0
    %1244 = vmatprep.subr.mxu0 0.0
    %1245 = vmatpush1.msra.mxu0 0.0
    %1246 = vmatprep.subr.mxu0 0.0
    %1247 = vmatpush1.msra.mxu0 0.0
    %1248 = vmatprep.subr.mxu0 0.0
    %1249 = vmatpush1.msra.mxu0 0.0
    %1250 = vmatprep.subr.mxu0 0.0
    %1251 = vmatpush1.msra.mxu0 0.0
    %1252 = vmatprep.subr.mxu0 0.0
    %1253 = vmatpush1.msra.mxu0 0.0
    %1254 = vmatprep.subr.mxu0 0.0
    %1255 = vmatpush1.msra.mxu0 0.0
    %1256 = vmatprep.subr.mxu0 0.0
    %1257 = vmatpush1.msra.mxu0 0.0
    %1258 = vmatprep.subr.mxu0 0.0
    %1259 = vmatpush1.msra.mxu0 0.0
    %1260 = vmatprep.subr.mxu0 0.0
    %1261 = vmatpush1.msra.mxu0 0.0
    %1262 = vmatprep.subr.mxu0 0.0
    %1263 = vmatpush1.msra.mxu0 0.0
    %1264 = vmatprep.subr.mxu0 0.0
    %1265 = vmatpush1.msra.mxu0 0.0
    %1266 = vmatprep.subr.mxu0 0.0
    %1267 = vmatpush1.msra.mxu0 0.0
    %1268 = vmatprep.subr.mxu0 0.0
    %1269 = vmatpush1.msra.mxu0 0.0
    %1270 = vmatprep.mubr.f32.mxu0 0.0
    %1271 = vmatmul.mubr.f32.gmra.mrb[0].mxu0 %v1202
    %v1272 = vpop.f32.mrb[0].mxu0
    %v1273 = vadd.f32 %v1194, %v1272
    %v1274 = vpop.f32.mrb[0].mxu0
    %1275 = vmatprep.mubr.f32.mxu0 0.0
    %1276 = vmatmul.mubr.f32.gmra.mrb[0].mxu0 %v1204
    %v1277 = vpop.f32.mrb[0].mxu0
    %v1278 = vadd.f32 %v1199, %v1277
    %v1279 = vpop.f32.mrb[0].mxu0
    %1280 = vdwg.mxu0
    %1281 = vrot.lane.b32.xlu0 %v1115, 120
    %v1282 = vpop.permute.xlu0 %1281
    %1283 = vrot.lane.b32.xlu0 %v1116, 120
    %v1284 = vpop.permute.xlu0 %1283
    %v1285 = vsel %vm298, %v1282, 0
    %v1287 = vsel %vm298, %v1284, 0
    %1289 = vmatprep.subr.mxu0 0.0
    %1290 = vmatpush1.msra.mxu0 %v458
    %1291 = vmatprep.subr.mxu0 0.0
    %1292 = vmatpush1.msra.mxu0 %v459
    %1293 = vmatprep.subr.mxu0 0.0
    %1294 = vmatpush1.msra.mxu0 %v460
    %1295 = vmatprep.subr.mxu0 0.0
    %1296 = vmatpush1.msra.mxu0 %v461
    %1297 = vmatprep.subr.mxu0 0.0
    %1298 = vmatpush1.msra.mxu0 %v462
    %1299 = vmatprep.subr.mxu0 0.0
    %1300 = vmatpush1.msra.mxu0 %v463
    %1301 = vmatprep.subr.mxu0 0.0
    %1302 = vmatpush1.msra.mxu0 %v464
    %1303 = vmatprep.subr.mxu0 0.0
    %1304 = vmatpush1.msra.mxu0 %v465
    %1305 = vmatprep.subr.mxu0 0.0
    %1306 = vmatpush1.msra.mxu0 0.0
    %1307 = vmatprep.subr.mxu0 0.0
    %1308 = vmatpush1.msra.mxu0 0.0
    %1309 = vmatprep.subr.mxu0 0.0
    %1310 = vmatpush1.msra.mxu0 0.0
    %1311 = vmatprep.subr.mxu0 0.0
    %1312 = vmatpush1.msra.mxu0 0.0
    %1313 = vmatprep.subr.mxu0 0.0
    %1314 = vmatpush1.msra.mxu0 0.0
    %1315 = vmatprep.subr.mxu0 0.0
    %1316 = vmatpush1.msra.mxu0 0.0
    %1317 = vmatprep.subr.mxu0 0.0
    %1318 = vmatpush1.msra.mxu0 0.0
    %1319 = vmatprep.subr.mxu0 0.0
    %1320 = vmatpush1.msra.mxu0 0.0
    %1321 = vmatprep.subr.mxu0 0.0
    %1322 = vmatpush1.msra.mxu0 0.0
    %1323 = vmatprep.subr.mxu0 0.0
    %1324 = vmatpush1.msra.mxu0 0.0
    %1325 = vmatprep.subr.mxu0 0.0
    %1326 = vmatpush1.msra.mxu0 0.0
    %1327 = vmatprep.subr.mxu0 0.0
    %1328 = vmatpush1.msra.mxu0 0.0
    %1329 = vmatprep.subr.mxu0 0.0
    %1330 = vmatpush1.msra.mxu0 0.0
    %1331 = vmatprep.subr.mxu0 0.0
    %1332 = vmatpush1.msra.mxu0 0.0
    %1333 = vmatprep.subr.mxu0 0.0
    %1334 = vmatpush1.msra.mxu0 0.0
    %1335 = vmatprep.subr.mxu0 0.0
    %1336 = vmatpush1.msra.mxu0 0.0
    %1337 = vmatprep.subr.mxu0 0.0
    %1338 = vmatpush1.msra.mxu0 0.0
    %1339 = vmatprep.subr.mxu0 0.0
    %1340 = vmatpush1.msra.mxu0 0.0
    %1341 = vmatprep.subr.mxu0 0.0
    %1342 = vmatpush1.msra.mxu0 0.0
    %1343 = vmatprep.subr.mxu0 0.0
    %1344 = vmatpush1.msra.mxu0 0.0
    %1345 = vmatprep.subr.mxu0 0.0
    %1346 = vmatpush1.msra.mxu0 0.0
    %1347 = vmatprep.subr.mxu0 0.0
    %1348 = vmatpush1.msra.mxu0 0.0
    %1349 = vmatprep.subr.mxu0 0.0
    %1350 = vmatpush1.msra.mxu0 0.0
    %1351 = vmatprep.subr.mxu0 0.0
    %1352 = vmatpush1.msra.mxu0 0.0
    %1353 = vmatprep.mubr.f32.mxu0 0.0
    %1354 = vmatmul.mubr.f32.gmra.mrb[0].mxu0 %v1285
    %v1355 = vpop.f32.mrb[0].mxu0
    %v1356 = vadd.f32 0.0, %v1355
    %v1357 = vpop.f32.mrb[0].mxu0
    %1358 = vmatprep.mubr.f32.mxu0 0.0
    %1359 = vmatmul.mubr.f32.gmra.mrb[0].mxu0 %v1287
    %v1360 = vpop.f32.mrb[0].mxu0
    %v1361 = vadd.f32 0.0, %v1360
    %v1362 = vpop.f32.mrb[0].mxu0
    %1363 = vdwg.mxu0
    %v1364 = vadd.f32 %v1273, %v1356
    %v1365 = vadd.f32 %v1278, %v1361
    %v1366 = vld [vmem:[%s270 + $0x1] sm:$0xff]
    %v1367 = vld [vmem:[%s270 + $0x9] sm:$0xff]
    %v1369 = vsel %vm298, %v1366, 0
    %v1372 = vsel %vm298, %v1367, 0
    %1374 = vmatprep.subr.mxu0 0.0
    %1375 = vmatpush1.msra.mxu0 %v554
    %1376 = vmatprep.subr.mxu0 0.0
    %1377 = vmatpush1.msra.mxu0 %v555
    %1378 = vmatprep.subr.mxu0 0.0
    %1379 = vmatpush1.msra.mxu0 %v556
    %1380 = vmatprep.subr.mxu0 0.0
    %1381 = vmatpush1.msra.mxu0 %v557
    %1382 = vmatprep.subr.mxu0 0.0
    %1383 = vmatpush1.msra.mxu0 %v558
    %1384 = vmatprep.subr.mxu0 0.0
    %1385 = vmatpush1.msra.mxu0 %v559
    %1386 = vmatprep.subr.mxu0 0.0
    %1387 = vmatpush1.msra.mxu0 %v560
    %1388 = vmatprep.subr.mxu0 0.0
    %1389 = vmatpush1.msra.mxu0 %v561
    %1390 = vmatprep.subr.mxu0 0.0
    %1391 = vmatpush1.msra.mxu0 0.0
    %1392 = vmatprep.subr.mxu0 0.0
    %1393 = vmatpush1.msra.mxu0 0.0
    %1394 = vmatprep.subr.mxu0 0.0
    %1395 = vmatpush1.msra.mxu0 0.0
    %1396 = vmatprep.subr.mxu0 0.0
    %1397 = vmatpush1.msra.mxu0 0.0
    %1398 = vmatprep.subr.mxu0 0.0
    %1399 = vmatpush1.msra.mxu0 0.0
    %1400 = vmatprep.subr.mxu0 0.0
    %1401 = vmatpush1.msra.mxu0 0.0
    %1402 = vmatprep.subr.mxu0 0.0
    %1403 = vmatpush1.msra.mxu0 0.0
    %1404 = vmatprep.subr.mxu0 0.0
    %1405 = vmatpush1.msra.mxu0 0.0
    %1406 = vmatprep.subr.mxu0 0.0
    %1407 = vmatpush1.msra.mxu0 0.0
    %1408 = vmatprep.subr.mxu0 0.0
    %1409 = vmatpush1.msra.mxu0 0.0
    %1410 = vmatprep.subr.mxu0 0.0
    %1411 = vmatpush1.msra.mxu0 0.0
    %1412 = vmatprep.subr.mxu0 0.0
    %1413 = vmatpush1.msra.mxu0 0.0
    %1414 = vmatprep.subr.mxu0 0.0
    %1415 = vmatpush1.msra.mxu0 0.0
    %1416 = vmatprep.subr.mxu0 0.0
    %1417 = vmatpush1.msra.mxu0 0.0
    %1418 = vmatprep.subr.mxu0 0.0
    %1419 = vmatpush1.msra.mxu0 0.0
    %1420 = vmatprep.subr.mxu0 0.0
    %1421 = vmatpush1.msra.mxu0 0.0
    %1422 = vmatprep.subr.mxu0 0.0
    %1423 = vmatpush1.msra.mxu0 0.0
    %1424 = vmatprep.subr.mxu0 0.0
    %1425 = vmatpush1.msra.mxu0 0.0
    %1426 = vmatprep.subr.mxu0 0.0
    %1427 = vmatpush1.msra.mxu0 0.0
    %1428 = vmatprep.subr.mxu0 0.0
    %1429 = vmatpush1.msra.mxu0 0.0
    %1430 = vmatprep.subr.mxu0 0.0
    %1431 = vmatpush1.msra.mxu0 0.0
    %1432 = vmatprep.subr.mxu0 0.0
    %1433 = vmatpush1.msra.mxu0 0.0
    %1434 = vmatprep.subr.mxu0 0.0
    %1435 = vmatpush1.msra.mxu0 0.0
    %1436 = vmatprep.subr.mxu0 0.0
    %1437 = vmatpush1.msra.mxu0 0.0
    %1438 = vmatprep.mubr.f32.mxu0 0.0
    %1439 = vmatmul.mubr.f32.gmra.mrb[0].mxu0 %v1369
    %v1440 = vpop.f32.mrb[0].mxu0
    %v1441 = vadd.f32 0.0, %v1440
    %v1442 = vpop.f32.mrb[0].mxu0
    %1443 = vmatprep.mubr.f32.mxu0 0.0
    %1444 = vmatmul.mubr.f32.gmra.mrb[0].mxu0 %v1372
    %v1445 = vpop.f32.mrb[0].mxu0
    %v1446 = vadd.f32 0.0, %v1445
    %v1447 = vpop.f32.mrb[0].mxu0
    %1448 = vdwg.mxu0
    %v1449 = vadd.f32 %v1364, %v1441
    %v1450 = vadd.f32 %v1365, %v1446
    %1451 = vrot.lane.b32.xlu0 %v1366, 124
    %v1452 = vpop.permute.xlu0 %1451
    %1453 = vrot.lane.b32.xlu0 %v1367, 124
    %v1454 = vpop.permute.xlu0 %1453
    %v1455 = vsel %vm298, %v1452, 0
    %v1457 = vsel %vm298, %v1454, 0
    %1459 = vmatprep.subr.mxu0 0.0
    %1460 = vmatpush1.msra.mxu0 %v646
    %1461 = vmatprep.subr.mxu0 0.0
    %1462 = vmatpush1.msra.mxu0 %v647
    %1463 = vmatprep.subr.mxu0 0.0
    %1464 = vmatpush1.msra.mxu0 %v648
    %1465 = vmatprep.subr.mxu0 0.0
    %1466 = vmatpush1.msra.mxu0 %v649
    %1467 = vmatprep.subr.mxu0 0.0
    %1468 = vmatpush1.msra.mxu0 %v650
    %1469 = vmatprep.subr.mxu0 0.0
    %1470 = vmatpush1.msra.mxu0 %v651
    %1471 = vmatprep.subr.mxu0 0.0
    %1472 = vmatpush1.msra.mxu0 %v652
    %1473 = vmatprep.subr.mxu0 0.0
    %1474 = vmatpush1.msra.mxu0 %v653
    %1475 = vmatprep.subr.mxu0 0.0
    %1476 = vmatpush1.msra.mxu0 0.0
    %1477 = vmatprep.subr.mxu0 0.0
    %1478 = vmatpush1.msra.mxu0 0.0
    %1479 = vmatprep.subr.mxu0 0.0
    %1480 = vmatpush1.msra.mxu0 0.0
    %1481 = vmatprep.subr.mxu0 0.0
    %1482 = vmatpush1.msra.mxu0 0.0
    %1483 = vmatprep.subr.mxu0 0.0
    %1484 = vmatpush1.msra.mxu0 0.0
    %1485 = vmatprep.subr.mxu0 0.0
    %1486 = vmatpush1.msra.mxu0 0.0
    %1487 = vmatprep.subr.mxu0 0.0
    %1488 = vmatpush1.msra.mxu0 0.0
    %1489 = vmatprep.subr.mxu0 0.0
    %1490 = vmatpush1.msra.mxu0 0.0
    %1491 = vmatprep.subr.mxu0 0.0
    %1492 = vmatpush1.msra.mxu0 0.0
    %1493 = vmatprep.subr.mxu0 0.0
    %1494 = vmatpush1.msra.mxu0 0.0
    %1495 = vmatprep.subr.mxu0 0.0
    %1496 = vmatpush1.msra.mxu0 0.0
    %1497 = vmatprep.subr.mxu0 0.0
    %1498 = vmatpush1.msra.mxu0 0.0
    %1499 = vmatprep.subr.mxu0 0.0
    %1500 = vmatpush1.msra.mxu0 0.0
    %1501 = vmatprep.subr.mxu0 0.0
    %1502 = vmatpush1.msra.mxu0 0.0
    %1503 = vmatprep.subr.mxu0 0.0
    %1504 = vmatpush1.msra.mxu0 0.0
    %1505 = vmatprep.subr.mxu0 0.0
    %1506 = vmatpush1.msra.mxu0 0.0
    %1507 = vmatprep.subr.mxu0 0.0
    %1508 = vmatpush1.msra.mxu0 0.0
    %1509 = vmatprep.subr.mxu0 0.0
    %1510 = vmatpush1.msra.mxu0 0.0
    %1511 = vmatprep.subr.mxu0 0.0
    %1512 = vmatpush1.msra.mxu0 0.0
    %1513 = vmatprep.subr.mxu0 0.0
    %1514 = vmatpush1.msra.mxu0 0.0
    %1515 = vmatprep.subr.mxu0 0.0
    %1516 = vmatpush1.msra.mxu0 0.0
    %1517 = vmatprep.subr.mxu0 0.0
    %1518 = vmatpush1.msra.mxu0 0.0
    %1519 = vmatprep.subr.mxu0 0.0
    %1520 = vmatpush1.msra.mxu0 0.0
    %1521 = vmatprep.subr.mxu0 0.0
    %1522 = vmatpush1.msra.mxu0 0.0
    %1523 = vmatprep.mubr.f32.mxu0 0.0
    %1524 = vmatmul.mubr.f32.gmra.mrb[0].mxu0 %v1455
    %v1525 = vpop.f32.mrb[0].mxu0
    %v1526 = vadd.f32 0.0, %v1525
    %v1527 = vpop.f32.mrb[0].mxu0
    %1528 = vmatprep.mubr.f32.mxu0 0.0
    %1529 = vmatmul.mubr.f32.gmra.mrb[0].mxu0 %v1457
    %v1530 = vpop.f32.mrb[0].mxu0
    %v1531 = vadd.f32 0.0, %v1530
    %v1532 = vpop.f32.mrb[0].mxu0
    %1533 = vdwg.mxu0
    %v1534 = vadd.f32 %v1449, %v1526
    %v1535 = vadd.f32 %v1450, %v1531
    %1536 = vrot.lane.b32.xlu0 %v1366, 120
    %v1537 = vpop.permute.xlu0 %1536
    %1538 = vrot.lane.b32.xlu0 %v1367, 120
    %v1539 = vpop.permute.xlu0 %1538
    %v1540 = vsel %vm298, %v1537, 0
    %v1542 = vsel %vm298, %v1539, 0
    %1544 = vmatprep.subr.mxu0 0.0
    %1545 = vmatpush1.msra.mxu0 %v740
    %1546 = vmatprep.subr.mxu0 0.0
    %1547 = vmatpush1.msra.mxu0 %v741
    %1548 = vmatprep.subr.mxu0 0.0
    %1549 = vmatpush1.msra.mxu0 %v742
    %1550 = vmatprep.subr.mxu0 0.0
    %1551 = vmatpush1.msra.mxu0 %v743
    %1552 = vmatprep.subr.mxu0 0.0
    %1553 = vmatpush1.msra.mxu0 %v744
    %1554 = vmatprep.subr.mxu0 0.0
    %1555 = vmatpush1.msra.mxu0 %v745
    %1556 = vmatprep.subr.mxu0 0.0
    %1557 = vmatpush1.msra.mxu0 %v746
    %1558 = vmatprep.subr.mxu0 0.0
    %1559 = vmatpush1.msra.mxu0 %v747
    %1560 = vmatprep.subr.mxu0 0.0
    %1561 = vmatpush1.msra.mxu0 0.0
    %1562 = vmatprep.subr.mxu0 0.0
    %1563 = vmatpush1.msra.mxu0 0.0
    %1564 = vmatprep.subr.mxu0 0.0
    %1565 = vmatpush1.msra.mxu0 0.0
    %1566 = vmatprep.subr.mxu0 0.0
    %1567 = vmatpush1.msra.mxu0 0.0
    %1568 = vmatprep.subr.mxu0 0.0
    %1569 = vmatpush1.msra.mxu0 0.0
    %1570 = vmatprep.subr.mxu0 0.0
    %1571 = vmatpush1.msra.mxu0 0.0
    %1572 = vmatprep.subr.mxu0 0.0
    %1573 = vmatpush1.msra.mxu0 0.0
    %1574 = vmatprep.subr.mxu0 0.0
    %1575 = vmatpush1.msra.mxu0 0.0
    %1576 = vmatprep.subr.mxu0 0.0
    %1577 = vmatpush1.msra.mxu0 0.0
    %1578 = vmatprep.subr.mxu0 0.0
    %1579 = vmatpush1.msra.mxu0 0.0
    %1580 = vmatprep.subr.mxu0 0.0
    %1581 = vmatpush1.msra.mxu0 0.0
    %1582 = vmatprep.subr.mxu0 0.0
    %1583 = vmatpush1.msra.mxu0 0.0
    %1584 = vmatprep.subr.mxu0 0.0
    %1585 = vmatpush1.msra.mxu0 0.0
    %1586 = vmatprep.subr.mxu0 0.0
    %1587 = vmatpush1.msra.mxu0 0.0
    %1588 = vmatprep.subr.mxu0 0.0
    %1589 = vmatpush1.msra.mxu0 0.0
    %1590 = vmatprep.subr.mxu0 0.0
    %1591 = vmatpush1.msra.mxu0 0.0
    %1592 = vmatprep.subr.mxu0 0.0
    %1593 = vmatpush1.msra.mxu0 0.0
    %1594 = vmatprep.subr.mxu0 0.0
    %1595 = vmatpush1.msra.mxu0 0.0
    %1596 = vmatprep.subr.mxu0 0.0
    %1597 = vmatpush1.msra.mxu0 0.0
    %1598 = vmatprep.subr.mxu0 0.0
    %1599 = vmatpush1.msra.mxu0 0.0
    %1600 = vmatprep.subr.mxu0 0.0
    %1601 = vmatpush1.msra.mxu0 0.0
    %1602 = vmatprep.subr.mxu0 0.0
    %1603 = vmatpush1.msra.mxu0 0.0
    %1604 = vmatprep.subr.mxu0 0.0
    %1605 = vmatpush1.msra.mxu0 0.0
    %1606 = vmatprep.subr.mxu0 0.0
    %1607 = vmatpush1.msra.mxu0 0.0
    %1608 = vmatprep.mubr.f32.mxu0 0.0
    %1609 = vmatmul.mubr.f32.gmra.mrb[0].mxu0 %v1540
    %v1610 = vpop.f32.mrb[0].mxu0
    %v1611 = vadd.f32 0.0, %v1610
    %v1612 = vpop.f32.mrb[0].mxu0
    %1613 = vmatprep.mubr.f32.mxu0 0.0
    %1614 = vmatmul.mubr.f32.gmra.mrb[0].mxu0 %v1542
    %v1615 = vpop.f32.mrb[0].mxu0
    %v1616 = vadd.f32 0.0, %v1615
    %v1617 = vpop.f32.mrb[0].mxu0
    %1618 = vdwg.mxu0
    %v1619 = vadd.f32 %v1534, %v1611
    %v1620 = vadd.f32 %v1535, %v1616
    %v1621 = vld [vmem:[%s270 + $0x2] sm:$0xff]
    %v1622 = vld [vmem:[%s270 + $0xa] sm:$0xff]
    %v1624 = vsel %vm298, %v1621, 0
    %v1627 = vsel %vm298, %v1622, 0
    %1629 = vmatprep.subr.mxu0 0.0
    %1630 = vmatpush1.msra.mxu0 %v836
    %1631 = vmatprep.subr.mxu0 0.0
    %1632 = vmatpush1.msra.mxu0 %v837
    %1633 = vmatprep.subr.mxu0 0.0
    %1634 = vmatpush1.msra.mxu0 %v838
    %1635 = vmatprep.subr.mxu0 0.0
    %1636 = vmatpush1.msra.mxu0 %v839
    %1637 = vmatprep.subr.mxu0 0.0
    %1638 = vmatpush1.msra.mxu0 %v840
    %1639 = vmatprep.subr.mxu0 0.0
    %1640 = vmatpush1.msra.mxu0 %v841
    %1641 = vmatprep.subr.mxu0 0.0
    %1642 = vmatpush1.msra.mxu0 %v842
    %1643 = vmatprep.subr.mxu0 0.0
    %1644 = vmatpush1.msra.mxu0 %v843
    %1645 = vmatprep.subr.mxu0 0.0
    %1646 = vmatpush1.msra.mxu0 0.0
    %1647 = vmatprep.subr.mxu0 0.0
    %1648 = vmatpush1.msra.mxu0 0.0
    %1649 = vmatprep.subr.mxu0 0.0
    %1650 = vmatpush1.msra.mxu0 0.0
    %1651 = vmatprep.subr.mxu0 0.0
    %1652 = vmatpush1.msra.mxu0 0.0
    %1653 = vmatprep.subr.mxu0 0.0
    %1654 = vmatpush1.msra.mxu0 0.0
    %1655 = vmatprep.subr.mxu0 0.0
    %1656 = vmatpush1.msra.mxu0 0.0
    %1657 = vmatprep.subr.mxu0 0.0
    %1658 = vmatpush1.msra.mxu0 0.0
    %1659 = vmatprep.subr.mxu0 0.0
    %1660 = vmatpush1.msra.mxu0 0.0
    %1661 = vmatprep.subr.mxu0 0.0
    %1662 = vmatpush1.msra.mxu0 0.0
    %1663 = vmatprep.subr.mxu0 0.0
    %1664 = vmatpush1.msra.mxu0 0.0
    %1665 = vmatprep.subr.mxu0 0.0
    %1666 = vmatpush1.msra.mxu0 0.0
    %1667 = vmatprep.subr.mxu0 0.0
    %1668 = vmatpush1.msra.mxu0 0.0
    %1669 = vmatprep.subr.mxu0 0.0
    %1670 = vmatpush1.msra.mxu0 0.0
    %1671 = vmatprep.subr.mxu0 0.0
    %1672 = vmatpush1.msra.mxu0 0.0
    %1673 = vmatprep.subr.mxu0 0.0
    %1674 = vmatpush1.msra.mxu0 0.0
    %1675 = vmatprep.subr.mxu0 0.0
    %1676 = vmatpush1.msra.mxu0 0.0
    %1677 = vmatprep.subr.mxu0 0.0
    %1678 = vmatpush1.msra.mxu0 0.0
    %1679 = vmatprep.subr.mxu0 0.0
    %1680 = vmatpush1.msra.mxu0 0.0
    %1681 = vmatprep.subr.mxu0 0.0
    %1682 = vmatpush1.msra.mxu0 0.0
    %1683 = vmatprep.subr.mxu0 0.0
    %1684 = vmatpush1.msra.mxu0 0.0
    %1685 = vmatprep.subr.mxu0 0.0
    %1686 = vmatpush1.msra.mxu0 0.0
    %1687 = vmatprep.subr.mxu0 0.0
    %1688 = vmatpush1.msra.mxu0 0.0
    %1689 = vmatprep.subr.mxu0 0.0
    %1690 = vmatpush1.msra.mxu0 0.0
    %1691 = vmatprep.subr.mxu0 0.0
    %1692 = vmatpush1.msra.mxu0 0.0
    %1693 = vmatprep.mubr.f32.mxu0 0.0
    %1694 = vmatmul.mubr.f32.gmra.mrb[0].mxu0 %v1624
    %v1695 = vpop.f32.mrb[0].mxu0
    %v1696 = vadd.f32 0.0, %v1695
    %v1697 = vpop.f32.mrb[0].mxu0
    %1698 = vmatprep.mubr.f32.mxu0 0.0
    %1699 = vmatmul.mubr.f32.gmra.mrb[0].mxu0 %v1627
    %v1700 = vpop.f32.mrb[0].mxu0
    %v1701 = vadd.f32 0.0, %v1700
    %v1702 = vpop.f32.mrb[0].mxu0
    %1703 = vdwg.mxu0
    %v1704 = vadd.f32 %v1619, %v1696
    %v1705 = vadd.f32 %v1620, %v1701
    %1706 = vrot.lane.b32.xlu0 %v1621, 124
    %v1707 = vpop.permute.xlu0 %1706
    %1708 = vrot.lane.b32.xlu0 %v1622, 124
    %v1709 = vpop.permute.xlu0 %1708
    %v1710 = vsel %vm298, %v1707, 0
    %v1712 = vsel %vm298, %v1709, 0
    %1714 = vmatprep.subr.mxu0 0.0
    %1715 = vmatpush1.msra.mxu0 %v928
    %1716 = vmatprep.subr.mxu0 0.0
    %1717 = vmatpush1.msra.mxu0 %v929
    %1718 = vmatprep.subr.mxu0 0.0
    %1719 = vmatpush1.msra.mxu0 %v930
    %1720 = vmatprep.subr.mxu0 0.0
    %1721 = vmatpush1.msra.mxu0 %v931
    %1722 = vmatprep.subr.mxu0 0.0
    %1723 = vmatpush1.msra.mxu0 %v932
    %1724 = vmatprep.subr.mxu0 0.0
    %1725 = vmatpush1.msra.mxu0 %v933
    %1726 = vmatprep.subr.mxu0 0.0
    %1727 = vmatpush1.msra.mxu0 %v934
    %1728 = vmatprep.subr.mxu0 0.0
    %1729 = vmatpush1.msra.mxu0 %v935
    %1730 = vmatprep.subr.mxu0 0.0
    %1731 = vmatpush1.msra.mxu0 0.0
    %1732 = vmatprep.subr.mxu0 0.0
    %1733 = vmatpush1.msra.mxu0 0.0
    %1734 = vmatprep.subr.mxu0 0.0
    %1735 = vmatpush1.msra.mxu0 0.0
    %1736 = vmatprep.subr.mxu0 0.0
    %1737 = vmatpush1.msra.mxu0 0.0
    %1738 = vmatprep.subr.mxu0 0.0
    %1739 = vmatpush1.msra.mxu0 0.0
    %1740 = vmatprep.subr.mxu0 0.0
    %1741 = vmatpush1.msra.mxu0 0.0
    %1742 = vmatprep.subr.mxu0 0.0
    %1743 = vmatpush1.msra.mxu0 0.0
    %1744 = vmatprep.subr.mxu0 0.0
    %1745 = vmatpush1.msra.mxu0 0.0
    %1746 = vmatprep.subr.mxu0 0.0
    %1747 = vmatpush1.msra.mxu0 0.0
    %1748 = vmatprep.subr.mxu0 0.0
    %1749 = vmatpush1.msra.mxu0 0.0
    %1750 = vmatprep.subr.mxu0 0.0
    %1751 = vmatpush1.msra.mxu0 0.0
    %1752 = vmatprep.subr.mxu0 0.0
    %1753 = vmatpush1.msra.mxu0 0.0
    %1754 = vmatprep.subr.mxu0 0.0
    %1755 = vmatpush1.msra.mxu0 0.0
    %1756 = vmatprep.subr.mxu0 0.0
    %1757 = vmatpush1.msra.mxu0 0.0
    %1758 = vmatprep.subr.mxu0 0.0
    %1759 = vmatpush1.msra.mxu0 0.0
    %1760 = vmatprep.subr.mxu0 0.0
    %1761 = vmatpush1.msra.mxu0 0.0
    %1762 = vmatprep.subr.mxu0 0.0
    %1763 = vmatpush1.msra.mxu0 0.0
    %1764 = vmatprep.subr.mxu0 0.0
    %1765 = vmatpush1.msra.mxu0 0.0
    %1766 = vmatprep.subr.mxu0 0.0
    %1767 = vmatpush1.msra.mxu0 0.0
    %1768 = vmatprep.subr.mxu0 0.0
    %1769 = vmatpush1.msra.mxu0 0.0
    %1770 = vmatprep.subr.mxu0 0.0
    %1771 = vmatpush1.msra.mxu0 0.0
    %1772 = vmatprep.subr.mxu0 0.0
    %1773 = vmatpush1.msra.mxu0 0.0
    %1774 = vmatprep.subr.mxu0 0.0
    %1775 = vmatpush1.msra.mxu0 0.0
    %1776 = vmatprep.subr.mxu0 0.0
    %1777 = vmatpush1.msra.mxu0 0.0
    %1778 = vmatprep.mubr.f32.mxu0 0.0
    %1779 = vmatmul.mubr.f32.gmra.mrb[0].mxu0 %v1710
    %v1780 = vpop.f32.mrb[0].mxu0
    %v1781 = vadd.f32 0.0, %v1780
    %v1782 = vpop.f32.mrb[0].mxu0
    %1783 = vmatprep.mubr.f32.mxu0 0.0
    %1784 = vmatmul.mubr.f32.gmra.mrb[0].mxu0 %v1712
    %v1785 = vpop.f32.mrb[0].mxu0
    %v1786 = vadd.f32 0.0, %v1785
    %v1787 = vpop.f32.mrb[0].mxu0
    %1788 = vdwg.mxu0
    %v1789 = vadd.f32 %v1704, %v1781
    %v1790 = vadd.f32 %v1705, %v1786
    %1791 = vrot.lane.b32.xlu0 %v1621, 120
    %v1792 = vpop.permute.xlu0 %1791
    %1793 = vrot.lane.b32.xlu0 %v1622, 120
    %v1794 = vpop.permute.xlu0 %1793
    %v1795 = vsel %vm298, %v1792, 0
    %v1797 = vsel %vm298, %v1794, 0
    %1799 = vmatprep.subr.mxu0 0.0
    %1800 = vmatpush1.msra.mxu0 %v1022
    %1801 = vmatprep.subr.mxu0 0.0
    %1802 = vmatpush1.msra.mxu0 %v1023
    %1803 = vmatprep.subr.mxu0 0.0
    %1804 = vmatpush1.msra.mxu0 %v1024
    %1805 = vmatprep.subr.mxu0 0.0
    %1806 = vmatpush1.msra.mxu0 %v1025
    %1807 = vmatprep.subr.mxu0 0.0
    %1808 = vmatpush1.msra.mxu0 %v1026
    %1809 = vmatprep.subr.mxu0 0.0
    %1810 = vmatpush1.msra.mxu0 %v1027
    %1811 = vmatprep.subr.mxu0 0.0
    %1812 = vmatpush1.msra.mxu0 %v1028
    %1813 = vmatprep.subr.mxu0 0.0
    %1814 = vmatpush1.msra.mxu0 %v1029
    %1815 = vmatprep.subr.mxu0 0.0
    %1816 = vmatpush1.msra.mxu0 0.0
    %1817 = vmatprep.subr.mxu0 0.0
    %1818 = vmatpush1.msra.mxu0 0.0
    %1819 = vmatprep.subr.mxu0 0.0
    %1820 = vmatpush1.msra.mxu0 0.0
    %1821 = vmatprep.subr.mxu0 0.0
    %1822 = vmatpush1.msra.mxu0 0.0
    %1823 = vmatprep.subr.mxu0 0.0
    %1824 = vmatpush1.msra.mxu0 0.0
    %1825 = vmatprep.subr.mxu0 0.0
    %1826 = vmatpush1.msra.mxu0 0.0
    %1827 = vmatprep.subr.mxu0 0.0
    %1828 = vmatpush1.msra.mxu0 0.0
    %1829 = vmatprep.subr.mxu0 0.0
    %1830 = vmatpush1.msra.mxu0 0.0
    %1831 = vmatprep.subr.mxu0 0.0
    %1832 = vmatpush1.msra.mxu0 0.0
    %1833 = vmatprep.subr.mxu0 0.0
    %1834 = vmatpush1.msra.mxu0 0.0
    %1835 = vmatprep.subr.mxu0 0.0
    %1836 = vmatpush1.msra.mxu0 0.0
    %1837 = vmatprep.subr.mxu0 0.0
    %1838 = vmatpush1.msra.mxu0 0.0
    %1839 = vmatprep.subr.mxu0 0.0
    %1840 = vmatpush1.msra.mxu0 0.0
    %1841 = vmatprep.subr.mxu0 0.0
    %1842 = vmatpush1.msra.mxu0 0.0
    %1843 = vmatprep.subr.mxu0 0.0
    %1844 = vmatpush1.msra.mxu0 0.0
    %1845 = vmatprep.subr.mxu0 0.0
    %1846 = vmatpush1.msra.mxu0 0.0
    %1847 = vmatprep.subr.mxu0 0.0
    %1848 = vmatpush1.msra.mxu0 0.0
    %1849 = vmatprep.subr.mxu0 0.0
    %1850 = vmatpush1.msra.mxu0 0.0
    %1851 = vmatprep.subr.mxu0 0.0
    %1852 = vmatpush1.msra.mxu0 0.0
    %1853 = vmatprep.subr.mxu0 0.0
    %1854 = vmatpush1.msra.mxu0 0.0
    %1855 = vmatprep.subr.mxu0 0.0
    %1856 = vmatpush1.msra.mxu0 0.0
    %1857 = vmatprep.subr.mxu0 0.0
    %1858 = vmatpush1.msra.mxu0 0.0
    %1859 = vmatprep.subr.mxu0 0.0
    %1860 = vmatpush1.msra.mxu0 0.0
    %1861 = vmatprep.subr.mxu0 0.0
    %1862 = vmatpush1.msra.mxu0 0.0
    %1863 = vmatprep.mubr.f32.mxu0 0.0
    %1864 = vmatmul.mubr.f32.gmra.mrb[0].mxu0 %v1795
    %v1865 = vpop.f32.mrb[0].mxu0
    %v1866 = vadd.f32 0.0, %v1865
    %v1867 = vpop.f32.mrb[0].mxu0
    %1868 = vmatprep.mubr.f32.mxu0 0.0
    %1869 = vmatmul.mubr.f32.gmra.mrb[0].mxu0 %v1797
    %v1870 = vpop.f32.mrb[0].mxu0
    %v1871 = vadd.f32 0.0, %v1870
    %v1872 = vpop.f32.mrb[0].mxu0
    %1873 = vdwg.mxu0
    %v1874 = vadd.f32 %v1789, %v1866
    %v1875 = vadd.f32 %v1790, %v1871
    %v1876 = vadd.f32 %v1113, %v1114
    %v1877 = vrot.slane %v1876, 4
    %v1878 = vadd.f32 %v1876, %v1877
    %v1879 = vrot.slane %v1878, 2
    %v1880 = vadd.f32 %v1878, %v1879
    %v1881 = vrot.slane %v1880, 1
    %v1882 = vadd.f32 %v1880, %v1881
    %v1883 = vadd.f32 %v1882, 0.0
    %v1884 = vmul.f32 %v1113, %v1113
    %v1885 = vmul.f32 %v1114, %v1114
    %v1886 = vadd.f32 %v1884, %v1885
    %v1887 = vrot.slane %v1886, 4
    %v1888 = vadd.f32 %v1886, %v1887
    %v1889 = vrot.slane %v1888, 2
    %v1890 = vadd.f32 %v1888, %v1889
    %v1891 = vrot.slane %v1890, 1
    %v1892 = vadd.f32 %v1890, %v1891
    %v1893 = vadd.f32 %v1892, 0.0
    %v1894 = vadd.f32 %v1874, %v1875
    %v1895 = vrot.slane %v1894, 4
    %v1896 = vadd.f32 %v1894, %v1895
    %v1897 = vrot.slane %v1896, 2
    %v1898 = vadd.f32 %v1896, %v1897
    %v1899 = vrot.slane %v1898, 1
    %v1900 = vadd.f32 %v1898, %v1899
    %v1901 = vadd.f32 %v1883, %v1900
    %v1902 = vmul.f32 %v1874, %v1874
    %v1903 = vmul.f32 %v1875, %v1875
    %v1904 = vadd.f32 %v1902, %v1903
    %v1905 = vrot.slane %v1904, 4
    %v1906 = vadd.f32 %v1904, %v1905
    %v1907 = vrot.slane %v1906, 2
    %v1908 = vadd.f32 %v1906, %v1907
    %v1909 = vrot.slane %v1908, 1
    %v1910 = vadd.f32 %v1908, %v1909
    %v1911 = vadd.f32 %v1893, %v1910
    %v1912 = vld [vmem:[%s2] sm:$0xff]
    %v1913 = vld [vmem:[%s2 + $0x8] sm:$0xff]
    %v1914 = vld [vmem:[%s2 + $0x10] sm:$0xff]
    %v1915 = vld [vmem:[%s2 + $0x18] sm:$0xff]
    %v1916 = vld [vmem:[%s2 + $0x20] sm:$0xff]
    %v1917 = vld [vmem:[%s2 + $0x28] sm:$0xff]
    %v1918 = vld [vmem:[%s2 + $0x30] sm:$0xff]
    %v1919 = vld [vmem:[%s2 + $0x38] sm:$0xff]
    %v1920 = vld [vmem:[%s2 + $0x40] sm:$0xff]
    %v1921 = vld [vmem:[%s2 + $0x48] sm:$0xff]
    %v1922 = vld [vmem:[%s2 + $0x50] sm:$0xff]
    %v1923 = vld [vmem:[%s2 + $0x58] sm:$0xff]
    %v1924 = vld [vmem:[%s2 + $0x60] sm:$0xff]
    %v1925 = vld [vmem:[%s2 + $0x68] sm:$0xff]
    %v1926 = vld [vmem:[%s2 + $0x70] sm:$0xff]
    %v1927 = vld [vmem:[%s2 + $0x78] sm:$0xff]
    %1928 = vmatprep.subr.mxu0 0.0
    %1929 = vmatpush1.msra.mxu0 %v1912
    %1930 = vmatprep.subr.mxu0 0.0
    %1931 = vmatpush1.msra.mxu0 %v1913
    %1932 = vmatprep.subr.mxu0 0.0
    %1933 = vmatpush1.msra.mxu0 %v1914
    %1934 = vmatprep.subr.mxu0 0.0
    %1935 = vmatpush1.msra.mxu0 %v1915
    %1936 = vmatprep.subr.mxu0 0.0
    %1937 = vmatpush1.msra.mxu0 %v1916
    %1938 = vmatprep.subr.mxu0 0.0
    %1939 = vmatpush1.msra.mxu0 %v1917
    %1940 = vmatprep.subr.mxu0 0.0
    %1941 = vmatpush1.msra.mxu0 %v1918
    %1942 = vmatprep.subr.mxu0 0.0
    %1943 = vmatpush1.msra.mxu0 %v1919
    %1944 = vmatprep.subr.mxu0 0.0
    %1945 = vmatpush1.msra.mxu0 %v1920
    %1946 = vmatprep.subr.mxu0 0.0
    %1947 = vmatpush1.msra.mxu0 %v1921
    %1948 = vmatprep.subr.mxu0 0.0
    %1949 = vmatpush1.msra.mxu0 %v1922
    %1950 = vmatprep.subr.mxu0 0.0
    %1951 = vmatpush1.msra.mxu0 %v1923
    %1952 = vmatprep.subr.mxu0 0.0
    %1953 = vmatpush1.msra.mxu0 %v1924
    %1954 = vmatprep.subr.mxu0 0.0
    %1955 = vmatpush1.msra.mxu0 %v1925
    %1956 = vmatprep.subr.mxu0 0.0
    %1957 = vmatpush1.msra.mxu0 %v1926
    %1958 = vmatprep.subr.mxu0 0.0
    %1959 = vmatpush1.msra.mxu0 %v1927
    %1960 = vmatprep.subr.mxu0 0.0
    %1961 = vmatpush1.msra.mxu0 0.0
    %1962 = vmatprep.subr.mxu0 0.0
    %1963 = vmatpush1.msra.mxu0 0.0
    %1964 = vmatprep.subr.mxu0 0.0
    %1965 = vmatpush1.msra.mxu0 0.0
    %1966 = vmatprep.subr.mxu0 0.0
    %1967 = vmatpush1.msra.mxu0 0.0
    %1968 = vmatprep.subr.mxu0 0.0
    %1969 = vmatpush1.msra.mxu0 0.0
    %1970 = vmatprep.subr.mxu0 0.0
    %1971 = vmatpush1.msra.mxu0 0.0
    %1972 = vmatprep.subr.mxu0 0.0
    %1973 = vmatpush1.msra.mxu0 0.0
    %1974 = vmatprep.subr.mxu0 0.0
    %1975 = vmatpush1.msra.mxu0 0.0
    %1976 = vmatprep.subr.mxu0 0.0
    %1977 = vmatpush1.msra.mxu0 0.0
    %1978 = vmatprep.subr.mxu0 0.0
    %1979 = vmatpush1.msra.mxu0 0.0
    %1980 = vmatprep.subr.mxu0 0.0
    %1981 = vmatpush1.msra.mxu0 0.0
    %1982 = vmatprep.subr.mxu0 0.0
    %1983 = vmatpush1.msra.mxu0 0.0
    %1984 = vmatprep.subr.mxu0 0.0
    %1985 = vmatpush1.msra.mxu0 0.0
    %1986 = vmatprep.subr.mxu0 0.0
    %1987 = vmatpush1.msra.mxu0 0.0
    %1988 = vmatprep.subr.mxu0 0.0
    %1989 = vmatpush1.msra.mxu0 0.0
    %1990 = vmatprep.subr.mxu0 0.0
    %1991 = vmatpush1.msra.mxu0 0.0
    %1992 = vmatprep.mubr.f32.mxu0 0.0
    %1993 = vmatmul.mubr.f32.gmra.mrb[0].mxu0 %v1901
    %v1994 = vpop.f32.mrb[0].mxu0
    %v1995 = vadd.f32 0.0, %v1994
    %v1996 = vpop.f32.mrb[0].mxu0
    %1997 = vdwg.mxu0
    %1998 = vmatprep.subr.mxu0 0.0
    %1999 = vmatpush1.msra.mxu0 %v1912
    %2000 = vmatprep.subr.mxu0 0.0
    %2001 = vmatpush1.msra.mxu0 %v1913
    %2002 = vmatprep.subr.mxu0 0.0
    %2003 = vmatpush1.msra.mxu0 %v1914
    %2004 = vmatprep.subr.mxu0 0.0
    %2005 = vmatpush1.msra.mxu0 %v1915
    %2006 = vmatprep.subr.mxu0 0.0
    %2007 = vmatpush1.msra.mxu0 %v1916
    %2008 = vmatprep.subr.mxu0 0.0
    %2009 = vmatpush1.msra.mxu0 %v1917
    %2010 = vmatprep.subr.mxu0 0.0
    %2011 = vmatpush1.msra.mxu0 %v1918
    %2012 = vmatprep.subr.mxu0 0.0
    %2013 = vmatpush1.msra.mxu0 %v1919
    %2014 = vmatprep.subr.mxu0 0.0
    %2015 = vmatpush1.msra.mxu0 %v1920
    %2016 = vmatprep.subr.mxu0 0.0
    %2017 = vmatpush1.msra.mxu0 %v1921
    %2018 = vmatprep.subr.mxu0 0.0
    %2019 = vmatpush1.msra.mxu0 %v1922
    %2020 = vmatprep.subr.mxu0 0.0
    %2021 = vmatpush1.msra.mxu0 %v1923
    %2022 = vmatprep.subr.mxu0 0.0
    %2023 = vmatpush1.msra.mxu0 %v1924
    %2024 = vmatprep.subr.mxu0 0.0
    %2025 = vmatpush1.msra.mxu0 %v1925
    %2026 = vmatprep.subr.mxu0 0.0
    %2027 = vmatpush1.msra.mxu0 %v1926
    %2028 = vmatprep.subr.mxu0 0.0
    %2029 = vmatpush1.msra.mxu0 %v1927
    %2030 = vmatprep.subr.mxu0 0.0
    %2031 = vmatpush1.msra.mxu0 0.0
    %2032 = vmatprep.subr.mxu0 0.0
    %2033 = vmatpush1.msra.mxu0 0.0
    %2034 = vmatprep.subr.mxu0 0.0
    %2035 = vmatpush1.msra.mxu0 0.0
    %2036 = vmatprep.subr.mxu0 0.0
    %2037 = vmatpush1.msra.mxu0 0.0
    %2038 = vmatprep.subr.mxu0 0.0
    %2039 = vmatpush1.msra.mxu0 0.0
    %2040 = vmatprep.subr.mxu0 0.0
    %2041 = vmatpush1.msra.mxu0 0.0
    %2042 = vmatprep.subr.mxu0 0.0
    %2043 = vmatpush1.msra.mxu0 0.0
    %2044 = vmatprep.subr.mxu0 0.0
    %2045 = vmatpush1.msra.mxu0 0.0
    %2046 = vmatprep.subr.mxu0 0.0
    %2047 = vmatpush1.msra.mxu0 0.0
    %2048 = vmatprep.subr.mxu0 0.0
    %2049 = vmatpush1.msra.mxu0 0.0
    %2050 = vmatprep.subr.mxu0 0.0
    %2051 = vmatpush1.msra.mxu0 0.0
    %2052 = vmatprep.subr.mxu0 0.0
    %2053 = vmatpush1.msra.mxu0 0.0
    %2054 = vmatprep.subr.mxu0 0.0
    %2055 = vmatpush1.msra.mxu0 0.0
    %2056 = vmatprep.subr.mxu0 0.0
    %2057 = vmatpush1.msra.mxu0 0.0
    %2058 = vmatprep.subr.mxu0 0.0
    %2059 = vmatpush1.msra.mxu0 0.0
    %2060 = vmatprep.subr.mxu0 0.0
    %2061 = vmatpush1.msra.mxu0 0.0
    %2062 = vmatprep.mubr.f32.mxu0 0.0
    %2063 = vmatmul.mubr.f32.gmra.mrb[0].mxu0 %v1911
    %v2064 = vpop.f32.mrb[0].mxu0
    %v2065 = vadd.f32 0.0, %v2064
    %v2066 = vpop.f32.mrb[0].mxu0
    %2067 = vdwg.mxu0
    %v2068 = vrcp.pop 512.0
    %v2069 = vmul.f32 %v1995, %v2068
    %v2070 = vmul.f32 %v2065, %v2068
    %v2071 = vmul.f32 %v2069, %v2069
    %v2072 = vsub.f32 %v2070, %v2071
    %v2073 = vmax.f32 %v2072, 0.0
    %v2074 = vld [vmem:[%s4] sm:$0x1]
    %v2075 = vadd.f32 %v2073, 1e-05
    %v2076 = vrsqrt.pop %v2075
    %v2077 = vmul.f32 %v2074, %v2076
    %v2078 = vld [vmem:[%s5] sm:$0x1]
    %v2079 = vmul.f32 %v2069, %v2077
    %v2080 = vsub.f32 %v2078, %v2079
    %v2081 = vld [vmem:[#allocation4] sm:$0xff]
    %vm2082 = vcmask 64512
    %v2084 = vsel %vm2082, %v2077, 0
    %2086 = vmatprep.subr.mxu0 0.0
    %2087 = vmatpush1.msra.mxu0 %v2081
    %2088 = vmatprep.subr.mxu0 0.0
    %2089 = vmatpush1.msra.mxu0 0.0
    %2090 = vmatprep.subr.mxu0 0.0
    %2091 = vmatpush1.msra.mxu0 0.0
    %2092 = vmatprep.subr.mxu0 0.0
    %2093 = vmatpush1.msra.mxu0 0.0
    %2094 = vmatprep.subr.mxu0 0.0
    %2095 = vmatpush1.msra.mxu0 0.0
    %2096 = vmatprep.subr.mxu0 0.0
    %2097 = vmatpush1.msra.mxu0 0.0
    %2098 = vmatprep.subr.mxu0 0.0
    %2099 = vmatpush1.msra.mxu0 0.0
    %2100 = vmatprep.subr.mxu0 0.0
    %2101 = vmatpush1.msra.mxu0 0.0
    %2102 = vmatprep.subr.mxu0 0.0
    %2103 = vmatpush1.msra.mxu0 0.0
    %2104 = vmatprep.subr.mxu0 0.0
    %2105 = vmatpush1.msra.mxu0 0.0
    %2106 = vmatprep.subr.mxu0 0.0
    %2107 = vmatpush1.msra.mxu0 0.0
    %2108 = vmatprep.subr.mxu0 0.0
    %2109 = vmatpush1.msra.mxu0 0.0
    %2110 = vmatprep.subr.mxu0 0.0
    %2111 = vmatpush1.msra.mxu0 0.0
    %2112 = vmatprep.subr.mxu0 0.0
    %2113 = vmatpush1.msra.mxu0 0.0
    %2114 = vmatprep.subr.mxu0 0.0
    %2115 = vmatpush1.msra.mxu0 0.0
    %2116 = vmatprep.subr.mxu0 0.0
    %2117 = vmatpush1.msra.mxu0 0.0
    %2118 = vmatprep.subr.mxu0 0.0
    %2119 = vmatpush1.msra.mxu0 0.0
    %2120 = vmatprep.subr.mxu0 0.0
    %2121 = vmatpush1.msra.mxu0 0.0
    %2122 = vmatprep.subr.mxu0 0.0
    %2123 = vmatpush1.msra.mxu0 0.0
    %2124 = vmatprep.subr.mxu0 0.0
    %2125 = vmatpush1.msra.mxu0 0.0
    %2126 = vmatprep.subr.mxu0 0.0
    %2127 = vmatpush1.msra.mxu0 0.0
    %2128 = vmatprep.subr.mxu0 0.0
    %2129 = vmatpush1.msra.mxu0 0.0
    %2130 = vmatprep.subr.mxu0 0.0
    %2131 = vmatpush1.msra.mxu0 0.0
    %2132 = vmatprep.subr.mxu0 0.0
    %2133 = vmatpush1.msra.mxu0 0.0
    %2134 = vmatprep.subr.mxu0 0.0
    %2135 = vmatpush1.msra.mxu0 0.0
    %2136 = vmatprep.subr.mxu0 0.0
    %2137 = vmatpush1.msra.mxu0 0.0
    %2138 = vmatprep.subr.mxu0 0.0
    %2139 = vmatpush1.msra.mxu0 0.0
    %2140 = vmatprep.subr.mxu0 0.0
    %2141 = vmatpush1.msra.mxu0 0.0
    %2142 = vmatprep.subr.mxu0 0.0
    %2143 = vmatpush1.msra.mxu0 0.0
    %2144 = vmatprep.subr.mxu0 0.0
    %2145 = vmatpush1.msra.mxu0 0.0
    %2146 = vmatprep.subr.mxu0 0.0
    %2147 = vmatpush1.msra.mxu0 0.0
    %2148 = vmatprep.subr.mxu0 0.0
    %2149 = vmatpush1.msra.mxu0 0.0
    %2150 = vmatprep.mubr.f32.mxu0 0.0
    %2151 = vmatmul.mubr.f32.gmra.mrb[0].mxu0 %v2084
    %v2152 = vpop.f32.mrb[0].mxu0
    %v2153 = vadd.f32 0.0, %v2152
    %v2154 = vpop.f32.mrb[0].mxu0
    %2155 = vdwg.mxu0
    %v2157 = vsel %vm2082, %v2080, 0
    %2159 = vmatprep.subr.mxu0 0.0
    %2160 = vmatpush1.msra.mxu0 %v2081
    %2161 = vmatprep.subr.mxu0 0.0
    %2162 = vmatpush1.msra.mxu0 0.0
    %2163 = vmatprep.subr.mxu0 0.0
    %2164 = vmatpush1.msra.mxu0 0.0
    %2165 = vmatprep.subr.mxu0 0.0
    %2166 = vmatpush1.msra.mxu0 0.0
    %2167 = vmatprep.subr.mxu0 0.0
    %2168 = vmatpush1.msra.mxu0 0.0
    %2169 = vmatprep.subr.mxu0 0.0
    %2170 = vmatpush1.msra.mxu0 0.0
    %2171 = vmatprep.subr.mxu0 0.0
    %2172 = vmatpush1.msra.mxu0 0.0
    %2173 = vmatprep.subr.mxu0 0.0
    %2174 = vmatpush1.msra.mxu0 0.0
    %2175 = vmatprep.subr.mxu0 0.0
    %2176 = vmatpush1.msra.mxu0 0.0
    %2177 = vmatprep.subr.mxu0 0.0
    %2178 = vmatpush1.msra.mxu0 0.0
    %2179 = vmatprep.subr.mxu0 0.0
    %2180 = vmatpush1.msra.mxu0 0.0
    %2181 = vmatprep.subr.mxu0 0.0
    %2182 = vmatpush1.msra.mxu0 0.0
    %2183 = vmatprep.subr.mxu0 0.0
    %2184 = vmatpush1.msra.mxu0 0.0
    %2185 = vmatprep.subr.mxu0 0.0
    %2186 = vmatpush1.msra.mxu0 0.0
    %2187 = vmatprep.subr.mxu0 0.0
    %2188 = vmatpush1.msra.mxu0 0.0
    %2189 = vmatprep.subr.mxu0 0.0
    %2190 = vmatpush1.msra.mxu0 0.0
    %2191 = vmatprep.subr.mxu0 0.0
    %2192 = vmatpush1.msra.mxu0 0.0
    %2193 = vmatprep.subr.mxu0 0.0
    %2194 = vmatpush1.msra.mxu0 0.0
    %2195 = vmatprep.subr.mxu0 0.0
    %2196 = vmatpush1.msra.mxu0 0.0
    %2197 = vmatprep.subr.mxu0 0.0
    %2198 = vmatpush1.msra.mxu0 0.0
    %2199 = vmatprep.subr.mxu0 0.0
    %2200 = vmatpush1.msra.mxu0 0.0
    %2201 = vmatprep.subr.mxu0 0.0
    %2202 = vmatpush1.msra.mxu0 0.0
    %2203 = vmatprep.subr.mxu0 0.0
    %2204 = vmatpush1.msra.mxu0 0.0
    %2205 = vmatprep.subr.mxu0 0.0
    %2206 = vmatpush1.msra.mxu0 0.0
    %2207 = vmatprep.subr.mxu0 0.0
    %2208 = vmatpush1.msra.mxu0 0.0
    %2209 = vmatprep.subr.mxu0 0.0
    %2210 = vmatpush1.msra.mxu0 0.0
    %2211 = vmatprep.subr.mxu0 0.0
    %2212 = vmatpush1.msra.mxu0 0.0
    %2213 = vmatprep.subr.mxu0 0.0
    %2214 = vmatpush1.msra.mxu0 0.0
    %2215 = vmatprep.subr.mxu0 0.0
    %2216 = vmatpush1.msra.mxu0 0.0
    %2217 = vmatprep.subr.mxu0 0.0
    %2218 = vmatpush1.msra.mxu0 0.0
    %2219 = vmatprep.subr.mxu0 0.0
    %2220 = vmatpush1.msra.mxu0 0.0
    %2221 = vmatprep.subr.mxu0 0.0
    %2222 = vmatpush1.msra.mxu0 0.0
    %2223 = vmatprep.mubr.f32.mxu0 0.0
    %2224 = vmatmul.mubr.f32.gmra.mrb[0].mxu0 %v2157
    %v2225 = vpop.f32.mrb[0].mxu0
    %v2226 = vadd.f32 0.0, %v2225
    %v2227 = vpop.f32.mrb[0].mxu0
    %2228 = vdwg.mxu0
    %vm2229 = vcmask 654336
    %2230 = vst.msk [vmem:[#allocation3] sm:$0xff] %vm2229, 0.0
    %vm2231 = vcmask 648192
    %2232 = vst.msk [vmem:[#allocation3 + $0x8] sm:$0x3] %vm2231, 0.0
    %2233 = vst.msk [vmem:[#allocation3 + $0x10] sm:$0xff] %vm2229, 0.0
    %2234 = vst.msk [vmem:[#allocation3 + $0x18] sm:$0x3] %vm2231, 0.0
    %v2235 = vlaneseq
    %v2236 = vshrl.u32 %v2235, 7
    %v2237 = vsub.s32 0, %v2236
    %v2238 = vrot.slane %v2153, %v2237
    %v2239 = vmul.f32 %v1113, %v2238
    %v2240 = vmul.f32 %v1114, %v2238
    %v2241 = vlaneseq
    %v2242 = vshrl.u32 %v2241, 7
    %v2243 = vsub.s32 0, %v2242
    %v2244 = vrot.slane %v2226, %v2243
    %v2245 = vadd.f32 %v2239, %v2244
    %v2246 = vadd.f32 %v2240, %v2244
    %v2247 = vmax.f32 %v2245, 0.0
    %v2248 = vmax.f32 %v2246, 0.0
    %v2249 = vld [vmem:[#allocation7] sm:$0xff]
    %vm2250 = vcmask 130048
    %v2252 = vsel %vm2250, %v2249, 0
    %2254 = vmatprep.subr.mxu0 0.0
    %2255 = vmatpush1.msra.mxu0 %v2247
    %2256 = vmatprep.subr.mxu0 0.0
    %2257 = vmatpush1.msra.mxu0 %v2248
    %2258 = vmatprep.subr.mxu0 0.0
    %2259 = vmatpush1.msra.mxu0 0.0
    %2260 = vmatprep.subr.mxu0 0.0
    %2261 = vmatpush1.msra.mxu0 0.0
    %2262 = vmatprep.subr.mxu0 0.0
    %2263 = vmatpush1.msra.mxu0 0.0
    %2264 = vmatprep.subr.mxu0 0.0
    %2265 = vmatpush1.msra.mxu0 0.0
    %2266 = vmatprep.subr.mxu0 0.0
    %2267 = vmatpush1.msra.mxu0 0.0
    %2268 = vmatprep.subr.mxu0 0.0
    %2269 = vmatpush1.msra.mxu0 0.0
    %2270 = vmatprep.subr.mxu0 0.0
    %2271 = vmatpush1.msra.mxu0 0.0
    %2272 = vmatprep.subr.mxu0 0.0
    %2273 = vmatpush1.msra.mxu0 0.0
    %2274 = vmatprep.subr.mxu0 0.0
    %2275 = vmatpush1.msra.mxu0 0.0
    %2276 = vmatprep.subr.mxu0 0.0
    %2277 = vmatpush1.msra.mxu0 0.0
    %2278 = vmatprep.subr.mxu0 0.0
    %2279 = vmatpush1.msra.mxu0 0.0
    %2280 = vmatprep.subr.mxu0 0.0
    %2281 = vmatpush1.msra.mxu0 0.0
    %2282 = vmatprep.subr.mxu0 0.0
    %2283 = vmatpush1.msra.mxu0 0.0
    %2284 = vmatprep.subr.mxu0 0.0
    %2285 = vmatpush1.msra.mxu0 0.0
    %2286 = vmatprep.subr.mxu0 0.0
    %2287 = vmatpush1.msra.mxu0 0.0
    %2288 = vmatprep.subr.mxu0 0.0
    %2289 = vmatpush1.msra.mxu0 0.0
    %2290 = vmatprep.subr.mxu0 0.0
    %2291 = vmatpush1.msra.mxu0 0.0
    %2292 = vmatprep.subr.mxu0 0.0
    %2293 = vmatpush1.msra.mxu0 0.0
    %2294 = vmatprep.subr.mxu0 0.0
    %2295 = vmatpush1.msra.mxu0 0.0
    %2296 = vmatprep.subr.mxu0 0.0
    %2297 = vmatpush1.msra.mxu0 0.0
    %2298 = vmatprep.subr.mxu0 0.0
    %2299 = vmatpush1.msra.mxu0 0.0
    %2300 = vmatprep.subr.mxu0 0.0
    %2301 = vmatpush1.msra.mxu0 0.0
    %2302 = vmatprep.subr.mxu0 0.0
    %2303 = vmatpush1.msra.mxu0 0.0
    %2304 = vmatprep.subr.mxu0 0.0
    %2305 = vmatpush1.msra.mxu0 0.0
    %2306 = vmatprep.subr.mxu0 0.0
    %2307 = vmatpush1.msra.mxu0 0.0
    %2308 = vmatprep.subr.mxu0 0.0
    %2309 = vmatpush1.msra.mxu0 0.0
    %2310 = vmatprep.subr.mxu0 0.0
    %2311 = vmatpush1.msra.mxu0 0.0
    %2312 = vmatprep.subr.mxu0 0.0
    %2313 = vmatpush1.msra.mxu0 0.0
    %2314 = vmatprep.subr.mxu0 0.0
    %2315 = vmatpush1.msra.mxu0 0.0
    %2316 = vmatprep.subr.mxu0 0.0
    %2317 = vmatpush1.msra.mxu0 0.0
    %2318 = vmatprep.mubr.f32.mxu0 0.0
    %2319 = vmatmul.mubr.f32.gmra.mrb[0].mxu0 %v2252
    %v2320 = vpop.f32.mrb[0].mxu0
    %v2321 = vadd.f32 0.0, %v2320
    %v2322 = vpop.f32.mrb[0].mxu0
    %2323 = vdwg.mxu0
    %s2324 = scalar_lea.vmem [#allocation7], 8
    %v2325 = vld [vmem:[%s2324] sm:$0xff]
    %v2327 = vsel %vm2250, %v2325, 0
    %2329 = vmatprep.subr.mxu0 0.0
    %2330 = vmatpush1.msra.mxu0 %v2247
    %2331 = vmatprep.subr.mxu0 0.0
    %2332 = vmatpush1.msra.mxu0 %v2248
    %2333 = vmatprep.subr.mxu0 0.0
    %2334 = vmatpush1.msra.mxu0 0.0
    %2335 = vmatprep.subr.mxu0 0.0
    %2336 = vmatpush1.msra.mxu0 0.0
    %2337 = vmatprep.subr.mxu0 0.0
    %2338 = vmatpush1.msra.mxu0 0.0
    %2339 = vmatprep.subr.mxu0 0.0
    %2340 = vmatpush1.msra.mxu0 0.0
    %2341 = vmatprep.subr.mxu0 0.0
    %2342 = vmatpush1.msra.mxu0 0.0
    %2343 = vmatprep.subr.mxu0 0.0
    %2344 = vmatpush1.msra.mxu0 0.0
    %2345 = vmatprep.subr.mxu0 0.0
    %2346 = vmatpush1.msra.mxu0 0.0
    %2347 = vmatprep.subr.mxu0 0.0
    %2348 = vmatpush1.msra.mxu0 0.0
    %2349 = vmatprep.subr.mxu0 0.0
    %2350 = vmatpush1.msra.mxu0 0.0
    %2351 = vmatprep.subr.mxu0 0.0
    %2352 = vmatpush1.msra.mxu0 0.0
    %2353 = vmatprep.subr.mxu0 0.0
    %2354 = vmatpush1.msra.mxu0 0.0
    %2355 = vmatprep.subr.mxu0 0.0
    %2356 = vmatpush1.msra.mxu0 0.0
    %2357 = vmatprep.subr.mxu0 0.0
    %2358 = vmatpush1.msra.mxu0 0.0
    %2359 = vmatprep.subr.mxu0 0.0
    %2360 = vmatpush1.msra.mxu0 0.0
    %2361 = vmatprep.subr.mxu0 0.0
    %2362 = vmatpush1.msra.mxu0 0.0
    %2363 = vmatprep.subr.mxu0 0.0
    %2364 = vmatpush1.msra.mxu0 0.0
    %2365 = vmatprep.subr.mxu0 0.0
    %2366 = vmatpush1.msra.mxu0 0.0
    %2367 = vmatprep.subr.mxu0 0.0
    %2368 = vmatpush1.msra.mxu0 0.0
    %2369 = vmatprep.subr.mxu0 0.0
    %2370 = vmatpush1.msra.mxu0 0.0
    %2371 = vmatprep.subr.mxu0 0.0
    %2372 = vmatpush1.msra.mxu0 0.0
    %2373 = vmatprep.subr.mxu0 0.0
    %2374 = vmatpush1.msra.mxu0 0.0
    %2375 = vmatprep.subr.mxu0 0.0
    %2376 = vmatpush1.msra.mxu0 0.0
    %2377 = vmatprep.subr.mxu0 0.0
    %2378 = vmatpush1.msra.mxu0 0.0
    %2379 = vmatprep.subr.mxu0 0.0
    %2380 = vmatpush1.msra.mxu0 0.0
    %2381 = vmatprep.subr.mxu0 0.0
    %2382 = vmatpush1.msra.mxu0 0.0
    %2383 = vmatprep.subr.mxu0 0.0
    %2384 = vmatpush1.msra.mxu0 0.0
    %2385 = vmatprep.subr.mxu0 0.0
    %2386 = vmatpush1.msra.mxu0 0.0
    %2387 = vmatprep.subr.mxu0 0.0
    %2388 = vmatpush1.msra.mxu0 0.0
    %2389 = vmatprep.subr.mxu0 0.0
    %2390 = vmatpush1.msra.mxu0 0.0
    %2391 = vmatprep.subr.mxu0 0.0
    %2392 = vmatpush1.msra.mxu0 0.0
    %2393 = vmatprep.mubr.f32.mxu0 0.0
    %2394 = vmatmul.mubr.f32.gmra.mrb[0].mxu0 %v2327
    %v2395 = vpop.f32.mrb[0].mxu0
    %v2396 = vadd.f32 0.0, %v2395
    %v2397 = vpop.f32.mrb[0].mxu0
    %2398 = vdwg.mxu0
    %v2399 = vmax.f32 %v2321, %v2396
    %v2400 = vld [vmem:[%s7] sm:$0xff]
    %v2401 = vld [vmem:[%s7 + $0x8] sm:$0xff]
    %v2402 = vld [vmem:[%s7 + $0x10] sm:$0xff]
    %v2403 = vld [vmem:[%s7 + $0x18] sm:$0xff]
    %v2404 = vld [vmem:[%s7 + $0x20] sm:$0xff]
    %v2405 = vld [vmem:[%s7 + $0x28] sm:$0xff]
    %v2406 = vld [vmem:[%s7 + $0x30] sm:$0xff]
    %v2407 = vld [vmem:[%s7 + $0x38] sm:$0xff]
    %v2408 = vld [vmem:[%s7 + $0x40] sm:$0xff]
    %v2409 = vld [vmem:[%s7 + $0x48] sm:$0xff]
    %v2410 = vld [vmem:[%s7 + $0x50] sm:$0xff]
    %v2411 = vld [vmem:[%s7 + $0x58] sm:$0xff]
    %v2412 = vld [vmem:[%s7 + $0x60] sm:$0xff]
    %v2413 = vld [vmem:[%s7 + $0x68] sm:$0xff]
    %v2414 = vld [vmem:[%s7 + $0x70] sm:$0xff]
    %v2415 = vld [vmem:[%s7 + $0x78] sm:$0xff]
    %2416 = vmatprep.subr.mxu0 0.0
    %2417 = vmatpush1.msra.mxu0 %v2400
    %2418 = vmatprep.subr.mxu0 0.0
    %2419 = vmatpush1.msra.mxu0 %v2401
    %2420 = vmatprep.subr.mxu0 0.0
    %2421 = vmatpush1.msra.mxu0 %v2402
    %2422 = vmatprep.subr.mxu0 0.0
    %2423 = vmatpush1.msra.mxu0 %v2403
    %2424 = vmatprep.subr.mxu0 0.0
    %2425 = vmatpush1.msra.mxu0 %v2404
    %2426 = vmatprep.subr.mxu0 0.0
    %2427 = vmatpush1.msra.mxu0 %v2405
    %2428 = vmatprep.subr.mxu0 0.0
    %2429 = vmatpush1.msra.mxu0 %v2406
    %2430 = vmatprep.subr.mxu0 0.0
    %2431 = vmatpush1.msra.mxu0 %v2407
    %2432 = vmatprep.subr.mxu0 0.0
    %2433 = vmatpush1.msra.mxu0 %v2408
    %2434 = vmatprep.subr.mxu0 0.0
    %2435 = vmatpush1.msra.mxu0 %v2409
    %2436 = vmatprep.subr.mxu0 0.0
    %2437 = vmatpush1.msra.mxu0 %v2410
    %2438 = vmatprep.subr.mxu0 0.0
    %2439 = vmatpush1.msra.mxu0 %v2411
    %2440 = vmatprep.subr.mxu0 0.0
    %2441 = vmatpush1.msra.mxu0 %v2412
    %2442 = vmatprep.subr.mxu0 0.0
    %2443 = vmatpush1.msra.mxu0 %v2413
    %2444 = vmatprep.subr.mxu0 0.0
    %2445 = vmatpush1.msra.mxu0 %v2414
    %2446 = vmatprep.subr.mxu0 0.0
    %2447 = vmatpush1.msra.mxu0 %v2415
    %2448 = vmatprep.subr.mxu0 0.0
    %2449 = vmatpush1.msra.mxu0 0.0
    %2450 = vmatprep.subr.mxu0 0.0
    %2451 = vmatpush1.msra.mxu0 0.0
    %2452 = vmatprep.subr.mxu0 0.0
    %2453 = vmatpush1.msra.mxu0 0.0
    %2454 = vmatprep.subr.mxu0 0.0
    %2455 = vmatpush1.msra.mxu0 0.0
    %2456 = vmatprep.subr.mxu0 0.0
    %2457 = vmatpush1.msra.mxu0 0.0
    %2458 = vmatprep.subr.mxu0 0.0
    %2459 = vmatpush1.msra.mxu0 0.0
    %2460 = vmatprep.subr.mxu0 0.0
    %2461 = vmatpush1.msra.mxu0 0.0
    %2462 = vmatprep.subr.mxu0 0.0
    %2463 = vmatpush1.msra.mxu0 0.0
    %2464 = vmatprep.subr.mxu0 0.0
    %2465 = vmatpush1.msra.mxu0 0.0
    %2466 = vmatprep.subr.mxu0 0.0
    %2467 = vmatpush1.msra.mxu0 0.0
    %2468 = vmatprep.subr.mxu0 0.0
    %2469 = vmatpush1.msra.mxu0 0.0
    %2470 = vmatprep.subr.mxu0 0.0
    %2471 = vmatpush1.msra.mxu0 0.0
    %2472 = vmatprep.subr.mxu0 0.0
    %2473 = vmatpush1.msra.mxu0 0.0
    %2474 = vmatprep.subr.mxu0 0.0
    %2475 = vmatpush1.msra.mxu0 0.0
    %2476 = vmatprep.subr.mxu0 0.0
    %2477 = vmatpush1.msra.mxu0 0.0
    %2478 = vmatprep.subr.mxu0 0.0
    %2479 = vmatpush1.msra.mxu0 0.0
    %2480 = vmatprep.mubr.f32.mxu0 0.0
    %2481 = vmatmul.mubr.f32.gmra.mrb[0].mxu0 %v2399
    %v2482 = vpop.f32.mrb[0].mxu0
    %v2483 = vadd.f32 0.0, %v2482
    %v2484 = vpop.f32.mrb[0].mxu0
    %2485 = vdwg.mxu0
    %s2486 = scalar_lea.vmem %s7, 128
    %v2487 = vld [vmem:[%s2486] sm:$0xff]
    %v2488 = vld [vmem:[%s2486 + $0x8] sm:$0xff]
    %v2489 = vld [vmem:[%s2486 + $0x10] sm:$0xff]
    %v2490 = vld [vmem:[%s2486 + $0x18] sm:$0xff]
    %v2491 = vld [vmem:[%s2486 + $0x20] sm:$0xff]
    %v2492 = vld [vmem:[%s2486 + $0x28] sm:$0xff]
    %v2493 = vld [vmem:[%s2486 + $0x30] sm:$0xff]
    %v2494 = vld [vmem:[%s2486 + $0x38] sm:$0xff]
    %v2495 = vld [vmem:[%s2486 + $0x40] sm:$0xff]
    %v2496 = vld [vmem:[%s2486 + $0x48] sm:$0xff]
    %v2497 = vld [vmem:[%s2486 + $0x50] sm:$0xff]
    %v2498 = vld [vmem:[%s2486 + $0x58] sm:$0xff]
    %v2499 = vld [vmem:[%s2486 + $0x60] sm:$0xff]
    %v2500 = vld [vmem:[%s2486 + $0x68] sm:$0xff]
    %v2501 = vld [vmem:[%s2486 + $0x70] sm:$0xff]
    %v2502 = vld [vmem:[%s2486 + $0x78] sm:$0xff]
    %2503 = vmatprep.subr.mxu0 0.0
    %2504 = vmatpush1.msra.mxu0 %v2487
    %2505 = vmatprep.subr.mxu0 0.0
    %2506 = vmatpush1.msra.mxu0 %v2488
    %2507 = vmatprep.subr.mxu0 0.0
    %2508 = vmatpush1.msra.mxu0 %v2489
    %2509 = vmatprep.subr.mxu0 0.0
    %2510 = vmatpush1.msra.mxu0 %v2490
    %2511 = vmatprep.subr.mxu0 0.0
    %2512 = vmatpush1.msra.mxu0 %v2491
    %2513 = vmatprep.subr.mxu0 0.0
    %2514 = vmatpush1.msra.mxu0 %v2492
    %2515 = vmatprep.subr.mxu0 0.0
    %2516 = vmatpush1.msra.mxu0 %v2493
    %2517 = vmatprep.subr.mxu0 0.0
    %2518 = vmatpush1.msra.mxu0 %v2494
    %2519 = vmatprep.subr.mxu0 0.0
    %2520 = vmatpush1.msra.mxu0 %v2495
    %2521 = vmatprep.subr.mxu0 0.0
    %2522 = vmatpush1.msra.mxu0 %v2496
    %2523 = vmatprep.subr.mxu0 0.0
    %2524 = vmatpush1.msra.mxu0 %v2497
    %2525 = vmatprep.subr.mxu0 0.0
    %2526 = vmatpush1.msra.mxu0 %v2498
    %2527 = vmatprep.subr.mxu0 0.0
    %2528 = vmatpush1.msra.mxu0 %v2499
    %2529 = vmatprep.subr.mxu0 0.0
    %2530 = vmatpush1.msra.mxu0 %v2500
    %2531 = vmatprep.subr.mxu0 0.0
    %2532 = vmatpush1.msra.mxu0 %v2501
    %2533 = vmatprep.subr.mxu0 0.0
    %2534 = vmatpush1.msra.mxu0 %v2502
    %2535 = vmatprep.subr.mxu0 0.0
    %2536 = vmatpush1.msra.mxu0 0.0
    %2537 = vmatprep.subr.mxu0 0.0
    %2538 = vmatpush1.msra.mxu0 0.0
    %2539 = vmatprep.subr.mxu0 0.0
    %2540 = vmatpush1.msra.mxu0 0.0
    %2541 = vmatprep.subr.mxu0 0.0
    %2542 = vmatpush1.msra.mxu0 0.0
    %2543 = vmatprep.subr.mxu0 0.0
    %2544 = vmatpush1.msra.mxu0 0.0
    %2545 = vmatprep.subr.mxu0 0.0
    %2546 = vmatpush1.msra.mxu0 0.0
    %2547 = vmatprep.subr.mxu0 0.0
    %2548 = vmatpush1.msra.mxu0 0.0
    %2549 = vmatprep.subr.mxu0 0.0
    %2550 = vmatpush1.msra.mxu0 0.0
    %2551 = vmatprep.subr.mxu0 0.0
    %2552 = vmatpush1.msra.mxu0 0.0
    %2553 = vmatprep.subr.mxu0 0.0
    %2554 = vmatpush1.msra.mxu0 0.0
    %2555 = vmatprep.subr.mxu0 0.0
    %2556 = vmatpush1.msra.mxu0 0.0
    %2557 = vmatprep.subr.mxu0 0.0
    %2558 = vmatpush1.msra.mxu0 0.0
    %2559 = vmatprep.subr.mxu0 0.0
    %2560 = vmatpush1.msra.mxu0 0.0
    %2561 = vmatprep.subr.mxu0 0.0
    %2562 = vmatpush1.msra.mxu0 0.0
    %2563 = vmatprep.subr.mxu0 0.0
    %2564 = vmatpush1.msra.mxu0 0.0
    %2565 = vmatprep.subr.mxu0 0.0
    %2566 = vmatpush1.msra.mxu0 0.0
    %2567 = vmatprep.mubr.f32.mxu0 0.0
    %2568 = vmatmul.mubr.f32.gmra.mrb[0].mxu0 %v2399
    %v2569 = vpop.f32.mrb[0].mxu0
    %v2570 = vadd.f32 0.0, %v2569
    %v2571 = vpop.f32.mrb[0].mxu0
    %2572 = vdwg.mxu0
    %v2573 = vmax.f32 %v2483, %v2570
    %2575 = vrot.lane.b32.xlu0 %v2573, 8
    %v2576 = vpop.permute.xlu0 %2575
    %vm2578 = vcmask 588864
    %2579 = vst.msk [vmem:[#allocation3 + $0x1] sm:$0xff] %vm2578, %v2576
    %v2580 = vmul.f32 %v1874, %v2238
    %v2581 = vmul.f32 %v1875, %v2238
    %v2582 = vadd.f32 %v2580, %v2244
    %v2583 = vadd.f32 %v2581, %v2244
    %v2584 = vmax.f32 %v2582, 0.0
    %v2585 = vmax.f32 %v2583, 0.0
    %v2586 = vld [vmem:[#allocation7] sm:$0xff]
    %v2588 = vsel %vm2250, %v2586, 0
    %2590 = vmatprep.subr.mxu0 0.0
    %2591 = vmatpush1.msra.mxu0 %v2584
    %2592 = vmatprep.subr.mxu0 0.0
    %2593 = vmatpush1.msra.mxu0 %v2585
    %2594 = vmatprep.subr.mxu0 0.0
    %2595 = vmatpush1.msra.mxu0 0.0
    %2596 = vmatprep.subr.mxu0 0.0
    %2597 = vmatpush1.msra.mxu0 0.0
    %2598 = vmatprep.subr.mxu0 0.0
    %2599 = vmatpush1.msra.mxu0 0.0
    %2600 = vmatprep.subr.mxu0 0.0
    %2601 = vmatpush1.msra.mxu0 0.0
    %2602 = vmatprep.subr.mxu0 0.0
    %2603 = vmatpush1.msra.mxu0 0.0
    %2604 = vmatprep.subr.mxu0 0.0
    %2605 = vmatpush1.msra.mxu0 0.0
    %2606 = vmatprep.subr.mxu0 0.0
    %2607 = vmatpush1.msra.mxu0 0.0
    %2608 = vmatprep.subr.mxu0 0.0
    %2609 = vmatpush1.msra.mxu0 0.0
    %2610 = vmatprep.subr.mxu0 0.0
    %2611 = vmatpush1.msra.mxu0 0.0
    %2612 = vmatprep.subr.mxu0 0.0
    %2613 = vmatpush1.msra.mxu0 0.0
    %2614 = vmatprep.subr.mxu0 0.0
    %2615 = vmatpush1.msra.mxu0 0.0
    %2616 = vmatprep.subr.mxu0 0.0
    %2617 = vmatpush1.msra.mxu0 0.0
    %2618 = vmatprep.subr.mxu0 0.0
    %2619 = vmatpush1.msra.mxu0 0.0
    %2620 = vmatprep.subr.mxu0 0.0
    %2621 = vmatpush1.msra.mxu0 0.0
    %2622 = vmatprep.subr.mxu0 0.0
    %2623 = vmatpush1.msra.mxu0 0.0
    %2624 = vmatprep.subr.mxu0 0.0
    %2625 = vmatpush1.msra.mxu0 0.0
    %2626 = vmatprep.subr.mxu0 0.0
    %2627 = vmatpush1.msra.mxu0 0.0
    %2628 = vmatprep.subr.mxu0 0.0
    %2629 = vmatpush1.msra.mxu0 0.0
    %2630 = vmatprep.subr.mxu0 0.0
    %2631 = vmatpush1.msra.mxu0 0.0
    %2632 = vmatprep.subr.mxu0 0.0
    %2633 = vmatpush1.msra.mxu0 0.0
    %2634 = vmatprep.subr.mxu0 0.0
    %2635 = vmatpush1.msra.mxu0 0.0
    %2636 = vmatprep.subr.mxu0 0.0
    %2637 = vmatpush1.msra.mxu0 0.0
    %2638 = vmatprep.subr.mxu0 0.0
    %2639 = vmatpush1.msra.mxu0 0.0
    %2640 = vmatprep.subr.mxu0 0.0
    %2641 = vmatpush1.msra.mxu0 0.0
    %2642 = vmatprep.subr.mxu0 0.0
    %2643 = vmatpush1.msra.mxu0 0.0
    %2644 = vmatprep.subr.mxu0 0.0
    %2645 = vmatpush1.msra.mxu0 0.0
    %2646 = vmatprep.subr.mxu0 0.0
    %2647 = vmatpush1.msra.mxu0 0.0
    %2648 = vmatprep.subr.mxu0 0.0
    %2649 = vmatpush1.msra.mxu0 0.0
    %2650 = vmatprep.subr.mxu0 0.0
    %2651 = vmatpush1.msra.mxu0 0.0
    %2652 = vmatprep.subr.mxu0 0.0
    %2653 = vmatpush1.msra.mxu0 0.0
    %2654 = vmatprep.mubr.f32.mxu0 0.0
    %2655 = vmatmul.mubr.f32.gmra.mrb[0].mxu0 %v2588
    %v2656 = vpop.f32.mrb[0].mxu0
    %v2657 = vadd.f32 0.0, %v2656
    %v2658 = vpop.f32.mrb[0].mxu0
    %2659 = vdwg.mxu0
    %v2660 = vld [vmem:[%s2324] sm:$0xff]
    %v2662 = vsel %vm2250, %v2660, 0
    %2664 = vmatprep.subr.mxu0 0.0
    %2665 = vmatpush1.msra.mxu0 %v2584
    %2666 = vmatprep.subr.mxu0 0.0
    %2667 = vmatpush1.msra.mxu0 %v2585
    %2668 = vmatprep.subr.mxu0 0.0
    %2669 = vmatpush1.msra.mxu0 0.0
    %2670 = vmatprep.subr.mxu0 0.0
    %2671 = vmatpush1.msra.mxu0 0.0
    %2672 = vmatprep.subr.mxu0 0.0
    %2673 = vmatpush1.msra.mxu0 0.0
    %2674 = vmatprep.subr.mxu0 0.0
    %2675 = vmatpush1.msra.mxu0 0.0
    %2676 = vmatprep.subr.mxu0 0.0
    %2677 = vmatpush1.msra.mxu0 0.0
    %2678 = vmatprep.subr.mxu0 0.0
    %2679 = vmatpush1.msra.mxu0 0.0
    %2680 = vmatprep.subr.mxu0 0.0
    %2681 = vmatpush1.msra.mxu0 0.0
    %2682 = vmatprep.subr.mxu0 0.0
    %2683 = vmatpush1.msra.mxu0 0.0
    %2684 = vmatprep.subr.mxu0 0.0
    %2685 = vmatpush1.msra.mxu0 0.0
    %2686 = vmatprep.subr.mxu0 0.0
    %2687 = vmatpush1.msra.mxu0 0.0
    %2688 = vmatprep.subr.mxu0 0.0
    %2689 = vmatpush1.msra.mxu0 0.0
    %2690 = vmatprep.subr.mxu0 0.0
    %2691 = vmatpush1.msra.mxu0 0.0
    %2692 = vmatprep.subr.mxu0 0.0
    %2693 = vmatpush1.msra.mxu0 0.0
    %2694 = vmatprep.subr.mxu0 0.0
    %2695 = vmatpush1.msra.mxu0 0.0
    %2696 = vmatprep.subr.mxu0 0.0
    %2697 = vmatpush1.msra.mxu0 0.0
    %2698 = vmatprep.subr.mxu0 0.0
    %2699 = vmatpush1.msra.mxu0 0.0
    %2700 = vmatprep.subr.mxu0 0.0
    %2701 = vmatpush1.msra.mxu0 0.0
    %2702 = vmatprep.subr.mxu0 0.0
    %2703 = vmatpush1.msra.mxu0 0.0
    %2704 = vmatprep.subr.mxu0 0.0
    %2705 = vmatpush1.msra.mxu0 0.0
    %2706 = vmatprep.subr.mxu0 0.0
    %2707 = vmatpush1.msra.mxu0 0.0
    %2708 = vmatprep.subr.mxu0 0.0
    %2709 = vmatpush1.msra.mxu0 0.0
    %2710 = vmatprep.subr.mxu0 0.0
    %2711 = vmatpush1.msra.mxu0 0.0
    %2712 = vmatprep.subr.mxu0 0.0
    %2713 = vmatpush1.msra.mxu0 0.0
    %2714 = vmatprep.subr.mxu0 0.0
    %2715 = vmatpush1.msra.mxu0 0.0
    %2716 = vmatprep.subr.mxu0 0.0
    %2717 = vmatpush1.msra.mxu0 0.0
    %2718 = vmatprep.subr.mxu0 0.0
    %2719 = vmatpush1.msra.mxu0 0.0
    %2720 = vmatprep.subr.mxu0 0.0
    %2721 = vmatpush1.msra.mxu0 0.0
    %2722 = vmatprep.subr.mxu0 0.0
    %2723 = vmatpush1.msra.mxu0 0.0
    %2724 = vmatprep.subr.mxu0 0.0
    %2725 = vmatpush1.msra.mxu0 0.0
    %2726 = vmatprep.subr.mxu0 0.0
    %2727 = vmatpush1.msra.mxu0 0.0
    %2728 = vmatprep.mubr.f32.mxu0 0.0
    %2729 = vmatmul.mubr.f32.gmra.mrb[0].mxu0 %v2662
    %v2730 = vpop.f32.mrb[0].mxu0
    %v2731 = vadd.f32 0.0, %v2730
    %v2732 = vpop.f32.mrb[0].mxu0
    %2733 = vdwg.mxu0
    %v2734 = vmax.f32 %v2657, %v2731
    %v2735 = vld [vmem:[%s7] sm:$0xff]
    %v2736 = vld [vmem:[%s7 + $0x8] sm:$0xff]
    %v2737 = vld [vmem:[%s7 + $0x10] sm:$0xff]
    %v2738 = vld [vmem:[%s7 + $0x18] sm:$0xff]
    %v2739 = vld [vmem:[%s7 + $0x20] sm:$0xff]
    %v2740 = vld [vmem:[%s7 + $0x28] sm:$0xff]
    %v2741 = vld [vmem:[%s7 + $0x30] sm:$0xff]
    %v2742 = vld [vmem:[%s7 + $0x38] sm:$0xff]
    %v2743 = vld [vmem:[%s7 + $0x40] sm:$0xff]
    %v2744 = vld [vmem:[%s7 + $0x48] sm:$0xff]
    %v2745 = vld [vmem:[%s7 + $0x50] sm:$0xff]
    %v2746 = vld [vmem:[%s7 + $0x58] sm:$0xff]
    %v2747 = vld [vmem:[%s7 + $0x60] sm:$0xff]
    %v2748 = vld [vmem:[%s7 + $0x68] sm:$0xff]
    %v2749 = vld [vmem:[%s7 + $0x70] sm:$0xff]
    %v2750 = vld [vmem:[%s7 + $0x78] sm:$0xff]
    %2751 = vmatprep.subr.mxu0 0.0
    %2752 = vmatpush1.msra.mxu0 %v2735
    %2753 = vmatprep.subr.mxu0 0.0
    %2754 = vmatpush1.msra.mxu0 %v2736
    %2755 = vmatprep.subr.mxu0 0.0
    %2756 = vmatpush1.msra.mxu0 %v2737
    %2757 = vmatprep.subr.mxu0 0.0
    %2758 = vmatpush1.msra.mxu0 %v2738
    %2759 = vmatprep.subr.mxu0 0.0
    %2760 = vmatpush1.msra.mxu0 %v2739
    %2761 = vmatprep.subr.mxu0 0.0
    %2762 = vmatpush1.msra.mxu0 %v2740
    %2763 = vmatprep.subr.mxu0 0.0
    %2764 = vmatpush1.msra.mxu0 %v2741
    %2765 = vmatprep.subr.mxu0 0.0
    %2766 = vmatpush1.msra.mxu0 %v2742
    %2767 = vmatprep.subr.mxu0 0.0
    %2768 = vmatpush1.msra.mxu0 %v2743
    %2769 = vmatprep.subr.mxu0 0.0
    %2770 = vmatpush1.msra.mxu0 %v2744
    %2771 = vmatprep.subr.mxu0 0.0
    %2772 = vmatpush1.msra.mxu0 %v2745
    %2773 = vmatprep.subr.mxu0 0.0
    %2774 = vmatpush1.msra.mxu0 %v2746
    %2775 = vmatprep.subr.mxu0 0.0
    %2776 = vmatpush1.msra.mxu0 %v2747
    %2777 = vmatprep.subr.mxu0 0.0
    %2778 = vmatpush1.msra.mxu0 %v2748
    %2779 = vmatprep.subr.mxu0 0.0
    %2780 = vmatpush1.msra.mxu0 %v2749
    %2781 = vmatprep.subr.mxu0 0.0
    %2782 = vmatpush1.msra.mxu0 %v2750
    %2783 = vmatprep.subr.mxu0 0.0
    %2784 = vmatpush1.msra.mxu0 0.0
    %2785 = vmatprep.subr.mxu0 0.0
    %2786 = vmatpush1.msra.mxu0 0.0
    %2787 = vmatprep.subr.mxu0 0.0
    %2788 = vmatpush1.msra.mxu0 0.0
    %2789 = vmatprep.subr.mxu0 0.0
    %2790 = vmatpush1.msra.mxu0 0.0
    %2791 = vmatprep.subr.mxu0 0.0
    %2792 = vmatpush1.msra.mxu0 0.0
    %2793 = vmatprep.subr.mxu0 0.0
    %2794 = vmatpush1.msra.mxu0 0.0
    %2795 = vmatprep.subr.mxu0 0.0
    %2796 = vmatpush1.msra.mxu0 0.0
    %2797 = vmatprep.subr.mxu0 0.0
    %2798 = vmatpush1.msra.mxu0 0.0
    %2799 = vmatprep.subr.mxu0 0.0
    %2800 = vmatpush1.msra.mxu0 0.0
    %2801 = vmatprep.subr.mxu0 0.0
    %2802 = vmatpush1.msra.mxu0 0.0
    %2803 = vmatprep.subr.mxu0 0.0
    %2804 = vmatpush1.msra.mxu0 0.0
    %2805 = vmatprep.subr.mxu0 0.0
    %2806 = vmatpush1.msra.mxu0 0.0
    %2807 = vmatprep.subr.mxu0 0.0
    %2808 = vmatpush1.msra.mxu0 0.0
    %2809 = vmatprep.subr.mxu0 0.0
    %2810 = vmatpush1.msra.mxu0 0.0
    %2811 = vmatprep.subr.mxu0 0.0
    %2812 = vmatpush1.msra.mxu0 0.0
    %2813 = vmatprep.subr.mxu0 0.0
    %2814 = vmatpush1.msra.mxu0 0.0
    %2815 = vmatprep.mubr.f32.mxu0 0.0
    %2816 = vmatmul.mubr.f32.gmra.mrb[0].mxu0 %v2734
    %v2817 = vpop.f32.mrb[0].mxu0
    %v2818 = vadd.f32 0.0, %v2817
    %v2819 = vpop.f32.mrb[0].mxu0
    %2820 = vdwg.mxu0
    %v2821 = vld [vmem:[%s2486] sm:$0xff]
    %v2822 = vld [vmem:[%s2486 + $0x8] sm:$0xff]
    %v2823 = vld [vmem:[%s2486 + $0x10] sm:$0xff]
    %v2824 = vld [vmem:[%s2486 + $0x18] sm:$0xff]
    %v2825 = vld [vmem:[%s2486 + $0x20] sm:$0xff]
    %v2826 = vld [vmem:[%s2486 + $0x28] sm:$0xff]
    %v2827 = vld [vmem:[%s2486 + $0x30] sm:$0xff]
    %v2828 = vld [vmem:[%s2486 + $0x38] sm:$0xff]
    %v2829 = vld [vmem:[%s2486 + $0x40] sm:$0xff]
    %v2830 = vld [vmem:[%s2486 + $0x48] sm:$0xff]
    %v2831 = vld [vmem:[%s2486 + $0x50] sm:$0xff]
    %v2832 = vld [vmem:[%s2486 + $0x58] sm:$0xff]
    %v2833 = vld [vmem:[%s2486 + $0x60] sm:$0xff]
    %v2834 = vld [vmem:[%s2486 + $0x68] sm:$0xff]
    %v2835 = vld [vmem:[%s2486 + $0x70] sm:$0xff]
    %v2836 = vld [vmem:[%s2486 + $0x78] sm:$0xff]
    %2837 = vmatprep.subr.mxu0 0.0
    %2838 = vmatpush1.msra.mxu0 %v2821
    %2839 = vmatprep.subr.mxu0 0.0
    %2840 = vmatpush1.msra.mxu0 %v2822
    %2841 = vmatprep.subr.mxu0 0.0
    %2842 = vmatpush1.msra.mxu0 %v2823
    %2843 = vmatprep.subr.mxu0 0.0
    %2844 = vmatpush1.msra.mxu0 %v2824
    %2845 = vmatprep.subr.mxu0 0.0
    %2846 = vmatpush1.msra.mxu0 %v2825
    %2847 = vmatprep.subr.mxu0 0.0
    %2848 = vmatpush1.msra.mxu0 %v2826
    %2849 = vmatprep.subr.mxu0 0.0
    %2850 = vmatpush1.msra.mxu0 %v2827
    %2851 = vmatprep.subr.mxu0 0.0
    %2852 = vmatpush1.msra.mxu0 %v2828
    %2853 = vmatprep.subr.mxu0 0.0
    %2854 = vmatpush1.msra.mxu0 %v2829
    %2855 = vmatprep.subr.mxu0 0.0
    %2856 = vmatpush1.msra.mxu0 %v2830
    %2857 = vmatprep.subr.mxu0 0.0
    %2858 = vmatpush1.msra.mxu0 %v2831
    %2859 = vmatprep.subr.mxu0 0.0
    %2860 = vmatpush1.msra.mxu0 %v2832
    %2861 = vmatprep.subr.mxu0 0.0
    %2862 = vmatpush1.msra.mxu0 %v2833
    %2863 = vmatprep.subr.mxu0 0.0
    %2864 = vmatpush1.msra.mxu0 %v2834
    %2865 = vmatprep.subr.mxu0 0.0
    %2866 = vmatpush1.msra.mxu0 %v2835
    %2867 = vmatprep.subr.mxu0 0.0
    %2868 = vmatpush1.msra.mxu0 %v2836
    %2869 = vmatprep.subr.mxu0 0.0
    %2870 = vmatpush1.msra.mxu0 0.0
    %2871 = vmatprep.subr.mxu0 0.0
    %2872 = vmatpush1.msra.mxu0 0.0
    %2873 = vmatprep.subr.mxu0 0.0
    %2874 = vmatpush1.msra.mxu0 0.0
    %2875 = vmatprep.subr.mxu0 0.0
    %2876 = vmatpush1.msra.mxu0 0.0
    %2877 = vmatprep.subr.mxu0 0.0
    %2878 = vmatpush1.msra.mxu0 0.0
    %2879 = vmatprep.subr.mxu0 0.0
    %2880 = vmatpush1.msra.mxu0 0.0
    %2881 = vmatprep.subr.mxu0 0.0
    %2882 = vmatpush1.msra.mxu0 0.0
    %2883 = vmatprep.subr.mxu0 0.0
    %2884 = vmatpush1.msra.mxu0 0.0
    %2885 = vmatprep.subr.mxu0 0.0
    %2886 = vmatpush1.msra.mxu0 0.0
    %2887 = vmatprep.subr.mxu0 0.0
    %2888 = vmatpush1.msra.mxu0 0.0
    %2889 = vmatprep.subr.mxu0 0.0
    %2890 = vmatpush1.msra.mxu0 0.0
    %2891 = vmatprep.subr.mxu0 0.0
    %2892 = vmatpush1.msra.mxu0 0.0
    %2893 = vmatprep.subr.mxu0 0.0
    %2894 = vmatpush1.msra.mxu0 0.0
    %2895 = vmatprep.subr.mxu0 0.0
    %2896 = vmatpush1.msra.mxu0 0.0
    %2897 = vmatprep.subr.mxu0 0.0
    %2898 = vmatpush1.msra.mxu0 0.0
    %2899 = vmatprep.subr.mxu0 0.0
    %2900 = vmatpush1.msra.mxu0 0.0
    %2901 = vmatprep.mubr.f32.mxu0 0.0
    %2902 = vmatmul.mubr.f32.gmra.mrb[0].mxu0 %v2734
    %v2903 = vpop.f32.mrb[0].mxu0
    %v2904 = vadd.f32 0.0, %v2903
    %v2905 = vpop.f32.mrb[0].mxu0
    %2906 = vdwg.mxu0
    %v2907 = vmax.f32 %v2818, %v2904
    %2909 = vrot.lane.b32.xlu0 %v2907, 8
    %v2910 = vpop.permute.xlu0 %2909
    %s2912 = scalar_lea.vmem [#allocation3], 16
    %2913 = vst.msk [vmem:[%s2912 + $0x1] sm:$0xff] %vm2578, %v2910
    %v2914 = vld [vmem:[#allocation3] sm:$0xff]
    %v2915 = vld [vmem:[%s8] sm:$0xff]
    %v2916 = vld [vmem:[%s8 + $0x8] sm:$0xff]
    %v2917 = vld [vmem:[%s8 + $0x10] sm:$0xff]
    %v2918 = vld [vmem:[%s8 + $0x18] sm:$0xff]
    %v2919 = vld [vmem:[%s8 + $0x20] sm:$0xff]
    %v2920 = vld [vmem:[%s8 + $0x28] sm:$0xff]
    %v2921 = vld [vmem:[%s8 + $0x30] sm:$0xff]
    %v2922 = vld [vmem:[%s8 + $0x38] sm:$0xff]
    %s2923 = scalar_lea.vmem %s8, 64
    %v2924 = vld [vmem:[%s2923] sm:$0xff]
    %v2925 = vld [vmem:[%s2923 + $0x8] sm:$0xff]
    %v2926 = vld [vmem:[%s2923 + $0x10] sm:$0xff]
    %v2927 = vld [vmem:[%s2923 + $0x18] sm:$0xff]
    %v2928 = vld [vmem:[%s2923 + $0x20] sm:$0xff]
    %v2929 = vld [vmem:[%s2923 + $0x28] sm:$0xff]
    %v2930 = vld [vmem:[%s2923 + $0x30] sm:$0xff]
    %v2931 = vld [vmem:[%s2923 + $0x38] sm:$0xff]
    %2933 = vrot.lane.b32.xlu0 %v2914, 120
    %v2934 = vpop.permute.xlu0 %2933
    %v2935 = vsel %vm298, %v2934, 0
    %2937 = vmatprep.subr.mxu0 0.0
    %2938 = vmatpush1.msra.mxu0 %v2924
    %2939 = vmatprep.subr.mxu0 0.0
    %2940 = vmatpush1.msra.mxu0 %v2925
    %2941 = vmatprep.subr.mxu0 0.0
    %2942 = vmatpush1.msra.mxu0 %v2926
    %2943 = vmatprep.subr.mxu0 0.0
    %2944 = vmatpush1.msra.mxu0 %v2927
    %2945 = vmatprep.subr.mxu0 0.0
    %2946 = vmatpush1.msra.mxu0 %v2928
    %2947 = vmatprep.subr.mxu0 0.0
    %2948 = vmatpush1.msra.mxu0 %v2929
    %2949 = vmatprep.subr.mxu0 0.0
    %2950 = vmatpush1.msra.mxu0 %v2930
    %2951 = vmatprep.subr.mxu0 0.0
    %2952 = vmatpush1.msra.mxu0 %v2931
    %2953 = vmatprep.subr.mxu0 0.0
    %2954 = vmatpush1.msra.mxu0 0.0
    %2955 = vmatprep.subr.mxu0 0.0
    %2956 = vmatpush1.msra.mxu0 0.0
    %2957 = vmatprep.subr.mxu0 0.0
    %2958 = vmatpush1.msra.mxu0 0.0
    %2959 = vmatprep.subr.mxu0 0.0
    %2960 = vmatpush1.msra.mxu0 0.0
    %2961 = vmatprep.subr.mxu0 0.0
    %2962 = vmatpush1.msra.mxu0 0.0
    %2963 = vmatprep.subr.mxu0 0.0
    %2964 = vmatpush1.msra.mxu0 0.0
    %2965 = vmatprep.subr.mxu0 0.0
    %2966 = vmatpush1.msra.mxu0 0.0
    %2967 = vmatprep.subr.mxu0 0.0
    %2968 = vmatpush1.msra.mxu0 0.0
    %2969 = vmatprep.subr.mxu0 0.0
    %2970 = vmatpush1.msra.mxu0 0.0
    %2971 = vmatprep.subr.mxu0 0.0
    %2972 = vmatpush1.msra.mxu0 0.0
    %2973 = vmatprep.subr.mxu0 0.0
    %2974 = vmatpush1.msra.mxu0 0.0
    %2975 = vmatprep.subr.mxu0 0.0
    %2976 = vmatpush1.msra.mxu0 0.0
    %2977 = vmatprep.subr.mxu0 0.0
    %2978 = vmatpush1.msra.mxu0 0.0
    %2979 = vmatprep.subr.mxu0 0.0
    %2980 = vmatpush1.msra.mxu0 0.0
    %2981 = vmatprep.subr.mxu0 0.0
    %2982 = vmatpush1.msra.mxu0 0.0
    %2983 = vmatprep.subr.mxu0 0.0
    %2984 = vmatpush1.msra.mxu0 0.0
    %2985 = vmatprep.subr.mxu0 0.0
    %2986 = vmatpush1.msra.mxu0 0.0
    %2987 = vmatprep.subr.mxu0 0.0
    %2988 = vmatpush1.msra.mxu0 0.0
    %2989 = vmatprep.subr.mxu0 0.0
    %2990 = vmatpush1.msra.mxu0 0.0
    %2991 = vmatprep.subr.mxu0 0.0
    %2992 = vmatpush1.msra.mxu0 0.0
    %2993 = vmatprep.subr.mxu0 0.0
    %2994 = vmatpush1.msra.mxu0 0.0
    %2995 = vmatprep.subr.mxu0 0.0
    %2996 = vmatpush1.msra.mxu0 0.0
    %2997 = vmatprep.subr.mxu0 0.0
    %2998 = vmatpush1.msra.mxu0 0.0
    %2999 = vmatprep.subr.mxu0 0.0
    %3000 = vmatpush1.msra.mxu0 0.0
    %3001 = vmatprep.mubr.f32.mxu0 0.0
    %3002 = vmatmul.mubr.f32.gmra.mrb[0].mxu0 %v2935
    %v3003 = vpop.f32.mrb[0].mxu0
    %v3004 = vadd.f32 0.0, %v3003
    %v3005 = vpop.f32.mrb[0].mxu0
    %3006 = vdwg.mxu0
    %v3007 = vsel %vm298, %v2914, 0
    %3009 = vmatprep.subr.mxu0 0.0
    %3010 = vmatpush1.msra.mxu0 %v2915
    %3011 = vmatprep.subr.mxu0 0.0
    %3012 = vmatpush1.msra.mxu0 %v2916
    %3013 = vmatprep.subr.mxu0 0.0
    %3014 = vmatpush1.msra.mxu0 %v2917
    %3015 = vmatprep.subr.mxu0 0.0
    %3016 = vmatpush1.msra.mxu0 %v2918
    %3017 = vmatprep.subr.mxu0 0.0
    %3018 = vmatpush1.msra.mxu0 %v2919
    %3019 = vmatprep.subr.mxu0 0.0
    %3020 = vmatpush1.msra.mxu0 %v2920
    %3021 = vmatprep.subr.mxu0 0.0
    %3022 = vmatpush1.msra.mxu0 %v2921
    %3023 = vmatprep.subr.mxu0 0.0
    %3024 = vmatpush1.msra.mxu0 %v2922
    %3025 = vmatprep.subr.mxu0 0.0
    %3026 = vmatpush1.msra.mxu0 0.0
    %3027 = vmatprep.subr.mxu0 0.0
    %3028 = vmatpush1.msra.mxu0 0.0
    %3029 = vmatprep.subr.mxu0 0.0
    %3030 = vmatpush1.msra.mxu0 0.0
    %3031 = vmatprep.subr.mxu0 0.0
    %3032 = vmatpush1.msra.mxu0 0.0
    %3033 = vmatprep.subr.mxu0 0.0
    %3034 = vmatpush1.msra.mxu0 0.0
    %3035 = vmatprep.subr.mxu0 0.0
    %3036 = vmatpush1.msra.mxu0 0.0
    %3037 = vmatprep.subr.mxu0 0.0
    %3038 = vmatpush1.msra.mxu0 0.0
    %3039 = vmatprep.subr.mxu0 0.0
    %3040 = vmatpush1.msra.mxu0 0.0
    %3041 = vmatprep.subr.mxu0 0.0
    %3042 = vmatpush1.msra.mxu0 0.0
    %3043 = vmatprep.subr.mxu0 0.0
    %3044 = vmatpush1.msra.mxu0 0.0
    %3045 = vmatprep.subr.mxu0 0.0
    %3046 = vmatpush1.msra.mxu0 0.0
    %3047 = vmatprep.subr.mxu0 0.0
    %3048 = vmatpush1.msra.mxu0 0.0
    %3049 = vmatprep.subr.mxu0 0.0
    %3050 = vmatpush1.msra.mxu0 0.0
    %3051 = vmatprep.subr.mxu0 0.0
    %3052 = vmatpush1.msra.mxu0 0.0
    %3053 = vmatprep.subr.mxu0 0.0
    %3054 = vmatpush1.msra.mxu0 0.0
    %3055 = vmatprep.subr.mxu0 0.0
    %3056 = vmatpush1.msra.mxu0 0.0
    %3057 = vmatprep.subr.mxu0 0.0
    %3058 = vmatpush1.msra.mxu0 0.0
    %3059 = vmatprep.subr.mxu0 0.0
    %3060 = vmatpush1.msra.mxu0 0.0
    %3061 = vmatprep.subr.mxu0 0.0
    %3062 = vmatpush1.msra.mxu0 0.0
    %3063 = vmatprep.subr.mxu0 0.0
    %3064 = vmatpush1.msra.mxu0 0.0
    %3065 = vmatprep.subr.mxu0 0.0
    %3066 = vmatpush1.msra.mxu0 0.0
    %3067 = vmatprep.subr.mxu0 0.0
    %3068 = vmatpush1.msra.mxu0 0.0
    %3069 = vmatprep.subr.mxu0 0.0
    %3070 = vmatpush1.msra.mxu0 0.0
    %3071 = vmatprep.subr.mxu0 0.0
    %3072 = vmatpush1.msra.mxu0 0.0
    %3073 = vmatprep.mubr.f32.mxu0 0.0
    %3074 = vmatmul.mubr.f32.gmra.mrb[0].mxu0 %v3007
    %v3075 = vpop.f32.mrb[0].mxu0
    %v3076 = vadd.f32 %v3004, %v3075
    %v3077 = vpop.f32.mrb[0].mxu0
    %3078 = vdwg.mxu0
    %s3079 = scalar_lea.vmem %s8, 128
    %v3080 = vld [vmem:[%s3079] sm:$0xff]
    %v3081 = vld [vmem:[%s3079 + $0x8] sm:$0xff]
    %v3082 = vld [vmem:[%s3079 + $0x10] sm:$0xff]
    %v3083 = vld [vmem:[%s3079 + $0x18] sm:$0xff]
    %v3084 = vld [vmem:[%s3079 + $0x20] sm:$0xff]
    %v3085 = vld [vmem:[%s3079 + $0x28] sm:$0xff]
    %v3086 = vld [vmem:[%s3079 + $0x30] sm:$0xff]
    %v3087 = vld [vmem:[%s3079 + $0x38] sm:$0xff]
    %3088 = vrot.lane.b32.xlu0 %v2914, 112
    %v3089 = vpop.permute.xlu0 %3088
    %v3090 = vsel %vm298, %v3089, 0
    %3092 = vmatprep.subr.mxu0 0.0
    %3093 = vmatpush1.msra.mxu0 %v3080
    %3094 = vmatprep.subr.mxu0 0.0
    %3095 = vmatpush1.msra.mxu0 %v3081
    %3096 = vmatprep.subr.mxu0 0.0
    %3097 = vmatpush1.msra.mxu0 %v3082
    %3098 = vmatprep.subr.mxu0 0.0
    %3099 = vmatpush1.msra.mxu0 %v3083
    %3100 = vmatprep.subr.mxu0 0.0
    %3101 = vmatpush1.msra.mxu0 %v3084
    %3102 = vmatprep.subr.mxu0 0.0
    %3103 = vmatpush1.msra.mxu0 %v3085
    %3104 = vmatprep.subr.mxu0 0.0
    %3105 = vmatpush1.msra.mxu0 %v3086
    %3106 = vmatprep.subr.mxu0 0.0
    %3107 = vmatpush1.msra.mxu0 %v3087
    %3108 = vmatprep.subr.mxu0 0.0
    %3109 = vmatpush1.msra.mxu0 0.0
    %3110 = vmatprep.subr.mxu0 0.0
    %3111 = vmatpush1.msra.mxu0 0.0
    %3112 = vmatprep.subr.mxu0 0.0
    %3113 = vmatpush1.msra.mxu0 0.0
    %3114 = vmatprep.subr.mxu0 0.0
    %3115 = vmatpush1.msra.mxu0 0.0
    %3116 = vmatprep.subr.mxu0 0.0
    %3117 = vmatpush1.msra.mxu0 0.0
    %3118 = vmatprep.subr.mxu0 0.0
    %3119 = vmatpush1.msra.mxu0 0.0
    %3120 = vmatprep.subr.mxu0 0.0
    %3121 = vmatpush1.msra.mxu0 0.0
    %3122 = vmatprep.subr.mxu0 0.0
    %3123 = vmatpush1.msra.mxu0 0.0
    %3124 = vmatprep.subr.mxu0 0.0
    %3125 = vmatpush1.msra.mxu0 0.0
    %3126 = vmatprep.subr.mxu0 0.0
    %3127 = vmatpush1.msra.mxu0 0.0
    %3128 = vmatprep.subr.mxu0 0.0
    %3129 = vmatpush1.msra.mxu0 0.0
    %3130 = vmatprep.subr.mxu0 0.0
    %3131 = vmatpush1.msra.mxu0 0.0
    %3132 = vmatprep.subr.mxu0 0.0
    %3133 = vmatpush1.msra.mxu0 0.0
    %3134 = vmatprep.subr.mxu0 0.0
    %3135 = vmatpush1.msra.mxu0 0.0
    %3136 = vmatprep.subr.mxu0 0.0
    %3137 = vmatpush1.msra.mxu0 0.0
    %3138 = vmatprep.subr.mxu0 0.0
    %3139 = vmatpush1.msra.mxu0 0.0
    %3140 = vmatprep.subr.mxu0 0.0
    %3141 = vmatpush1.msra.mxu0 0.0
    %3142 = vmatprep.subr.mxu0 0.0
    %3143 = vmatpush1.msra.mxu0 0.0
    %3144 = vmatprep.subr.mxu0 0.0
    %3145 = vmatpush1.msra.mxu0 0.0
    %3146 = vmatprep.subr.mxu0 0.0
    %3147 = vmatpush1.msra.mxu0 0.0
    %3148 = vmatprep.subr.mxu0 0.0
    %3149 = vmatpush1.msra.mxu0 0.0
    %3150 = vmatprep.subr.mxu0 0.0
    %3151 = vmatpush1.msra.mxu0 0.0
    %3152 = vmatprep.subr.mxu0 0.0
    %3153 = vmatpush1.msra.mxu0 0.0
    %3154 = vmatprep.subr.mxu0 0.0
    %3155 = vmatpush1.msra.mxu0 0.0
    %3156 = vmatprep.mubr.f32.mxu0 0.0
    %3157 = vmatmul.mubr.f32.gmra.mrb[0].mxu0 %v3090
    %v3158 = vpop.f32.mrb[0].mxu0
    %v3159 = vadd.f32 0.0, %v3158
    %v3160 = vpop.f32.mrb[0].mxu0
    %3161 = vdwg.mxu0
    %v3162 = vadd.f32 %v3076, %v3159
    %v3163 = vld [vmem:[#allocation3 + $0x1] sm:$0xff]
    %s3164 = scalar_lea.vmem %s8, 192
    %v3165 = vld [vmem:[%s3164] sm:$0xff]
    %v3166 = vld [vmem:[%s3164 + $0x8] sm:$0xff]
    %v3167 = vld [vmem:[%s3164 + $0x10] sm:$0xff]
    %v3168 = vld [vmem:[%s3164 + $0x18] sm:$0xff]
    %v3169 = vld [vmem:[%s3164 + $0x20] sm:$0xff]
    %v3170 = vld [vmem:[%s3164 + $0x28] sm:$0xff]
    %v3171 = vld [vmem:[%s3164 + $0x30] sm:$0xff]
    %v3172 = vld [vmem:[%s3164 + $0x38] sm:$0xff]
    %v3174 = vsel %vm298, %v3163, 0
    %3176 = vmatprep.subr.mxu0 0.0
    %3177 = vmatpush1.msra.mxu0 %v3165
    %3178 = vmatprep.subr.mxu0 0.0
    %3179 = vmatpush1.msra.mxu0 %v3166
    %3180 = vmatprep.subr.mxu0 0.0
    %3181 = vmatpush1.msra.mxu0 %v3167
    %3182 = vmatprep.subr.mxu0 0.0
    %3183 = vmatpush1.msra.mxu0 %v3168
    %3184 = vmatprep.subr.mxu0 0.0
    %3185 = vmatpush1.msra.mxu0 %v3169
    %3186 = vmatprep.subr.mxu0 0.0
    %3187 = vmatpush1.msra.mxu0 %v3170
    %3188 = vmatprep.subr.mxu0 0.0
    %3189 = vmatpush1.msra.mxu0 %v3171
    %3190 = vmatprep.subr.mxu0 0.0
    %3191 = vmatpush1.msra.mxu0 %v3172
    %3192 = vmatprep.subr.mxu0 0.0
    %3193 = vmatpush1.msra.mxu0 0.0
    %3194 = vmatprep.subr.mxu0 0.0
    %3195 = vmatpush1.msra.mxu0 0.0
    %3196 = vmatprep.subr.mxu0 0.0
    %3197 = vmatpush1.msra.mxu0 0.0
    %3198 = vmatprep.subr.mxu0 0.0
    %3199 = vmatpush1.msra.mxu0 0.0
    %3200 = vmatprep.subr.mxu0 0.0
    %3201 = vmatpush1.msra.mxu0 0.0
    %3202 = vmatprep.subr.mxu0 0.0
    %3203 = vmatpush1.msra.mxu0 0.0
    %3204 = vmatprep.subr.mxu0 0.0
    %3205 = vmatpush1.msra.mxu0 0.0
    %3206 = vmatprep.subr.mxu0 0.0
    %3207 = vmatpush1.msra.mxu0 0.0
    %3208 = vmatprep.subr.mxu0 0.0
    %3209 = vmatpush1.msra.mxu0 0.0
    %3210 = vmatprep.subr.mxu0 0.0
    %3211 = vmatpush1.msra.mxu0 0.0
    %3212 = vmatprep.subr.mxu0 0.0
    %3213 = vmatpush1.msra.mxu0 0.0
    %3214 = vmatprep.subr.mxu0 0.0
    %3215 = vmatpush1.msra.mxu0 0.0
    %3216 = vmatprep.subr.mxu0 0.0
    %3217 = vmatpush1.msra.mxu0 0.0
    %3218 = vmatprep.subr.mxu0 0.0
    %3219 = vmatpush1.msra.mxu0 0.0
    %3220 = vmatprep.subr.mxu0 0.0
    %3221 = vmatpush1.msra.mxu0 0.0
    %3222 = vmatprep.subr.mxu0 0.0
    %3223 = vmatpush1.msra.mxu0 0.0
    %3224 = vmatprep.subr.mxu0 0.0
    %3225 = vmatpush1.msra.mxu0 0.0
    %3226 = vmatprep.subr.mxu0 0.0
    %3227 = vmatpush1.msra.mxu0 0.0
    %3228 = vmatprep.subr.mxu0 0.0
    %3229 = vmatpush1.msra.mxu0 0.0
    %3230 = vmatprep.subr.mxu0 0.0
    %3231 = vmatpush1.msra.mxu0 0.0
    %3232 = vmatprep.subr.mxu0 0.0
    %3233 = vmatpush1.msra.mxu0 0.0
    %3234 = vmatprep.subr.mxu0 0.0
    %3235 = vmatpush1.msra.mxu0 0.0
    %3236 = vmatprep.subr.mxu0 0.0
    %3237 = vmatpush1.msra.mxu0 0.0
    %3238 = vmatprep.subr.mxu0 0.0
    %3239 = vmatpush1.msra.mxu0 0.0
    %3240 = vmatprep.mubr.f32.mxu0 0.0
    %3241 = vmatmul.mubr.f32.gmra.mrb[0].mxu0 %v3174
    %v3242 = vpop.f32.mrb[0].mxu0
    %v3243 = vadd.f32 0.0, %v3242
    %v3244 = vpop.f32.mrb[0].mxu0
    %3245 = vdwg.mxu0
    %v3246 = vadd.f32 %v3162, %v3243
    %s3247 = scalar_lea.vmem %s8, 256
    %v3248 = vld [vmem:[%s3247] sm:$0xff]
    %v3249 = vld [vmem:[%s3247 + $0x8] sm:$0xff]
    %v3250 = vld [vmem:[%s3247 + $0x10] sm:$0xff]
    %v3251 = vld [vmem:[%s3247 + $0x18] sm:$0xff]
    %v3252 = vld [vmem:[%s3247 + $0x20] sm:$0xff]
    %v3253 = vld [vmem:[%s3247 + $0x28] sm:$0xff]
    %v3254 = vld [vmem:[%s3247 + $0x30] sm:$0xff]
    %v3255 = vld [vmem:[%s3247 + $0x38] sm:$0xff]
    %3256 = vrot.lane.b32.xlu0 %v3163, 120
    %v3257 = vpop.permute.xlu0 %3256
    %v3258 = vsel %vm298, %v3257, 0
    %3260 = vmatprep.subr.mxu0 0.0
    %3261 = vmatpush1.msra.mxu0 %v3248
    %3262 = vmatprep.subr.mxu0 0.0
    %3263 = vmatpush1.msra.mxu0 %v3249
    %3264 = vmatprep.subr.mxu0 0.0
    %3265 = vmatpush1.msra.mxu0 %v3250
    %3266 = vmatprep.subr.mxu0 0.0
    %3267 = vmatpush1.msra.mxu0 %v3251
    %3268 = vmatprep.subr.mxu0 0.0
    %3269 = vmatpush1.msra.mxu0 %v3252
    %3270 = vmatprep.subr.mxu0 0.0
    %3271 = vmatpush1.msra.mxu0 %v3253
    %3272 = vmatprep.subr.mxu0 0.0
    %3273 = vmatpush1.msra.mxu0 %v3254
    %3274 = vmatprep.subr.mxu0 0.0
    %3275 = vmatpush1.msra.mxu0 %v3255
    %3276 = vmatprep.subr.mxu0 0.0
    %3277 = vmatpush1.msra.mxu0 0.0
    %3278 = vmatprep.subr.mxu0 0.0
    %3279 = vmatpush1.msra.mxu0 0.0
    %3280 = vmatprep.subr.mxu0 0.0
    %3281 = vmatpush1.msra.mxu0 0.0
    %3282 = vmatprep.subr.mxu0 0.0
    %3283 = vmatpush1.msra.mxu0 0.0
    %3284 = vmatprep.subr.mxu0 0.0
    %3285 = vmatpush1.msra.mxu0 0.0
    %3286 = vmatprep.subr.mxu0 0.0
    %3287 = vmatpush1.msra.mxu0 0.0
    %3288 = vmatprep.subr.mxu0 0.0
    %3289 = vmatpush1.msra.mxu0 0.0
    %3290 = vmatprep.subr.mxu0 0.0
    %3291 = vmatpush1.msra.mxu0 0.0
    %3292 = vmatprep.subr.mxu0 0.0
    %3293 = vmatpush1.msra.mxu0 0.0
    %3294 = vmatprep.subr.mxu0 0.0
    %3295 = vmatpush1.msra.mxu0 0.0
    %3296 = vmatprep.subr.mxu0 0.0
    %3297 = vmatpush1.msra.mxu0 0.0
    %3298 = vmatprep.subr.mxu0 0.0
    %3299 = vmatpush1.msra.mxu0 0.0
    %3300 = vmatprep.subr.mxu0 0.0
    %3301 = vmatpush1.msra.mxu0 0.0
    %3302 = vmatprep.subr.mxu0 0.0
    %3303 = vmatpush1.msra.mxu0 0.0
    %3304 = vmatprep.subr.mxu0 0.0
    %3305 = vmatpush1.msra.mxu0 0.0
    %3306 = vmatprep.subr.mxu0 0.0
    %3307 = vmatpush1.msra.mxu0 0.0
    %3308 = vmatprep.subr.mxu0 0.0
    %3309 = vmatpush1.msra.mxu0 0.0
    %3310 = vmatprep.subr.mxu0 0.0
    %3311 = vmatpush1.msra.mxu0 0.0
    %3312 = vmatprep.subr.mxu0 0.0
    %3313 = vmatpush1.msra.mxu0 0.0
    %3314 = vmatprep.subr.mxu0 0.0
    %3315 = vmatpush1.msra.mxu0 0.0
    %3316 = vmatprep.subr.mxu0 0.0
    %3317 = vmatpush1.msra.mxu0 0.0
    %3318 = vmatprep.subr.mxu0 0.0
    %3319 = vmatpush1.msra.mxu0 0.0
    %3320 = vmatprep.subr.mxu0 0.0
    %3321 = vmatpush1.msra.mxu0 0.0
    %3322 = vmatprep.subr.mxu0 0.0
    %3323 = vmatpush1.msra.mxu0 0.0
    %3324 = vmatprep.mubr.f32.mxu0 0.0
    %3325 = vmatmul.mubr.f32.gmra.mrb[0].mxu0 %v3258
    %v3326 = vpop.f32.mrb[0].mxu0
    %v3327 = vadd.f32 0.0, %v3326
    %v3328 = vpop.f32.mrb[0].mxu0
    %3329 = vdwg.mxu0
    %v3330 = vadd.f32 %v3246, %v3327
    %s3331 = scalar_lea.vmem %s8, 320
    %v3332 = vld [vmem:[%s3331] sm:$0xff]
    %v3333 = vld [vmem:[%s3331 + $0x8] sm:$0xff]
    %v3334 = vld [vmem:[%s3331 + $0x10] sm:$0xff]
    %v3335 = vld [vmem:[%s3331 + $0x18] sm:$0xff]
    %v3336 = vld [vmem:[%s3331 + $0x20] sm:$0xff]
    %v3337 = vld [vmem:[%s3331 + $0x28] sm:$0xff]
    %v3338 = vld [vmem:[%s3331 + $0x30] sm:$0xff]
    %v3339 = vld [vmem:[%s3331 + $0x38] sm:$0xff]
    %3340 = vrot.lane.b32.xlu0 %v3163, 112
    %v3341 = vpop.permute.xlu0 %3340
    %v3342 = vsel %vm298, %v3341, 0
    %3344 = vmatprep.subr.mxu0 0.0
    %3345 = vmatpush1.msra.mxu0 %v3332
    %3346 = vmatprep.subr.mxu0 0.0
    %3347 = vmatpush1.msra.mxu0 %v3333
    %3348 = vmatprep.subr.mxu0 0.0
    %3349 = vmatpush1.msra.mxu0 %v3334
    %3350 = vmatprep.subr.mxu0 0.0
    %3351 = vmatpush1.msra.mxu0 %v3335
    %3352 = vmatprep.subr.mxu0 0.0
    %3353 = vmatpush1.msra.mxu0 %v3336
    %3354 = vmatprep.subr.mxu0 0.0
    %3355 = vmatpush1.msra.mxu0 %v3337
    %3356 = vmatprep.subr.mxu0 0.0
    %3357 = vmatpush1.msra.mxu0 %v3338
    %3358 = vmatprep.subr.mxu0 0.0
    %3359 = vmatpush1.msra.mxu0 %v3339
    %3360 = vmatprep.subr.mxu0 0.0
    %3361 = vmatpush1.msra.mxu0 0.0
    %3362 = vmatprep.subr.mxu0 0.0
    %3363 = vmatpush1.msra.mxu0 0.0
    %3364 = vmatprep.subr.mxu0 0.0
    %3365 = vmatpush1.msra.mxu0 0.0
    %3366 = vmatprep.subr.mxu0 0.0
    %3367 = vmatpush1.msra.mxu0 0.0
    %3368 = vmatprep.subr.mxu0 0.0
    %3369 = vmatpush1.msra.mxu0 0.0
    %3370 = vmatprep.subr.mxu0 0.0
    %3371 = vmatpush1.msra.mxu0 0.0
    %3372 = vmatprep.subr.mxu0 0.0
    %3373 = vmatpush1.msra.mxu0 0.0
    %3374 = vmatprep.subr.mxu0 0.0
    %3375 = vmatpush1.msra.mxu0 0.0
    %3376 = vmatprep.subr.mxu0 0.0
    %3377 = vmatpush1.msra.mxu0 0.0
    %3378 = vmatprep.subr.mxu0 0.0
    %3379 = vmatpush1.msra.mxu0 0.0
    %3380 = vmatprep.subr.mxu0 0.0
    %3381 = vmatpush1.msra.mxu0 0.0
    %3382 = vmatprep.subr.mxu0 0.0
    %3383 = vmatpush1.msra.mxu0 0.0
    %3384 = vmatprep.subr.mxu0 0.0
    %3385 = vmatpush1.msra.mxu0 0.0
    %3386 = vmatprep.subr.mxu0 0.0
    %3387 = vmatpush1.msra.mxu0 0.0
    %3388 = vmatprep.subr.mxu0 0.0
    %3389 = vmatpush1.msra.mxu0 0.0
    %3390 = vmatprep.subr.mxu0 0.0
    %3391 = vmatpush1.msra.mxu0 0.0
    %3392 = vmatprep.subr.mxu0 0.0
    %3393 = vmatpush1.msra.mxu0 0.0
    %3394 = vmatprep.subr.mxu0 0.0
    %3395 = vmatpush1.msra.mxu0 0.0
    %3396 = vmatprep.subr.mxu0 0.0
    %3397 = vmatpush1.msra.mxu0 0.0
    %3398 = vmatprep.subr.mxu0 0.0
    %3399 = vmatpush1.msra.mxu0 0.0
    %3400 = vmatprep.subr.mxu0 0.0
    %3401 = vmatpush1.msra.mxu0 0.0
    %3402 = vmatprep.subr.mxu0 0.0
    %3403 = vmatpush1.msra.mxu0 0.0
    %3404 = vmatprep.subr.mxu0 0.0
    %3405 = vmatpush1.msra.mxu0 0.0
    %3406 = vmatprep.subr.mxu0 0.0
    %3407 = vmatpush1.msra.mxu0 0.0
    %3408 = vmatprep.mubr.f32.mxu0 0.0
    %3409 = vmatmul.mubr.f32.gmra.mrb[0].mxu0 %v3342
    %v3410 = vpop.f32.mrb[0].mxu0
    %v3411 = vadd.f32 0.0, %v3410
    %v3412 = vpop.f32.mrb[0].mxu0
    %3413 = vdwg.mxu0
    %v3414 = vadd.f32 %v3330, %v3411
    %v3415 = vld [vmem:[#allocation3 + $0x2] sm:$0xff]
    %s3416 = scalar_lea.vmem %s8, 384
    %v3417 = vld [vmem:[%s3416] sm:$0xff]
    %v3418 = vld [vmem:[%s3416 + $0x8] sm:$0xff]
    %v3419 = vld [vmem:[%s3416 + $0x10] sm:$0xff]
    %v3420 = vld [vmem:[%s3416 + $0x18] sm:$0xff]
    %v3421 = vld [vmem:[%s3416 + $0x20] sm:$0xff]
    %v3422 = vld [vmem:[%s3416 + $0x28] sm:$0xff]
    %v3423 = vld [vmem:[%s3416 + $0x30] sm:$0xff]
    %v3424 = vld [vmem:[%s3416 + $0x38] sm:$0xff]
    %v3426 = vsel %vm298, %v3415, 0
    %3428 = vmatprep.subr.mxu0 0.0
    %3429 = vmatpush1.msra.mxu0 %v3417
    %3430 = vmatprep.subr.mxu0 0.0
    %3431 = vmatpush1.msra.mxu0 %v3418
    %3432 = vmatprep.subr.mxu0 0.0
    %3433 = vmatpush1.msra.mxu0 %v3419
    %3434 = vmatprep.subr.mxu0 0.0
    %3435 = vmatpush1.msra.mxu0 %v3420
    %3436 = vmatprep.subr.mxu0 0.0
    %3437 = vmatpush1.msra.mxu0 %v3421
    %3438 = vmatprep.subr.mxu0 0.0
    %3439 = vmatpush1.msra.mxu0 %v3422
    %3440 = vmatprep.subr.mxu0 0.0
    %3441 = vmatpush1.msra.mxu0 %v3423
    %3442 = vmatprep.subr.mxu0 0.0
    %3443 = vmatpush1.msra.mxu0 %v3424
    %3444 = vmatprep.subr.mxu0 0.0
    %3445 = vmatpush1.msra.mxu0 0.0
    %3446 = vmatprep.subr.mxu0 0.0
    %3447 = vmatpush1.msra.mxu0 0.0
    %3448 = vmatprep.subr.mxu0 0.0
    %3449 = vmatpush1.msra.mxu0 0.0
    %3450 = vmatprep.subr.mxu0 0.0
    %3451 = vmatpush1.msra.mxu0 0.0
    %3452 = vmatprep.subr.mxu0 0.0
    %3453 = vmatpush1.msra.mxu0 0.0
    %3454 = vmatprep.subr.mxu0 0.0
    %3455 = vmatpush1.msra.mxu0 0.0
    %3456 = vmatprep.subr.mxu0 0.0
    %3457 = vmatpush1.msra.mxu0 0.0
    %3458 = vmatprep.subr.mxu0 0.0
    %3459 = vmatpush1.msra.mxu0 0.0
    %3460 = vmatprep.subr.mxu0 0.0
    %3461 = vmatpush1.msra.mxu0 0.0
    %3462 = vmatprep.subr.mxu0 0.0
    %3463 = vmatpush1.msra.mxu0 0.0
    %3464 = vmatprep.subr.mxu0 0.0
    %3465 = vmatpush1.msra.mxu0 0.0
    %3466 = vmatprep.subr.mxu0 0.0
    %3467 = vmatpush1.msra.mxu0 0.0
    %3468 = vmatprep.subr.mxu0 0.0
    %3469 = vmatpush1.msra.mxu0 0.0
    %3470 = vmatprep.subr.mxu0 0.0
    %3471 = vmatpush1.msra.mxu0 0.0
    %3472 = vmatprep.subr.mxu0 0.0
    %3473 = vmatpush1.msra.mxu0 0.0
    %3474 = vmatprep.subr.mxu0 0.0
    %3475 = vmatpush1.msra.mxu0 0.0
    %3476 = vmatprep.subr.mxu0 0.0
    %3477 = vmatpush1.msra.mxu0 0.0
    %3478 = vmatprep.subr.mxu0 0.0
    %3479 = vmatpush1.msra.mxu0 0.0
    %3480 = vmatprep.subr.mxu0 0.0
    %3481 = vmatpush1.msra.mxu0 0.0
    %3482 = vmatprep.subr.mxu0 0.0
    %3483 = vmatpush1.msra.mxu0 0.0
    %3484 = vmatprep.subr.mxu0 0.0
    %3485 = vmatpush1.msra.mxu0 0.0
    %3486 = vmatprep.subr.mxu0 0.0
    %3487 = vmatpush1.msra.mxu0 0.0
    %3488 = vmatprep.subr.mxu0 0.0
    %3489 = vmatpush1.msra.mxu0 0.0
    %3490 = vmatprep.subr.mxu0 0.0
    %3491 = vmatpush1.msra.mxu0 0.0
    %3492 = vmatprep.mubr.f32.mxu0 0.0
    %3493 = vmatmul.mubr.f32.gmra.mrb[0].mxu0 %v3426
    %v3494 = vpop.f32.mrb[0].mxu0
    %v3495 = vadd.f32 0.0, %v3494
    %v3496 = vpop.f32.mrb[0].mxu0
    %3497 = vdwg.mxu0
    %v3498 = vadd.f32 %v3414, %v3495
    %s3499 = scalar_lea.vmem %s8, 448
    %v3500 = vld [vmem:[%s3499] sm:$0xff]
    %v3501 = vld [vmem:[%s3499 + $0x8] sm:$0xff]
    %v3502 = vld [vmem:[%s3499 + $0x10] sm:$0xff]
    %v3503 = vld [vmem:[%s3499 + $0x18] sm:$0xff]
    %v3504 = vld [vmem:[%s3499 + $0x20] sm:$0xff]
    %v3505 = vld [vmem:[%s3499 + $0x28] sm:$0xff]
    %v3506 = vld [vmem:[%s3499 + $0x30] sm:$0xff]
    %v3507 = vld [vmem:[%s3499 + $0x38] sm:$0xff]
    %3508 = vrot.lane.b32.xlu0 %v3415, 120
    %v3509 = vpop.permute.xlu0 %3508
    %v3510 = vsel %vm298, %v3509, 0
    %3512 = vmatprep.subr.mxu0 0.0
    %3513 = vmatpush1.msra.mxu0 %v3500
    %3514 = vmatprep.subr.mxu0 0.0
    %3515 = vmatpush1.msra.mxu0 %v3501
    %3516 = vmatprep.subr.mxu0 0.0
    %3517 = vmatpush1.msra.mxu0 %v3502
    %3518 = vmatprep.subr.mxu0 0.0
    %3519 = vmatpush1.msra.mxu0 %v3503
    %3520 = vmatprep.subr.mxu0 0.0
    %3521 = vmatpush1.msra.mxu0 %v3504
    %3522 = vmatprep.subr.mxu0 0.0
    %3523 = vmatpush1.msra.mxu0 %v3505
    %3524 = vmatprep.subr.mxu0 0.0
    %3525 = vmatpush1.msra.mxu0 %v3506
    %3526 = vmatprep.subr.mxu0 0.0
    %3527 = vmatpush1.msra.mxu0 %v3507
    %3528 = vmatprep.subr.mxu0 0.0
    %3529 = vmatpush1.msra.mxu0 0.0
    %3530 = vmatprep.subr.mxu0 0.0
    %3531 = vmatpush1.msra.mxu0 0.0
    %3532 = vmatprep.subr.mxu0 0.0
    %3533 = vmatpush1.msra.mxu0 0.0
    %3534 = vmatprep.subr.mxu0 0.0
    %3535 = vmatpush1.msra.mxu0 0.0
    %3536 = vmatprep.subr.mxu0 0.0
    %3537 = vmatpush1.msra.mxu0 0.0
    %3538 = vmatprep.subr.mxu0 0.0
    %3539 = vmatpush1.msra.mxu0 0.0
    %3540 = vmatprep.subr.mxu0 0.0
    %3541 = vmatpush1.msra.mxu0 0.0
    %3542 = vmatprep.subr.mxu0 0.0
    %3543 = vmatpush1.msra.mxu0 0.0
    %3544 = vmatprep.subr.mxu0 0.0
    %3545 = vmatpush1.msra.mxu0 0.0
    %3546 = vmatprep.subr.mxu0 0.0
    %3547 = vmatpush1.msra.mxu0 0.0
    %3548 = vmatprep.subr.mxu0 0.0
    %3549 = vmatpush1.msra.mxu0 0.0
    %3550 = vmatprep.subr.mxu0 0.0
    %3551 = vmatpush1.msra.mxu0 0.0
    %3552 = vmatprep.subr.mxu0 0.0
    %3553 = vmatpush1.msra.mxu0 0.0
    %3554 = vmatprep.subr.mxu0 0.0
    %3555 = vmatpush1.msra.mxu0 0.0
    %3556 = vmatprep.subr.mxu0 0.0
    %3557 = vmatpush1.msra.mxu0 0.0
    %3558 = vmatprep.subr.mxu0 0.0
    %3559 = vmatpush1.msra.mxu0 0.0
    %3560 = vmatprep.subr.mxu0 0.0
    %3561 = vmatpush1.msra.mxu0 0.0
    %3562 = vmatprep.subr.mxu0 0.0
    %3563 = vmatpush1.msra.mxu0 0.0
    %3564 = vmatprep.subr.mxu0 0.0
    %3565 = vmatpush1.msra.mxu0 0.0
    %3566 = vmatprep.subr.mxu0 0.0
    %3567 = vmatpush1.msra.mxu0 0.0
    %3568 = vmatprep.subr.mxu0 0.0
    %3569 = vmatpush1.msra.mxu0 0.0
    %3570 = vmatprep.subr.mxu0 0.0
    %3571 = vmatpush1.msra.mxu0 0.0
    %3572 = vmatprep.subr.mxu0 0.0
    %3573 = vmatpush1.msra.mxu0 0.0
    %3574 = vmatprep.subr.mxu0 0.0
    %3575 = vmatpush1.msra.mxu0 0.0
    %3576 = vmatprep.mubr.f32.mxu0 0.0
    %3577 = vmatmul.mubr.f32.gmra.mrb[0].mxu0 %v3510
    %v3578 = vpop.f32.mrb[0].mxu0
    %v3579 = vadd.f32 0.0, %v3578
    %v3580 = vpop.f32.mrb[0].mxu0
    %3581 = vdwg.mxu0
    %v3582 = vadd.f32 %v3498, %v3579
    %s3583 = scalar_lea.vmem %s8, 512
    %v3584 = vld [vmem:[%s3583] sm:$0xff]
    %v3585 = vld [vmem:[%s3583 + $0x8] sm:$0xff]
    %v3586 = vld [vmem:[%s3583 + $0x10] sm:$0xff]
    %v3587 = vld [vmem:[%s3583 + $0x18] sm:$0xff]
    %v3588 = vld [vmem:[%s3583 + $0x20] sm:$0xff]
    %v3589 = vld [vmem:[%s3583 + $0x28] sm:$0xff]
    %v3590 = vld [vmem:[%s3583 + $0x30] sm:$0xff]
    %v3591 = vld [vmem:[%s3583 + $0x38] sm:$0xff]
    %3592 = vrot.lane.b32.xlu0 %v3415, 112
    %v3593 = vpop.permute.xlu0 %3592
    %v3594 = vsel %vm298, %v3593, 0
    %3596 = vmatprep.subr.mxu0 0.0
    %3597 = vmatpush1.msra.mxu0 %v3584
    %3598 = vmatprep.subr.mxu0 0.0
    %3599 = vmatpush1.msra.mxu0 %v3585
    %3600 = vmatprep.subr.mxu0 0.0
    %3601 = vmatpush1.msra.mxu0 %v3586
    %3602 = vmatprep.subr.mxu0 0.0
    %3603 = vmatpush1.msra.mxu0 %v3587
    %3604 = vmatprep.subr.mxu0 0.0
    %3605 = vmatpush1.msra.mxu0 %v3588
    %3606 = vmatprep.subr.mxu0 0.0
    %3607 = vmatpush1.msra.mxu0 %v3589
    %3608 = vmatprep.subr.mxu0 0.0
    %3609 = vmatpush1.msra.mxu0 %v3590
    %3610 = vmatprep.subr.mxu0 0.0
    %3611 = vmatpush1.msra.mxu0 %v3591
    %3612 = vmatprep.subr.mxu0 0.0
    %3613 = vmatpush1.msra.mxu0 0.0
    %3614 = vmatprep.subr.mxu0 0.0
    %3615 = vmatpush1.msra.mxu0 0.0
    %3616 = vmatprep.subr.mxu0 0.0
    %3617 = vmatpush1.msra.mxu0 0.0
    %3618 = vmatprep.subr.mxu0 0.0
    %3619 = vmatpush1.msra.mxu0 0.0
    %3620 = vmatprep.subr.mxu0 0.0
    %3621 = vmatpush1.msra.mxu0 0.0
    %3622 = vmatprep.subr.mxu0 0.0
    %3623 = vmatpush1.msra.mxu0 0.0
    %3624 = vmatprep.subr.mxu0 0.0
    %3625 = vmatpush1.msra.mxu0 0.0
    %3626 = vmatprep.subr.mxu0 0.0
    %3627 = vmatpush1.msra.mxu0 0.0
    %3628 = vmatprep.subr.mxu0 0.0
    %3629 = vmatpush1.msra.mxu0 0.0
    %3630 = vmatprep.subr.mxu0 0.0
    %3631 = vmatpush1.msra.mxu0 0.0
    %3632 = vmatprep.subr.mxu0 0.0
    %3633 = vmatpush1.msra.mxu0 0.0
    %3634 = vmatprep.subr.mxu0 0.0
    %3635 = vmatpush1.msra.mxu0 0.0
    %3636 = vmatprep.subr.mxu0 0.0
    %3637 = vmatpush1.msra.mxu0 0.0
    %3638 = vmatprep.subr.mxu0 0.0
    %3639 = vmatpush1.msra.mxu0 0.0
    %3640 = vmatprep.subr.mxu0 0.0
    %3641 = vmatpush1.msra.mxu0 0.0
    %3642 = vmatprep.subr.mxu0 0.0
    %3643 = vmatpush1.msra.mxu0 0.0
    %3644 = vmatprep.subr.mxu0 0.0
    %3645 = vmatpush1.msra.mxu0 0.0
    %3646 = vmatprep.subr.mxu0 0.0
    %3647 = vmatpush1.msra.mxu0 0.0
    %3648 = vmatprep.subr.mxu0 0.0
    %3649 = vmatpush1.msra.mxu0 0.0
    %3650 = vmatprep.subr.mxu0 0.0
    %3651 = vmatpush1.msra.mxu0 0.0
    %3652 = vmatprep.subr.mxu0 0.0
    %3653 = vmatpush1.msra.mxu0 0.0
    %3654 = vmatprep.subr.mxu0 0.0
    %3655 = vmatpush1.msra.mxu0 0.0
    %3656 = vmatprep.subr.mxu0 0.0
    %3657 = vmatpush1.msra.mxu0 0.0
    %3658 = vmatprep.subr.mxu0 0.0
    %3659 = vmatpush1.msra.mxu0 0.0
    %3660 = vmatprep.mubr.f32.mxu0 0.0
    %3661 = vmatmul.mubr.f32.gmra.mrb[0].mxu0 %v3594
    %v3662 = vpop.f32.mrb[0].mxu0
    %v3663 = vadd.f32 0.0, %v3662
    %v3664 = vpop.f32.mrb[0].mxu0
    %3665 = vdwg.mxu0
    %v3666 = vadd.f32 %v3582, %v3663
    %v3667 = vld [vmem:[%s2912] sm:$0xff]
    %3669 = vrot.lane.b32.xlu0 %v3667, 120
    %v3670 = vpop.permute.xlu0 %3669
    %v3671 = vsel %vm298, %v3670, 0
    %3673 = vmatprep.subr.mxu0 0.0
    %3674 = vmatpush1.msra.mxu0 %v2924
    %3675 = vmatprep.subr.mxu0 0.0
    %3676 = vmatpush1.msra.mxu0 %v2925
    %3677 = vmatprep.subr.mxu0 0.0
    %3678 = vmatpush1.msra.mxu0 %v2926
    %3679 = vmatprep.subr.mxu0 0.0
    %3680 = vmatpush1.msra.mxu0 %v2927
    %3681 = vmatprep.subr.mxu0 0.0
    %3682 = vmatpush1.msra.mxu0 %v2928
    %3683 = vmatprep.subr.mxu0 0.0
    %3684 = vmatpush1.msra.mxu0 %v2929
    %3685 = vmatprep.subr.mxu0 0.0
    %3686 = vmatpush1.msra.mxu0 %v2930
    %3687 = vmatprep.subr.mxu0 0.0
    %3688 = vmatpush1.msra.mxu0 %v2931
    %3689 = vmatprep.subr.mxu0 0.0
    %3690 = vmatpush1.msra.mxu0 0.0
    %3691 = vmatprep.subr.mxu0 0.0
    %3692 = vmatpush1.msra.mxu0 0.0
    %3693 = vmatprep.subr.mxu0 0.0
    %3694 = vmatpush1.msra.mxu0 0.0
    %3695 = vmatprep.subr.mxu0 0.0
    %3696 = vmatpush1.msra.mxu0 0.0
    %3697 = vmatprep.subr.mxu0 0.0
    %3698 = vmatpush1.msra.mxu0 0.0
    %3699 = vmatprep.subr.mxu0 0.0
    %3700 = vmatpush1.msra.mxu0 0.0
    %3701 = vmatprep.subr.mxu0 0.0
    %3702 = vmatpush1.msra.mxu0 0.0
    %3703 = vmatprep.subr.mxu0 0.0
    %3704 = vmatpush1.msra.mxu0 0.0
    %3705 = vmatprep.subr.mxu0 0.0
    %3706 = vmatpush1.msra.mxu0 0.0
    %3707 = vmatprep.subr.mxu0 0.0
    %3708 = vmatpush1.msra.mxu0 0.0
    %3709 = vmatprep.subr.mxu0 0.0
    %3710 = vmatpush1.msra.mxu0 0.0
    %3711 = vmatprep.subr.mxu0 0.0
    %3712 = vmatpush1.msra.mxu0 0.0
    %3713 = vmatprep.subr.mxu0 0.0
    %3714 = vmatpush1.msra.mxu0 0.0
    %3715 = vmatprep.subr.mxu0 0.0
    %3716 = vmatpush1.msra.mxu0 0.0
    %3717 = vmatprep.subr.mxu0 0.0
    %3718 = vmatpush1.msra.mxu0 0.0
    %3719 = vmatprep.subr.mxu0 0.0
    %3720 = vmatpush1.msra.mxu0 0.0
    %3721 = vmatprep.subr.mxu0 0.0
    %3722 = vmatpush1.msra.mxu0 0.0
    %3723 = vmatprep.subr.mxu0 0.0
    %3724 = vmatpush1.msra.mxu0 0.0
    %3725 = vmatprep.subr.mxu0 0.0
    %3726 = vmatpush1.msra.mxu0 0.0
    %3727 = vmatprep.subr.mxu0 0.0
    %3728 = vmatpush1.msra.mxu0 0.0
    %3729 = vmatprep.subr.mxu0 0.0
    %3730 = vmatpush1.msra.mxu0 0.0
    %3731 = vmatprep.subr.mxu0 0.0
    %3732 = vmatpush1.msra.mxu0 0.0
    %3733 = vmatprep.subr.mxu0 0.0
    %3734 = vmatpush1.msra.mxu0 0.0
    %3735 = vmatprep.subr.mxu0 0.0
    %3736 = vmatpush1.msra.mxu0 0.0
    %3737 = vmatprep.mubr.f32.mxu0 0.0
    %3738 = vmatmul.mubr.f32.gmra.mrb[0].mxu0 %v3671
    %v3739 = vpop.f32.mrb[0].mxu0
    %v3740 = vadd.f32 0.0, %v3739
    %v3741 = vpop.f32.mrb[0].mxu0
    %3742 = vdwg.mxu0
    %v3743 = vsel %vm298, %v3667, 0
    %3745 = vmatprep.subr.mxu0 0.0
    %3746 = vmatpush1.msra.mxu0 %v2915
    %3747 = vmatprep.subr.mxu0 0.0
    %3748 = vmatpush1.msra.mxu0 %v2916
    %3749 = vmatprep.subr.mxu0 0.0
    %3750 = vmatpush1.msra.mxu0 %v2917
    %3751 = vmatprep.subr.mxu0 0.0
    %3752 = vmatpush1.msra.mxu0 %v2918
    %3753 = vmatprep.subr.mxu0 0.0
    %3754 = vmatpush1.msra.mxu0 %v2919
    %3755 = vmatprep.subr.mxu0 0.0
    %3756 = vmatpush1.msra.mxu0 %v2920
    %3757 = vmatprep.subr.mxu0 0.0
    %3758 = vmatpush1.msra.mxu0 %v2921
    %3759 = vmatprep.subr.mxu0 0.0
    %3760 = vmatpush1.msra.mxu0 %v2922
    %3761 = vmatprep.subr.mxu0 0.0
    %3762 = vmatpush1.msra.mxu0 0.0
    %3763 = vmatprep.subr.mxu0 0.0
    %3764 = vmatpush1.msra.mxu0 0.0
    %3765 = vmatprep.subr.mxu0 0.0
    %3766 = vmatpush1.msra.mxu0 0.0
    %3767 = vmatprep.subr.mxu0 0.0
    %3768 = vmatpush1.msra.mxu0 0.0
    %3769 = vmatprep.subr.mxu0 0.0
    %3770 = vmatpush1.msra.mxu0 0.0
    %3771 = vmatprep.subr.mxu0 0.0
    %3772 = vmatpush1.msra.mxu0 0.0
    %3773 = vmatprep.subr.mxu0 0.0
    %3774 = vmatpush1.msra.mxu0 0.0
    %3775 = vmatprep.subr.mxu0 0.0
    %3776 = vmatpush1.msra.mxu0 0.0
    %3777 = vmatprep.subr.mxu0 0.0
    %3778 = vmatpush1.msra.mxu0 0.0
    %3779 = vmatprep.subr.mxu0 0.0
    %3780 = vmatpush1.msra.mxu0 0.0
    %3781 = vmatprep.subr.mxu0 0.0
    %3782 = vmatpush1.msra.mxu0 0.0
    %3783 = vmatprep.subr.mxu0 0.0
    %3784 = vmatpush1.msra.mxu0 0.0
    %3785 = vmatprep.subr.mxu0 0.0
    %3786 = vmatpush1.msra.mxu0 0.0
    %3787 = vmatprep.subr.mxu0 0.0
    %3788 = vmatpush1.msra.mxu0 0.0
    %3789 = vmatprep.subr.mxu0 0.0
    %3790 = vmatpush1.msra.mxu0 0.0
    %3791 = vmatprep.subr.mxu0 0.0
    %3792 = vmatpush1.msra.mxu0 0.0
    %3793 = vmatprep.subr.mxu0 0.0
    %3794 = vmatpush1.msra.mxu0 0.0
    %3795 = vmatprep.subr.mxu0 0.0
    %3796 = vmatpush1.msra.mxu0 0.0
    %3797 = vmatprep.subr.mxu0 0.0
    %3798 = vmatpush1.msra.mxu0 0.0
    %3799 = vmatprep.subr.mxu0 0.0
    %3800 = vmatpush1.msra.mxu0 0.0
    %3801 = vmatprep.subr.mxu0 0.0
    %3802 = vmatpush1.msra.mxu0 0.0
    %3803 = vmatprep.subr.mxu0 0.0
    %3804 = vmatpush1.msra.mxu0 0.0
    %3805 = vmatprep.subr.mxu0 0.0
    %3806 = vmatpush1.msra.mxu0 0.0
    %3807 = vmatprep.subr.mxu0 0.0
    %3808 = vmatpush1.msra.mxu0 0.0
    %3809 = vmatprep.mubr.f32.mxu0 0.0
    %3810 = vmatmul.mubr.f32.gmra.mrb[0].mxu0 %v3743
    %v3811 = vpop.f32.mrb[0].mxu0
    %v3812 = vadd.f32 %v3740, %v3811
    %v3813 = vpop.f32.mrb[0].mxu0
    %3814 = vdwg.mxu0
    %3815 = vrot.lane.b32.xlu0 %v3667, 112
    %v3816 = vpop.permute.xlu0 %3815
    %v3817 = vsel %vm298, %v3816, 0
    %3819 = vmatprep.subr.mxu0 0.0
    %3820 = vmatpush1.msra.mxu0 %v3080
    %3821 = vmatprep.subr.mxu0 0.0
    %3822 = vmatpush1.msra.mxu0 %v3081
    %3823 = vmatprep.subr.mxu0 0.0
    %3824 = vmatpush1.msra.mxu0 %v3082
    %3825 = vmatprep.subr.mxu0 0.0
    %3826 = vmatpush1.msra.mxu0 %v3083
    %3827 = vmatprep.subr.mxu0 0.0
    %3828 = vmatpush1.msra.mxu0 %v3084
    %3829 = vmatprep.subr.mxu0 0.0
    %3830 = vmatpush1.msra.mxu0 %v3085
    %3831 = vmatprep.subr.mxu0 0.0
    %3832 = vmatpush1.msra.mxu0 %v3086
    %3833 = vmatprep.subr.mxu0 0.0
    %3834 = vmatpush1.msra.mxu0 %v3087
    %3835 = vmatprep.subr.mxu0 0.0
    %3836 = vmatpush1.msra.mxu0 0.0
    %3837 = vmatprep.subr.mxu0 0.0
    %3838 = vmatpush1.msra.mxu0 0.0
    %3839 = vmatprep.subr.mxu0 0.0
    %3840 = vmatpush1.msra.mxu0 0.0
    %3841 = vmatprep.subr.mxu0 0.0
    %3842 = vmatpush1.msra.mxu0 0.0
    %3843 = vmatprep.subr.mxu0 0.0
    %3844 = vmatpush1.msra.mxu0 0.0
    %3845 = vmatprep.subr.mxu0 0.0
    %3846 = vmatpush1.msra.mxu0 0.0
    %3847 = vmatprep.subr.mxu0 0.0
    %3848 = vmatpush1.msra.mxu0 0.0
    %3849 = vmatprep.subr.mxu0 0.0
    %3850 = vmatpush1.msra.mxu0 0.0
    %3851 = vmatprep.subr.mxu0 0.0
    %3852 = vmatpush1.msra.mxu0 0.0
    %3853 = vmatprep.subr.mxu0 0.0
    %3854 = vmatpush1.msra.mxu0 0.0
    %3855 = vmatprep.subr.mxu0 0.0
    %3856 = vmatpush1.msra.mxu0 0.0
    %3857 = vmatprep.subr.mxu0 0.0
    %3858 = vmatpush1.msra.mxu0 0.0
    %3859 = vmatprep.subr.mxu0 0.0
    %3860 = vmatpush1.msra.mxu0 0.0
    %3861 = vmatprep.subr.mxu0 0.0
    %3862 = vmatpush1.msra.mxu0 0.0
    %3863 = vmatprep.subr.mxu0 0.0
    %3864 = vmatpush1.msra.mxu0 0.0
    %3865 = vmatprep.subr.mxu0 0.0
    %3866 = vmatpush1.msra.mxu0 0.0
    %3867 = vmatprep.subr.mxu0 0.0
    %3868 = vmatpush1.msra.mxu0 0.0
    %3869 = vmatprep.subr.mxu0 0.0
    %3870 = vmatpush1.msra.mxu0 0.0
    %3871 = vmatprep.subr.mxu0 0.0
    %3872 = vmatpush1.msra.mxu0 0.0
    %3873 = vmatprep.subr.mxu0 0.0
    %3874 = vmatpush1.msra.mxu0 0.0
    %3875 = vmatprep.subr.mxu0 0.0
    %3876 = vmatpush1.msra.mxu0 0.0
    %3877 = vmatprep.subr.mxu0 0.0
    %3878 = vmatpush1.msra.mxu0 0.0
    %3879 = vmatprep.subr.mxu0 0.0
    %3880 = vmatpush1.msra.mxu0 0.0
    %3881 = vmatprep.subr.mxu0 0.0
    %3882 = vmatpush1.msra.mxu0 0.0
    %3883 = vmatprep.mubr.f32.mxu0 0.0
    %3884 = vmatmul.mubr.f32.gmra.mrb[0].mxu0 %v3817
    %v3885 = vpop.f32.mrb[0].mxu0
    %v3886 = vadd.f32 0.0, %v3885
    %v3887 = vpop.f32.mrb[0].mxu0
    %3888 = vdwg.mxu0
    %v3889 = vadd.f32 %v3812, %v3886
    %v3890 = vld [vmem:[%s2912 + $0x1] sm:$0xff]
    %v3892 = vsel %vm298, %v3890, 0
    %3894 = vmatprep.subr.mxu0 0.0
    %3895 = vmatpush1.msra.mxu0 %v3165
    %3896 = vmatprep.subr.mxu0 0.0
    %3897 = vmatpush1.msra.mxu0 %v3166
    %3898 = vmatprep.subr.mxu0 0.0
    %3899 = vmatpush1.msra.mxu0 %v3167
    %3900 = vmatprep.subr.mxu0 0.0
    %3901 = vmatpush1.msra.mxu0 %v3168
    %3902 = vmatprep.subr.mxu0 0.0
    %3903 = vmatpush1.msra.mxu0 %v3169
    %3904 = vmatprep.subr.mxu0 0.0
    %3905 = vmatpush1.msra.mxu0 %v3170
    %3906 = vmatprep.subr.mxu0 0.0
    %3907 = vmatpush1.msra.mxu0 %v3171
    %3908 = vmatprep.subr.mxu0 0.0
    %3909 = vmatpush1.msra.mxu0 %v3172
    %3910 = vmatprep.subr.mxu0 0.0
    %3911 = vmatpush1.msra.mxu0 0.0
    %3912 = vmatprep.subr.mxu0 0.0
    %3913 = vmatpush1.msra.mxu0 0.0
    %3914 = vmatprep.subr.mxu0 0.0
    %3915 = vmatpush1.msra.mxu0 0.0
    %3916 = vmatprep.subr.mxu0 0.0
    %3917 = vmatpush1.msra.mxu0 0.0
    %3918 = vmatprep.subr.mxu0 0.0
    %3919 = vmatpush1.msra.mxu0 0.0
    %3920 = vmatprep.subr.mxu0 0.0
    %3921 = vmatpush1.msra.mxu0 0.0
    %3922 = vmatprep.subr.mxu0 0.0
    %3923 = vmatpush1.msra.mxu0 0.0
    %3924 = vmatprep.subr.mxu0 0.0
    %3925 = vmatpush1.msra.mxu0 0.0
    %3926 = vmatprep.subr.mxu0 0.0
    %3927 = vmatpush1.msra.mxu0 0.0
    %3928 = vmatprep.subr.mxu0 0.0
    %3929 = vmatpush1.msra.mxu0 0.0
    %3930 = vmatprep.subr.mxu0 0.0
    %3931 = vmatpush1.msra.mxu0 0.0
    %3932 = vmatprep.subr.mxu0 0.0
    %3933 = vmatpush1.msra.mxu0 0.0
    %3934 = vmatprep.subr.mxu0 0.0
    %3935 = vmatpush1.msra.mxu0 0.0
    %3936 = vmatprep.subr.mxu0 0.0
    %3937 = vmatpush1.msra.mxu0 0.0
    %3938 = vmatprep.subr.mxu0 0.0
    %3939 = vmatpush1.msra.mxu0 0.0
    %3940 = vmatprep.subr.mxu0 0.0
    %3941 = vmatpush1.msra.mxu0 0.0
    %3942 = vmatprep.subr.mxu0 0.0
    %3943 = vmatpush1.msra.mxu0 0.0
    %3944 = vmatprep.subr.mxu0 0.0
    %3945 = vmatpush1.msra.mxu0 0.0
    %3946 = vmatprep.subr.mxu0 0.0
    %3947 = vmatpush1.msra.mxu0 0.0
    %3948 = vmatprep.subr.mxu0 0.0
    %3949 = vmatpush1.msra.mxu0 0.0
    %3950 = vmatprep.subr.mxu0 0.0
    %3951 = vmatpush1.msra.mxu0 0.0
    %3952 = vmatprep.subr.mxu0 0.0
    %3953 = vmatpush1.msra.mxu0 0.0
    %3954 = vmatprep.subr.mxu0 0.0
    %3955 = vmatpush1.msra.mxu0 0.0
    %3956 = vmatprep.subr.mxu0 0.0
    %3957 = vmatpush1.msra.mxu0 0.0
    %3958 = vmatprep.mubr.f32.mxu0 0.0
    %3959 = vmatmul.mubr.f32.gmra.mrb[0].mxu0 %v3892
    %v3960 = vpop.f32.mrb[0].mxu0
    %v3961 = vadd.f32 0.0, %v3960
    %v3962 = vpop.f32.mrb[0].mxu0
    %3963 = vdwg.mxu0
    %v3964 = vadd.f32 %v3889, %v3961
    %3965 = vrot.lane.b32.xlu0 %v3890, 120
    %v3966 = vpop.permute.xlu0 %3965
    %v3967 = vsel %vm298, %v3966, 0
    %3969 = vmatprep.subr.mxu0 0.0
    %3970 = vmatpush1.msra.mxu0 %v3248
    %3971 = vmatprep.subr.mxu0 0.0
    %3972 = vmatpush1.msra.mxu0 %v3249
    %3973 = vmatprep.subr.mxu0 0.0
    %3974 = vmatpush1.msra.mxu0 %v3250
    %3975 = vmatprep.subr.mxu0 0.0
    %3976 = vmatpush1.msra.mxu0 %v3251
    %3977 = vmatprep.subr.mxu0 0.0
    %3978 = vmatpush1.msra.mxu0 %v3252
    %3979 = vmatprep.subr.mxu0 0.0
    %3980 = vmatpush1.msra.mxu0 %v3253
    %3981 = vmatprep.subr.mxu0 0.0
    %3982 = vmatpush1.msra.mxu0 %v3254
    %3983 = vmatprep.subr.mxu0 0.0
    %3984 = vmatpush1.msra.mxu0 %v3255
    %3985 = vmatprep.subr.mxu0 0.0
    %3986 = vmatpush1.msra.mxu0 0.0
    %3987 = vmatprep.subr.mxu0 0.0
    %3988 = vmatpush1.msra.mxu0 0.0
    %3989 = vmatprep.subr.mxu0 0.0
    %3990 = vmatpush1.msra.mxu0 0.0
    %3991 = vmatprep.subr.mxu0 0.0
    %3992 = vmatpush1.msra.mxu0 0.0
    %3993 = vmatprep.subr.mxu0 0.0
    %3994 = vmatpush1.msra.mxu0 0.0
    %3995 = vmatprep.subr.mxu0 0.0
    %3996 = vmatpush1.msra.mxu0 0.0
    %3997 = vmatprep.subr.mxu0 0.0
    %3998 = vmatpush1.msra.mxu0 0.0
    %3999 = vmatprep.subr.mxu0 0.0
    %4000 = vmatpush1.msra.mxu0 0.0
    %4001 = vmatprep.subr.mxu0 0.0
    %4002 = vmatpush1.msra.mxu0 0.0
    %4003 = vmatprep.subr.mxu0 0.0
    %4004 = vmatpush1.msra.mxu0 0.0
    %4005 = vmatprep.subr.mxu0 0.0
    %4006 = vmatpush1.msra.mxu0 0.0
    %4007 = vmatprep.subr.mxu0 0.0
    %4008 = vmatpush1.msra.mxu0 0.0
    %4009 = vmatprep.subr.mxu0 0.0
    %4010 = vmatpush1.msra.mxu0 0.0
    %4011 = vmatprep.subr.mxu0 0.0
    %4012 = vmatpush1.msra.mxu0 0.0
    %4013 = vmatprep.subr.mxu0 0.0
    %4014 = vmatpush1.msra.mxu0 0.0
    %4015 = vmatprep.subr.mxu0 0.0
    %4016 = vmatpush1.msra.mxu0 0.0
    %4017 = vmatprep.subr.mxu0 0.0
    %4018 = vmatpush1.msra.mxu0 0.0
    %4019 = vmatprep.subr.mxu0 0.0
    %4020 = vmatpush1.msra.mxu0 0.0
    %4021 = vmatprep.subr.mxu0 0.0
    %4022 = vmatpush1.msra.mxu0 0.0
    %4023 = vmatprep.subr.mxu0 0.0
    %4024 = vmatpush1.msra.mxu0 0.0
    %4025 = vmatprep.subr.mxu0 0.0
    %4026 = vmatpush1.msra.mxu0 0.0
    %4027 = vmatprep.subr.mxu0 0.0
    %4028 = vmatpush1.msra.mxu0 0.0
    %4029 = vmatprep.subr.mxu0 0.0
    %4030 = vmatpush1.msra.mxu0 0.0
    %4031 = vmatprep.subr.mxu0 0.0
    %4032 = vmatpush1.msra.mxu0 0.0
    %4033 = vmatprep.mubr.f32.mxu0 0.0
    %4034 = vmatmul.mubr.f32.gmra.mrb[0].mxu0 %v3967
    %v4035 = vpop.f32.mrb[0].mxu0
    %v4036 = vadd.f32 0.0, %v4035
    %v4037 = vpop.f32.mrb[0].mxu0
    %4038 = vdwg.mxu0
    %v4039 = vadd.f32 %v3964, %v4036
    %4040 = vrot.lane.b32.xlu0 %v3890, 112
    %v4041 = vpop.permute.xlu0 %4040
    %v4042 = vsel %vm298, %v4041, 0
    %4044 = vmatprep.subr.mxu0 0.0
    %4045 = vmatpush1.msra.mxu0 %v3332
    %4046 = vmatprep.subr.mxu0 0.0
    %4047 = vmatpush1.msra.mxu0 %v3333
    %4048 = vmatprep.subr.mxu0 0.0
    %4049 = vmatpush1.msra.mxu0 %v3334
    %4050 = vmatprep.subr.mxu0 0.0
    %4051 = vmatpush1.msra.mxu0 %v3335
    %4052 = vmatprep.subr.mxu0 0.0
    %4053 = vmatpush1.msra.mxu0 %v3336
    %4054 = vmatprep.subr.mxu0 0.0
    %4055 = vmatpush1.msra.mxu0 %v3337
    %4056 = vmatprep.subr.mxu0 0.0
    %4057 = vmatpush1.msra.mxu0 %v3338
    %4058 = vmatprep.subr.mxu0 0.0
    %4059 = vmatpush1.msra.mxu0 %v3339
    %4060 = vmatprep.subr.mxu0 0.0
    %4061 = vmatpush1.msra.mxu0 0.0
    %4062 = vmatprep.subr.mxu0 0.0
    %4063 = vmatpush1.msra.mxu0 0.0
    %4064 = vmatprep.subr.mxu0 0.0
    %4065 = vmatpush1.msra.mxu0 0.0
    %4066 = vmatprep.subr.mxu0 0.0
    %4067 = vmatpush1.msra.mxu0 0.0
    %4068 = vmatprep.subr.mxu0 0.0
    %4069 = vmatpush1.msra.mxu0 0.0
    %4070 = vmatprep.subr.mxu0 0.0
    %4071 = vmatpush1.msra.mxu0 0.0
    %4072 = vmatprep.subr.mxu0 0.0
    %4073 = vmatpush1.msra.mxu0 0.0
    %4074 = vmatprep.subr.mxu0 0.0
    %4075 = vmatpush1.msra.mxu0 0.0
    %4076 = vmatprep.subr.mxu0 0.0
    %4077 = vmatpush1.msra.mxu0 0.0
    %4078 = vmatprep.subr.mxu0 0.0
    %4079 = vmatpush1.msra.mxu0 0.0
    %4080 = vmatprep.subr.mxu0 0.0
    %4081 = vmatpush1.msra.mxu0 0.0
    %4082 = vmatprep.subr.mxu0 0.0
    %4083 = vmatpush1.msra.mxu0 0.0
    %4084 = vmatprep.subr.mxu0 0.0
    %4085 = vmatpush1.msra.mxu0 0.0
    %4086 = vmatprep.subr.mxu0 0.0
    %4087 = vmatpush1.msra.mxu0 0.0
    %4088 = vmatprep.subr.mxu0 0.0
    %4089 = vmatpush1.msra.mxu0 0.0
    %4090 = vmatprep.subr.mxu0 0.0
    %4091 = vmatpush1.msra.mxu0 0.0
    %4092 = vmatprep.subr.mxu0 0.0
    %4093 = vmatpush1.msra.mxu0 0.0
    %4094 = vmatprep.subr.mxu0 0.0
    %4095 = vmatpush1.msra.mxu0 0.0
    %4096 = vmatprep.subr.mxu0 0.0
    %4097 = vmatpush1.msra.mxu0 0.0
    %4098 = vmatprep.subr.mxu0 0.0
    %4099 = vmatpush1.msra.mxu0 0.0
    %4100 = vmatprep.subr.mxu0 0.0
    %4101 = vmatpush1.msra.mxu0 0.0
    %4102 = vmatprep.subr.mxu0 0.0
    %4103 = vmatpush1.msra.mxu0 0.0
    %4104 = vmatprep.subr.mxu0 0.0
    %4105 = vmatpush1.msra.mxu0 0.0
    %4106 = vmatprep.subr.mxu0 0.0
    %4107 = vmatpush1.msra.mxu0 0.0
    %4108 = vmatprep.mubr.f32.mxu0 0.0
    %4109 = vmatmul.mubr.f32.gmra.mrb[0].mxu0 %v4042
    %v4110 = vpop.f32.mrb[0].mxu0
    %v4111 = vadd.f32 0.0, %v4110
    %v4112 = vpop.f32.mrb[0].mxu0
    %4113 = vdwg.mxu0
    %v4114 = vadd.f32 %v4039, %v4111
    %v4115 = vld [vmem:[%s2912 + $0x2] sm:$0xff]
    %v4117 = vsel %vm298, %v4115, 0
    %4119 = vmatprep.subr.mxu0 0.0
    %4120 = vmatpush1.msra.mxu0 %v3417
    %4121 = vmatprep.subr.mxu0 0.0
    %4122 = vmatpush1.msra.mxu0 %v3418
    %4123 = vmatprep.subr.mxu0 0.0
    %4124 = vmatpush1.msra.mxu0 %v3419
    %4125 = vmatprep.subr.mxu0 0.0
    %4126 = vmatpush1.msra.mxu0 %v3420
    %4127 = vmatprep.subr.mxu0 0.0
    %4128 = vmatpush1.msra.mxu0 %v3421
    %4129 = vmatprep.subr.mxu0 0.0
    %4130 = vmatpush1.msra.mxu0 %v3422
    %4131 = vmatprep.subr.mxu0 0.0
    %4132 = vmatpush1.msra.mxu0 %v3423
    %4133 = vmatprep.subr.mxu0 0.0
    %4134 = vmatpush1.msra.mxu0 %v3424
    %4135 = vmatprep.subr.mxu0 0.0
    %4136 = vmatpush1.msra.mxu0 0.0
    %4137 = vmatprep.subr.mxu0 0.0
    %4138 = vmatpush1.msra.mxu0 0.0
    %4139 = vmatprep.subr.mxu0 0.0
    %4140 = vmatpush1.msra.mxu0 0.0
    %4141 = vmatprep.subr.mxu0 0.0
    %4142 = vmatpush1.msra.mxu0 0.0
    %4143 = vmatprep.subr.mxu0 0.0
    %4144 = vmatpush1.msra.mxu0 0.0
    %4145 = vmatprep.subr.mxu0 0.0
    %4146 = vmatpush1.msra.mxu0 0.0
    %4147 = vmatprep.subr.mxu0 0.0
    %4148 = vmatpush1.msra.mxu0 0.0
    %4149 = vmatprep.subr.mxu0 0.0
    %4150 = vmatpush1.msra.mxu0 0.0
    %4151 = vmatprep.subr.mxu0 0.0
    %4152 = vmatpush1.msra.mxu0 0.0
    %4153 = vmatprep.subr.mxu0 0.0
    %4154 = vmatpush1.msra.mxu0 0.0
    %4155 = vmatprep.subr.mxu0 0.0
    %4156 = vmatpush1.msra.mxu0 0.0
    %4157 = vmatprep.subr.mxu0 0.0
    %4158 = vmatpush1.msra.mxu0 0.0
    %4159 = vmatprep.subr.mxu0 0.0
    %4160 = vmatpush1.msra.mxu0 0.0
    %4161 = vmatprep.subr.mxu0 0.0
    %4162 = vmatpush1.msra.mxu0 0.0
    %4163 = vmatprep.subr.mxu0 0.0
    %4164 = vmatpush1.msra.mxu0 0.0
    %4165 = vmatprep.subr.mxu0 0.0
    %4166 = vmatpush1.msra.mxu0 0.0
    %4167 = vmatprep.subr.mxu0 0.0
    %4168 = vmatpush1.msra.mxu0 0.0
    %4169 = vmatprep.subr.mxu0 0.0
    %4170 = vmatpush1.msra.mxu0 0.0
    %4171 = vmatprep.subr.mxu0 0.0
    %4172 = vmatpush1.msra.mxu0 0.0
    %4173 = vmatprep.subr.mxu0 0.0
    %4174 = vmatpush1.msra.mxu0 0.0
    %4175 = vmatprep.subr.mxu0 0.0
    %4176 = vmatpush1.msra.mxu0 0.0
    %4177 = vmatprep.subr.mxu0 0.0
    %4178 = vmatpush1.msra.mxu0 0.0
    %4179 = vmatprep.subr.mxu0 0.0
    %4180 = vmatpush1.msra.mxu0 0.0
    %4181 = vmatprep.subr.mxu0 0.0
    %4182 = vmatpush1.msra.mxu0 0.0
    %4183 = vmatprep.mubr.f32.mxu0 0.0
    %4184 = vmatmul.mubr.f32.gmra.mrb[0].mxu0 %v4117
    %v4185 = vpop.f32.mrb[0].mxu0
    %v4186 = vadd.f32 0.0, %v4185
    %v4187 = vpop.f32.mrb[0].mxu0
    %4188 = vdwg.mxu0
    %v4189 = vadd.f32 %v4114, %v4186
    %4190 = vrot.lane.b32.xlu0 %v4115, 120
    %v4191 = vpop.permute.xlu0 %4190
    %v4192 = vsel %vm298, %v4191, 0
    %4194 = vmatprep.subr.mxu0 0.0
    %4195 = vmatpush1.msra.mxu0 %v3500
    %4196 = vmatprep.subr.mxu0 0.0
    %4197 = vmatpush1.msra.mxu0 %v3501
    %4198 = vmatprep.subr.mxu0 0.0
    %4199 = vmatpush1.msra.mxu0 %v3502
    %4200 = vmatprep.subr.mxu0 0.0
    %4201 = vmatpush1.msra.mxu0 %v3503
    %4202 = vmatprep.subr.mxu0 0.0
    %4203 = vmatpush1.msra.mxu0 %v3504
    %4204 = vmatprep.subr.mxu0 0.0
    %4205 = vmatpush1.msra.mxu0 %v3505
    %4206 = vmatprep.subr.mxu0 0.0
    %4207 = vmatpush1.msra.mxu0 %v3506
    %4208 = vmatprep.subr.mxu0 0.0
    %4209 = vmatpush1.msra.mxu0 %v3507
    %4210 = vmatprep.subr.mxu0 0.0
    %4211 = vmatpush1.msra.mxu0 0.0
    %4212 = vmatprep.subr.mxu0 0.0
    %4213 = vmatpush1.msra.mxu0 0.0
    %4214 = vmatprep.subr.mxu0 0.0
    %4215 = vmatpush1.msra.mxu0 0.0
    %4216 = vmatprep.subr.mxu0 0.0
    %4217 = vmatpush1.msra.mxu0 0.0
    %4218 = vmatprep.subr.mxu0 0.0
    %4219 = vmatpush1.msra.mxu0 0.0
    %4220 = vmatprep.subr.mxu0 0.0
    %4221 = vmatpush1.msra.mxu0 0.0
    %4222 = vmatprep.subr.mxu0 0.0
    %4223 = vmatpush1.msra.mxu0 0.0
    %4224 = vmatprep.subr.mxu0 0.0
    %4225 = vmatpush1.msra.mxu0 0.0
    %4226 = vmatprep.subr.mxu0 0.0
    %4227 = vmatpush1.msra.mxu0 0.0
    %4228 = vmatprep.subr.mxu0 0.0
    %4229 = vmatpush1.msra.mxu0 0.0
    %4230 = vmatprep.subr.mxu0 0.0
    %4231 = vmatpush1.msra.mxu0 0.0
    %4232 = vmatprep.subr.mxu0 0.0
    %4233 = vmatpush1.msra.mxu0 0.0
    %4234 = vmatprep.subr.mxu0 0.0
    %4235 = vmatpush1.msra.mxu0 0.0
    %4236 = vmatprep.subr.mxu0 0.0
    %4237 = vmatpush1.msra.mxu0 0.0
    %4238 = vmatprep.subr.mxu0 0.0
    %4239 = vmatpush1.msra.mxu0 0.0
    %4240 = vmatprep.subr.mxu0 0.0
    %4241 = vmatpush1.msra.mxu0 0.0
    %4242 = vmatprep.subr.mxu0 0.0
    %4243 = vmatpush1.msra.mxu0 0.0
    %4244 = vmatprep.subr.mxu0 0.0
    %4245 = vmatpush1.msra.mxu0 0.0
    %4246 = vmatprep.subr.mxu0 0.0
    %4247 = vmatpush1.msra.mxu0 0.0
    %4248 = vmatprep.subr.mxu0 0.0
    %4249 = vmatpush1.msra.mxu0 0.0
    %4250 = vmatprep.subr.mxu0 0.0
    %4251 = vmatpush1.msra.mxu0 0.0
    %4252 = vmatprep.subr.mxu0 0.0
    %4253 = vmatpush1.msra.mxu0 0.0
    %4254 = vmatprep.subr.mxu0 0.0
    %4255 = vmatpush1.msra.mxu0 0.0
    %4256 = vmatprep.subr.mxu0 0.0
    %4257 = vmatpush1.msra.mxu0 0.0
    %4258 = vmatprep.mubr.f32.mxu0 0.0
    %4259 = vmatmul.mubr.f32.gmra.mrb[0].mxu0 %v4192
    %v4260 = vpop.f32.mrb[0].mxu0
    %v4261 = vadd.f32 0.0, %v4260
    %v4262 = vpop.f32.mrb[0].mxu0
    %4263 = vdwg.mxu0
    %v4264 = vadd.f32 %v4189, %v4261
    %4265 = vrot.lane.b32.xlu0 %v4115, 112
    %v4266 = vpop.permute.xlu0 %4265
    %v4267 = vsel %vm298, %v4266, 0
    %4269 = vmatprep.subr.mxu0 0.0
    %4270 = vmatpush1.msra.mxu0 %v3584
    %4271 = vmatprep.subr.mxu0 0.0
    %4272 = vmatpush1.msra.mxu0 %v3585
    %4273 = vmatprep.subr.mxu0 0.0
    %4274 = vmatpush1.msra.mxu0 %v3586
    %4275 = vmatprep.subr.mxu0 0.0
    %4276 = vmatpush1.msra.mxu0 %v3587
    %4277 = vmatprep.subr.mxu0 0.0
    %4278 = vmatpush1.msra.mxu0 %v3588
    %4279 = vmatprep.subr.mxu0 0.0
    %4280 = vmatpush1.msra.mxu0 %v3589
    %4281 = vmatprep.subr.mxu0 0.0
    %4282 = vmatpush1.msra.mxu0 %v3590
    %4283 = vmatprep.subr.mxu0 0.0
    %4284 = vmatpush1.msra.mxu0 %v3591
    %4285 = vmatprep.subr.mxu0 0.0
    %4286 = vmatpush1.msra.mxu0 0.0
    %4287 = vmatprep.subr.mxu0 0.0
    %4288 = vmatpush1.msra.mxu0 0.0
    %4289 = vmatprep.subr.mxu0 0.0
    %4290 = vmatpush1.msra.mxu0 0.0
    %4291 = vmatprep.subr.mxu0 0.0
    %4292 = vmatpush1.msra.mxu0 0.0
    %4293 = vmatprep.subr.mxu0 0.0
    %4294 = vmatpush1.msra.mxu0 0.0
    %4295 = vmatprep.subr.mxu0 0.0
    %4296 = vmatpush1.msra.mxu0 0.0
    %4297 = vmatprep.subr.mxu0 0.0
    %4298 = vmatpush1.msra.mxu0 0.0
    %4299 = vmatprep.subr.mxu0 0.0
    %4300 = vmatpush1.msra.mxu0 0.0
    %4301 = vmatprep.subr.mxu0 0.0
    %4302 = vmatpush1.msra.mxu0 0.0
    %4303 = vmatprep.subr.mxu0 0.0
    %4304 = vmatpush1.msra.mxu0 0.0
    %4305 = vmatprep.subr.mxu0 0.0
    %4306 = vmatpush1.msra.mxu0 0.0
    %4307 = vmatprep.subr.mxu0 0.0
    %4308 = vmatpush1.msra.mxu0 0.0
    %4309 = vmatprep.subr.mxu0 0.0
    %4310 = vmatpush1.msra.mxu0 0.0
    %4311 = vmatprep.subr.mxu0 0.0
    %4312 = vmatpush1.msra.mxu0 0.0
    %4313 = vmatprep.subr.mxu0 0.0
    %4314 = vmatpush1.msra.mxu0 0.0
    %4315 = vmatprep.subr.mxu0 0.0
    %4316 = vmatpush1.msra.mxu0 0.0
    %4317 = vmatprep.subr.mxu0 0.0
    %4318 = vmatpush1.msra.mxu0 0.0
    %4319 = vmatprep.subr.mxu0 0.0
    %4320 = vmatpush1.msra.mxu0 0.0
    %4321 = vmatprep.subr.mxu0 0.0
    %4322 = vmatpush1.msra.mxu0 0.0
    %4323 = vmatprep.subr.mxu0 0.0
    %4324 = vmatpush1.msra.mxu0 0.0
    %4325 = vmatprep.subr.mxu0 0.0
    %4326 = vmatpush1.msra.mxu0 0.0
    %4327 = vmatprep.subr.mxu0 0.0
    %4328 = vmatpush1.msra.mxu0 0.0
    %4329 = vmatprep.subr.mxu0 0.0
    %4330 = vmatpush1.msra.mxu0 0.0
    %4331 = vmatprep.subr.mxu0 0.0
    %4332 = vmatpush1.msra.mxu0 0.0
    %4333 = vmatprep.mubr.f32.mxu0 0.0
    %4334 = vmatmul.mubr.f32.gmra.mrb[0].mxu0 %v4267
    %v4335 = vpop.f32.mrb[0].mxu0
    %v4336 = vadd.f32 0.0, %v4335
    %v4337 = vpop.f32.mrb[0].mxu0
    %4338 = vdwg.mxu0
    %v4339 = vadd.f32 %v4264, %v4336
    %v4340 = vsel %vm298, %v3666, 0.0
    %v4341 = vrot.slane %v4340, 4
    %v4342 = vadd.f32 %v4340, %v4341
    %v4343 = vrot.slane %v4342, 2
    %v4344 = vadd.f32 %v4342, %v4343
    %v4345 = vrot.slane %v4344, 1
    %v4346 = vadd.f32 %v4344, %v4345
    %v4347 = vadd.f32 %v4346, 0.0
    %v4348 = vmul.f32 %v3666, %v3666
    %v4349 = vsel %vm298, %v4348, 0.0
    %v4350 = vrot.slane %v4349, 4
    %v4351 = vadd.f32 %v4349, %v4350
    %v4352 = vrot.slane %v4351, 2
    %v4353 = vadd.f32 %v4351, %v4352
    %v4354 = vrot.slane %v4353, 1
    %v4355 = vadd.f32 %v4353, %v4354
    %v4356 = vadd.f32 %v4355, 0.0
    %v4357 = vsel %vm298, %v4339, 0.0
    %v4358 = vrot.slane %v4357, 4
    %v4359 = vadd.f32 %v4357, %v4358
    %v4360 = vrot.slane %v4359, 2
    %v4361 = vadd.f32 %v4359, %v4360
    %v4362 = vrot.slane %v4361, 1
    %v4363 = vadd.f32 %v4361, %v4362
    %v4364 = vadd.f32 %v4347, %v4363
    %v4365 = vmul.f32 %v4339, %v4339
    %v4366 = vsel %vm298, %v4365, 0.0
    %v4367 = vrot.slane %v4366, 4
    %v4368 = vadd.f32 %v4366, %v4367
    %v4369 = vrot.slane %v4368, 2
    %v4370 = vadd.f32 %v4368, %v4369
    %v4371 = vrot.slane %v4370, 1
    %v4372 = vadd.f32 %v4370, %v4371
    %v4373 = vadd.f32 %v4356, %v4372
    %v4374 = vld [vmem:[%s9] sm:$0xff]
    %v4375 = vld [vmem:[%s9 + $0x8] sm:$0xff]
    %v4376 = vld [vmem:[%s9 + $0x10] sm:$0xff]
    %v4377 = vld [vmem:[%s9 + $0x18] sm:$0xff]
    %v4378 = vld [vmem:[%s9 + $0x20] sm:$0xff]
    %v4379 = vld [vmem:[%s9 + $0x28] sm:$0xff]
    %v4380 = vld [vmem:[%s9 + $0x30] sm:$0xff]
    %v4381 = vld [vmem:[%s9 + $0x38] sm:$0xff]
    %v4383 = vsel %vm298, %v4364, 0
    %4385 = vmatprep.subr.mxu0 0.0
    %4386 = vmatpush1.msra.mxu0 %v4374
    %4387 = vmatprep.subr.mxu0 0.0
    %4388 = vmatpush1.msra.mxu0 %v4375
    %4389 = vmatprep.subr.mxu0 0.0
    %4390 = vmatpush1.msra.mxu0 %v4376
    %4391 = vmatprep.subr.mxu0 0.0
    %4392 = vmatpush1.msra.mxu0 %v4377
    %4393 = vmatprep.subr.mxu0 0.0
    %4394 = vmatpush1.msra.mxu0 %v4378
    %4395 = vmatprep.subr.mxu0 0.0
    %4396 = vmatpush1.msra.mxu0 %v4379
    %4397 = vmatprep.subr.mxu0 0.0
    %4398 = vmatpush1.msra.mxu0 %v4380
    %4399 = vmatprep.subr.mxu0 0.0
    %4400 = vmatpush1.msra.mxu0 %v4381
    %4401 = vmatprep.subr.mxu0 0.0
    %4402 = vmatpush1.msra.mxu0 0.0
    %4403 = vmatprep.subr.mxu0 0.0
    %4404 = vmatpush1.msra.mxu0 0.0
    %4405 = vmatprep.subr.mxu0 0.0
    %4406 = vmatpush1.msra.mxu0 0.0
    %4407 = vmatprep.subr.mxu0 0.0
    %4408 = vmatpush1.msra.mxu0 0.0
    %4409 = vmatprep.subr.mxu0 0.0
    %4410 = vmatpush1.msra.mxu0 0.0
    %4411 = vmatprep.subr.mxu0 0.0
    %4412 = vmatpush1.msra.mxu0 0.0
    %4413 = vmatprep.subr.mxu0 0.0
    %4414 = vmatpush1.msra.mxu0 0.0
    %4415 = vmatprep.subr.mxu0 0.0
    %4416 = vmatpush1.msra.mxu0 0.0
    %4417 = vmatprep.subr.mxu0 0.0
    %4418 = vmatpush1.msra.mxu0 0.0
    %4419 = vmatprep.subr.mxu0 0.0
    %4420 = vmatpush1.msra.mxu0 0.0
    %4421 = vmatprep.subr.mxu0 0.0
    %4422 = vmatpush1.msra.mxu0 0.0
    %4423 = vmatprep.subr.mxu0 0.0
    %4424 = vmatpush1.msra.mxu0 0.0
    %4425 = vmatprep.subr.mxu0 0.0
    %4426 = vmatpush1.msra.mxu0 0.0
    %4427 = vmatprep.subr.mxu0 0.0
    %4428 = vmatpush1.msra.mxu0 0.0
    %4429 = vmatprep.subr.mxu0 0.0
    %4430 = vmatpush1.msra.mxu0 0.0
    %4431 = vmatprep.subr.mxu0 0.0
    %4432 = vmatpush1.msra.mxu0 0.0
    %4433 = vmatprep.subr.mxu0 0.0
    %4434 = vmatpush1.msra.mxu0 0.0
    %4435 = vmatprep.subr.mxu0 0.0
    %4436 = vmatpush1.msra.mxu0 0.0
    %4437 = vmatprep.subr.mxu0 0.0
    %4438 = vmatpush1.msra.mxu0 0.0
    %4439 = vmatprep.subr.mxu0 0.0
    %4440 = vmatpush1.msra.mxu0 0.0
    %4441 = vmatprep.subr.mxu0 0.0
    %4442 = vmatpush1.msra.mxu0 0.0
    %4443 = vmatprep.subr.mxu0 0.0
    %4444 = vmatpush1.msra.mxu0 0.0
    %4445 = vmatprep.subr.mxu0 0.0
    %4446 = vmatpush1.msra.mxu0 0.0
    %4447 = vmatprep.subr.mxu0 0.0
    %4448 = vmatpush1.msra.mxu0 0.0
    %4449 = vmatprep.mubr.f32.mxu0 0.0
    %4450 = vmatmul.mubr.f32.gmra.mrb[0].mxu0 %v4383
    %v4451 = vpop.f32.mrb[0].mxu0
    %v4452 = vadd.f32 0.0, %v4451
    %v4453 = vpop.f32.mrb[0].mxu0
    %4454 = vdwg.mxu0
    %v4456 = vsel %vm298, %v4373, 0
    %4458 = vmatprep.subr.mxu0 0.0
    %4459 = vmatpush1.msra.mxu0 %v4374
    %4460 = vmatprep.subr.mxu0 0.0
    %4461 = vmatpush1.msra.mxu0 %v4375
    %4462 = vmatprep.subr.mxu0 0.0
    %4463 = vmatpush1.msra.mxu0 %v4376
    %4464 = vmatprep.subr.mxu0 0.0
    %4465 = vmatpush1.msra.mxu0 %v4377
    %4466 = vmatprep.subr.mxu0 0.0
    %4467 = vmatpush1.msra.mxu0 %v4378
    %4468 = vmatprep.subr.mxu0 0.0
    %4469 = vmatpush1.msra.mxu0 %v4379
    %4470 = vmatprep.subr.mxu0 0.0
    %4471 = vmatpush1.msra.mxu0 %v4380
    %4472 = vmatprep.subr.mxu0 0.0
    %4473 = vmatpush1.msra.mxu0 %v4381
    %4474 = vmatprep.subr.mxu0 0.0
    %4475 = vmatpush1.msra.mxu0 0.0
    %4476 = vmatprep.subr.mxu0 0.0
    %4477 = vmatpush1.msra.mxu0 0.0
    %4478 = vmatprep.subr.mxu0 0.0
    %4479 = vmatpush1.msra.mxu0 0.0
    %4480 = vmatprep.subr.mxu0 0.0
    %4481 = vmatpush1.msra.mxu0 0.0
    %4482 = vmatprep.subr.mxu0 0.0
    %4483 = vmatpush1.msra.mxu0 0.0
    %4484 = vmatprep.subr.mxu0 0.0
    %4485 = vmatpush1.msra.mxu0 0.0
    %4486 = vmatprep.subr.mxu0 0.0
    %4487 = vmatpush1.msra.mxu0 0.0
    %4488 = vmatprep.subr.mxu0 0.0
    %4489 = vmatpush1.msra.mxu0 0.0
    %4490 = vmatprep.subr.mxu0 0.0
    %4491 = vmatpush1.msra.mxu0 0.0
    %4492 = vmatprep.subr.mxu0 0.0
    %4493 = vmatpush1.msra.mxu0 0.0
    %4494 = vmatprep.subr.mxu0 0.0
    %4495 = vmatpush1.msra.mxu0 0.0
    %4496 = vmatprep.subr.mxu0 0.0
    %4497 = vmatpush1.msra.mxu0 0.0
    %4498 = vmatprep.subr.mxu0 0.0
    %4499 = vmatpush1.msra.mxu0 0.0
    %4500 = vmatprep.subr.mxu0 0.0
    %4501 = vmatpush1.msra.mxu0 0.0
    %4502 = vmatprep.subr.mxu0 0.0
    %4503 = vmatpush1.msra.mxu0 0.0
    %4504 = vmatprep.subr.mxu0 0.0
    %4505 = vmatpush1.msra.mxu0 0.0
    %4506 = vmatprep.subr.mxu0 0.0
    %4507 = vmatpush1.msra.mxu0 0.0
    %4508 = vmatprep.subr.mxu0 0.0
    %4509 = vmatpush1.msra.mxu0 0.0
    %4510 = vmatprep.subr.mxu0 0.0
    %4511 = vmatpush1.msra.mxu0 0.0
    %4512 = vmatprep.subr.mxu0 0.0
    %4513 = vmatpush1.msra.mxu0 0.0
    %4514 = vmatprep.subr.mxu0 0.0
    %4515 = vmatpush1.msra.mxu0 0.0
    %4516 = vmatprep.subr.mxu0 0.0
    %4517 = vmatpush1.msra.mxu0 0.0
    %4518 = vmatprep.subr.mxu0 0.0
    %4519 = vmatpush1.msra.mxu0 0.0
    %4520 = vmatprep.subr.mxu0 0.0
    %4521 = vmatpush1.msra.mxu0 0.0
    %4522 = vmatprep.mubr.f32.mxu0 0.0
    %4523 = vmatmul.mubr.f32.gmra.mrb[0].mxu0 %v4456
    %v4524 = vpop.f32.mrb[0].mxu0
    %v4525 = vadd.f32 0.0, %v4524
    %v4526 = vpop.f32.mrb[0].mxu0
    %4527 = vdwg.mxu0
    %v4528 = vrcp.pop 128.0
    %v4529 = vmul.f32 %v4452, %v4528
    %v4530 = vmul.f32 %v4525, %v4528
    %v4531 = vmul.f32 %v4529, %v4529
    %v4532 = vsub.f32 %v4530, %v4531
    %v4533 = vmax.f32 %v4532, 0.0
    %v4534 = vld [vmem:[%s11] sm:$0x1]
    %v4535 = vadd.f32 %v4533, 1e-05
    %v4536 = vrsqrt.pop %v4535
    %v4537 = vmul.f32 %v4534, %v4536
    %v4538 = vld [vmem:[#allocation10] sm:$0x1]
    %v4539 = vmul.f32 %v4529, %v4537
    %v4540 = vsub.f32 %v4538, %v4539
    %v4541 = vld [vmem:[#allocation9] sm:$0xff]
    %v4543 = vsel %vm2082, %v4537, 0
    %4545 = vmatprep.subr.mxu0 0.0
    %4546 = vmatpush1.msra.mxu0 %v4541
    %4547 = vmatprep.subr.mxu0 0.0
    %4548 = vmatpush1.msra.mxu0 0.0
    %4549 = vmatprep.subr.mxu0 0.0
    %4550 = vmatpush1.msra.mxu0 0.0
    %4551 = vmatprep.subr.mxu0 0.0
    %4552 = vmatpush1.msra.mxu0 0.0
    %4553 = vmatprep.subr.mxu0 0.0
    %4554 = vmatpush1.msra.mxu0 0.0
    %4555 = vmatprep.subr.mxu0 0.0
    %4556 = vmatpush1.msra.mxu0 0.0
    %4557 = vmatprep.subr.mxu0 0.0
    %4558 = vmatpush1.msra.mxu0 0.0
    %4559 = vmatprep.subr.mxu0 0.0
    %4560 = vmatpush1.msra.mxu0 0.0
    %4561 = vmatprep.subr.mxu0 0.0
    %4562 = vmatpush1.msra.mxu0 0.0
    %4563 = vmatprep.subr.mxu0 0.0
    %4564 = vmatpush1.msra.mxu0 0.0
    %4565 = vmatprep.subr.mxu0 0.0
    %4566 = vmatpush1.msra.mxu0 0.0
    %4567 = vmatprep.subr.mxu0 0.0
    %4568 = vmatpush1.msra.mxu0 0.0
    %4569 = vmatprep.subr.mxu0 0.0
    %4570 = vmatpush1.msra.mxu0 0.0
    %4571 = vmatprep.subr.mxu0 0.0
    %4572 = vmatpush1.msra.mxu0 0.0
    %4573 = vmatprep.subr.mxu0 0.0
    %4574 = vmatpush1.msra.mxu0 0.0
    %4575 = vmatprep.subr.mxu0 0.0
    %4576 = vmatpush1.msra.mxu0 0.0
    %4577 = vmatprep.subr.mxu0 0.0
    %4578 = vmatpush1.msra.mxu0 0.0
    %4579 = vmatprep.subr.mxu0 0.0
    %4580 = vmatpush1.msra.mxu0 0.0
    %4581 = vmatprep.subr.mxu0 0.0
    %4582 = vmatpush1.msra.mxu0 0.0
    %4583 = vmatprep.subr.mxu0 0.0
    %4584 = vmatpush1.msra.mxu0 0.0
    %4585 = vmatprep.subr.mxu0 0.0
    %4586 = vmatpush1.msra.mxu0 0.0
    %4587 = vmatprep.subr.mxu0 0.0
    %4588 = vmatpush1.msra.mxu0 0.0
    %4589 = vmatprep.subr.mxu0 0.0
    %4590 = vmatpush1.msra.mxu0 0.0
    %4591 = vmatprep.subr.mxu0 0.0
    %4592 = vmatpush1.msra.mxu0 0.0
    %4593 = vmatprep.subr.mxu0 0.0
    %4594 = vmatpush1.msra.mxu0 0.0
    %4595 = vmatprep.subr.mxu0 0.0
    %4596 = vmatpush1.msra.mxu0 0.0
    %4597 = vmatprep.subr.mxu0 0.0
    %4598 = vmatpush1.msra.mxu0 0.0
    %4599 = vmatprep.subr.mxu0 0.0
    %4600 = vmatpush1.msra.mxu0 0.0
    %4601 = vmatprep.subr.mxu0 0.0
    %4602 = vmatpush1.msra.mxu0 0.0
    %4603 = vmatprep.subr.mxu0 0.0
    %4604 = vmatpush1.msra.mxu0 0.0
    %4605 = vmatprep.subr.mxu0 0.0
    %4606 = vmatpush1.msra.mxu0 0.0
    %4607 = vmatprep.subr.mxu0 0.0
    %4608 = vmatpush1.msra.mxu0 0.0
    %4609 = vmatprep.mubr.f32.mxu0 0.0
    %4610 = vmatmul.mubr.f32.gmra.mrb[0].mxu0 %v4543
    %v4611 = vpop.f32.mrb[0].mxu0
    %v4612 = vadd.f32 0.0, %v4611
    %v4613 = vpop.f32.mrb[0].mxu0
    %4614 = vdwg.mxu0
    %v4616 = vsel %vm2082, %v4540, 0
    %4618 = vmatprep.subr.mxu0 0.0
    %4619 = vmatpush1.msra.mxu0 %v4541
    %4620 = vmatprep.subr.mxu0 0.0
    %4621 = vmatpush1.msra.mxu0 0.0
    %4622 = vmatprep.subr.mxu0 0.0
    %4623 = vmatpush1.msra.mxu0 0.0
    %4624 = vmatprep.subr.mxu0 0.0
    %4625 = vmatpush1.msra.mxu0 0.0
    %4626 = vmatprep.subr.mxu0 0.0
    %4627 = vmatpush1.msra.mxu0 0.0
    %4628 = vmatprep.subr.mxu0 0.0
    %4629 = vmatpush1.msra.mxu0 0.0
    %4630 = vmatprep.subr.mxu0 0.0
    %4631 = vmatpush1.msra.mxu0 0.0
    %4632 = vmatprep.subr.mxu0 0.0
    %4633 = vmatpush1.msra.mxu0 0.0
    %4634 = vmatprep.subr.mxu0 0.0
    %4635 = vmatpush1.msra.mxu0 0.0
    %4636 = vmatprep.subr.mxu0 0.0
    %4637 = vmatpush1.msra.mxu0 0.0
    %4638 = vmatprep.subr.mxu0 0.0
    %4639 = vmatpush1.msra.mxu0 0.0
    %4640 = vmatprep.subr.mxu0 0.0
    %4641 = vmatpush1.msra.mxu0 0.0
    %4642 = vmatprep.subr.mxu0 0.0
    %4643 = vmatpush1.msra.mxu0 0.0
    %4644 = vmatprep.subr.mxu0 0.0
    %4645 = vmatpush1.msra.mxu0 0.0
    %4646 = vmatprep.subr.mxu0 0.0
    %4647 = vmatpush1.msra.mxu0 0.0
    %4648 = vmatprep.subr.mxu0 0.0
    %4649 = vmatpush1.msra.mxu0 0.0
    %4650 = vmatprep.subr.mxu0 0.0
    %4651 = vmatpush1.msra.mxu0 0.0
    %4652 = vmatprep.subr.mxu0 0.0
    %4653 = vmatpush1.msra.mxu0 0.0
    %4654 = vmatprep.subr.mxu0 0.0
    %4655 = vmatpush1.msra.mxu0 0.0
    %4656 = vmatprep.subr.mxu0 0.0
    %4657 = vmatpush1.msra.mxu0 0.0
    %4658 = vmatprep.subr.mxu0 0.0
    %4659 = vmatpush1.msra.mxu0 0.0
    %4660 = vmatprep.subr.mxu0 0.0
    %4661 = vmatpush1.msra.mxu0 0.0
    %4662 = vmatprep.subr.mxu0 0.0
    %4663 = vmatpush1.msra.mxu0 0.0
    %4664 = vmatprep.subr.mxu0 0.0
    %4665 = vmatpush1.msra.mxu0 0.0
    %4666 = vmatprep.subr.mxu0 0.0
    %4667 = vmatpush1.msra.mxu0 0.0
    %4668 = vmatprep.subr.mxu0 0.0
    %4669 = vmatpush1.msra.mxu0 0.0
    %4670 = vmatprep.subr.mxu0 0.0
    %4671 = vmatpush1.msra.mxu0 0.0
    %4672 = vmatprep.subr.mxu0 0.0
    %4673 = vmatpush1.msra.mxu0 0.0
    %4674 = vmatprep.subr.mxu0 0.0
    %4675 = vmatpush1.msra.mxu0 0.0
    %4676 = vmatprep.subr.mxu0 0.0
    %4677 = vmatpush1.msra.mxu0 0.0
    %4678 = vmatprep.subr.mxu0 0.0
    %4679 = vmatpush1.msra.mxu0 0.0
    %4680 = vmatprep.subr.mxu0 0.0
    %4681 = vmatpush1.msra.mxu0 0.0
    %4682 = vmatprep.mubr.f32.mxu0 0.0
    %4683 = vmatmul.mubr.f32.gmra.mrb[0].mxu0 %v4616
    %v4684 = vpop.f32.mrb[0].mxu0
    %v4685 = vadd.f32 0.0, %v4684
    %v4686 = vpop.f32.mrb[0].mxu0
    %4687 = vdwg.mxu0
    %v4688 = vlaneseq
    %v4689 = vshrl.u32 %v4688, 7
    %v4690 = vsub.s32 0, %v4689
    %v4691 = vrot.slane %v4612, %v4690
    %v4692 = vmul.f32 %v3666, %v4691
    %v4693 = vlaneseq
    %v4694 = vshrl.u32 %v4693, 7
    %v4695 = vsub.s32 0, %v4694
    %v4696 = vrot.slane %v4685, %v4695
    %v4697 = vadd.f32 %v4692, %v4696
    %v4698 = vmax.f32 %v4697, 0.0
    %v4699 = vld [vmem:[#allocation12] sm:$0xf]
    %v4701 = vsel %vm2082, %v4699, 0
    %4703 = vmatprep.subr.mxu0 0.0
    %4704 = vmatpush1.msra.mxu0 %v4698
    %4705 = vmatprep.subr.mxu0 0.0
    %4706 = vmatpush1.msra.mxu0 0.0
    %4707 = vmatprep.subr.mxu0 0.0
    %4708 = vmatpush1.msra.mxu0 0.0
    %4709 = vmatprep.subr.mxu0 0.0
    %4710 = vmatpush1.msra.mxu0 0.0
    %4711 = vmatprep.subr.mxu0 0.0
    %4712 = vmatpush1.msra.mxu0 0.0
    %4713 = vmatprep.subr.mxu0 0.0
    %4714 = vmatpush1.msra.mxu0 0.0
    %4715 = vmatprep.subr.mxu0 0.0
    %4716 = vmatpush1.msra.mxu0 0.0
    %4717 = vmatprep.subr.mxu0 0.0
    %4718 = vmatpush1.msra.mxu0 0.0
    %4719 = vmatprep.subr.mxu0 0.0
    %4720 = vmatpush1.msra.mxu0 0.0
    %4721 = vmatprep.subr.mxu0 0.0
    %4722 = vmatpush1.msra.mxu0 0.0
    %4723 = vmatprep.subr.mxu0 0.0
    %4724 = vmatpush1.msra.mxu0 0.0
    %4725 = vmatprep.subr.mxu0 0.0
    %4726 = vmatpush1.msra.mxu0 0.0
    %4727 = vmatprep.subr.mxu0 0.0
    %4728 = vmatpush1.msra.mxu0 0.0
    %4729 = vmatprep.subr.mxu0 0.0
    %4730 = vmatpush1.msra.mxu0 0.0
    %4731 = vmatprep.subr.mxu0 0.0
    %4732 = vmatpush1.msra.mxu0 0.0
    %4733 = vmatprep.subr.mxu0 0.0
    %4734 = vmatpush1.msra.mxu0 0.0
    %4735 = vmatprep.subr.mxu0 0.0
    %4736 = vmatpush1.msra.mxu0 0.0
    %4737 = vmatprep.subr.mxu0 0.0
    %4738 = vmatpush1.msra.mxu0 0.0
    %4739 = vmatprep.subr.mxu0 0.0
    %4740 = vmatpush1.msra.mxu0 0.0
    %4741 = vmatprep.subr.mxu0 0.0
    %4742 = vmatpush1.msra.mxu0 0.0
    %4743 = vmatprep.subr.mxu0 0.0
    %4744 = vmatpush1.msra.mxu0 0.0
    %4745 = vmatprep.subr.mxu0 0.0
    %4746 = vmatpush1.msra.mxu0 0.0
    %4747 = vmatprep.subr.mxu0 0.0
    %4748 = vmatpush1.msra.mxu0 0.0
    %4749 = vmatprep.subr.mxu0 0.0
    %4750 = vmatpush1.msra.mxu0 0.0
    %4751 = vmatprep.subr.mxu0 0.0
    %4752 = vmatpush1.msra.mxu0 0.0
    %4753 = vmatprep.subr.mxu0 0.0
    %4754 = vmatpush1.msra.mxu0 0.0
    %4755 = vmatprep.subr.mxu0 0.0
    %4756 = vmatpush1.msra.mxu0 0.0
    %4757 = vmatprep.subr.mxu0 0.0
    %4758 = vmatpush1.msra.mxu0 0.0
    %4759 = vmatprep.subr.mxu0 0.0
    %4760 = vmatpush1.msra.mxu0 0.0
    %4761 = vmatprep.subr.mxu0 0.0
    %4762 = vmatpush1.msra.mxu0 0.0
    %4763 = vmatprep.subr.mxu0 0.0
    %4764 = vmatpush1.msra.mxu0 0.0
    %4765 = vmatprep.subr.mxu0 0.0
    %4766 = vmatpush1.msra.mxu0 0.0
    %4767 = vmatprep.mubr.f32.mxu0 0.0
    %4768 = vmatmul.mubr.f32.gmra.mrb[0].mxu0 %v4701
    %v4769 = vpop.f32.mrb[0].mxu0
    %v4770 = vadd.f32 0.0, %v4769
    %v4771 = vpop.f32.mrb[0].mxu0
    %4772 = vdwg.mxu0
    %s4773 = scalar_lea.vmem [#allocation12], 4
    %v4774 = vld [vmem:[%s4773] sm:$0xf]
    %v4776 = vsel %vm2082, %v4774, 0
    %4778 = vmatprep.subr.mxu0 0.0
    %4779 = vmatpush1.msra.mxu0 %v4698
    %4780 = vmatprep.subr.mxu0 0.0
    %4781 = vmatpush1.msra.mxu0 0.0
    %4782 = vmatprep.subr.mxu0 0.0
    %4783 = vmatpush1.msra.mxu0 0.0
    %4784 = vmatprep.subr.mxu0 0.0
    %4785 = vmatpush1.msra.mxu0 0.0
    %4786 = vmatprep.subr.mxu0 0.0
    %4787 = vmatpush1.msra.mxu0 0.0
    %4788 = vmatprep.subr.mxu0 0.0
    %4789 = vmatpush1.msra.mxu0 0.0
    %4790 = vmatprep.subr.mxu0 0.0
    %4791 = vmatpush1.msra.mxu0 0.0
    %4792 = vmatprep.subr.mxu0 0.0
    %4793 = vmatpush1.msra.mxu0 0.0
    %4794 = vmatprep.subr.mxu0 0.0
    %4795 = vmatpush1.msra.mxu0 0.0
    %4796 = vmatprep.subr.mxu0 0.0
    %4797 = vmatpush1.msra.mxu0 0.0
    %4798 = vmatprep.subr.mxu0 0.0
    %4799 = vmatpush1.msra.mxu0 0.0
    %4800 = vmatprep.subr.mxu0 0.0
    %4801 = vmatpush1.msra.mxu0 0.0
    %4802 = vmatprep.subr.mxu0 0.0
    %4803 = vmatpush1.msra.mxu0 0.0
    %4804 = vmatprep.subr.mxu0 0.0
    %4805 = vmatpush1.msra.mxu0 0.0
    %4806 = vmatprep.subr.mxu0 0.0
    %4807 = vmatpush1.msra.mxu0 0.0
    %4808 = vmatprep.subr.mxu0 0.0
    %4809 = vmatpush1.msra.mxu0 0.0
    %4810 = vmatprep.subr.mxu0 0.0
    %4811 = vmatpush1.msra.mxu0 0.0
    %4812 = vmatprep.subr.mxu0 0.0
    %4813 = vmatpush1.msra.mxu0 0.0
    %4814 = vmatprep.subr.mxu0 0.0
    %4815 = vmatpush1.msra.mxu0 0.0
    %4816 = vmatprep.subr.mxu0 0.0
    %4817 = vmatpush1.msra.mxu0 0.0
    %4818 = vmatprep.subr.mxu0 0.0
    %4819 = vmatpush1.msra.mxu0 0.0
    %4820 = vmatprep.subr.mxu0 0.0
    %4821 = vmatpush1.msra.mxu0 0.0
    %4822 = vmatprep.subr.mxu0 0.0
    %4823 = vmatpush1.msra.mxu0 0.0
    %4824 = vmatprep.subr.mxu0 0.0
    %4825 = vmatpush1.msra.mxu0 0.0
    %4826 = vmatprep.subr.mxu0 0.0
    %4827 = vmatpush1.msra.mxu0 0.0
    %4828 = vmatprep.subr.mxu0 0.0
    %4829 = vmatpush1.msra.mxu0 0.0
    %4830 = vmatprep.subr.mxu0 0.0
    %4831 = vmatpush1.msra.mxu0 0.0
    %4832 = vmatprep.subr.mxu0 0.0
    %4833 = vmatpush1.msra.mxu0 0.0
    %4834 = vmatprep.subr.mxu0 0.0
    %4835 = vmatpush1.msra.mxu0 0.0
    %4836 = vmatprep.subr.mxu0 0.0
    %4837 = vmatpush1.msra.mxu0 0.0
    %4838 = vmatprep.subr.mxu0 0.0
    %4839 = vmatpush1.msra.mxu0 0.0
    %4840 = vmatprep.subr.mxu0 0.0
    %4841 = vmatpush1.msra.mxu0 0.0
    %4842 = vmatprep.mubr.f32.mxu0 0.0
    %4843 = vmatmul.mubr.f32.gmra.mrb[0].mxu0 %v4776
    %v4844 = vpop.f32.mrb[0].mxu0
    %v4845 = vadd.f32 0.0, %v4844
    %v4846 = vpop.f32.mrb[0].mxu0
    %4847 = vdwg.mxu0
    %v4848 = vmax.f32 %v4770, %v4845
    %v4849 = vld [vmem:[%s14] sm:$0xff]
    %v4850 = vld [vmem:[%s14 + $0x8] sm:$0xff]
    %v4851 = vld [vmem:[%s14 + $0x10] sm:$0xff]
    %v4852 = vld [vmem:[%s14 + $0x18] sm:$0xff]
    %v4853 = vld [vmem:[%s14 + $0x20] sm:$0xff]
    %v4854 = vld [vmem:[%s14 + $0x28] sm:$0xff]
    %v4855 = vld [vmem:[%s14 + $0x30] sm:$0xff]
    %v4856 = vld [vmem:[%s14 + $0x38] sm:$0xff]
    %v4858 = vsel %vm298, %v4848, 0
    %4860 = vmatprep.subr.mxu0 0.0
    %4861 = vmatpush1.msra.mxu0 %v4849
    %4862 = vmatprep.subr.mxu0 0.0
    %4863 = vmatpush1.msra.mxu0 %v4850
    %4864 = vmatprep.subr.mxu0 0.0
    %4865 = vmatpush1.msra.mxu0 %v4851
    %4866 = vmatprep.subr.mxu0 0.0
    %4867 = vmatpush1.msra.mxu0 %v4852
    %4868 = vmatprep.subr.mxu0 0.0
    %4869 = vmatpush1.msra.mxu0 %v4853
    %4870 = vmatprep.subr.mxu0 0.0
    %4871 = vmatpush1.msra.mxu0 %v4854
    %4872 = vmatprep.subr.mxu0 0.0
    %4873 = vmatpush1.msra.mxu0 %v4855
    %4874 = vmatprep.subr.mxu0 0.0
    %4875 = vmatpush1.msra.mxu0 %v4856
    %4876 = vmatprep.subr.mxu0 0.0
    %4877 = vmatpush1.msra.mxu0 0.0
    %4878 = vmatprep.subr.mxu0 0.0
    %4879 = vmatpush1.msra.mxu0 0.0
    %4880 = vmatprep.subr.mxu0 0.0
    %4881 = vmatpush1.msra.mxu0 0.0
    %4882 = vmatprep.subr.mxu0 0.0
    %4883 = vmatpush1.msra.mxu0 0.0
    %4884 = vmatprep.subr.mxu0 0.0
    %4885 = vmatpush1.msra.mxu0 0.0
    %4886 = vmatprep.subr.mxu0 0.0
    %4887 = vmatpush1.msra.mxu0 0.0
    %4888 = vmatprep.subr.mxu0 0.0
    %4889 = vmatpush1.msra.mxu0 0.0
    %4890 = vmatprep.subr.mxu0 0.0
    %4891 = vmatpush1.msra.mxu0 0.0
    %4892 = vmatprep.subr.mxu0 0.0
    %4893 = vmatpush1.msra.mxu0 0.0
    %4894 = vmatprep.subr.mxu0 0.0
    %4895 = vmatpush1.msra.mxu0 0.0
    %4896 = vmatprep.subr.mxu0 0.0
    %4897 = vmatpush1.msra.mxu0 0.0
    %4898 = vmatprep.subr.mxu0 0.0
    %4899 = vmatpush1.msra.mxu0 0.0
    %4900 = vmatprep.subr.mxu0 0.0
    %4901 = vmatpush1.msra.mxu0 0.0
    %4902 = vmatprep.subr.mxu0 0.0
    %4903 = vmatpush1.msra.mxu0 0.0
    %4904 = vmatprep.subr.mxu0 0.0
    %4905 = vmatpush1.msra.mxu0 0.0
    %4906 = vmatprep.subr.mxu0 0.0
    %4907 = vmatpush1.msra.mxu0 0.0
    %4908 = vmatprep.subr.mxu0 0.0
    %4909 = vmatpush1.msra.mxu0 0.0
    %4910 = vmatprep.subr.mxu0 0.0
    %4911 = vmatpush1.msra.mxu0 0.0
    %4912 = vmatprep.subr.mxu0 0.0
    %4913 = vmatpush1.msra.mxu0 0.0
    %4914 = vmatprep.subr.mxu0 0.0
    %4915 = vmatpush1.msra.mxu0 0.0
    %4916 = vmatprep.subr.mxu0 0.0
    %4917 = vmatpush1.msra.mxu0 0.0
    %4918 = vmatprep.subr.mxu0 0.0
    %4919 = vmatpush1.msra.mxu0 0.0
    %4920 = vmatprep.subr.mxu0 0.0
    %4921 = vmatpush1.msra.mxu0 0.0
    %4922 = vmatprep.subr.mxu0 0.0
    %4923 = vmatpush1.msra.mxu0 0.0
    %4924 = vmatprep.mubr.f32.mxu0 0.0
    %4925 = vmatmul.mubr.f32.gmra.mrb[0].mxu0 %v4858
    %v4926 = vpop.f32.mrb[0].mxu0
    %v4927 = vadd.f32 0.0, %v4926
    %v4928 = vpop.f32.mrb[0].mxu0
    %4929 = vdwg.mxu0
    %s4930 = scalar_lea.vmem %s14, 64
    %v4931 = vld [vmem:[%s4930] sm:$0xff]
    %v4932 = vld [vmem:[%s4930 + $0x8] sm:$0xff]
    %v4933 = vld [vmem:[%s4930 + $0x10] sm:$0xff]
    %v4934 = vld [vmem:[%s4930 + $0x18] sm:$0xff]
    %v4935 = vld [vmem:[%s4930 + $0x20] sm:$0xff]
    %v4936 = vld [vmem:[%s4930 + $0x28] sm:$0xff]
    %v4937 = vld [vmem:[%s4930 + $0x30] sm:$0xff]
    %v4938 = vld [vmem:[%s4930 + $0x38] sm:$0xff]
    %4939 = vmatprep.subr.mxu0 0.0
    %4940 = vmatpush1.msra.mxu0 %v4931
    %4941 = vmatprep.subr.mxu0 0.0
    %4942 = vmatpush1.msra.mxu0 %v4932
    %4943 = vmatprep.subr.mxu0 0.0
    %4944 = vmatpush1.msra.mxu0 %v4933
    %4945 = vmatprep.subr.mxu0 0.0
    %4946 = vmatpush1.msra.mxu0 %v4934
    %4947 = vmatprep.subr.mxu0 0.0
    %4948 = vmatpush1.msra.mxu0 %v4935
    %4949 = vmatprep.subr.mxu0 0.0
    %4950 = vmatpush1.msra.mxu0 %v4936
    %4951 = vmatprep.subr.mxu0 0.0
    %4952 = vmatpush1.msra.mxu0 %v4937
    %4953 = vmatprep.subr.mxu0 0.0
    %4954 = vmatpush1.msra.mxu0 %v4938
    %4955 = vmatprep.subr.mxu0 0.0
    %4956 = vmatpush1.msra.mxu0 0.0
    %4957 = vmatprep.subr.mxu0 0.0
    %4958 = vmatpush1.msra.mxu0 0.0
    %4959 = vmatprep.subr.mxu0 0.0
    %4960 = vmatpush1.msra.mxu0 0.0
    %4961 = vmatprep.subr.mxu0 0.0
    %4962 = vmatpush1.msra.mxu0 0.0
    %4963 = vmatprep.subr.mxu0 0.0
    %4964 = vmatpush1.msra.mxu0 0.0
    %4965 = vmatprep.subr.mxu0 0.0
    %4966 = vmatpush1.msra.mxu0 0.0
    %4967 = vmatprep.subr.mxu0 0.0
    %4968 = vmatpush1.msra.mxu0 0.0
    %4969 = vmatprep.subr.mxu0 0.0
    %4970 = vmatpush1.msra.mxu0 0.0
    %4971 = vmatprep.subr.mxu0 0.0
    %4972 = vmatpush1.msra.mxu0 0.0
    %4973 = vmatprep.subr.mxu0 0.0
    %4974 = vmatpush1.msra.mxu0 0.0
    %4975 = vmatprep.subr.mxu0 0.0
    %4976 = vmatpush1.msra.mxu0 0.0
    %4977 = vmatprep.subr.mxu0 0.0
    %4978 = vmatpush1.msra.mxu0 0.0
    %4979 = vmatprep.subr.mxu0 0.0
    %4980 = vmatpush1.msra.mxu0 0.0
    %4981 = vmatprep.subr.mxu0 0.0
    %4982 = vmatpush1.msra.mxu0 0.0
    %4983 = vmatprep.subr.mxu0 0.0
    %4984 = vmatpush1.msra.mxu0 0.0
    %4985 = vmatprep.subr.mxu0 0.0
    %4986 = vmatpush1.msra.mxu0 0.0
    %4987 = vmatprep.subr.mxu0 0.0
    %4988 = vmatpush1.msra.mxu0 0.0
    %4989 = vmatprep.subr.mxu0 0.0
    %4990 = vmatpush1.msra.mxu0 0.0
    %4991 = vmatprep.subr.mxu0 0.0
    %4992 = vmatpush1.msra.mxu0 0.0
    %4993 = vmatprep.subr.mxu0 0.0
    %4994 = vmatpush1.msra.mxu0 0.0
    %4995 = vmatprep.subr.mxu0 0.0
    %4996 = vmatpush1.msra.mxu0 0.0
    %4997 = vmatprep.subr.mxu0 0.0
    %4998 = vmatpush1.msra.mxu0 0.0
    %4999 = vmatprep.subr.mxu0 0.0
    %5000 = vmatpush1.msra.mxu0 0.0
    %5001 = vmatprep.subr.mxu0 0.0
    %5002 = vmatpush1.msra.mxu0 0.0
    %5003 = vmatprep.mubr.f32.mxu0 0.0
    %5004 = vmatmul.mubr.f32.gmra.mrb[0].mxu0 %v4858
    %v5005 = vpop.f32.mrb[0].mxu0
    %v5006 = vadd.f32 0.0, %v5005
    %v5007 = vpop.f32.mrb[0].mxu0
    %5008 = vdwg.mxu0
    %v5009 = vmax.f32 %v4927, %v5006
    %v5010 = vmul.f32 %v4339, %v4691
    %v5011 = vadd.f32 %v5010, %v4696
    %v5012 = vmax.f32 %v5011, 0.0
    %5013 = vmatprep.subr.mxu0 0.0
    %5014 = vmatpush1.msra.mxu0 %v5012
    %5015 = vmatprep.subr.mxu0 0.0
    %5016 = vmatpush1.msra.mxu0 0.0
    %5017 = vmatprep.subr.mxu0 0.0
    %5018 = vmatpush1.msra.mxu0 0.0
    %5019 = vmatprep.subr.mxu0 0.0
    %5020 = vmatpush1.msra.mxu0 0.0
    %5021 = vmatprep.subr.mxu0 0.0
    %5022 = vmatpush1.msra.mxu0 0.0
    %5023 = vmatprep.subr.mxu0 0.0
    %5024 = vmatpush1.msra.mxu0 0.0
    %5025 = vmatprep.subr.mxu0 0.0
    %5026 = vmatpush1.msra.mxu0 0.0
    %5027 = vmatprep.subr.mxu0 0.0
    %5028 = vmatpush1.msra.mxu0 0.0
    %5029 = vmatprep.subr.mxu0 0.0
    %5030 = vmatpush1.msra.mxu0 0.0
    %5031 = vmatprep.subr.mxu0 0.0
    %5032 = vmatpush1.msra.mxu0 0.0
    %5033 = vmatprep.subr.mxu0 0.0
    %5034 = vmatpush1.msra.mxu0 0.0
    %5035 = vmatprep.subr.mxu0 0.0
    %5036 = vmatpush1.msra.mxu0 0.0
    %5037 = vmatprep.subr.mxu0 0.0
    %5038 = vmatpush1.msra.mxu0 0.0
    %5039 = vmatprep.subr.mxu0 0.0
    %5040 = vmatpush1.msra.mxu0 0.0
    %5041 = vmatprep.subr.mxu0 0.0
    %5042 = vmatpush1.msra.mxu0 0.0
    %5043 = vmatprep.subr.mxu0 0.0
    %5044 = vmatpush1.msra.mxu0 0.0
    %5045 = vmatprep.subr.mxu0 0.0
    %5046 = vmatpush1.msra.mxu0 0.0
    %5047 = vmatprep.subr.mxu0 0.0
    %5048 = vmatpush1.msra.mxu0 0.0
    %5049 = vmatprep.subr.mxu0 0.0
    %5050 = vmatpush1.msra.mxu0 0.0
    %5051 = vmatprep.subr.mxu0 0.0
    %5052 = vmatpush1.msra.mxu0 0.0
    %5053 = vmatprep.subr.mxu0 0.0
    %5054 = vmatpush1.msra.mxu0 0.0
    %5055 = vmatprep.subr.mxu0 0.0
    %5056 = vmatpush1.msra.mxu0 0.0
    %5057 = vmatprep.subr.mxu0 0.0
    %5058 = vmatpush1.msra.mxu0 0.0
    %5059 = vmatprep.subr.mxu0 0.0
    %5060 = vmatpush1.msra.mxu0 0.0
    %5061 = vmatprep.subr.mxu0 0.0
    %5062 = vmatpush1.msra.mxu0 0.0
    %5063 = vmatprep.subr.mxu0 0.0
    %5064 = vmatpush1.msra.mxu0 0.0
    %5065 = vmatprep.subr.mxu0 0.0
    %5066 = vmatpush1.msra.mxu0 0.0
    %5067 = vmatprep.subr.mxu0 0.0
    %5068 = vmatpush1.msra.mxu0 0.0
    %5069 = vmatprep.subr.mxu0 0.0
    %5070 = vmatpush1.msra.mxu0 0.0
    %5071 = vmatprep.subr.mxu0 0.0
    %5072 = vmatpush1.msra.mxu0 0.0
    %5073 = vmatprep.subr.mxu0 0.0
    %5074 = vmatpush1.msra.mxu0 0.0
    %5075 = vmatprep.subr.mxu0 0.0
    %5076 = vmatpush1.msra.mxu0 0.0
    %5077 = vmatprep.mubr.f32.mxu0 0.0
    %5078 = vmatmul.mubr.f32.gmra.mrb[0].mxu0 %v4701
    %v5079 = vpop.f32.mrb[0].mxu0
    %v5080 = vadd.f32 0.0, %v5079
    %v5081 = vpop.f32.mrb[0].mxu0
    %5082 = vdwg.mxu0
    %5083 = vmatprep.subr.mxu0 0.0
    %5084 = vmatpush1.msra.mxu0 %v5012
    %5085 = vmatprep.subr.mxu0 0.0
    %5086 = vmatpush1.msra.mxu0 0.0
    %5087 = vmatprep.subr.mxu0 0.0
    %5088 = vmatpush1.msra.mxu0 0.0
    %5089 = vmatprep.subr.mxu0 0.0
    %5090 = vmatpush1.msra.mxu0 0.0
    %5091 = vmatprep.subr.mxu0 0.0
    %5092 = vmatpush1.msra.mxu0 0.0
    %5093 = vmatprep.subr.mxu0 0.0
    %5094 = vmatpush1.msra.mxu0 0.0
    %5095 = vmatprep.subr.mxu0 0.0
    %5096 = vmatpush1.msra.mxu0 0.0
    %5097 = vmatprep.subr.mxu0 0.0
    %5098 = vmatpush1.msra.mxu0 0.0
    %5099 = vmatprep.subr.mxu0 0.0
    %5100 = vmatpush1.msra.mxu0 0.0
    %5101 = vmatprep.subr.mxu0 0.0
    %5102 = vmatpush1.msra.mxu0 0.0
    %5103 = vmatprep.subr.mxu0 0.0
    %5104 = vmatpush1.msra.mxu0 0.0
    %5105 = vmatprep.subr.mxu0 0.0
    %5106 = vmatpush1.msra.mxu0 0.0
    %5107 = vmatprep.subr.mxu0 0.0
    %5108 = vmatpush1.msra.mxu0 0.0
    %5109 = vmatprep.subr.mxu0 0.0
    %5110 = vmatpush1.msra.mxu0 0.0
    %5111 = vmatprep.subr.mxu0 0.0
    %5112 = vmatpush1.msra.mxu0 0.0
    %5113 = vmatprep.subr.mxu0 0.0
    %5114 = vmatpush1.msra.mxu0 0.0
    %5115 = vmatprep.subr.mxu0 0.0
    %5116 = vmatpush1.msra.mxu0 0.0
    %5117 = vmatprep.subr.mxu0 0.0
    %5118 = vmatpush1.msra.mxu0 0.0
    %5119 = vmatprep.subr.mxu0 0.0
    %5120 = vmatpush1.msra.mxu0 0.0
    %5121 = vmatprep.subr.mxu0 0.0
    %5122 = vmatpush1.msra.mxu0 0.0
    %5123 = vmatprep.subr.mxu0 0.0
    %5124 = vmatpush1.msra.mxu0 0.0
    %5125 = vmatprep.subr.mxu0 0.0
    %5126 = vmatpush1.msra.mxu0 0.0
    %5127 = vmatprep.subr.mxu0 0.0
    %5128 = vmatpush1.msra.mxu0 0.0
    %5129 = vmatprep.subr.mxu0 0.0
    %5130 = vmatpush1.msra.mxu0 0.0
    %5131 = vmatprep.subr.mxu0 0.0
    %5132 = vmatpush1.msra.mxu0 0.0
    %5133 = vmatprep.subr.mxu0 0.0
    %5134 = vmatpush1.msra.mxu0 0.0
    %5135 = vmatprep.subr.mxu0 0.0
    %5136 = vmatpush1.msra.mxu0 0.0
    %5137 = vmatprep.subr.mxu0 0.0
    %5138 = vmatpush1.msra.mxu0 0.0
    %5139 = vmatprep.subr.mxu0 0.0
    %5140 = vmatpush1.msra.mxu0 0.0
    %5141 = vmatprep.subr.mxu0 0.0
    %5142 = vmatpush1.msra.mxu0 0.0
    %5143 = vmatprep.subr.mxu0 0.0
    %5144 = vmatpush1.msra.mxu0 0.0
    %5145 = vmatprep.subr.mxu0 0.0
    %5146 = vmatpush1.msra.mxu0 0.0
    %5147 = vmatprep.mubr.f32.mxu0 0.0
    %5148 = vmatmul.mubr.f32.gmra.mrb[0].mxu0 %v4776
    %v5149 = vpop.f32.mrb[0].mxu0
    %v5150 = vadd.f32 0.0, %v5149
    %v5151 = vpop.f32.mrb[0].mxu0
    %5152 = vdwg.mxu0
    %v5153 = vmax.f32 %v5080, %v5150
    %v5155 = vsel %vm298, %v5153, 0
    %5157 = vmatprep.subr.mxu0 0.0
    %5158 = vmatpush1.msra.mxu0 %v4849
    %5159 = vmatprep.subr.mxu0 0.0
    %5160 = vmatpush1.msra.mxu0 %v4850
    %5161 = vmatprep.subr.mxu0 0.0
    %5162 = vmatpush1.msra.mxu0 %v4851
    %5163 = vmatprep.subr.mxu0 0.0
    %5164 = vmatpush1.msra.mxu0 %v4852
    %5165 = vmatprep.subr.mxu0 0.0
    %5166 = vmatpush1.msra.mxu0 %v4853
    %5167 = vmatprep.subr.mxu0 0.0
    %5168 = vmatpush1.msra.mxu0 %v4854
    %5169 = vmatprep.subr.mxu0 0.0
    %5170 = vmatpush1.msra.mxu0 %v4855
    %5171 = vmatprep.subr.mxu0 0.0
    %5172 = vmatpush1.msra.mxu0 %v4856
    %5173 = vmatprep.subr.mxu0 0.0
    %5174 = vmatpush1.msra.mxu0 0.0
    %5175 = vmatprep.subr.mxu0 0.0
    %5176 = vmatpush1.msra.mxu0 0.0
    %5177 = vmatprep.subr.mxu0 0.0
    %5178 = vmatpush1.msra.mxu0 0.0
    %5179 = vmatprep.subr.mxu0 0.0
    %5180 = vmatpush1.msra.mxu0 0.0
    %5181 = vmatprep.subr.mxu0 0.0
    %5182 = vmatpush1.msra.mxu0 0.0
    %5183 = vmatprep.subr.mxu0 0.0
    %5184 = vmatpush1.msra.mxu0 0.0
    %5185 = vmatprep.subr.mxu0 0.0
    %5186 = vmatpush1.msra.mxu0 0.0
    %5187 = vmatprep.subr.mxu0 0.0
    %5188 = vmatpush1.msra.mxu0 0.0
    %5189 = vmatprep.subr.mxu0 0.0
    %5190 = vmatpush1.msra.mxu0 0.0
    %5191 = vmatprep.subr.mxu0 0.0
    %5192 = vmatpush1.msra.mxu0 0.0
    %5193 = vmatprep.subr.mxu0 0.0
    %5194 = vmatpush1.msra.mxu0 0.0
    %5195 = vmatprep.subr.mxu0 0.0
    %5196 = vmatpush1.msra.mxu0 0.0
    %5197 = vmatprep.subr.mxu0 0.0
    %5198 = vmatpush1.msra.mxu0 0.0
    %5199 = vmatprep.subr.mxu0 0.0
    %5200 = vmatpush1.msra.mxu0 0.0
    %5201 = vmatprep.subr.mxu0 0.0
    %5202 = vmatpush1.msra.mxu0 0.0
    %5203 = vmatprep.subr.mxu0 0.0
    %5204 = vmatpush1.msra.mxu0 0.0
    %5205 = vmatprep.subr.mxu0 0.0
    %5206 = vmatpush1.msra.mxu0 0.0
    %5207 = vmatprep.subr.mxu0 0.0
    %5208 = vmatpush1.msra.mxu0 0.0
    %5209 = vmatprep.subr.mxu0 0.0
    %5210 = vmatpush1.msra.mxu0 0.0
    %5211 = vmatprep.subr.mxu0 0.0
    %5212 = vmatpush1.msra.mxu0 0.0
    %5213 = vmatprep.subr.mxu0 0.0
    %5214 = vmatpush1.msra.mxu0 0.0
    %5215 = vmatprep.subr.mxu0 0.0
    %5216 = vmatpush1.msra.mxu0 0.0
    %5217 = vmatprep.subr.mxu0 0.0
    %5218 = vmatpush1.msra.mxu0 0.0
    %5219 = vmatprep.subr.mxu0 0.0
    %5220 = vmatpush1.msra.mxu0 0.0
    %5221 = vmatprep.mubr.f32.mxu0 0.0
    %5222 = vmatmul.mubr.f32.gmra.mrb[0].mxu0 %v5155
    %v5223 = vpop.f32.mrb[0].mxu0
    %v5224 = vadd.f32 0.0, %v5223
    %v5225 = vpop.f32.mrb[0].mxu0
    %5226 = vdwg.mxu0
    %5227 = vmatprep.subr.mxu0 0.0
    %5228 = vmatpush1.msra.mxu0 %v4931
    %5229 = vmatprep.subr.mxu0 0.0
    %5230 = vmatpush1.msra.mxu0 %v4932
    %5231 = vmatprep.subr.mxu0 0.0
    %5232 = vmatpush1.msra.mxu0 %v4933
    %5233 = vmatprep.subr.mxu0 0.0
    %5234 = vmatpush1.msra.mxu0 %v4934
    %5235 = vmatprep.subr.mxu0 0.0
    %5236 = vmatpush1.msra.mxu0 %v4935
    %5237 = vmatprep.subr.mxu0 0.0
    %5238 = vmatpush1.msra.mxu0 %v4936
    %5239 = vmatprep.subr.mxu0 0.0
    %5240 = vmatpush1.msra.mxu0 %v4937
    %5241 = vmatprep.subr.mxu0 0.0
    %5242 = vmatpush1.msra.mxu0 %v4938
    %5243 = vmatprep.subr.mxu0 0.0
    %5244 = vmatpush1.msra.mxu0 0.0
    %5245 = vmatprep.subr.mxu0 0.0
    %5246 = vmatpush1.msra.mxu0 0.0
    %5247 = vmatprep.subr.mxu0 0.0
    %5248 = vmatpush1.msra.mxu0 0.0
    %5249 = vmatprep.subr.mxu0 0.0
    %5250 = vmatpush1.msra.mxu0 0.0
    %5251 = vmatprep.subr.mxu0 0.0
    %5252 = vmatpush1.msra.mxu0 0.0
    %5253 = vmatprep.subr.mxu0 0.0
    %5254 = vmatpush1.msra.mxu0 0.0
    %5255 = vmatprep.subr.mxu0 0.0
    %5256 = vmatpush1.msra.mxu0 0.0
    %5257 = vmatprep.subr.mxu0 0.0
    %5258 = vmatpush1.msra.mxu0 0.0
    %5259 = vmatprep.subr.mxu0 0.0
    %5260 = vmatpush1.msra.mxu0 0.0
    %5261 = vmatprep.subr.mxu0 0.0
    %5262 = vmatpush1.msra.mxu0 0.0
    %5263 = vmatprep.subr.mxu0 0.0
    %5264 = vmatpush1.msra.mxu0 0.0
    %5265 = vmatprep.subr.mxu0 0.0
    %5266 = vmatpush1.msra.mxu0 0.0
    %5267 = vmatprep.subr.mxu0 0.0
    %5268 = vmatpush1.msra.mxu0 0.0
    %5269 = vmatprep.subr.mxu0 0.0
    %5270 = vmatpush1.msra.mxu0 0.0
    %5271 = vmatprep.subr.mxu0 0.0
    %5272 = vmatpush1.msra.mxu0 0.0
    %5273 = vmatprep.subr.mxu0 0.0
    %5274 = vmatpush1.msra.mxu0 0.0
    %5275 = vmatprep.subr.mxu0 0.0
    %5276 = vmatpush1.msra.mxu0 0.0
    %5277 = vmatprep.subr.mxu0 0.0
    %5278 = vmatpush1.msra.mxu0 0.0
    %5279 = vmatprep.subr.mxu0 0.0
    %5280 = vmatpush1.msra.mxu0 0.0
    %5281 = vmatprep.subr.mxu0 0.0
    %5282 = vmatpush1.msra.mxu0 0.0
    %5283 = vmatprep.subr.mxu0 0.0
    %5284 = vmatpush1.msra.mxu0 0.0
    %5285 = vmatprep.subr.mxu0 0.0
    %5286 = vmatpush1.msra.mxu0 0.0
    %5287 = vmatprep.subr.mxu0 0.0
    %5288 = vmatpush1.msra.mxu0 0.0
    %5289 = vmatprep.subr.mxu0 0.0
    %5290 = vmatpush1.msra.mxu0 0.0
    %5291 = vmatprep.mubr.f32.mxu0 0.0
    %5292 = vmatmul.mubr.f32.gmra.mrb[0].mxu0 %v5155
    %v5293 = vpop.f32.mrb[0].mxu0
    %v5294 = vadd.f32 0.0, %v5293
    %v5295 = vpop.f32.mrb[0].mxu0
    %5296 = vdwg.mxu0
    %v5297 = vmax.f32 %v5224, %v5294
    %v5298 = vld [vmem:[#allocation13] sm:$0xff]
    %v5299 = vld [vmem:[#allocation13 + $0x8] sm:$0xff]
    %v5300 = vld [vmem:[#allocation13 + $0x10] sm:$0xff]
    %s5301 = scalar_lea.vmem [#allocation13], 24
    %v5302 = vld [vmem:[%s5301] sm:$0xff]
    %v5303 = vld [vmem:[%s5301 + $0x8] sm:$0xff]
    %v5304 = vld [vmem:[%s5301 + $0x10] sm:$0xff]
    %5306 = vrot.lane.b32.xlu0 %v5009, 120
    %v5307 = vpop.permute.xlu0 %5306
    %vm5308 = vcmask 195584
    %v5309 = vsel %vm5308, %v5307, 0
    %5311 = vmatprep.subr.mxu0 0.0
    %5312 = vmatpush1.msra.mxu0 %v5302
    %5313 = vmatprep.subr.mxu0 0.0
    %5314 = vmatpush1.msra.mxu0 %v5303
    %5315 = vmatprep.subr.mxu0 0.0
    %5316 = vmatpush1.msra.mxu0 %v5304
    %5317 = vmatprep.subr.mxu0 0.0
    %5318 = vmatpush1.msra.mxu0 0.0
    %5319 = vmatprep.subr.mxu0 0.0
    %5320 = vmatpush1.msra.mxu0 0.0
    %5321 = vmatprep.subr.mxu0 0.0
    %5322 = vmatpush1.msra.mxu0 0.0
    %5323 = vmatprep.subr.mxu0 0.0
    %5324 = vmatpush1.msra.mxu0 0.0
    %5325 = vmatprep.subr.mxu0 0.0
    %5326 = vmatpush1.msra.mxu0 0.0
    %5327 = vmatprep.subr.mxu0 0.0
    %5328 = vmatpush1.msra.mxu0 0.0
    %5329 = vmatprep.subr.mxu0 0.0
    %5330 = vmatpush1.msra.mxu0 0.0
    %5331 = vmatprep.subr.mxu0 0.0
    %5332 = vmatpush1.msra.mxu0 0.0
    %5333 = vmatprep.subr.mxu0 0.0
    %5334 = vmatpush1.msra.mxu0 0.0
    %5335 = vmatprep.subr.mxu0 0.0
    %5336 = vmatpush1.msra.mxu0 0.0
    %5337 = vmatprep.subr.mxu0 0.0
    %5338 = vmatpush1.msra.mxu0 0.0
    %5339 = vmatprep.subr.mxu0 0.0
    %5340 = vmatpush1.msra.mxu0 0.0
    %5341 = vmatprep.subr.mxu0 0.0
    %5342 = vmatpush1.msra.mxu0 0.0
    %5343 = vmatprep.subr.mxu0 0.0
    %5344 = vmatpush1.msra.mxu0 0.0
    %5345 = vmatprep.subr.mxu0 0.0
    %5346 = vmatpush1.msra.mxu0 0.0
    %5347 = vmatprep.subr.mxu0 0.0
    %5348 = vmatpush1.msra.mxu0 0.0
    %5349 = vmatprep.subr.mxu0 0.0
    %5350 = vmatpush1.msra.mxu0 0.0
    %5351 = vmatprep.subr.mxu0 0.0
    %5352 = vmatpush1.msra.mxu0 0.0
    %5353 = vmatprep.subr.mxu0 0.0
    %5354 = vmatpush1.msra.mxu0 0.0
    %5355 = vmatprep.subr.mxu0 0.0
    %5356 = vmatpush1.msra.mxu0 0.0
    %5357 = vmatprep.subr.mxu0 0.0
    %5358 = vmatpush1.msra.mxu0 0.0
    %5359 = vmatprep.subr.mxu0 0.0
    %5360 = vmatpush1.msra.mxu0 0.0
    %5361 = vmatprep.subr.mxu0 0.0
    %5362 = vmatpush1.msra.mxu0 0.0
    %5363 = vmatprep.subr.mxu0 0.0
    %5364 = vmatpush1.msra.mxu0 0.0
    %5365 = vmatprep.subr.mxu0 0.0
    %5366 = vmatpush1.msra.mxu0 0.0
    %5367 = vmatprep.subr.mxu0 0.0
    %5368 = vmatpush1.msra.mxu0 0.0
    %5369 = vmatprep.subr.mxu0 0.0
    %5370 = vmatpush1.msra.mxu0 0.0
    %5371 = vmatprep.subr.mxu0 0.0
    %5372 = vmatpush1.msra.mxu0 0.0
    %5373 = vmatprep.subr.mxu0 0.0
    %5374 = vmatpush1.msra.mxu0 0.0
    %5375 = vmatprep.mubr.f32.mxu0 0.0
    %5376 = vmatmul.mubr.f32.gmra.mrb[0].mxu0 %v5309
    %v5377 = vpop.f32.mrb[0].mxu0
    %v5378 = vadd.f32 0.0, %v5377
    %v5379 = vpop.f32.mrb[0].mxu0
    %5380 = vdwg.mxu0
    %v5381 = vsel %vm5308, %v5009, 0
    %5383 = vmatprep.subr.mxu0 0.0
    %5384 = vmatpush1.msra.mxu0 %v5298
    %5385 = vmatprep.subr.mxu0 0.0
    %5386 = vmatpush1.msra.mxu0 %v5299
    %5387 = vmatprep.subr.mxu0 0.0
    %5388 = vmatpush1.msra.mxu0 %v5300
    %5389 = vmatprep.subr.mxu0 0.0
    %5390 = vmatpush1.msra.mxu0 0.0
    %5391 = vmatprep.subr.mxu0 0.0
    %5392 = vmatpush1.msra.mxu0 0.0
    %5393 = vmatprep.subr.mxu0 0.0
    %5394 = vmatpush1.msra.mxu0 0.0
    %5395 = vmatprep.subr.mxu0 0.0
    %5396 = vmatpush1.msra.mxu0 0.0
    %5397 = vmatprep.subr.mxu0 0.0
    %5398 = vmatpush1.msra.mxu0 0.0
    %5399 = vmatprep.subr.mxu0 0.0
    %5400 = vmatpush1.msra.mxu0 0.0
    %5401 = vmatprep.subr.mxu0 0.0
    %5402 = vmatpush1.msra.mxu0 0.0
    %5403 = vmatprep.subr.mxu0 0.0
    %5404 = vmatpush1.msra.mxu0 0.0
    %5405 = vmatprep.subr.mxu0 0.0
    %5406 = vmatpush1.msra.mxu0 0.0
    %5407 = vmatprep.subr.mxu0 0.0
    %5408 = vmatpush1.msra.mxu0 0.0
    %5409 = vmatprep.subr.mxu0 0.0
    %5410 = vmatpush1.msra.mxu0 0.0
    %5411 = vmatprep.subr.mxu0 0.0
    %5412 = vmatpush1.msra.mxu0 0.0
    %5413 = vmatprep.subr.mxu0 0.0
    %5414 = vmatpush1.msra.mxu0 0.0
    %5415 = vmatprep.subr.mxu0 0.0
    %5416 = vmatpush1.msra.mxu0 0.0
    %5417 = vmatprep.subr.mxu0 0.0
    %5418 = vmatpush1.msra.mxu0 0.0
    %5419 = vmatprep.subr.mxu0 0.0
    %5420 = vmatpush1.msra.mxu0 0.0
    %5421 = vmatprep.subr.mxu0 0.0
    %5422 = vmatpush1.msra.mxu0 0.0
    %5423 = vmatprep.subr.mxu0 0.0
    %5424 = vmatpush1.msra.mxu0 0.0
    %5425 = vmatprep.subr.mxu0 0.0
    %5426 = vmatpush1.msra.mxu0 0.0
    %5427 = vmatprep.subr.mxu0 0.0
    %5428 = vmatpush1.msra.mxu0 0.0
    %5429 = vmatprep.subr.mxu0 0.0
    %5430 = vmatpush1.msra.mxu0 0.0
    %5431 = vmatprep.subr.mxu0 0.0
    %5432 = vmatpush1.msra.mxu0 0.0
    %5433 = vmatprep.subr.mxu0 0.0
    %5434 = vmatpush1.msra.mxu0 0.0
    %5435 = vmatprep.subr.mxu0 0.0
    %5436 = vmatpush1.msra.mxu0 0.0
    %5437 = vmatprep.subr.mxu0 0.0
    %5438 = vmatpush1.msra.mxu0 0.0
    %5439 = vmatprep.subr.mxu0 0.0
    %5440 = vmatpush1.msra.mxu0 0.0
    %5441 = vmatprep.subr.mxu0 0.0
    %5442 = vmatpush1.msra.mxu0 0.0
    %5443 = vmatprep.subr.mxu0 0.0
    %5444 = vmatpush1.msra.mxu0 0.0
    %5445 = vmatprep.subr.mxu0 0.0
    %5446 = vmatpush1.msra.mxu0 0.0
    %5447 = vmatprep.mubr.f32.mxu0 0.0
    %5448 = vmatmul.mubr.f32.gmra.mrb[0].mxu0 %v5381
    %v5449 = vpop.f32.mrb[0].mxu0
    %v5450 = vadd.f32 %v5378, %v5449
    %v5451 = vpop.f32.mrb[0].mxu0
    %5452 = vdwg.mxu0
    %s5453 = scalar_lea.vmem [#allocation13], 48
    %v5454 = vld [vmem:[%s5453] sm:$0xff]
    %v5455 = vld [vmem:[%s5453 + $0x8] sm:$0xff]
    %v5456 = vld [vmem:[%s5453 + $0x10] sm:$0xff]
    %v5457 = vrot.slane %v5009, 1
    %v5458 = vsel %vm5308, %v5457, 0
    %5460 = vmatprep.subr.mxu0 0.0
    %5461 = vmatpush1.msra.mxu0 %v5454
    %5462 = vmatprep.subr.mxu0 0.0
    %5463 = vmatpush1.msra.mxu0 %v5455
    %5464 = vmatprep.subr.mxu0 0.0
    %5465 = vmatpush1.msra.mxu0 %v5456
    %5466 = vmatprep.subr.mxu0 0.0
    %5467 = vmatpush1.msra.mxu0 0.0
    %5468 = vmatprep.subr.mxu0 0.0
    %5469 = vmatpush1.msra.mxu0 0.0
    %5470 = vmatprep.subr.mxu0 0.0
    %5471 = vmatpush1.msra.mxu0 0.0
    %5472 = vmatprep.subr.mxu0 0.0
    %5473 = vmatpush1.msra.mxu0 0.0
    %5474 = vmatprep.subr.mxu0 0.0
    %5475 = vmatpush1.msra.mxu0 0.0
    %5476 = vmatprep.subr.mxu0 0.0
    %5477 = vmatpush1.msra.mxu0 0.0
    %5478 = vmatprep.subr.mxu0 0.0
    %5479 = vmatpush1.msra.mxu0 0.0
    %5480 = vmatprep.subr.mxu0 0.0
    %5481 = vmatpush1.msra.mxu0 0.0
    %5482 = vmatprep.subr.mxu0 0.0
    %5483 = vmatpush1.msra.mxu0 0.0
    %5484 = vmatprep.subr.mxu0 0.0
    %5485 = vmatpush1.msra.mxu0 0.0
    %5486 = vmatprep.subr.mxu0 0.0
    %5487 = vmatpush1.msra.mxu0 0.0
    %5488 = vmatprep.subr.mxu0 0.0
    %5489 = vmatpush1.msra.mxu0 0.0
    %5490 = vmatprep.subr.mxu0 0.0
    %5491 = vmatpush1.msra.mxu0 0.0
    %5492 = vmatprep.subr.mxu0 0.0
    %5493 = vmatpush1.msra.mxu0 0.0
    %5494 = vmatprep.subr.mxu0 0.0
    %5495 = vmatpush1.msra.mxu0 0.0
    %5496 = vmatprep.subr.mxu0 0.0
    %5497 = vmatpush1.msra.mxu0 0.0
    %5498 = vmatprep.subr.mxu0 0.0
    %5499 = vmatpush1.msra.mxu0 0.0
    %5500 = vmatprep.subr.mxu0 0.0
    %5501 = vmatpush1.msra.mxu0 0.0
    %5502 = vmatprep.subr.mxu0 0.0
    %5503 = vmatpush1.msra.mxu0 0.0
    %5504 = vmatprep.subr.mxu0 0.0
    %5505 = vmatpush1.msra.mxu0 0.0
    %5506 = vmatprep.subr.mxu0 0.0
    %5507 = vmatpush1.msra.mxu0 0.0
    %5508 = vmatprep.subr.mxu0 0.0
    %5509 = vmatpush1.msra.mxu0 0.0
    %5510 = vmatprep.subr.mxu0 0.0
    %5511 = vmatpush1.msra.mxu0 0.0
    %5512 = vmatprep.subr.mxu0 0.0
    %5513 = vmatpush1.msra.mxu0 0.0
    %5514 = vmatprep.subr.mxu0 0.0
    %5515 = vmatpush1.msra.mxu0 0.0
    %5516 = vmatprep.subr.mxu0 0.0
    %5517 = vmatpush1.msra.mxu0 0.0
    %5518 = vmatprep.subr.mxu0 0.0
    %5519 = vmatpush1.msra.mxu0 0.0
    %5520 = vmatprep.subr.mxu0 0.0
    %5521 = vmatpush1.msra.mxu0 0.0
    %5522 = vmatprep.subr.mxu0 0.0
    %5523 = vmatpush1.msra.mxu0 0.0
    %5524 = vmatprep.mubr.f32.mxu0 0.0
    %5525 = vmatmul.mubr.f32.gmra.mrb[0].mxu0 %v5458
    %v5526 = vpop.f32.mrb[0].mxu0
    %v5527 = vadd.f32 0.0, %v5526
    %v5528 = vpop.f32.mrb[0].mxu0
    %5529 = vdwg.mxu0
    %v5530 = vadd.f32 %v5450, %v5527
    %s5531 = scalar_lea.vmem [#allocation13], 72
    %v5532 = vld [vmem:[%s5531] sm:$0xff]
    %v5533 = vld [vmem:[%s5531 + $0x8] sm:$0xff]
    %v5534 = vld [vmem:[%s5531 + $0x10] sm:$0xff]
    %5535 = vrot.lane.b32.xlu0 %v5457, 120
    %v5536 = vpop.permute.xlu0 %5535
    %v5537 = vsel %vm5308, %v5536, 0
    %5539 = vmatprep.subr.mxu0 0.0
    %5540 = vmatpush1.msra.mxu0 %v5532
    %5541 = vmatprep.subr.mxu0 0.0
    %5542 = vmatpush1.msra.mxu0 %v5533
    %5543 = vmatprep.subr.mxu0 0.0
    %5544 = vmatpush1.msra.mxu0 %v5534
    %5545 = vmatprep.subr.mxu0 0.0
    %5546 = vmatpush1.msra.mxu0 0.0
    %5547 = vmatprep.subr.mxu0 0.0
    %5548 = vmatpush1.msra.mxu0 0.0
    %5549 = vmatprep.subr.mxu0 0.0
    %5550 = vmatpush1.msra.mxu0 0.0
    %5551 = vmatprep.subr.mxu0 0.0
    %5552 = vmatpush1.msra.mxu0 0.0
    %5553 = vmatprep.subr.mxu0 0.0
    %5554 = vmatpush1.msra.mxu0 0.0
    %5555 = vmatprep.subr.mxu0 0.0
    %5556 = vmatpush1.msra.mxu0 0.0
    %5557 = vmatprep.subr.mxu0 0.0
    %5558 = vmatpush1.msra.mxu0 0.0
    %5559 = vmatprep.subr.mxu0 0.0
    %5560 = vmatpush1.msra.mxu0 0.0
    %5561 = vmatprep.subr.mxu0 0.0
    %5562 = vmatpush1.msra.mxu0 0.0
    %5563 = vmatprep.subr.mxu0 0.0
    %5564 = vmatpush1.msra.mxu0 0.0
    %5565 = vmatprep.subr.mxu0 0.0
    %5566 = vmatpush1.msra.mxu0 0.0
    %5567 = vmatprep.subr.mxu0 0.0
    %5568 = vmatpush1.msra.mxu0 0.0
    %5569 = vmatprep.subr.mxu0 0.0
    %5570 = vmatpush1.msra.mxu0 0.0
    %5571 = vmatprep.subr.mxu0 0.0
    %5572 = vmatpush1.msra.mxu0 0.0
    %5573 = vmatprep.subr.mxu0 0.0
    %5574 = vmatpush1.msra.mxu0 0.0
    %5575 = vmatprep.subr.mxu0 0.0
    %5576 = vmatpush1.msra.mxu0 0.0
    %5577 = vmatprep.subr.mxu0 0.0
    %5578 = vmatpush1.msra.mxu0 0.0
    %5579 = vmatprep.subr.mxu0 0.0
    %5580 = vmatpush1.msra.mxu0 0.0
    %5581 = vmatprep.subr.mxu0 0.0
    %5582 = vmatpush1.msra.mxu0 0.0
    %5583 = vmatprep.subr.mxu0 0.0
    %5584 = vmatpush1.msra.mxu0 0.0
    %5585 = vmatprep.subr.mxu0 0.0
    %5586 = vmatpush1.msra.mxu0 0.0
    %5587 = vmatprep.subr.mxu0 0.0
    %5588 = vmatpush1.msra.mxu0 0.0
    %5589 = vmatprep.subr.mxu0 0.0
    %5590 = vmatpush1.msra.mxu0 0.0
    %5591 = vmatprep.subr.mxu0 0.0
    %5592 = vmatpush1.msra.mxu0 0.0
    %5593 = vmatprep.subr.mxu0 0.0
    %5594 = vmatpush1.msra.mxu0 0.0
    %5595 = vmatprep.subr.mxu0 0.0
    %5596 = vmatpush1.msra.mxu0 0.0
    %5597 = vmatprep.subr.mxu0 0.0
    %5598 = vmatpush1.msra.mxu0 0.0
    %5599 = vmatprep.subr.mxu0 0.0
    %5600 = vmatpush1.msra.mxu0 0.0
    %5601 = vmatprep.subr.mxu0 0.0
    %5602 = vmatpush1.msra.mxu0 0.0
    %5603 = vmatprep.mubr.f32.mxu0 0.0
    %5604 = vmatmul.mubr.f32.gmra.mrb[0].mxu0 %v5537
    %v5605 = vpop.f32.mrb[0].mxu0
    %v5606 = vadd.f32 0.0, %v5605
    %v5607 = vpop.f32.mrb[0].mxu0
    %5608 = vdwg.mxu0
    %v5609 = vadd.f32 %v5530, %v5606
    %v5610 = vld [vmem:[#allocation15] sm:$0x1]
    %v5612 = vlaneseq
    %v5613 = vshrl.u32 %v5612, 7
    %v5614 = vsub.s32 0, %v5613
    %v5615 = vrot.slane %v5610, %v5614
    %v5617 = vadd.f32 %v5609, %v5615
    %v5618 = vmax.f32 %v5617, 0.0
    %v5619 = vld [vmem:[#allocation16] sm:$0xff]
    %v5620 = vld [vmem:[#allocation16 + $0x8] sm:$0xff]
    %s5621 = scalar_lea.vmem [#allocation16], 16
    %v5622 = vld [vmem:[%s5621] sm:$0xff]
    %v5623 = vld [vmem:[%s5621 + $0x8] sm:$0xff]
    %v5624 = vsel %vm2250, %v5307, 0
    %5626 = vmatprep.subr.mxu0 0.0
    %5627 = vmatpush1.msra.mxu0 %v5622
    %5628 = vmatprep.subr.mxu0 0.0
    %5629 = vmatpush1.msra.mxu0 %v5623
    %5630 = vmatprep.subr.mxu0 0.0
    %5631 = vmatpush1.msra.mxu0 0.0
    %5632 = vmatprep.subr.mxu0 0.0
    %5633 = vmatpush1.msra.mxu0 0.0
    %5634 = vmatprep.subr.mxu0 0.0
    %5635 = vmatpush1.msra.mxu0 0.0
    %5636 = vmatprep.subr.mxu0 0.0
    %5637 = vmatpush1.msra.mxu0 0.0
    %5638 = vmatprep.subr.mxu0 0.0
    %5639 = vmatpush1.msra.mxu0 0.0
    %5640 = vmatprep.subr.mxu0 0.0
    %5641 = vmatpush1.msra.mxu0 0.0
    %5642 = vmatprep.subr.mxu0 0.0
    %5643 = vmatpush1.msra.mxu0 0.0
    %5644 = vmatprep.subr.mxu0 0.0
    %5645 = vmatpush1.msra.mxu0 0.0
    %5646 = vmatprep.subr.mxu0 0.0
    %5647 = vmatpush1.msra.mxu0 0.0
    %5648 = vmatprep.subr.mxu0 0.0
    %5649 = vmatpush1.msra.mxu0 0.0
    %5650 = vmatprep.subr.mxu0 0.0
    %5651 = vmatpush1.msra.mxu0 0.0
    %5652 = vmatprep.subr.mxu0 0.0
    %5653 = vmatpush1.msra.mxu0 0.0
    %5654 = vmatprep.subr.mxu0 0.0
    %5655 = vmatpush1.msra.mxu0 0.0
    %5656 = vmatprep.subr.mxu0 0.0
    %5657 = vmatpush1.msra.mxu0 0.0
    %5658 = vmatprep.subr.mxu0 0.0
    %5659 = vmatpush1.msra.mxu0 0.0
    %5660 = vmatprep.subr.mxu0 0.0
    %5661 = vmatpush1.msra.mxu0 0.0
    %5662 = vmatprep.subr.mxu0 0.0
    %5663 = vmatpush1.msra.mxu0 0.0
    %5664 = vmatprep.subr.mxu0 0.0
    %5665 = vmatpush1.msra.mxu0 0.0
    %5666 = vmatprep.subr.mxu0 0.0
    %5667 = vmatpush1.msra.mxu0 0.0
    %5668 = vmatprep.subr.mxu0 0.0
    %5669 = vmatpush1.msra.mxu0 0.0
    %5670 = vmatprep.subr.mxu0 0.0
    %5671 = vmatpush1.msra.mxu0 0.0
    %5672 = vmatprep.subr.mxu0 0.0
    %5673 = vmatpush1.msra.mxu0 0.0
    %5674 = vmatprep.subr.mxu0 0.0
    %5675 = vmatpush1.msra.mxu0 0.0
    %5676 = vmatprep.subr.mxu0 0.0
    %5677 = vmatpush1.msra.mxu0 0.0
    %5678 = vmatprep.subr.mxu0 0.0
    %5679 = vmatpush1.msra.mxu0 0.0
    %5680 = vmatprep.subr.mxu0 0.0
    %5681 = vmatpush1.msra.mxu0 0.0
    %5682 = vmatprep.subr.mxu0 0.0
    %5683 = vmatpush1.msra.mxu0 0.0
    %5684 = vmatprep.subr.mxu0 0.0
    %5685 = vmatpush1.msra.mxu0 0.0
    %5686 = vmatprep.subr.mxu0 0.0
    %5687 = vmatpush1.msra.mxu0 0.0
    %5688 = vmatprep.subr.mxu0 0.0
    %5689 = vmatpush1.msra.mxu0 0.0
    %5690 = vmatprep.mubr.f32.mxu0 0.0
    %5691 = vmatmul.mubr.f32.gmra.mrb[0].mxu0 %v5624
    %v5692 = vpop.f32.mrb[0].mxu0
    %v5693 = vadd.f32 0.0, %v5692
    %v5694 = vpop.f32.mrb[0].mxu0
    %5695 = vdwg.mxu0
    %v5696 = vsel %vm2250, %v5009, 0
    %5698 = vmatprep.subr.mxu0 0.0
    %5699 = vmatpush1.msra.mxu0 %v5619
    %5700 = vmatprep.subr.mxu0 0.0
    %5701 = vmatpush1.msra.mxu0 %v5620
    %5702 = vmatprep.subr.mxu0 0.0
    %5703 = vmatpush1.msra.mxu0 0.0
    %5704 = vmatprep.subr.mxu0 0.0
    %5705 = vmatpush1.msra.mxu0 0.0
    %5706 = vmatprep.subr.mxu0 0.0
    %5707 = vmatpush1.msra.mxu0 0.0
    %5708 = vmatprep.subr.mxu0 0.0
    %5709 = vmatpush1.msra.mxu0 0.0
    %5710 = vmatprep.subr.mxu0 0.0
    %5711 = vmatpush1.msra.mxu0 0.0
    %5712 = vmatprep.subr.mxu0 0.0
    %5713 = vmatpush1.msra.mxu0 0.0
    %5714 = vmatprep.subr.mxu0 0.0
    %5715 = vmatpush1.msra.mxu0 0.0
    %5716 = vmatprep.subr.mxu0 0.0
    %5717 = vmatpush1.msra.mxu0 0.0
    %5718 = vmatprep.subr.mxu0 0.0
    %5719 = vmatpush1.msra.mxu0 0.0
    %5720 = vmatprep.subr.mxu0 0.0
    %5721 = vmatpush1.msra.mxu0 0.0
    %5722 = vmatprep.subr.mxu0 0.0
    %5723 = vmatpush1.msra.mxu0 0.0
    %5724 = vmatprep.subr.mxu0 0.0
    %5725 = vmatpush1.msra.mxu0 0.0
    %5726 = vmatprep.subr.mxu0 0.0
    %5727 = vmatpush1.msra.mxu0 0.0
    %5728 = vmatprep.subr.mxu0 0.0
    %5729 = vmatpush1.msra.mxu0 0.0
    %5730 = vmatprep.subr.mxu0 0.0
    %5731 = vmatpush1.msra.mxu0 0.0
    %5732 = vmatprep.subr.mxu0 0.0
    %5733 = vmatpush1.msra.mxu0 0.0
    %5734 = vmatprep.subr.mxu0 0.0
    %5735 = vmatpush1.msra.mxu0 0.0
    %5736 = vmatprep.subr.mxu0 0.0
    %5737 = vmatpush1.msra.mxu0 0.0
    %5738 = vmatprep.subr.mxu0 0.0
    %5739 = vmatpush1.msra.mxu0 0.0
    %5740 = vmatprep.subr.mxu0 0.0
    %5741 = vmatpush1.msra.mxu0 0.0
    %5742 = vmatprep.subr.mxu0 0.0
    %5743 = vmatpush1.msra.mxu0 0.0
    %5744 = vmatprep.subr.mxu0 0.0
    %5745 = vmatpush1.msra.mxu0 0.0
    %5746 = vmatprep.subr.mxu0 0.0
    %5747 = vmatpush1.msra.mxu0 0.0
    %5748 = vmatprep.subr.mxu0 0.0
    %5749 = vmatpush1.msra.mxu0 0.0
    %5750 = vmatprep.subr.mxu0 0.0
    %5751 = vmatpush1.msra.mxu0 0.0
    %5752 = vmatprep.subr.mxu0 0.0
    %5753 = vmatpush1.msra.mxu0 0.0
    %5754 = vmatprep.subr.mxu0 0.0
    %5755 = vmatpush1.msra.mxu0 0.0
    %5756 = vmatprep.subr.mxu0 0.0
    %5757 = vmatpush1.msra.mxu0 0.0
    %5758 = vmatprep.subr.mxu0 0.0
    %5759 = vmatpush1.msra.mxu0 0.0
    %5760 = vmatprep.subr.mxu0 0.0
    %5761 = vmatpush1.msra.mxu0 0.0
    %5762 = vmatprep.mubr.f32.mxu0 0.0
    %5763 = vmatmul.mubr.f32.gmra.mrb[0].mxu0 %v5696
    %v5764 = vpop.f32.mrb[0].mxu0
    %v5765 = vadd.f32 %v5693, %v5764
    %v5766 = vpop.f32.mrb[0].mxu0
    %5767 = vdwg.mxu0
    %s5768 = scalar_lea.vmem [#allocation16], 32
    %v5769 = vld [vmem:[%s5768] sm:$0xff]
    %v5770 = vld [vmem:[%s5768 + $0x8] sm:$0xff]
    %5771 = vrot.lane.b32.xlu0 %v5009, 112
    %v5772 = vpop.permute.xlu0 %5771
    %v5773 = vsel %vm2250, %v5772, 0
    %5775 = vmatprep.subr.mxu0 0.0
    %5776 = vmatpush1.msra.mxu0 %v5769
    %5777 = vmatprep.subr.mxu0 0.0
    %5778 = vmatpush1.msra.mxu0 %v5770
    %5779 = vmatprep.subr.mxu0 0.0
    %5780 = vmatpush1.msra.mxu0 0.0
    %5781 = vmatprep.subr.mxu0 0.0
    %5782 = vmatpush1.msra.mxu0 0.0
    %5783 = vmatprep.subr.mxu0 0.0
    %5784 = vmatpush1.msra.mxu0 0.0
    %5785 = vmatprep.subr.mxu0 0.0
    %5786 = vmatpush1.msra.mxu0 0.0
    %5787 = vmatprep.subr.mxu0 0.0
    %5788 = vmatpush1.msra.mxu0 0.0
    %5789 = vmatprep.subr.mxu0 0.0
    %5790 = vmatpush1.msra.mxu0 0.0
    %5791 = vmatprep.subr.mxu0 0.0
    %5792 = vmatpush1.msra.mxu0 0.0
    %5793 = vmatprep.subr.mxu0 0.0
    %5794 = vmatpush1.msra.mxu0 0.0
    %5795 = vmatprep.subr.mxu0 0.0
    %5796 = vmatpush1.msra.mxu0 0.0
    %5797 = vmatprep.subr.mxu0 0.0
    %5798 = vmatpush1.msra.mxu0 0.0
    %5799 = vmatprep.subr.mxu0 0.0
    %5800 = vmatpush1.msra.mxu0 0.0
    %5801 = vmatprep.subr.mxu0 0.0
    %5802 = vmatpush1.msra.mxu0 0.0
    %5803 = vmatprep.subr.mxu0 0.0
    %5804 = vmatpush1.msra.mxu0 0.0
    %5805 = vmatprep.subr.mxu0 0.0
    %5806 = vmatpush1.msra.mxu0 0.0
    %5807 = vmatprep.subr.mxu0 0.0
    %5808 = vmatpush1.msra.mxu0 0.0
    %5809 = vmatprep.subr.mxu0 0.0
    %5810 = vmatpush1.msra.mxu0 0.0
    %5811 = vmatprep.subr.mxu0 0.0
    %5812 = vmatpush1.msra.mxu0 0.0
    %5813 = vmatprep.subr.mxu0 0.0
    %5814 = vmatpush1.msra.mxu0 0.0
    %5815 = vmatprep.subr.mxu0 0.0
    %5816 = vmatpush1.msra.mxu0 0.0
    %5817 = vmatprep.subr.mxu0 0.0
    %5818 = vmatpush1.msra.mxu0 0.0
    %5819 = vmatprep.subr.mxu0 0.0
    %5820 = vmatpush1.msra.mxu0 0.0
    %5821 = vmatprep.subr.mxu0 0.0
    %5822 = vmatpush1.msra.mxu0 0.0
    %5823 = vmatprep.subr.mxu0 0.0
    %5824 = vmatpush1.msra.mxu0 0.0
    %5825 = vmatprep.subr.mxu0 0.0
    %5826 = vmatpush1.msra.mxu0 0.0
    %5827 = vmatprep.subr.mxu0 0.0
    %5828 = vmatpush1.msra.mxu0 0.0
    %5829 = vmatprep.subr.mxu0 0.0
    %5830 = vmatpush1.msra.mxu0 0.0
    %5831 = vmatprep.subr.mxu0 0.0
    %5832 = vmatpush1.msra.mxu0 0.0
    %5833 = vmatprep.subr.mxu0 0.0
    %5834 = vmatpush1.msra.mxu0 0.0
    %5835 = vmatprep.subr.mxu0 0.0
    %5836 = vmatpush1.msra.mxu0 0.0
    %5837 = vmatprep.subr.mxu0 0.0
    %5838 = vmatpush1.msra.mxu0 0.0
    %5839 = vmatprep.mubr.f32.mxu0 0.0
    %5840 = vmatmul.mubr.f32.gmra.mrb[0].mxu0 %v5773
    %v5841 = vpop.f32.mrb[0].mxu0
    %v5842 = vadd.f32 0.0, %v5841
    %v5843 = vpop.f32.mrb[0].mxu0
    %5844 = vdwg.mxu0
    %v5845 = vadd.f32 %v5765, %v5842
    %s5846 = scalar_lea.vmem [#allocation16], 48
    %v5847 = vld [vmem:[%s5846] sm:$0xff]
    %v5848 = vld [vmem:[%s5846 + $0x8] sm:$0xff]
    %v5849 = vsel %vm2250, %v5457, 0
    %5851 = vmatprep.subr.mxu0 0.0
    %5852 = vmatpush1.msra.mxu0 %v5847
    %5853 = vmatprep.subr.mxu0 0.0
    %5854 = vmatpush1.msra.mxu0 %v5848
    %5855 = vmatprep.subr.mxu0 0.0
    %5856 = vmatpush1.msra.mxu0 0.0
    %5857 = vmatprep.subr.mxu0 0.0
    %5858 = vmatpush1.msra.mxu0 0.0
    %5859 = vmatprep.subr.mxu0 0.0
    %5860 = vmatpush1.msra.mxu0 0.0
    %5861 = vmatprep.subr.mxu0 0.0
    %5862 = vmatpush1.msra.mxu0 0.0
    %5863 = vmatprep.subr.mxu0 0.0
    %5864 = vmatpush1.msra.mxu0 0.0
    %5865 = vmatprep.subr.mxu0 0.0
    %5866 = vmatpush1.msra.mxu0 0.0
    %5867 = vmatprep.subr.mxu0 0.0
    %5868 = vmatpush1.msra.mxu0 0.0
    %5869 = vmatprep.subr.mxu0 0.0
    %5870 = vmatpush1.msra.mxu0 0.0
    %5871 = vmatprep.subr.mxu0 0.0
    %5872 = vmatpush1.msra.mxu0 0.0
    %5873 = vmatprep.subr.mxu0 0.0
    %5874 = vmatpush1.msra.mxu0 0.0
    %5875 = vmatprep.subr.mxu0 0.0
    %5876 = vmatpush1.msra.mxu0 0.0
    %5877 = vmatprep.subr.mxu0 0.0
    %5878 = vmatpush1.msra.mxu0 0.0
    %5879 = vmatprep.subr.mxu0 0.0
    %5880 = vmatpush1.msra.mxu0 0.0
    %5881 = vmatprep.subr.mxu0 0.0
    %5882 = vmatpush1.msra.mxu0 0.0
    %5883 = vmatprep.subr.mxu0 0.0
    %5884 = vmatpush1.msra.mxu0 0.0
    %5885 = vmatprep.subr.mxu0 0.0
    %5886 = vmatpush1.msra.mxu0 0.0
    %5887 = vmatprep.subr.mxu0 0.0
    %5888 = vmatpush1.msra.mxu0 0.0
    %5889 = vmatprep.subr.mxu0 0.0
    %5890 = vmatpush1.msra.mxu0 0.0
    %5891 = vmatprep.subr.mxu0 0.0
    %5892 = vmatpush1.msra.mxu0 0.0
    %5893 = vmatprep.subr.mxu0 0.0
    %5894 = vmatpush1.msra.mxu0 0.0
    %5895 = vmatprep.subr.mxu0 0.0
    %5896 = vmatpush1.msra.mxu0 0.0
    %5897 = vmatprep.subr.mxu0 0.0
    %5898 = vmatpush1.msra.mxu0 0.0
    %5899 = vmatprep.subr.mxu0 0.0
    %5900 = vmatpush1.msra.mxu0 0.0
    %5901 = vmatprep.subr.mxu0 0.0
    %5902 = vmatpush1.msra.mxu0 0.0
    %5903 = vmatprep.subr.mxu0 0.0
    %5904 = vmatpush1.msra.mxu0 0.0
    %5905 = vmatprep.subr.mxu0 0.0
    %5906 = vmatpush1.msra.mxu0 0.0
    %5907 = vmatprep.subr.mxu0 0.0
    %5908 = vmatpush1.msra.mxu0 0.0
    %5909 = vmatprep.subr.mxu0 0.0
    %5910 = vmatpush1.msra.mxu0 0.0
    %5911 = vmatprep.subr.mxu0 0.0
    %5912 = vmatpush1.msra.mxu0 0.0
    %5913 = vmatprep.subr.mxu0 0.0
    %5914 = vmatpush1.msra.mxu0 0.0
    %5915 = vmatprep.mubr.f32.mxu0 0.0
    %5916 = vmatmul.mubr.f32.gmra.mrb[0].mxu0 %v5849
    %v5917 = vpop.f32.mrb[0].mxu0
    %v5918 = vadd.f32 0.0, %v5917
    %v5919 = vpop.f32.mrb[0].mxu0
    %5920 = vdwg.mxu0
    %v5921 = vadd.f32 %v5845, %v5918
    %s5922 = scalar_lea.vmem [#allocation16], 64
    %v5923 = vld [vmem:[%s5922] sm:$0xff]
    %v5924 = vld [vmem:[%s5922 + $0x8] sm:$0xff]
    %v5925 = vsel %vm2250, %v5536, 0
    %5927 = vmatprep.subr.mxu0 0.0
    %5928 = vmatpush1.msra.mxu0 %v5923
    %5929 = vmatprep.subr.mxu0 0.0
    %5930 = vmatpush1.msra.mxu0 %v5924
    %5931 = vmatprep.subr.mxu0 0.0
    %5932 = vmatpush1.msra.mxu0 0.0
    %5933 = vmatprep.subr.mxu0 0.0
    %5934 = vmatpush1.msra.mxu0 0.0
    %5935 = vmatprep.subr.mxu0 0.0
    %5936 = vmatpush1.msra.mxu0 0.0
    %5937 = vmatprep.subr.mxu0 0.0
    %5938 = vmatpush1.msra.mxu0 0.0
    %5939 = vmatprep.subr.mxu0 0.0
    %5940 = vmatpush1.msra.mxu0 0.0
    %5941 = vmatprep.subr.mxu0 0.0
    %5942 = vmatpush1.msra.mxu0 0.0
    %5943 = vmatprep.subr.mxu0 0.0
    %5944 = vmatpush1.msra.mxu0 0.0
    %5945 = vmatprep.subr.mxu0 0.0
    %5946 = vmatpush1.msra.mxu0 0.0
    %5947 = vmatprep.subr.mxu0 0.0
    %5948 = vmatpush1.msra.mxu0 0.0
    %5949 = vmatprep.subr.mxu0 0.0
    %5950 = vmatpush1.msra.mxu0 0.0
    %5951 = vmatprep.subr.mxu0 0.0
    %5952 = vmatpush1.msra.mxu0 0.0
    %5953 = vmatprep.subr.mxu0 0.0
    %5954 = vmatpush1.msra.mxu0 0.0
    %5955 = vmatprep.subr.mxu0 0.0
    %5956 = vmatpush1.msra.mxu0 0.0
    %5957 = vmatprep.subr.mxu0 0.0
    %5958 = vmatpush1.msra.mxu0 0.0
    %5959 = vmatprep.subr.mxu0 0.0
    %5960 = vmatpush1.msra.mxu0 0.0
    %5961 = vmatprep.subr.mxu0 0.0
    %5962 = vmatpush1.msra.mxu0 0.0
    %5963 = vmatprep.subr.mxu0 0.0
    %5964 = vmatpush1.msra.mxu0 0.0
    %5965 = vmatprep.subr.mxu0 0.0
    %5966 = vmatpush1.msra.mxu0 0.0
    %5967 = vmatprep.subr.mxu0 0.0
    %5968 = vmatpush1.msra.mxu0 0.0
    %5969 = vmatprep.subr.mxu0 0.0
    %5970 = vmatpush1.msra.mxu0 0.0
    %5971 = vmatprep.subr.mxu0 0.0
    %5972 = vmatpush1.msra.mxu0 0.0
    %5973 = vmatprep.subr.mxu0 0.0
    %5974 = vmatpush1.msra.mxu0 0.0
    %5975 = vmatprep.subr.mxu0 0.0
    %5976 = vmatpush1.msra.mxu0 0.0
    %5977 = vmatprep.subr.mxu0 0.0
    %5978 = vmatpush1.msra.mxu0 0.0
    %5979 = vmatprep.subr.mxu0 0.0
    %5980 = vmatpush1.msra.mxu0 0.0
    %5981 = vmatprep.subr.mxu0 0.0
    %5982 = vmatpush1.msra.mxu0 0.0
    %5983 = vmatprep.subr.mxu0 0.0
    %5984 = vmatpush1.msra.mxu0 0.0
    %5985 = vmatprep.subr.mxu0 0.0
    %5986 = vmatpush1.msra.mxu0 0.0
    %5987 = vmatprep.subr.mxu0 0.0
    %5988 = vmatpush1.msra.mxu0 0.0
    %5989 = vmatprep.subr.mxu0 0.0
    %5990 = vmatpush1.msra.mxu0 0.0
    %5991 = vmatprep.mubr.f32.mxu0 0.0
    %5992 = vmatmul.mubr.f32.gmra.mrb[0].mxu0 %v5925
    %v5993 = vpop.f32.mrb[0].mxu0
    %v5994 = vadd.f32 0.0, %v5993
    %v5995 = vpop.f32.mrb[0].mxu0
    %5996 = vdwg.mxu0
    %v5997 = vadd.f32 %v5921, %v5994
    %s5998 = scalar_lea.vmem [#allocation16], 80
    %v5999 = vld [vmem:[%s5998] sm:$0xff]
    %v6000 = vld [vmem:[%s5998 + $0x8] sm:$0xff]
    %6001 = vrot.lane.b32.xlu0 %v5457, 112
    %v6002 = vpop.permute.xlu0 %6001
    %v6003 = vsel %vm2250, %v6002, 0
    %6005 = vmatprep.subr.mxu0 0.0
    %6006 = vmatpush1.msra.mxu0 %v5999
    %6007 = vmatprep.subr.mxu0 0.0
    %6008 = vmatpush1.msra.mxu0 %v6000
    %6009 = vmatprep.subr.mxu0 0.0
    %6010 = vmatpush1.msra.mxu0 0.0
    %6011 = vmatprep.subr.mxu0 0.0
    %6012 = vmatpush1.msra.mxu0 0.0
    %6013 = vmatprep.subr.mxu0 0.0
    %6014 = vmatpush1.msra.mxu0 0.0
    %6015 = vmatprep.subr.mxu0 0.0
    %6016 = vmatpush1.msra.mxu0 0.0
    %6017 = vmatprep.subr.mxu0 0.0
    %6018 = vmatpush1.msra.mxu0 0.0
    %6019 = vmatprep.subr.mxu0 0.0
    %6020 = vmatpush1.msra.mxu0 0.0
    %6021 = vmatprep.subr.mxu0 0.0
    %6022 = vmatpush1.msra.mxu0 0.0
    %6023 = vmatprep.subr.mxu0 0.0
    %6024 = vmatpush1.msra.mxu0 0.0
    %6025 = vmatprep.subr.mxu0 0.0
    %6026 = vmatpush1.msra.mxu0 0.0
    %6027 = vmatprep.subr.mxu0 0.0
    %6028 = vmatpush1.msra.mxu0 0.0
    %6029 = vmatprep.subr.mxu0 0.0
    %6030 = vmatpush1.msra.mxu0 0.0
    %6031 = vmatprep.subr.mxu0 0.0
    %6032 = vmatpush1.msra.mxu0 0.0
    %6033 = vmatprep.subr.mxu0 0.0
    %6034 = vmatpush1.msra.mxu0 0.0
    %6035 = vmatprep.subr.mxu0 0.0
    %6036 = vmatpush1.msra.mxu0 0.0
    %6037 = vmatprep.subr.mxu0 0.0
    %6038 = vmatpush1.msra.mxu0 0.0
    %6039 = vmatprep.subr.mxu0 0.0
    %6040 = vmatpush1.msra.mxu0 0.0
    %6041 = vmatprep.subr.mxu0 0.0
    %6042 = vmatpush1.msra.mxu0 0.0
    %6043 = vmatprep.subr.mxu0 0.0
    %6044 = vmatpush1.msra.mxu0 0.0
    %6045 = vmatprep.subr.mxu0 0.0
    %6046 = vmatpush1.msra.mxu0 0.0
    %6047 = vmatprep.subr.mxu0 0.0
    %6048 = vmatpush1.msra.mxu0 0.0
    %6049 = vmatprep.subr.mxu0 0.0
    %6050 = vmatpush1.msra.mxu0 0.0
    %6051 = vmatprep.subr.mxu0 0.0
    %6052 = vmatpush1.msra.mxu0 0.0
    %6053 = vmatprep.subr.mxu0 0.0
    %6054 = vmatpush1.msra.mxu0 0.0
    %6055 = vmatprep.subr.mxu0 0.0
    %6056 = vmatpush1.msra.mxu0 0.0
    %6057 = vmatprep.subr.mxu0 0.0
    %6058 = vmatpush1.msra.mxu0 0.0
    %6059 = vmatprep.subr.mxu0 0.0
    %6060 = vmatpush1.msra.mxu0 0.0
    %6061 = vmatprep.subr.mxu0 0.0
    %6062 = vmatpush1.msra.mxu0 0.0
    %6063 = vmatprep.subr.mxu0 0.0
    %6064 = vmatpush1.msra.mxu0 0.0
    %6065 = vmatprep.subr.mxu0 0.0
    %6066 = vmatpush1.msra.mxu0 0.0
    %6067 = vmatprep.subr.mxu0 0.0
    %6068 = vmatpush1.msra.mxu0 0.0
    %6069 = vmatprep.mubr.f32.mxu0 0.0
    %6070 = vmatmul.mubr.f32.gmra.mrb[0].mxu0 %v6003
    %v6071 = vpop.f32.mrb[0].mxu0
    %v6072 = vadd.f32 0.0, %v6071
    %v6073 = vpop.f32.mrb[0].mxu0
    %6074 = vdwg.mxu0
    %v6075 = vadd.f32 %v5997, %v6072
    %s6076 = scalar_lea.vmem [#allocation16], 96
    %v6077 = vld [vmem:[%s6076] sm:$0xff]
    %v6078 = vld [vmem:[%s6076 + $0x8] sm:$0xff]
    %v6079 = vrot.slane %v5009, 2
    %v6080 = vsel %vm2250, %v6079, 0
    %6082 = vmatprep.subr.mxu0 0.0
    %6083 = vmatpush1.msra.mxu0 %v6077
    %6084 = vmatprep.subr.mxu0 0.0
    %6085 = vmatpush1.msra.mxu0 %v6078
    %6086 = vmatprep.subr.mxu0 0.0
    %6087 = vmatpush1.msra.mxu0 0.0
    %6088 = vmatprep.subr.mxu0 0.0
    %6089 = vmatpush1.msra.mxu0 0.0
    %6090 = vmatprep.subr.mxu0 0.0
    %6091 = vmatpush1.msra.mxu0 0.0
    %6092 = vmatprep.subr.mxu0 0.0
    %6093 = vmatpush1.msra.mxu0 0.0
    %6094 = vmatprep.subr.mxu0 0.0
    %6095 = vmatpush1.msra.mxu0 0.0
    %6096 = vmatprep.subr.mxu0 0.0
    %6097 = vmatpush1.msra.mxu0 0.0
    %6098 = vmatprep.subr.mxu0 0.0
    %6099 = vmatpush1.msra.mxu0 0.0
    %6100 = vmatprep.subr.mxu0 0.0
    %6101 = vmatpush1.msra.mxu0 0.0
    %6102 = vmatprep.subr.mxu0 0.0
    %6103 = vmatpush1.msra.mxu0 0.0
    %6104 = vmatprep.subr.mxu0 0.0
    %6105 = vmatpush1.msra.mxu0 0.0
    %6106 = vmatprep.subr.mxu0 0.0
    %6107 = vmatpush1.msra.mxu0 0.0
    %6108 = vmatprep.subr.mxu0 0.0
    %6109 = vmatpush1.msra.mxu0 0.0
    %6110 = vmatprep.subr.mxu0 0.0
    %6111 = vmatpush1.msra.mxu0 0.0
    %6112 = vmatprep.subr.mxu0 0.0
    %6113 = vmatpush1.msra.mxu0 0.0
    %6114 = vmatprep.subr.mxu0 0.0
    %6115 = vmatpush1.msra.mxu0 0.0
    %6116 = vmatprep.subr.mxu0 0.0
    %6117 = vmatpush1.msra.mxu0 0.0
    %6118 = vmatprep.subr.mxu0 0.0
    %6119 = vmatpush1.msra.mxu0 0.0
    %6120 = vmatprep.subr.mxu0 0.0
    %6121 = vmatpush1.msra.mxu0 0.0
    %6122 = vmatprep.subr.mxu0 0.0
    %6123 = vmatpush1.msra.mxu0 0.0
    %6124 = vmatprep.subr.mxu0 0.0
    %6125 = vmatpush1.msra.mxu0 0.0
    %6126 = vmatprep.subr.mxu0 0.0
    %6127 = vmatpush1.msra.mxu0 0.0
    %6128 = vmatprep.subr.mxu0 0.0
    %6129 = vmatpush1.msra.mxu0 0.0
    %6130 = vmatprep.subr.mxu0 0.0
    %6131 = vmatpush1.msra.mxu0 0.0
    %6132 = vmatprep.subr.mxu0 0.0
    %6133 = vmatpush1.msra.mxu0 0.0
    %6134 = vmatprep.subr.mxu0 0.0
    %6135 = vmatpush1.msra.mxu0 0.0
    %6136 = vmatprep.subr.mxu0 0.0
    %6137 = vmatpush1.msra.mxu0 0.0
    %6138 = vmatprep.subr.mxu0 0.0
    %6139 = vmatpush1.msra.mxu0 0.0
    %6140 = vmatprep.subr.mxu0 0.0
    %6141 = vmatpush1.msra.mxu0 0.0
    %6142 = vmatprep.subr.mxu0 0.0
    %6143 = vmatpush1.msra.mxu0 0.0
    %6144 = vmatprep.subr.mxu0 0.0
    %6145 = vmatpush1.msra.mxu0 0.0
    %6146 = vmatprep.mubr.f32.mxu0 0.0
    %6147 = vmatmul.mubr.f32.gmra.mrb[0].mxu0 %v6080
    %v6148 = vpop.f32.mrb[0].mxu0
    %v6149 = vadd.f32 0.0, %v6148
    %v6150 = vpop.f32.mrb[0].mxu0
    %6151 = vdwg.mxu0
    %v6152 = vadd.f32 %v6075, %v6149
    %s6153 = scalar_lea.vmem [#allocation16], 112
    %v6154 = vld [vmem:[%s6153] sm:$0xff]
    %v6155 = vld [vmem:[%s6153 + $0x8] sm:$0xff]
    %6156 = vrot.lane.b32.xlu0 %v6079, 120
    %v6157 = vpop.permute.xlu0 %6156
    %v6158 = vsel %vm2250, %v6157, 0
    %6160 = vmatprep.subr.mxu0 0.0
    %6161 = vmatpush1.msra.mxu0 %v6154
    %6162 = vmatprep.subr.mxu0 0.0
    %6163 = vmatpush1.msra.mxu0 %v6155
    %6164 = vmatprep.subr.mxu0 0.0
    %6165 = vmatpush1.msra.mxu0 0.0
    %6166 = vmatprep.subr.mxu0 0.0
    %6167 = vmatpush1.msra.mxu0 0.0
    %6168 = vmatprep.subr.mxu0 0.0
    %6169 = vmatpush1.msra.mxu0 0.0
    %6170 = vmatprep.subr.mxu0 0.0
    %6171 = vmatpush1.msra.mxu0 0.0
    %6172 = vmatprep.subr.mxu0 0.0
    %6173 = vmatpush1.msra.mxu0 0.0
    %6174 = vmatprep.subr.mxu0 0.0
    %6175 = vmatpush1.msra.mxu0 0.0
    %6176 = vmatprep.subr.mxu0 0.0
    %6177 = vmatpush1.msra.mxu0 0.0
    %6178 = vmatprep.subr.mxu0 0.0
    %6179 = vmatpush1.msra.mxu0 0.0
    %6180 = vmatprep.subr.mxu0 0.0
    %6181 = vmatpush1.msra.mxu0 0.0
    %6182 = vmatprep.subr.mxu0 0.0
    %6183 = vmatpush1.msra.mxu0 0.0
    %6184 = vmatprep.subr.mxu0 0.0
    %6185 = vmatpush1.msra.mxu0 0.0
    %6186 = vmatprep.subr.mxu0 0.0
    %6187 = vmatpush1.msra.mxu0 0.0
    %6188 = vmatprep.subr.mxu0 0.0
    %6189 = vmatpush1.msra.mxu0 0.0
    %6190 = vmatprep.subr.mxu0 0.0
    %6191 = vmatpush1.msra.mxu0 0.0
    %6192 = vmatprep.subr.mxu0 0.0
    %6193 = vmatpush1.msra.mxu0 0.0
    %6194 = vmatprep.subr.mxu0 0.0
    %6195 = vmatpush1.msra.mxu0 0.0
    %6196 = vmatprep.subr.mxu0 0.0
    %6197 = vmatpush1.msra.mxu0 0.0
    %6198 = vmatprep.subr.mxu0 0.0
    %6199 = vmatpush1.msra.mxu0 0.0
    %6200 = vmatprep.subr.mxu0 0.0
    %6201 = vmatpush1.msra.mxu0 0.0
    %6202 = vmatprep.subr.mxu0 0.0
    %6203 = vmatpush1.msra.mxu0 0.0
    %6204 = vmatprep.subr.mxu0 0.0
    %6205 = vmatpush1.msra.mxu0 0.0
    %6206 = vmatprep.subr.mxu0 0.0
    %6207 = vmatpush1.msra.mxu0 0.0
    %6208 = vmatprep.subr.mxu0 0.0
    %6209 = vmatpush1.msra.mxu0 0.0
    %6210 = vmatprep.subr.mxu0 0.0
    %6211 = vmatpush1.msra.mxu0 0.0
    %6212 = vmatprep.subr.mxu0 0.0
    %6213 = vmatpush1.msra.mxu0 0.0
    %6214 = vmatprep.subr.mxu0 0.0
    %6215 = vmatpush1.msra.mxu0 0.0
    %6216 = vmatprep.subr.mxu0 0.0
    %6217 = vmatpush1.msra.mxu0 0.0
    %6218 = vmatprep.subr.mxu0 0.0
    %6219 = vmatpush1.msra.mxu0 0.0
    %6220 = vmatprep.subr.mxu0 0.0
    %6221 = vmatpush1.msra.mxu0 0.0
    %6222 = vmatprep.subr.mxu0 0.0
    %6223 = vmatpush1.msra.mxu0 0.0
    %6224 = vmatprep.mubr.f32.mxu0 0.0
    %6225 = vmatmul.mubr.f32.gmra.mrb[0].mxu0 %v6158
    %v6226 = vpop.f32.mrb[0].mxu0
    %v6227 = vadd.f32 0.0, %v6226
    %v6228 = vpop.f32.mrb[0].mxu0
    %6229 = vdwg.mxu0
    %v6230 = vadd.f32 %v6152, %v6227
    %s6231 = scalar_lea.vmem [#allocation16], 128
    %v6232 = vld [vmem:[%s6231] sm:$0xff]
    %v6233 = vld [vmem:[%s6231 + $0x8] sm:$0xff]
    %6234 = vrot.lane.b32.xlu0 %v6079, 112
    %v6235 = vpop.permute.xlu0 %6234
    %v6236 = vsel %vm2250, %v6235, 0
    %6238 = vmatprep.subr.mxu0 0.0
    %6239 = vmatpush1.msra.mxu0 %v6232
    %6240 = vmatprep.subr.mxu0 0.0
    %6241 = vmatpush1.msra.mxu0 %v6233
    %6242 = vmatprep.subr.mxu0 0.0
    %6243 = vmatpush1.msra.mxu0 0.0
    %6244 = vmatprep.subr.mxu0 0.0
    %6245 = vmatpush1.msra.mxu0 0.0
    %6246 = vmatprep.subr.mxu0 0.0
    %6247 = vmatpush1.msra.mxu0 0.0
    %6248 = vmatprep.subr.mxu0 0.0
    %6249 = vmatpush1.msra.mxu0 0.0
    %6250 = vmatprep.subr.mxu0 0.0
    %6251 = vmatpush1.msra.mxu0 0.0
    %6252 = vmatprep.subr.mxu0 0.0
    %6253 = vmatpush1.msra.mxu0 0.0
    %6254 = vmatprep.subr.mxu0 0.0
    %6255 = vmatpush1.msra.mxu0 0.0
    %6256 = vmatprep.subr.mxu0 0.0
    %6257 = vmatpush1.msra.mxu0 0.0
    %6258 = vmatprep.subr.mxu0 0.0
    %6259 = vmatpush1.msra.mxu0 0.0
    %6260 = vmatprep.subr.mxu0 0.0
    %6261 = vmatpush1.msra.mxu0 0.0
    %6262 = vmatprep.subr.mxu0 0.0
    %6263 = vmatpush1.msra.mxu0 0.0
    %6264 = vmatprep.subr.mxu0 0.0
    %6265 = vmatpush1.msra.mxu0 0.0
    %6266 = vmatprep.subr.mxu0 0.0
    %6267 = vmatpush1.msra.mxu0 0.0
    %6268 = vmatprep.subr.mxu0 0.0
    %6269 = vmatpush1.msra.mxu0 0.0
    %6270 = vmatprep.subr.mxu0 0.0
    %6271 = vmatpush1.msra.mxu0 0.0
    %6272 = vmatprep.subr.mxu0 0.0
    %6273 = vmatpush1.msra.mxu0 0.0
    %6274 = vmatprep.subr.mxu0 0.0
    %6275 = vmatpush1.msra.mxu0 0.0
    %6276 = vmatprep.subr.mxu0 0.0
    %6277 = vmatpush1.msra.mxu0 0.0
    %6278 = vmatprep.subr.mxu0 0.0
    %6279 = vmatpush1.msra.mxu0 0.0
    %6280 = vmatprep.subr.mxu0 0.0
    %6281 = vmatpush1.msra.mxu0 0.0
    %6282 = vmatprep.subr.mxu0 0.0
    %6283 = vmatpush1.msra.mxu0 0.0
    %6284 = vmatprep.subr.mxu0 0.0
    %6285 = vmatpush1.msra.mxu0 0.0
    %6286 = vmatprep.subr.mxu0 0.0
    %6287 = vmatpush1.msra.mxu0 0.0
    %6288 = vmatprep.subr.mxu0 0.0
    %6289 = vmatpush1.msra.mxu0 0.0
    %6290 = vmatprep.subr.mxu0 0.0
    %6291 = vmatpush1.msra.mxu0 0.0
    %6292 = vmatprep.subr.mxu0 0.0
    %6293 = vmatpush1.msra.mxu0 0.0
    %6294 = vmatprep.subr.mxu0 0.0
    %6295 = vmatpush1.msra.mxu0 0.0
    %6296 = vmatprep.subr.mxu0 0.0
    %6297 = vmatpush1.msra.mxu0 0.0
    %6298 = vmatprep.subr.mxu0 0.0
    %6299 = vmatpush1.msra.mxu0 0.0
    %6300 = vmatprep.subr.mxu0 0.0
    %6301 = vmatpush1.msra.mxu0 0.0
    %6302 = vmatprep.mubr.f32.mxu0 0.0
    %6303 = vmatmul.mubr.f32.gmra.mrb[0].mxu0 %v6236
    %v6304 = vpop.f32.mrb[0].mxu0
    %v6305 = vadd.f32 0.0, %v6304
    %v6306 = vpop.f32.mrb[0].mxu0
    %6307 = vdwg.mxu0
    %v6308 = vadd.f32 %v6230, %v6305
    %v6309 = vld [vmem:[#allocation18] sm:$0x1]
    %v6311 = vlaneseq
    %v6312 = vshrl.u32 %v6311, 7
    %v6313 = vsub.s32 0, %v6312
    %v6314 = vrot.slane %v6309, %v6313
    %v6316 = vadd.f32 %v6308, %v6314
    %v6317 = vmax.f32 %v6316, 0.0
    %6319 = vrot.lane.b32.xlu0 %v6317, 120
    %v6320 = vpop.permute.xlu0 %6319
    %v6322 = vmax.f32 %v6317, %v6320
    %v6324 = vrot.slane %v6322, 1
    %v6326 = vmax.f32 %v6322, %v6324
    %v6327 = vld [vmem:[#allocation19] sm:$0xff]
    %v6328 = vld [vmem:[%s20] sm:$0x1]
    %v6330 = vrot.slane %v5618, 1
    %6331 = vrot.lane.b32.xlu0 %v6330, 120
    %v6332 = vpop.permute.xlu0 %6331
    %v6333 = vsel %vm2082, %v6332, 0
    %6335 = vmatprep.subr.mxu0 0.0
    %6336 = vmatpush1.msra.mxu0 %v6327
    %6337 = vmatprep.subr.mxu0 0.0
    %6338 = vmatpush1.msra.mxu0 0.0
    %6339 = vmatprep.subr.mxu0 0.0
    %6340 = vmatpush1.msra.mxu0 0.0
    %6341 = vmatprep.subr.mxu0 0.0
    %6342 = vmatpush1.msra.mxu0 0.0
    %6343 = vmatprep.subr.mxu0 0.0
    %6344 = vmatpush1.msra.mxu0 0.0
    %6345 = vmatprep.subr.mxu0 0.0
    %6346 = vmatpush1.msra.mxu0 0.0
    %6347 = vmatprep.subr.mxu0 0.0
    %6348 = vmatpush1.msra.mxu0 0.0
    %6349 = vmatprep.subr.mxu0 0.0
    %6350 = vmatpush1.msra.mxu0 0.0
    %6351 = vmatprep.subr.mxu0 0.0
    %6352 = vmatpush1.msra.mxu0 0.0
    %6353 = vmatprep.subr.mxu0 0.0
    %6354 = vmatpush1.msra.mxu0 0.0
    %6355 = vmatprep.subr.mxu0 0.0
    %6356 = vmatpush1.msra.mxu0 0.0
    %6357 = vmatprep.subr.mxu0 0.0
    %6358 = vmatpush1.msra.mxu0 0.0
    %6359 = vmatprep.subr.mxu0 0.0
    %6360 = vmatpush1.msra.mxu0 0.0
    %6361 = vmatprep.subr.mxu0 0.0
    %6362 = vmatpush1.msra.mxu0 0.0
    %6363 = vmatprep.subr.mxu0 0.0
    %6364 = vmatpush1.msra.mxu0 0.0
    %6365 = vmatprep.subr.mxu0 0.0
    %6366 = vmatpush1.msra.mxu0 0.0
    %6367 = vmatprep.subr.mxu0 0.0
    %6368 = vmatpush1.msra.mxu0 0.0
    %6369 = vmatprep.subr.mxu0 0.0
    %6370 = vmatpush1.msra.mxu0 0.0
    %6371 = vmatprep.subr.mxu0 0.0
    %6372 = vmatpush1.msra.mxu0 0.0
    %6373 = vmatprep.subr.mxu0 0.0
    %6374 = vmatpush1.msra.mxu0 0.0
    %6375 = vmatprep.subr.mxu0 0.0
    %6376 = vmatpush1.msra.mxu0 0.0
    %6377 = vmatprep.subr.mxu0 0.0
    %6378 = vmatpush1.msra.mxu0 0.0
    %6379 = vmatprep.subr.mxu0 0.0
    %6380 = vmatpush1.msra.mxu0 0.0
    %6381 = vmatprep.subr.mxu0 0.0
    %6382 = vmatpush1.msra.mxu0 0.0
    %6383 = vmatprep.subr.mxu0 0.0
    %6384 = vmatpush1.msra.mxu0 0.0
    %6385 = vmatprep.subr.mxu0 0.0
    %6386 = vmatpush1.msra.mxu0 0.0
    %6387 = vmatprep.subr.mxu0 0.0
    %6388 = vmatpush1.msra.mxu0 0.0
    %6389 = vmatprep.subr.mxu0 0.0
    %6390 = vmatpush1.msra.mxu0 0.0
    %6391 = vmatprep.subr.mxu0 0.0
    %6392 = vmatpush1.msra.mxu0 0.0
    %6393 = vmatprep.subr.mxu0 0.0
    %6394 = vmatpush1.msra.mxu0 0.0
    %6395 = vmatprep.subr.mxu0 0.0
    %6396 = vmatpush1.msra.mxu0 0.0
    %6397 = vmatprep.subr.mxu0 0.0
    %6398 = vmatpush1.msra.mxu0 0.0
    %6399 = vmatprep.mubr.f32.mxu0 0.0
    %6400 = vmatmul.mubr.f32.gmra.mrb[0].mxu0 %v6333
    %v6401 = vpop.f32.mrb[0].mxu0
    %v6402 = vadd.f32 %v6328, %v6401
    %v6403 = vpop.f32.mrb[0].mxu0
    %6404 = vdwg.mxu0
    %v6405 = vmax.f32 %v6402, 0.0
    %s6406 = scalar_lea.vmem [#allocation19], 16
    %v6407 = vld [vmem:[%s6406] sm:$0xff]
    %s6408 = scalar_lea.vmem %s20, 2
    %v6409 = vld [vmem:[%s6408] sm:$0x1]
    %v6411 = vsel %vm2082, %v6326, 0
    %6413 = vmatprep.subr.mxu0 0.0
    %6414 = vmatpush1.msra.mxu0 %v6407
    %6415 = vmatprep.subr.mxu0 0.0
    %6416 = vmatpush1.msra.mxu0 0.0
    %6417 = vmatprep.subr.mxu0 0.0
    %6418 = vmatpush1.msra.mxu0 0.0
    %6419 = vmatprep.subr.mxu0 0.0
    %6420 = vmatpush1.msra.mxu0 0.0
    %6421 = vmatprep.subr.mxu0 0.0
    %6422 = vmatpush1.msra.mxu0 0.0
    %6423 = vmatprep.subr.mxu0 0.0
    %6424 = vmatpush1.msra.mxu0 0.0
    %6425 = vmatprep.subr.mxu0 0.0
    %6426 = vmatpush1.msra.mxu0 0.0
    %6427 = vmatprep.subr.mxu0 0.0
    %6428 = vmatpush1.msra.mxu0 0.0
    %6429 = vmatprep.subr.mxu0 0.0
    %6430 = vmatpush1.msra.mxu0 0.0
    %6431 = vmatprep.subr.mxu0 0.0
    %6432 = vmatpush1.msra.mxu0 0.0
    %6433 = vmatprep.subr.mxu0 0.0
    %6434 = vmatpush1.msra.mxu0 0.0
    %6435 = vmatprep.subr.mxu0 0.0
    %6436 = vmatpush1.msra.mxu0 0.0
    %6437 = vmatprep.subr.mxu0 0.0
    %6438 = vmatpush1.msra.mxu0 0.0
    %6439 = vmatprep.subr.mxu0 0.0
    %6440 = vmatpush1.msra.mxu0 0.0
    %6441 = vmatprep.subr.mxu0 0.0
    %6442 = vmatpush1.msra.mxu0 0.0
    %6443 = vmatprep.subr.mxu0 0.0
    %6444 = vmatpush1.msra.mxu0 0.0
    %6445 = vmatprep.subr.mxu0 0.0
    %6446 = vmatpush1.msra.mxu0 0.0
    %6447 = vmatprep.subr.mxu0 0.0
    %6448 = vmatpush1.msra.mxu0 0.0
    %6449 = vmatprep.subr.mxu0 0.0
    %6450 = vmatpush1.msra.mxu0 0.0
    %6451 = vmatprep.subr.mxu0 0.0
    %6452 = vmatpush1.msra.mxu0 0.0
    %6453 = vmatprep.subr.mxu0 0.0
    %6454 = vmatpush1.msra.mxu0 0.0
    %6455 = vmatprep.subr.mxu0 0.0
    %6456 = vmatpush1.msra.mxu0 0.0
    %6457 = vmatprep.subr.mxu0 0.0
    %6458 = vmatpush1.msra.mxu0 0.0
    %6459 = vmatprep.subr.mxu0 0.0
    %6460 = vmatpush1.msra.mxu0 0.0
    %6461 = vmatprep.subr.mxu0 0.0
    %6462 = vmatpush1.msra.mxu0 0.0
    %6463 = vmatprep.subr.mxu0 0.0
    %6464 = vmatpush1.msra.mxu0 0.0
    %6465 = vmatprep.subr.mxu0 0.0
    %6466 = vmatpush1.msra.mxu0 0.0
    %6467 = vmatprep.subr.mxu0 0.0
    %6468 = vmatpush1.msra.mxu0 0.0
    %6469 = vmatprep.subr.mxu0 0.0
    %6470 = vmatpush1.msra.mxu0 0.0
    %6471 = vmatprep.subr.mxu0 0.0
    %6472 = vmatpush1.msra.mxu0 0.0
    %6473 = vmatprep.subr.mxu0 0.0
    %6474 = vmatpush1.msra.mxu0 0.0
    %6475 = vmatprep.subr.mxu0 0.0
    %6476 = vmatpush1.msra.mxu0 0.0
    %6477 = vmatprep.mubr.f32.mxu0 0.0
    %6478 = vmatmul.mubr.f32.gmra.mrb[0].mxu0 %v6411
    %v6479 = vpop.f32.mrb[0].mxu0
    %v6480 = vadd.f32 %v6409, %v6479
    %v6481 = vpop.f32.mrb[0].mxu0
    %6482 = vdwg.mxu0
    %v6483 = vmax.f32 %v6480, 0.0
    %s6484 = scalar_lea.vmem [#allocation19], 8
    %v6485 = vld [vmem:[%s6484] sm:$0xff]
    %s6486 = scalar_lea.vmem %s20, 1
    %v6487 = vld [vmem:[%s6486] sm:$0x1]
    %v6489 = vsel %vm2082, %v6405, 0
    %6491 = vmatprep.subr.mxu0 0.0
    %6492 = vmatpush1.msra.mxu0 %v6485
    %6493 = vmatprep.subr.mxu0 0.0
    %6494 = vmatpush1.msra.mxu0 0.0
    %6495 = vmatprep.subr.mxu0 0.0
    %6496 = vmatpush1.msra.mxu0 0.0
    %6497 = vmatprep.subr.mxu0 0.0
    %6498 = vmatpush1.msra.mxu0 0.0
    %6499 = vmatprep.subr.mxu0 0.0
    %6500 = vmatpush1.msra.mxu0 0.0
    %6501 = vmatprep.subr.mxu0 0.0
    %6502 = vmatpush1.msra.mxu0 0.0
    %6503 = vmatprep.subr.mxu0 0.0
    %6504 = vmatpush1.msra.mxu0 0.0
    %6505 = vmatprep.subr.mxu0 0.0
    %6506 = vmatpush1.msra.mxu0 0.0
    %6507 = vmatprep.subr.mxu0 0.0
    %6508 = vmatpush1.msra.mxu0 0.0
    %6509 = vmatprep.subr.mxu0 0.0
    %6510 = vmatpush1.msra.mxu0 0.0
    %6511 = vmatprep.subr.mxu0 0.0
    %6512 = vmatpush1.msra.mxu0 0.0
    %6513 = vmatprep.subr.mxu0 0.0
    %6514 = vmatpush1.msra.mxu0 0.0
    %6515 = vmatprep.subr.mxu0 0.0
    %6516 = vmatpush1.msra.mxu0 0.0
    %6517 = vmatprep.subr.mxu0 0.0
    %6518 = vmatpush1.msra.mxu0 0.0
    %6519 = vmatprep.subr.mxu0 0.0
    %6520 = vmatpush1.msra.mxu0 0.0
    %6521 = vmatprep.subr.mxu0 0.0
    %6522 = vmatpush1.msra.mxu0 0.0
    %6523 = vmatprep.subr.mxu0 0.0
    %6524 = vmatpush1.msra.mxu0 0.0
    %6525 = vmatprep.subr.mxu0 0.0
    %6526 = vmatpush1.msra.mxu0 0.0
    %6527 = vmatprep.subr.mxu0 0.0
    %6528 = vmatpush1.msra.mxu0 0.0
    %6529 = vmatprep.subr.mxu0 0.0
    %6530 = vmatpush1.msra.mxu0 0.0
    %6531 = vmatprep.subr.mxu0 0.0
    %6532 = vmatpush1.msra.mxu0 0.0
    %6533 = vmatprep.subr.mxu0 0.0
    %6534 = vmatpush1.msra.mxu0 0.0
    %6535 = vmatprep.subr.mxu0 0.0
    %6536 = vmatpush1.msra.mxu0 0.0
    %6537 = vmatprep.subr.mxu0 0.0
    %6538 = vmatpush1.msra.mxu0 0.0
    %6539 = vmatprep.subr.mxu0 0.0
    %6540 = vmatpush1.msra.mxu0 0.0
    %6541 = vmatprep.subr.mxu0 0.0
    %6542 = vmatpush1.msra.mxu0 0.0
    %6543 = vmatprep.subr.mxu0 0.0
    %6544 = vmatpush1.msra.mxu0 0.0
    %6545 = vmatprep.subr.mxu0 0.0
    %6546 = vmatpush1.msra.mxu0 0.0
    %6547 = vmatprep.subr.mxu0 0.0
    %6548 = vmatpush1.msra.mxu0 0.0
    %6549 = vmatprep.subr.mxu0 0.0
    %6550 = vmatpush1.msra.mxu0 0.0
    %6551 = vmatprep.subr.mxu0 0.0
    %6552 = vmatpush1.msra.mxu0 0.0
    %6553 = vmatprep.subr.mxu0 0.0
    %6554 = vmatpush1.msra.mxu0 0.0
    %6555 = vmatprep.mubr.f32.mxu0 0.0
    %6556 = vmatmul.mubr.f32.gmra.mrb[0].mxu0 %v6489
    %v6557 = vpop.f32.mrb[0].mxu0
    %v6558 = vadd.f32 %v6487, %v6557
    %v6559 = vpop.f32.mrb[0].mxu0
    %6560 = vdwg.mxu0
    %v6561 = vmax.f32 %v6558, 0.0
    %s6562 = scalar_lea.vmem [#allocation19], 24
    %v6563 = vld [vmem:[%s6562] sm:$0xff]
    %s6564 = scalar_lea.vmem %s20, 3
    %v6565 = vld [vmem:[%s6564] sm:$0x1]
    %v6567 = vsel %vm2082, %v6483, 0
    %6569 = vmatprep.subr.mxu0 0.0
    %6570 = vmatpush1.msra.mxu0 %v6563
    %6571 = vmatprep.subr.mxu0 0.0
    %6572 = vmatpush1.msra.mxu0 0.0
    %6573 = vmatprep.subr.mxu0 0.0
    %6574 = vmatpush1.msra.mxu0 0.0
    %6575 = vmatprep.subr.mxu0 0.0
    %6576 = vmatpush1.msra.mxu0 0.0
    %6577 = vmatprep.subr.mxu0 0.0
    %6578 = vmatpush1.msra.mxu0 0.0
    %6579 = vmatprep.subr.mxu0 0.0
    %6580 = vmatpush1.msra.mxu0 0.0
    %6581 = vmatprep.subr.mxu0 0.0
    %6582 = vmatpush1.msra.mxu0 0.0
    %6583 = vmatprep.subr.mxu0 0.0
    %6584 = vmatpush1.msra.mxu0 0.0
    %6585 = vmatprep.subr.mxu0 0.0
    %6586 = vmatpush1.msra.mxu0 0.0
    %6587 = vmatprep.subr.mxu0 0.0
    %6588 = vmatpush1.msra.mxu0 0.0
    %6589 = vmatprep.subr.mxu0 0.0
    %6590 = vmatpush1.msra.mxu0 0.0
    %6591 = vmatprep.subr.mxu0 0.0
    %6592 = vmatpush1.msra.mxu0 0.0
    %6593 = vmatprep.subr.mxu0 0.0
    %6594 = vmatpush1.msra.mxu0 0.0
    %6595 = vmatprep.subr.mxu0 0.0
    %6596 = vmatpush1.msra.mxu0 0.0
    %6597 = vmatprep.subr.mxu0 0.0
    %6598 = vmatpush1.msra.mxu0 0.0
    %6599 = vmatprep.subr.mxu0 0.0
    %6600 = vmatpush1.msra.mxu0 0.0
    %6601 = vmatprep.subr.mxu0 0.0
    %6602 = vmatpush1.msra.mxu0 0.0
    %6603 = vmatprep.subr.mxu0 0.0
    %6604 = vmatpush1.msra.mxu0 0.0
    %6605 = vmatprep.subr.mxu0 0.0
    %6606 = vmatpush1.msra.mxu0 0.0
    %6607 = vmatprep.subr.mxu0 0.0
    %6608 = vmatpush1.msra.mxu0 0.0
    %6609 = vmatprep.subr.mxu0 0.0
    %6610 = vmatpush1.msra.mxu0 0.0
    %6611 = vmatprep.subr.mxu0 0.0
    %6612 = vmatpush1.msra.mxu0 0.0
    %6613 = vmatprep.subr.mxu0 0.0
    %6614 = vmatpush1.msra.mxu0 0.0
    %6615 = vmatprep.subr.mxu0 0.0
    %6616 = vmatpush1.msra.mxu0 0.0
    %6617 = vmatprep.subr.mxu0 0.0
    %6618 = vmatpush1.msra.mxu0 0.0
    %6619 = vmatprep.subr.mxu0 0.0
    %6620 = vmatpush1.msra.mxu0 0.0
    %6621 = vmatprep.subr.mxu0 0.0
    %6622 = vmatpush1.msra.mxu0 0.0
    %6623 = vmatprep.subr.mxu0 0.0
    %6624 = vmatpush1.msra.mxu0 0.0
    %6625 = vmatprep.subr.mxu0 0.0
    %6626 = vmatpush1.msra.mxu0 0.0
    %6627 = vmatprep.subr.mxu0 0.0
    %6628 = vmatpush1.msra.mxu0 0.0
    %6629 = vmatprep.subr.mxu0 0.0
    %6630 = vmatpush1.msra.mxu0 0.0
    %6631 = vmatprep.subr.mxu0 0.0
    %6632 = vmatpush1.msra.mxu0 0.0
    %6633 = vmatprep.mubr.f32.mxu0 0.0
    %6634 = vmatmul.mubr.f32.gmra.mrb[0].mxu0 %v6567
    %v6635 = vpop.f32.mrb[0].mxu0
    %v6636 = vadd.f32 %v6565, %v6635
    %v6637 = vpop.f32.mrb[0].mxu0
    %6638 = vdwg.mxu0
    %v6639 = vmax.f32 %v6636, 0.0
    %v6640 = vld [vmem:[#allocation21] sm:$0xff]
    %v6641 = vld [vmem:[#allocation22] sm:$0xff]
    %v6643 = vsel %vm2082, %v6639, 0
    %6645 = vmatprep.subr.mxu0 0.0
    %6646 = vmatpush1.msra.mxu0 %v6641
    %6647 = vmatprep.subr.mxu0 0.0
    %6648 = vmatpush1.msra.mxu0 0.0
    %6649 = vmatprep.subr.mxu0 0.0
    %6650 = vmatpush1.msra.mxu0 0.0
    %6651 = vmatprep.subr.mxu0 0.0
    %6652 = vmatpush1.msra.mxu0 0.0
    %6653 = vmatprep.subr.mxu0 0.0
    %6654 = vmatpush1.msra.mxu0 0.0
    %6655 = vmatprep.subr.mxu0 0.0
    %6656 = vmatpush1.msra.mxu0 0.0
    %6657 = vmatprep.subr.mxu0 0.0
    %6658 = vmatpush1.msra.mxu0 0.0
    %6659 = vmatprep.subr.mxu0 0.0
    %6660 = vmatpush1.msra.mxu0 0.0
    %6661 = vmatprep.subr.mxu0 0.0
    %6662 = vmatpush1.msra.mxu0 0.0
    %6663 = vmatprep.subr.mxu0 0.0
    %6664 = vmatpush1.msra.mxu0 0.0
    %6665 = vmatprep.subr.mxu0 0.0
    %6666 = vmatpush1.msra.mxu0 0.0
    %6667 = vmatprep.subr.mxu0 0.0
    %6668 = vmatpush1.msra.mxu0 0.0
    %6669 = vmatprep.subr.mxu0 0.0
    %6670 = vmatpush1.msra.mxu0 0.0
    %6671 = vmatprep.subr.mxu0 0.0
    %6672 = vmatpush1.msra.mxu0 0.0
    %6673 = vmatprep.subr.mxu0 0.0
    %6674 = vmatpush1.msra.mxu0 0.0
    %6675 = vmatprep.subr.mxu0 0.0
    %6676 = vmatpush1.msra.mxu0 0.0
    %6677 = vmatprep.subr.mxu0 0.0
    %6678 = vmatpush1.msra.mxu0 0.0
    %6679 = vmatprep.subr.mxu0 0.0
    %6680 = vmatpush1.msra.mxu0 0.0
    %6681 = vmatprep.subr.mxu0 0.0
    %6682 = vmatpush1.msra.mxu0 0.0
    %6683 = vmatprep.subr.mxu0 0.0
    %6684 = vmatpush1.msra.mxu0 0.0
    %6685 = vmatprep.subr.mxu0 0.0
    %6686 = vmatpush1.msra.mxu0 0.0
    %6687 = vmatprep.subr.mxu0 0.0
    %6688 = vmatpush1.msra.mxu0 0.0
    %6689 = vmatprep.subr.mxu0 0.0
    %6690 = vmatpush1.msra.mxu0 0.0
    %6691 = vmatprep.subr.mxu0 0.0
    %6692 = vmatpush1.msra.mxu0 0.0
    %6693 = vmatprep.subr.mxu0 0.0
    %6694 = vmatpush1.msra.mxu0 0.0
    %6695 = vmatprep.subr.mxu0 0.0
    %6696 = vmatpush1.msra.mxu0 0.0
    %6697 = vmatprep.subr.mxu0 0.0
    %6698 = vmatpush1.msra.mxu0 0.0
    %6699 = vmatprep.subr.mxu0 0.0
    %6700 = vmatpush1.msra.mxu0 0.0
    %6701 = vmatprep.subr.mxu0 0.0
    %6702 = vmatpush1.msra.mxu0 0.0
    %6703 = vmatprep.subr.mxu0 0.0
    %6704 = vmatpush1.msra.mxu0 0.0
    %6705 = vmatprep.subr.mxu0 0.0
    %6706 = vmatpush1.msra.mxu0 0.0
    %6707 = vmatprep.subr.mxu0 0.0
    %6708 = vmatpush1.msra.mxu0 0.0
    %6709 = vmatprep.mubr.f32.mxu0 0.0
    %6710 = vmatmul.mubr.f32.gmra.mrb[0].mxu0 %v6643
    %v6711 = vpop.f32.mrb[0].mxu0
    %v6712 = vadd.f32 0.0, %v6711
    %v6713 = vpop.f32.mrb[0].mxu0
    %6714 = vdwg.mxu0
    %v6716 = vsel %vm2082, %v6561, 0
    %6718 = vmatprep.subr.mxu0 0.0
    %6719 = vmatpush1.msra.mxu0 %v6640
    %6720 = vmatprep.subr.mxu0 0.0
    %6721 = vmatpush1.msra.mxu0 0.0
    %6722 = vmatprep.subr.mxu0 0.0
    %6723 = vmatpush1.msra.mxu0 0.0
    %6724 = vmatprep.subr.mxu0 0.0
    %6725 = vmatpush1.msra.mxu0 0.0
    %6726 = vmatprep.subr.mxu0 0.0
    %6727 = vmatpush1.msra.mxu0 0.0
    %6728 = vmatprep.subr.mxu0 0.0
    %6729 = vmatpush1.msra.mxu0 0.0
    %6730 = vmatprep.subr.mxu0 0.0
    %6731 = vmatpush1.msra.mxu0 0.0
    %6732 = vmatprep.subr.mxu0 0.0
    %6733 = vmatpush1.msra.mxu0 0.0
    %6734 = vmatprep.subr.mxu0 0.0
    %6735 = vmatpush1.msra.mxu0 0.0
    %6736 = vmatprep.subr.mxu0 0.0
    %6737 = vmatpush1.msra.mxu0 0.0
    %6738 = vmatprep.subr.mxu0 0.0
    %6739 = vmatpush1.msra.mxu0 0.0
    %6740 = vmatprep.subr.mxu0 0.0
    %6741 = vmatpush1.msra.mxu0 0.0
    %6742 = vmatprep.subr.mxu0 0.0
    %6743 = vmatpush1.msra.mxu0 0.0
    %6744 = vmatprep.subr.mxu0 0.0
    %6745 = vmatpush1.msra.mxu0 0.0
    %6746 = vmatprep.subr.mxu0 0.0
    %6747 = vmatpush1.msra.mxu0 0.0
    %6748 = vmatprep.subr.mxu0 0.0
    %6749 = vmatpush1.msra.mxu0 0.0
    %6750 = vmatprep.subr.mxu0 0.0
    %6751 = vmatpush1.msra.mxu0 0.0
    %6752 = vmatprep.subr.mxu0 0.0
    %6753 = vmatpush1.msra.mxu0 0.0
    %6754 = vmatprep.subr.mxu0 0.0
    %6755 = vmatpush1.msra.mxu0 0.0
    %6756 = vmatprep.subr.mxu0 0.0
    %6757 = vmatpush1.msra.mxu0 0.0
    %6758 = vmatprep.subr.mxu0 0.0
    %6759 = vmatpush1.msra.mxu0 0.0
    %6760 = vmatprep.subr.mxu0 0.0
    %6761 = vmatpush1.msra.mxu0 0.0
    %6762 = vmatprep.subr.mxu0 0.0
    %6763 = vmatpush1.msra.mxu0 0.0
    %6764 = vmatprep.subr.mxu0 0.0
    %6765 = vmatpush1.msra.mxu0 0.0
    %6766 = vmatprep.subr.mxu0 0.0
    %6767 = vmatpush1.msra.mxu0 0.0
    %6768 = vmatprep.subr.mxu0 0.0
    %6769 = vmatpush1.msra.mxu0 0.0
    %6770 = vmatprep.subr.mxu0 0.0
    %6771 = vmatpush1.msra.mxu0 0.0
    %6772 = vmatprep.subr.mxu0 0.0
    %6773 = vmatpush1.msra.mxu0 0.0
    %6774 = vmatprep.subr.mxu0 0.0
    %6775 = vmatpush1.msra.mxu0 0.0
    %6776 = vmatprep.subr.mxu0 0.0
    %6777 = vmatpush1.msra.mxu0 0.0
    %6778 = vmatprep.subr.mxu0 0.0
    %6779 = vmatpush1.msra.mxu0 0.0
    %6780 = vmatprep.subr.mxu0 0.0
    %6781 = vmatpush1.msra.mxu0 0.0
    %6782 = vmatprep.mubr.f32.mxu0 0.0
    %6783 = vmatmul.mubr.f32.gmra.mrb[0].mxu0 %v6716
    %v6784 = vpop.f32.mrb[0].mxu0
    %v6785 = vadd.f32 %v6712, %v6784
    %v6786 = vpop.f32.mrb[0].mxu0
    %6787 = vdwg.mxu0
    %v6788 = vld [vmem:[#allocation24] sm:$0x1]
    %v6789 = vadd.f32 %v6785, %v6788
    %vm6790 = vcmask 57344
    %6791 = vst.msk [vmem:[#allocation25] sm:$0x1] %vm6790, %v6789
    %v6792 = vld [vmem:[#allocation13] sm:$0xff]
    %v6793 = vld [vmem:[#allocation13 + $0x8] sm:$0xff]
    %v6794 = vld [vmem:[#allocation13 + $0x10] sm:$0xff]
    %v6795 = vld [vmem:[%s5301] sm:$0xff]
    %v6796 = vld [vmem:[%s5301 + $0x8] sm:$0xff]
    %v6797 = vld [vmem:[%s5301 + $0x10] sm:$0xff]
    %6799 = vrot.lane.b32.xlu0 %v5297, 120
    %v6800 = vpop.permute.xlu0 %6799
    %v6801 = vsel %vm5308, %v6800, 0
    %6803 = vmatprep.subr.mxu0 0.0
    %6804 = vmatpush1.msra.mxu0 %v6795
    %6805 = vmatprep.subr.mxu0 0.0
    %6806 = vmatpush1.msra.mxu0 %v6796
    %6807 = vmatprep.subr.mxu0 0.0
    %6808 = vmatpush1.msra.mxu0 %v6797
    %6809 = vmatprep.subr.mxu0 0.0
    %6810 = vmatpush1.msra.mxu0 0.0
    %6811 = vmatprep.subr.mxu0 0.0
    %6812 = vmatpush1.msra.mxu0 0.0
    %6813 = vmatprep.subr.mxu0 0.0
    %6814 = vmatpush1.msra.mxu0 0.0
    %6815 = vmatprep.subr.mxu0 0.0
    %6816 = vmatpush1.msra.mxu0 0.0
    %6817 = vmatprep.subr.mxu0 0.0
    %6818 = vmatpush1.msra.mxu0 0.0
    %6819 = vmatprep.subr.mxu0 0.0
    %6820 = vmatpush1.msra.mxu0 0.0
    %6821 = vmatprep.subr.mxu0 0.0
    %6822 = vmatpush1.msra.mxu0 0.0
    %6823 = vmatprep.subr.mxu0 0.0
    %6824 = vmatpush1.msra.mxu0 0.0
    %6825 = vmatprep.subr.mxu0 0.0
    %6826 = vmatpush1.msra.mxu0 0.0
    %6827 = vmatprep.subr.mxu0 0.0
    %6828 = vmatpush1.msra.mxu0 0.0
    %6829 = vmatprep.subr.mxu0 0.0
    %6830 = vmatpush1.msra.mxu0 0.0
    %6831 = vmatprep.subr.mxu0 0.0
    %6832 = vmatpush1.msra.mxu0 0.0
    %6833 = vmatprep.subr.mxu0 0.0
    %6834 = vmatpush1.msra.mxu0 0.0
    %6835 = vmatprep.subr.mxu0 0.0
    %6836 = vmatpush1.msra.mxu0 0.0
    %6837 = vmatprep.subr.mxu0 0.0
    %6838 = vmatpush1.msra.mxu0 0.0
    %6839 = vmatprep.subr.mxu0 0.0
    %6840 = vmatpush1.msra.mxu0 0.0
    %6841 = vmatprep.subr.mxu0 0.0
    %6842 = vmatpush1.msra.mxu0 0.0
    %6843 = vmatprep.subr.mxu0 0.0
    %6844 = vmatpush1.msra.mxu0 0.0
    %6845 = vmatprep.subr.mxu0 0.0
    %6846 = vmatpush1.msra.mxu0 0.0
    %6847 = vmatprep.subr.mxu0 0.0
    %6848 = vmatpush1.msra.mxu0 0.0
    %6849 = vmatprep.subr.mxu0 0.0
    %6850 = vmatpush1.msra.mxu0 0.0
    %6851 = vmatprep.subr.mxu0 0.0
    %6852 = vmatpush1.msra.mxu0 0.0
    %6853 = vmatprep.subr.mxu0 0.0
    %6854 = vmatpush1.msra.mxu0 0.0
    %6855 = vmatprep.subr.mxu0 0.0
    %6856 = vmatpush1.msra.mxu0 0.0
    %6857 = vmatprep.subr.mxu0 0.0
    %6858 = vmatpush1.msra.mxu0 0.0
    %6859 = vmatprep.subr.mxu0 0.0
    %6860 = vmatpush1.msra.mxu0 0.0
    %6861 = vmatprep.subr.mxu0 0.0
    %6862 = vmatpush1.msra.mxu0 0.0
    %6863 = vmatprep.subr.mxu0 0.0
    %6864 = vmatpush1.msra.mxu0 0.0
    %6865 = vmatprep.subr.mxu0 0.0
    %6866 = vmatpush1.msra.mxu0 0.0
    %6867 = vmatprep.mubr.f32.mxu0 0.0
    %6868 = vmatmul.mubr.f32.gmra.mrb[0].mxu0 %v6801
    %v6869 = vpop.f32.mrb[0].mxu0
    %v6870 = vadd.f32 0.0, %v6869
    %v6871 = vpop.f32.mrb[0].mxu0
    %6872 = vdwg.mxu0
    %v6873 = vsel %vm5308, %v5297, 0
    %6875 = vmatprep.subr.mxu0 0.0
    %6876 = vmatpush1.msra.mxu0 %v6792
    %6877 = vmatprep.subr.mxu0 0.0
    %6878 = vmatpush1.msra.mxu0 %v6793
    %6879 = vmatprep.subr.mxu0 0.0
    %6880 = vmatpush1.msra.mxu0 %v6794
    %6881 = vmatprep.subr.mxu0 0.0
    %6882 = vmatpush1.msra.mxu0 0.0
    %6883 = vmatprep.subr.mxu0 0.0
    %6884 = vmatpush1.msra.mxu0 0.0
    %6885 = vmatprep.subr.mxu0 0.0
    %6886 = vmatpush1.msra.mxu0 0.0
    %6887 = vmatprep.subr.mxu0 0.0
    %6888 = vmatpush1.msra.mxu0 0.0
    %6889 = vmatprep.subr.mxu0 0.0
    %6890 = vmatpush1.msra.mxu0 0.0
    %6891 = vmatprep.subr.mxu0 0.0
    %6892 = vmatpush1.msra.mxu0 0.0
    %6893 = vmatprep.subr.mxu0 0.0
    %6894 = vmatpush1.msra.mxu0 0.0
    %6895 = vmatprep.subr.mxu0 0.0
    %6896 = vmatpush1.msra.mxu0 0.0
    %6897 = vmatprep.subr.mxu0 0.0
    %6898 = vmatpush1.msra.mxu0 0.0
    %6899 = vmatprep.subr.mxu0 0.0
    %6900 = vmatpush1.msra.mxu0 0.0
    %6901 = vmatprep.subr.mxu0 0.0
    %6902 = vmatpush1.msra.mxu0 0.0
    %6903 = vmatprep.subr.mxu0 0.0
    %6904 = vmatpush1.msra.mxu0 0.0
    %6905 = vmatprep.subr.mxu0 0.0
    %6906 = vmatpush1.msra.mxu0 0.0
    %6907 = vmatprep.subr.mxu0 0.0
    %6908 = vmatpush1.msra.mxu0 0.0
    %6909 = vmatprep.subr.mxu0 0.0
    %6910 = vmatpush1.msra.mxu0 0.0
    %6911 = vmatprep.subr.mxu0 0.0
    %6912 = vmatpush1.msra.mxu0 0.0
    %6913 = vmatprep.subr.mxu0 0.0
    %6914 = vmatpush1.msra.mxu0 0.0
    %6915 = vmatprep.subr.mxu0 0.0
    %6916 = vmatpush1.msra.mxu0 0.0
    %6917 = vmatprep.subr.mxu0 0.0
    %6918 = vmatpush1.msra.mxu0 0.0
    %6919 = vmatprep.subr.mxu0 0.0
    %6920 = vmatpush1.msra.mxu0 0.0
    %6921 = vmatprep.subr.mxu0 0.0
    %6922 = vmatpush1.msra.mxu0 0.0
    %6923 = vmatprep.subr.mxu0 0.0
    %6924 = vmatpush1.msra.mxu0 0.0
    %6925 = vmatprep.subr.mxu0 0.0
    %6926 = vmatpush1.msra.mxu0 0.0
    %6927 = vmatprep.subr.mxu0 0.0
    %6928 = vmatpush1.msra.mxu0 0.0
    %6929 = vmatprep.subr.mxu0 0.0
    %6930 = vmatpush1.msra.mxu0 0.0
    %6931 = vmatprep.subr.mxu0 0.0
    %6932 = vmatpush1.msra.mxu0 0.0
    %6933 = vmatprep.subr.mxu0 0.0
    %6934 = vmatpush1.msra.mxu0 0.0
    %6935 = vmatprep.subr.mxu0 0.0
    %6936 = vmatpush1.msra.mxu0 0.0
    %6937 = vmatprep.subr.mxu0 0.0
    %6938 = vmatpush1.msra.mxu0 0.0
    %6939 = vmatprep.mubr.f32.mxu0 0.0
    %6940 = vmatmul.mubr.f32.gmra.mrb[0].mxu0 %v6873
    %v6941 = vpop.f32.mrb[0].mxu0
    %v6942 = vadd.f32 %v6870, %v6941
    %v6943 = vpop.f32.mrb[0].mxu0
    %6944 = vdwg.mxu0
    %v6945 = vld [vmem:[%s5453] sm:$0xff]
    %v6946 = vld [vmem:[%s5453 + $0x8] sm:$0xff]
    %v6947 = vld [vmem:[%s5453 + $0x10] sm:$0xff]
    %v6948 = vrot.slane %v5297, 1
    %v6949 = vsel %vm5308, %v6948, 0
    %6951 = vmatprep.subr.mxu0 0.0
    %6952 = vmatpush1.msra.mxu0 %v6945
    %6953 = vmatprep.subr.mxu0 0.0
    %6954 = vmatpush1.msra.mxu0 %v6946
    %6955 = vmatprep.subr.mxu0 0.0
    %6956 = vmatpush1.msra.mxu0 %v6947
    %6957 = vmatprep.subr.mxu0 0.0
    %6958 = vmatpush1.msra.mxu0 0.0
    %6959 = vmatprep.subr.mxu0 0.0
    %6960 = vmatpush1.msra.mxu0 0.0
    %6961 = vmatprep.subr.mxu0 0.0
    %6962 = vmatpush1.msra.mxu0 0.0
    %6963 = vmatprep.subr.mxu0 0.0
    %6964 = vmatpush1.msra.mxu0 0.0
    %6965 = vmatprep.subr.mxu0 0.0
    %6966 = vmatpush1.msra.mxu0 0.0
    %6967 = vmatprep.subr.mxu0 0.0
    %6968 = vmatpush1.msra.mxu0 0.0
    %6969 = vmatprep.subr.mxu0 0.0
    %6970 = vmatpush1.msra.mxu0 0.0
    %6971 = vmatprep.subr.mxu0 0.0
    %6972 = vmatpush1.msra.mxu0 0.0
    %6973 = vmatprep.subr.mxu0 0.0
    %6974 = vmatpush1.msra.mxu0 0.0
    %6975 = vmatprep.subr.mxu0 0.0
    %6976 = vmatpush1.msra.mxu0 0.0
    %6977 = vmatprep.subr.mxu0 0.0
    %6978 = vmatpush1.msra.mxu0 0.0
    %6979 = vmatprep.subr.mxu0 0.0
    %6980 = vmatpush1.msra.mxu0 0.0
    %6981 = vmatprep.subr.mxu0 0.0
    %6982 = vmatpush1.msra.mxu0 0.0
    %6983 = vmatprep.subr.mxu0 0.0
    %6984 = vmatpush1.msra.mxu0 0.0
    %6985 = vmatprep.subr.mxu0 0.0
    %6986 = vmatpush1.msra.mxu0 0.0
    %6987 = vmatprep.subr.mxu0 0.0
    %6988 = vmatpush1.msra.mxu0 0.0
    %6989 = vmatprep.subr.mxu0 0.0
    %6990 = vmatpush1.msra.mxu0 0.0
    %6991 = vmatprep.subr.mxu0 0.0
    %6992 = vmatpush1.msra.mxu0 0.0
    %6993 = vmatprep.subr.mxu0 0.0
    %6994 = vmatpush1.msra.mxu0 0.0
    %6995 = vmatprep.subr.mxu0 0.0
    %6996 = vmatpush1.msra.mxu0 0.0
    %6997 = vmatprep.subr.mxu0 0.0
    %6998 = vmatpush1.msra.mxu0 0.0
    %6999 = vmatprep.subr.mxu0 0.0
    %7000 = vmatpush1.msra.mxu0 0.0
    %7001 = vmatprep.subr.mxu0 0.0
    %7002 = vmatpush1.msra.mxu0 0.0
    %7003 = vmatprep.subr.mxu0 0.0
    %7004 = vmatpush1.msra.mxu0 0.0
    %7005 = vmatprep.subr.mxu0 0.0
    %7006 = vmatpush1.msra.mxu0 0.0
    %7007 = vmatprep.subr.mxu0 0.0
    %7008 = vmatpush1.msra.mxu0 0.0
    %7009 = vmatprep.subr.mxu0 0.0
    %7010 = vmatpush1.msra.mxu0 0.0
    %7011 = vmatprep.subr.mxu0 0.0
    %7012 = vmatpush1.msra.mxu0 0.0
    %7013 = vmatprep.subr.mxu0 0.0
    %7014 = vmatpush1.msra.mxu0 0.0
    %7015 = vmatprep.mubr.f32.mxu0 0.0
    %7016 = vmatmul.mubr.f32.gmra.mrb[0].mxu0 %v6949
    %v7017 = vpop.f32.mrb[0].mxu0
    %v7018 = vadd.f32 0.0, %v7017
    %v7019 = vpop.f32.mrb[0].mxu0
    %7020 = vdwg.mxu0
    %v7021 = vadd.f32 %v6942, %v7018
    %v7022 = vld [vmem:[%s5531] sm:$0xff]
    %v7023 = vld [vmem:[%s5531 + $0x8] sm:$0xff]
    %v7024 = vld [vmem:[%s5531 + $0x10] sm:$0xff]
    %7025 = vrot.lane.b32.xlu0 %v6948, 120
    %v7026 = vpop.permute.xlu0 %7025
    %v7027 = vsel %vm5308, %v7026, 0
    %7029 = vmatprep.subr.mxu0 0.0
    %7030 = vmatpush1.msra.mxu0 %v7022
    %7031 = vmatprep.subr.mxu0 0.0
    %7032 = vmatpush1.msra.mxu0 %v7023
    %7033 = vmatprep.subr.mxu0 0.0
    %7034 = vmatpush1.msra.mxu0 %v7024
    %7035 = vmatprep.subr.mxu0 0.0
    %7036 = vmatpush1.msra.mxu0 0.0
    %7037 = vmatprep.subr.mxu0 0.0
    %7038 = vmatpush1.msra.mxu0 0.0
    %7039 = vmatprep.subr.mxu0 0.0
    %7040 = vmatpush1.msra.mxu0 0.0
    %7041 = vmatprep.subr.mxu0 0.0
    %7042 = vmatpush1.msra.mxu0 0.0
    %7043 = vmatprep.subr.mxu0 0.0
    %7044 = vmatpush1.msra.mxu0 0.0
    %7045 = vmatprep.subr.mxu0 0.0
    %7046 = vmatpush1.msra.mxu0 0.0
    %7047 = vmatprep.subr.mxu0 0.0
    %7048 = vmatpush1.msra.mxu0 0.0
    %7049 = vmatprep.subr.mxu0 0.0
    %7050 = vmatpush1.msra.mxu0 0.0
    %7051 = vmatprep.subr.mxu0 0.0
    %7052 = vmatpush1.msra.mxu0 0.0
    %7053 = vmatprep.subr.mxu0 0.0
    %7054 = vmatpush1.msra.mxu0 0.0
    %7055 = vmatprep.subr.mxu0 0.0
    %7056 = vmatpush1.msra.mxu0 0.0
    %7057 = vmatprep.subr.mxu0 0.0
    %7058 = vmatpush1.msra.mxu0 0.0
    %7059 = vmatprep.subr.mxu0 0.0
    %7060 = vmatpush1.msra.mxu0 0.0
    %7061 = vmatprep.subr.mxu0 0.0
    %7062 = vmatpush1.msra.mxu0 0.0
    %7063 = vmatprep.subr.mxu0 0.0
    %7064 = vmatpush1.msra.mxu0 0.0
    %7065 = vmatprep.subr.mxu0 0.0
    %7066 = vmatpush1.msra.mxu0 0.0
    %7067 = vmatprep.subr.mxu0 0.0
    %7068 = vmatpush1.msra.mxu0 0.0
    %7069 = vmatprep.subr.mxu0 0.0
    %7070 = vmatpush1.msra.mxu0 0.0
    %7071 = vmatprep.subr.mxu0 0.0
    %7072 = vmatpush1.msra.mxu0 0.0
    %7073 = vmatprep.subr.mxu0 0.0
    %7074 = vmatpush1.msra.mxu0 0.0
    %7075 = vmatprep.subr.mxu0 0.0
    %7076 = vmatpush1.msra.mxu0 0.0
    %7077 = vmatprep.subr.mxu0 0.0
    %7078 = vmatpush1.msra.mxu0 0.0
    %7079 = vmatprep.subr.mxu0 0.0
    %7080 = vmatpush1.msra.mxu0 0.0
    %7081 = vmatprep.subr.mxu0 0.0
    %7082 = vmatpush1.msra.mxu0 0.0
    %7083 = vmatprep.subr.mxu0 0.0
    %7084 = vmatpush1.msra.mxu0 0.0
    %7085 = vmatprep.subr.mxu0 0.0
    %7086 = vmatpush1.msra.mxu0 0.0
    %7087 = vmatprep.subr.mxu0 0.0
    %7088 = vmatpush1.msra.mxu0 0.0
    %7089 = vmatprep.subr.mxu0 0.0
    %7090 = vmatpush1.msra.mxu0 0.0
    %7091 = vmatprep.subr.mxu0 0.0
    %7092 = vmatpush1.msra.mxu0 0.0
    %7093 = vmatprep.mubr.f32.mxu0 0.0
    %7094 = vmatmul.mubr.f32.gmra.mrb[0].mxu0 %v7027
    %v7095 = vpop.f32.mrb[0].mxu0
    %v7096 = vadd.f32 0.0, %v7095
    %v7097 = vpop.f32.mrb[0].mxu0
    %7098 = vdwg.mxu0
    %v7099 = vadd.f32 %v7021, %v7096
    %v7100 = vld [vmem:[#allocation15] sm:$0x1]
    %v7102 = vlaneseq
    %v7103 = vshrl.u32 %v7102, 7
    %v7104 = vsub.s32 0, %v7103
    %v7105 = vrot.slane %v7100, %v7104
    %v7107 = vadd.f32 %v7099, %v7105
    %v7108 = vmax.f32 %v7107, 0.0
    %v7109 = vld [vmem:[#allocation16] sm:$0xff]
    %v7110 = vld [vmem:[#allocation16 + $0x8] sm:$0xff]
    %v7111 = vld [vmem:[%s5621] sm:$0xff]
    %v7112 = vld [vmem:[%s5621 + $0x8] sm:$0xff]
    %v7113 = vsel %vm2250, %v6800, 0
    %7115 = vmatprep.subr.mxu0 0.0
    %7116 = vmatpush1.msra.mxu0 %v7111
    %7117 = vmatprep.subr.mxu0 0.0
    %7118 = vmatpush1.msra.mxu0 %v7112
    %7119 = vmatprep.subr.mxu0 0.0
    %7120 = vmatpush1.msra.mxu0 0.0
    %7121 = vmatprep.subr.mxu0 0.0
    %7122 = vmatpush1.msra.mxu0 0.0
    %7123 = vmatprep.subr.mxu0 0.0
    %7124 = vmatpush1.msra.mxu0 0.0
    %7125 = vmatprep.subr.mxu0 0.0
    %7126 = vmatpush1.msra.mxu0 0.0
    %7127 = vmatprep.subr.mxu0 0.0
    %7128 = vmatpush1.msra.mxu0 0.0
    %7129 = vmatprep.subr.mxu0 0.0
    %7130 = vmatpush1.msra.mxu0 0.0
    %7131 = vmatprep.subr.mxu0 0.0
    %7132 = vmatpush1.msra.mxu0 0.0
    %7133 = vmatprep.subr.mxu0 0.0
    %7134 = vmatpush1.msra.mxu0 0.0
    %7135 = vmatprep.subr.mxu0 0.0
    %7136 = vmatpush1.msra.mxu0 0.0
    %7137 = vmatprep.subr.mxu0 0.0
    %7138 = vmatpush1.msra.mxu0 0.0
    %7139 = vmatprep.subr.mxu0 0.0
    %7140 = vmatpush1.msra.mxu0 0.0
    %7141 = vmatprep.subr.mxu0 0.0
    %7142 = vmatpush1.msra.mxu0 0.0
    %7143 = vmatprep.subr.mxu0 0.0
    %7144 = vmatpush1.msra.mxu0 0.0
    %7145 = vmatprep.subr.mxu0 0.0
    %7146 = vmatpush1.msra.mxu0 0.0
    %7147 = vmatprep.subr.mxu0 0.0
    %7148 = vmatpush1.msra.mxu0 0.0
    %7149 = vmatprep.subr.mxu0 0.0
    %7150 = vmatpush1.msra.mxu0 0.0
    %7151 = vmatprep.subr.mxu0 0.0
    %7152 = vmatpush1.msra.mxu0 0.0
    %7153 = vmatprep.subr.mxu0 0.0
    %7154 = vmatpush1.msra.mxu0 0.0
    %7155 = vmatprep.subr.mxu0 0.0
    %7156 = vmatpush1.msra.mxu0 0.0
    %7157 = vmatprep.subr.mxu0 0.0
    %7158 = vmatpush1.msra.mxu0 0.0
    %7159 = vmatprep.subr.mxu0 0.0
    %7160 = vmatpush1.msra.mxu0 0.0
    %7161 = vmatprep.subr.mxu0 0.0
    %7162 = vmatpush1.msra.mxu0 0.0
    %7163 = vmatprep.subr.mxu0 0.0
    %7164 = vmatpush1.msra.mxu0 0.0
    %7165 = vmatprep.subr.mxu0 0.0
    %7166 = vmatpush1.msra.mxu0 0.0
    %7167 = vmatprep.subr.mxu0 0.0
    %7168 = vmatpush1.msra.mxu0 0.0
    %7169 = vmatprep.subr.mxu0 0.0
    %7170 = vmatpush1.msra.mxu0 0.0
    %7171 = vmatprep.subr.mxu0 0.0
    %7172 = vmatpush1.msra.mxu0 0.0
    %7173 = vmatprep.subr.mxu0 0.0
    %7174 = vmatpush1.msra.mxu0 0.0
    %7175 = vmatprep.subr.mxu0 0.0
    %7176 = vmatpush1.msra.mxu0 0.0
    %7177 = vmatprep.subr.mxu0 0.0
    %7178 = vmatpush1.msra.mxu0 0.0
    %7179 = vmatprep.mubr.f32.mxu0 0.0
    %7180 = vmatmul.mubr.f32.gmra.mrb[0].mxu0 %v7113
    %v7181 = vpop.f32.mrb[0].mxu0
    %v7182 = vadd.f32 0.0, %v7181
    %v7183 = vpop.f32.mrb[0].mxu0
    %7184 = vdwg.mxu0
    %v7185 = vsel %vm2250, %v5297, 0
    %7187 = vmatprep.subr.mxu0 0.0
    %7188 = vmatpush1.msra.mxu0 %v7109
    %7189 = vmatprep.subr.mxu0 0.0
    %7190 = vmatpush1.msra.mxu0 %v7110
    %7191 = vmatprep.subr.mxu0 0.0
    %7192 = vmatpush1.msra.mxu0 0.0
    %7193 = vmatprep.subr.mxu0 0.0
    %7194 = vmatpush1.msra.mxu0 0.0
    %7195 = vmatprep.subr.mxu0 0.0
    %7196 = vmatpush1.msra.mxu0 0.0
    %7197 = vmatprep.subr.mxu0 0.0
    %7198 = vmatpush1.msra.mxu0 0.0
    %7199 = vmatprep.subr.mxu0 0.0
    %7200 = vmatpush1.msra.mxu0 0.0
    %7201 = vmatprep.subr.mxu0 0.0
    %7202 = vmatpush1.msra.mxu0 0.0
    %7203 = vmatprep.subr.mxu0 0.0
    %7204 = vmatpush1.msra.mxu0 0.0
    %7205 = vmatprep.subr.mxu0 0.0
    %7206 = vmatpush1.msra.mxu0 0.0
    %7207 = vmatprep.subr.mxu0 0.0
    %7208 = vmatpush1.msra.mxu0 0.0
    %7209 = vmatprep.subr.mxu0 0.0
    %7210 = vmatpush1.msra.mxu0 0.0
    %7211 = vmatprep.subr.mxu0 0.0
    %7212 = vmatpush1.msra.mxu0 0.0
    %7213 = vmatprep.subr.mxu0 0.0
    %7214 = vmatpush1.msra.mxu0 0.0
    %7215 = vmatprep.subr.mxu0 0.0
    %7216 = vmatpush1.msra.mxu0 0.0
    %7217 = vmatprep.subr.mxu0 0.0
    %7218 = vmatpush1.msra.mxu0 0.0
    %7219 = vmatprep.subr.mxu0 0.0
    %7220 = vmatpush1.msra.mxu0 0.0
    %7221 = vmatprep.subr.mxu0 0.0
    %7222 = vmatpush1.msra.mxu0 0.0
    %7223 = vmatprep.subr.mxu0 0.0
    %7224 = vmatpush1.msra.mxu0 0.0
    %7225 = vmatprep.subr.mxu0 0.0
    %7226 = vmatpush1.msra.mxu0 0.0
    %7227 = vmatprep.subr.mxu0 0.0
    %7228 = vmatpush1.msra.mxu0 0.0
    %7229 = vmatprep.subr.mxu0 0.0
    %7230 = vmatpush1.msra.mxu0 0.0
    %7231 = vmatprep.subr.mxu0 0.0
    %7232 = vmatpush1.msra.mxu0 0.0
    %7233 = vmatprep.subr.mxu0 0.0
    %7234 = vmatpush1.msra.mxu0 0.0
    %7235 = vmatprep.subr.mxu0 0.0
    %7236 = vmatpush1.msra.mxu0 0.0
    %7237 = vmatprep.subr.mxu0 0.0
    %7238 = vmatpush1.msra.mxu0 0.0
    %7239 = vmatprep.subr.mxu0 0.0
    %7240 = vmatpush1.msra.mxu0 0.0
    %7241 = vmatprep.subr.mxu0 0.0
    %7242 = vmatpush1.msra.mxu0 0.0
    %7243 = vmatprep.subr.mxu0 0.0
    %7244 = vmatpush1.msra.mxu0 0.0
    %7245 = vmatprep.subr.mxu0 0.0
    %7246 = vmatpush1.msra.mxu0 0.0
    %7247 = vmatprep.subr.mxu0 0.0
    %7248 = vmatpush1.msra.mxu0 0.0
    %7249 = vmatprep.subr.mxu0 0.0
    %7250 = vmatpush1.msra.mxu0 0.0
    %7251 = vmatprep.mubr.f32.mxu0 0.0
    %7252 = vmatmul.mubr.f32.gmra.mrb[0].mxu0 %v7185
    %v7253 = vpop.f32.mrb[0].mxu0
    %v7254 = vadd.f32 %v7182, %v7253
    %v7255 = vpop.f32.mrb[0].mxu0
    %7256 = vdwg.mxu0
    %v7257 = vld [vmem:[%s5768] sm:$0xff]
    %v7258 = vld [vmem:[%s5768 + $0x8] sm:$0xff]
    %7259 = vrot.lane.b32.xlu0 %v5297, 112
    %v7260 = vpop.permute.xlu0 %7259
    %v7261 = vsel %vm2250, %v7260, 0
    %7263 = vmatprep.subr.mxu0 0.0
    %7264 = vmatpush1.msra.mxu0 %v7257
    %7265 = vmatprep.subr.mxu0 0.0
    %7266 = vmatpush1.msra.mxu0 %v7258
    %7267 = vmatprep.subr.mxu0 0.0
    %7268 = vmatpush1.msra.mxu0 0.0
    %7269 = vmatprep.subr.mxu0 0.0
    %7270 = vmatpush1.msra.mxu0 0.0
    %7271 = vmatprep.subr.mxu0 0.0
    %7272 = vmatpush1.msra.mxu0 0.0
    %7273 = vmatprep.subr.mxu0 0.0
    %7274 = vmatpush1.msra.mxu0 0.0
    %7275 = vmatprep.subr.mxu0 0.0
    %7276 = vmatpush1.msra.mxu0 0.0
    %7277 = vmatprep.subr.mxu0 0.0
    %7278 = vmatpush1.msra.mxu0 0.0
    %7279 = vmatprep.subr.mxu0 0.0
    %7280 = vmatpush1.msra.mxu0 0.0
    %7281 = vmatprep.subr.mxu0 0.0
    %7282 = vmatpush1.msra.mxu0 0.0
    %7283 = vmatprep.subr.mxu0 0.0
    %7284 = vmatpush1.msra.mxu0 0.0
    %7285 = vmatprep.subr.mxu0 0.0
    %7286 = vmatpush1.msra.mxu0 0.0
    %7287 = vmatprep.subr.mxu0 0.0
    %7288 = vmatpush1.msra.mxu0 0.0
    %7289 = vmatprep.subr.mxu0 0.0
    %7290 = vmatpush1.msra.mxu0 0.0
    %7291 = vmatprep.subr.mxu0 0.0
    %7292 = vmatpush1.msra.mxu0 0.0
    %7293 = vmatprep.subr.mxu0 0.0
    %7294 = vmatpush1.msra.mxu0 0.0
    %7295 = vmatprep.subr.mxu0 0.0
    %7296 = vmatpush1.msra.mxu0 0.0
    %7297 = vmatprep.subr.mxu0 0.0
    %7298 = vmatpush1.msra.mxu0 0.0
    %7299 = vmatprep.subr.mxu0 0.0
    %7300 = vmatpush1.msra.mxu0 0.0
    %7301 = vmatprep.subr.mxu0 0.0
    %7302 = vmatpush1.msra.mxu0 0.0
    %7303 = vmatprep.subr.mxu0 0.0
    %7304 = vmatpush1.msra.mxu0 0.0
    %7305 = vmatprep.subr.mxu0 0.0
    %7306 = vmatpush1.msra.mxu0 0.0
    %7307 = vmatprep.subr.mxu0 0.0
    %7308 = vmatpush1.msra.mxu0 0.0
    %7309 = vmatprep.subr.mxu0 0.0
    %7310 = vmatpush1.msra.mxu0 0.0
    %7311 = vmatprep.subr.mxu0 0.0
    %7312 = vmatpush1.msra.mxu0 0.0
    %7313 = vmatprep.subr.mxu0 0.0
    %7314 = vmatpush1.msra.mxu0 0.0
    %7315 = vmatprep.subr.mxu0 0.0
    %7316 = vmatpush1.msra.mxu0 0.0
    %7317 = vmatprep.subr.mxu0 0.0
    %7318 = vmatpush1.msra.mxu0 0.0
    %7319 = vmatprep.subr.mxu0 0.0
    %7320 = vmatpush1.msra.mxu0 0.0
    %7321 = vmatprep.subr.mxu0 0.0
    %7322 = vmatpush1.msra.mxu0 0.0
    %7323 = vmatprep.subr.mxu0 0.0
    %7324 = vmatpush1.msra.mxu0 0.0
    %7325 = vmatprep.subr.mxu0 0.0
    %7326 = vmatpush1.msra.mxu0 0.0
    %7327 = vmatprep.mubr.f32.mxu0 0.0
    %7328 = vmatmul.mubr.f32.gmra.mrb[0].mxu0 %v7261
    %v7329 = vpop.f32.mrb[0].mxu0
    %v7330 = vadd.f32 0.0, %v7329
    %v7331 = vpop.f32.mrb[0].mxu0
    %7332 = vdwg.mxu0
    %v7333 = vadd.f32 %v7254, %v7330
    %v7334 = vld [vmem:[%s5846] sm:$0xff]
    %v7335 = vld [vmem:[%s5846 + $0x8] sm:$0xff]
    %v7336 = vsel %vm2250, %v6948, 0
    %7338 = vmatprep.subr.mxu0 0.0
    %7339 = vmatpush1.msra.mxu0 %v7334
    %7340 = vmatprep.subr.mxu0 0.0
    %7341 = vmatpush1.msra.mxu0 %v7335
    %7342 = vmatprep.subr.mxu0 0.0
    %7343 = vmatpush1.msra.mxu0 0.0
    %7344 = vmatprep.subr.mxu0 0.0
    %7345 = vmatpush1.msra.mxu0 0.0
    %7346 = vmatprep.subr.mxu0 0.0
    %7347 = vmatpush1.msra.mxu0 0.0
    %7348 = vmatprep.subr.mxu0 0.0
    %7349 = vmatpush1.msra.mxu0 0.0
    %7350 = vmatprep.subr.mxu0 0.0
    %7351 = vmatpush1.msra.mxu0 0.0
    %7352 = vmatprep.subr.mxu0 0.0
    %7353 = vmatpush1.msra.mxu0 0.0
    %7354 = vmatprep.subr.mxu0 0.0
    %7355 = vmatpush1.msra.mxu0 0.0
    %7356 = vmatprep.subr.mxu0 0.0
    %7357 = vmatpush1.msra.mxu0 0.0
    %7358 = vmatprep.subr.mxu0 0.0
    %7359 = vmatpush1.msra.mxu0 0.0
    %7360 = vmatprep.subr.mxu0 0.0
    %7361 = vmatpush1.msra.mxu0 0.0
    %7362 = vmatprep.subr.mxu0 0.0
    %7363 = vmatpush1.msra.mxu0 0.0
    %7364 = vmatprep.subr.mxu0 0.0
    %7365 = vmatpush1.msra.mxu0 0.0
    %7366 = vmatprep.subr.mxu0 0.0
    %7367 = vmatpush1.msra.mxu0 0.0
    %7368 = vmatprep.subr.mxu0 0.0
    %7369 = vmatpush1.msra.mxu0 0.0
    %7370 = vmatprep.subr.mxu0 0.0
    %7371 = vmatpush1.msra.mxu0 0.0
    %7372 = vmatprep.subr.mxu0 0.0
    %7373 = vmatpush1.msra.mxu0 0.0
    %7374 = vmatprep.subr.mxu0 0.0
    %7375 = vmatpush1.msra.mxu0 0.0
    %7376 = vmatprep.subr.mxu0 0.0
    %7377 = vmatpush1.msra.mxu0 0.0
    %7378 = vmatprep.subr.mxu0 0.0
    %7379 = vmatpush1.msra.mxu0 0.0
    %7380 = vmatprep.subr.mxu0 0.0
    %7381 = vmatpush1.msra.mxu0 0.0
    %7382 = vmatprep.subr.mxu0 0.0
    %7383 = vmatpush1.msra.mxu0 0.0
    %7384 = vmatprep.subr.mxu0 0.0
    %7385 = vmatpush1.msra.mxu0 0.0
    %7386 = vmatprep.subr.mxu0 0.0
    %7387 = vmatpush1.msra.mxu0 0.0
    %7388 = vmatprep.subr.mxu0 0.0
    %7389 = vmatpush1.msra.mxu0 0.0
    %7390 = vmatprep.subr.mxu0 0.0
    %7391 = vmatpush1.msra.mxu0 0.0
    %7392 = vmatprep.subr.mxu0 0.0
    %7393 = vmatpush1.msra.mxu0 0.0
    %7394 = vmatprep.subr.mxu0 0.0
    %7395 = vmatpush1.msra.mxu0 0.0
    %7396 = vmatprep.subr.mxu0 0.0
    %7397 = vmatpush1.msra.mxu0 0.0
    %7398 = vmatprep.subr.mxu0 0.0
    %7399 = vmatpush1.msra.mxu0 0.0
    %7400 = vmatprep.subr.mxu0 0.0
    %7401 = vmatpush1.msra.mxu0 0.0
    %7402 = vmatprep.mubr.f32.mxu0 0.0
    %7403 = vmatmul.mubr.f32.gmra.mrb[0].mxu0 %v7336
    %v7404 = vpop.f32.mrb[0].mxu0
    %v7405 = vadd.f32 0.0, %v7404
    %v7406 = vpop.f32.mrb[0].mxu0
    %7407 = vdwg.mxu0
    %v7408 = vadd.f32 %v7333, %v7405
    %v7409 = vld [vmem:[%s5922] sm:$0xff]
    %v7410 = vld [vmem:[%s5922 + $0x8] sm:$0xff]
    %v7411 = vsel %vm2250, %v7026, 0
    %7413 = vmatprep.subr.mxu0 0.0
    %7414 = vmatpush1.msra.mxu0 %v7409
    %7415 = vmatprep.subr.mxu0 0.0
    %7416 = vmatpush1.msra.mxu0 %v7410
    %7417 = vmatprep.subr.mxu0 0.0
    %7418 = vmatpush1.msra.mxu0 0.0
    %7419 = vmatprep.subr.mxu0 0.0
    %7420 = vmatpush1.msra.mxu0 0.0
    %7421 = vmatprep.subr.mxu0 0.0
    %7422 = vmatpush1.msra.mxu0 0.0
    %7423 = vmatprep.subr.mxu0 0.0
    %7424 = vmatpush1.msra.mxu0 0.0
    %7425 = vmatprep.subr.mxu0 0.0
    %7426 = vmatpush1.msra.mxu0 0.0
    %7427 = vmatprep.subr.mxu0 0.0
    %7428 = vmatpush1.msra.mxu0 0.0
    %7429 = vmatprep.subr.mxu0 0.0
    %7430 = vmatpush1.msra.mxu0 0.0
    %7431 = vmatprep.subr.mxu0 0.0
    %7432 = vmatpush1.msra.mxu0 0.0
    %7433 = vmatprep.subr.mxu0 0.0
    %7434 = vmatpush1.msra.mxu0 0.0
    %7435 = vmatprep.subr.mxu0 0.0
    %7436 = vmatpush1.msra.mxu0 0.0
    %7437 = vmatprep.subr.mxu0 0.0
    %7438 = vmatpush1.msra.mxu0 0.0
    %7439 = vmatprep.subr.mxu0 0.0
    %7440 = vmatpush1.msra.mxu0 0.0
    %7441 = vmatprep.subr.mxu0 0.0
    %7442 = vmatpush1.msra.mxu0 0.0
    %7443 = vmatprep.subr.mxu0 0.0
    %7444 = vmatpush1.msra.mxu0 0.0
    %7445 = vmatprep.subr.mxu0 0.0
    %7446 = vmatpush1.msra.mxu0 0.0
    %7447 = vmatprep.subr.mxu0 0.0
    %7448 = vmatpush1.msra.mxu0 0.0
    %7449 = vmatprep.subr.mxu0 0.0
    %7450 = vmatpush1.msra.mxu0 0.0
    %7451 = vmatprep.subr.mxu0 0.0
    %7452 = vmatpush1.msra.mxu0 0.0
    %7453 = vmatprep.subr.mxu0 0.0
    %7454 = vmatpush1.msra.mxu0 0.0
    %7455 = vmatprep.subr.mxu0 0.0
    %7456 = vmatpush1.msra.mxu0 0.0
    %7457 = vmatprep.subr.mxu0 0.0
    %7458 = vmatpush1.msra.mxu0 0.0
    %7459 = vmatprep.subr.mxu0 0.0
    %7460 = vmatpush1.msra.mxu0 0.0
    %7461 = vmatprep.subr.mxu0 0.0
    %7462 = vmatpush1.msra.mxu0 0.0
    %7463 = vmatprep.subr.mxu0 0.0
    %7464 = vmatpush1.msra.mxu0 0.0
    %7465 = vmatprep.subr.mxu0 0.0
    %7466 = vmatpush1.msra.mxu0 0.0
    %7467 = vmatprep.subr.mxu0 0.0
    %7468 = vmatpush1.msra.mxu0 0.0
    %7469 = vmatprep.subr.mxu0 0.0
    %7470 = vmatpush1.msra.mxu0 0.0
    %7471 = vmatprep.subr.mxu0 0.0
    %7472 = vmatpush1.msra.mxu0 0.0
    %7473 = vmatprep.subr.mxu0 0.0
    %7474 = vmatpush1.msra.mxu0 0.0
    %7475 = vmatprep.subr.mxu0 0.0
    %7476 = vmatpush1.msra.mxu0 0.0
    %7477 = vmatprep.mubr.f32.mxu0 0.0
    %7478 = vmatmul.mubr.f32.gmra.mrb[0].mxu0 %v7411
    %v7479 = vpop.f32.mrb[0].mxu0
    %v7480 = vadd.f32 0.0, %v7479
    %v7481 = vpop.f32.mrb[0].mxu0
    %7482 = vdwg.mxu0
    %v7483 = vadd.f32 %v7408, %v7480
    %v7484 = vld [vmem:[%s5998] sm:$0xff]
    %v7485 = vld [vmem:[%s5998 + $0x8] sm:$0xff]
    %7486 = vrot.lane.b32.xlu0 %v6948, 112
    %v7487 = vpop.permute.xlu0 %7486
    %v7488 = vsel %vm2250, %v7487, 0
    %7490 = vmatprep.subr.mxu0 0.0
    %7491 = vmatpush1.msra.mxu0 %v7484
    %7492 = vmatprep.subr.mxu0 0.0
    %7493 = vmatpush1.msra.mxu0 %v7485
    %7494 = vmatprep.subr.mxu0 0.0
    %7495 = vmatpush1.msra.mxu0 0.0
    %7496 = vmatprep.subr.mxu0 0.0
    %7497 = vmatpush1.msra.mxu0 0.0
    %7498 = vmatprep.subr.mxu0 0.0
    %7499 = vmatpush1.msra.mxu0 0.0
    %7500 = vmatprep.subr.mxu0 0.0
    %7501 = vmatpush1.msra.mxu0 0.0
    %7502 = vmatprep.subr.mxu0 0.0
    %7503 = vmatpush1.msra.mxu0 0.0
    %7504 = vmatprep.subr.mxu0 0.0
    %7505 = vmatpush1.msra.mxu0 0.0
    %7506 = vmatprep.subr.mxu0 0.0
    %7507 = vmatpush1.msra.mxu0 0.0
    %7508 = vmatprep.subr.mxu0 0.0
    %7509 = vmatpush1.msra.mxu0 0.0
    %7510 = vmatprep.subr.mxu0 0.0
    %7511 = vmatpush1.msra.mxu0 0.0
    %7512 = vmatprep.subr.mxu0 0.0
    %7513 = vmatpush1.msra.mxu0 0.0
    %7514 = vmatprep.subr.mxu0 0.0
    %7515 = vmatpush1.msra.mxu0 0.0
    %7516 = vmatprep.subr.mxu0 0.0
    %7517 = vmatpush1.msra.mxu0 0.0
    %7518 = vmatprep.subr.mxu0 0.0
    %7519 = vmatpush1.msra.mxu0 0.0
    %7520 = vmatprep.subr.mxu0 0.0
    %7521 = vmatpush1.msra.mxu0 0.0
    %7522 = vmatprep.subr.mxu0 0.0
    %7523 = vmatpush1.msra.mxu0 0.0
    %7524 = vmatprep.subr.mxu0 0.0
    %7525 = vmatpush1.msra.mxu0 0.0
    %7526 = vmatprep.subr.mxu0 0.0
    %7527 = vmatpush1.msra.mxu0 0.0
    %7528 = vmatprep.subr.mxu0 0.0
    %7529 = vmatpush1.msra.mxu0 0.0
    %7530 = vmatprep.subr.mxu0 0.0
    %7531 = vmatpush1.msra.mxu0 0.0
    %7532 = vmatprep.subr.mxu0 0.0
    %7533 = vmatpush1.msra.mxu0 0.0
    %7534 = vmatprep.subr.mxu0 0.0
    %7535 = vmatpush1.msra.mxu0 0.0
    %7536 = vmatprep.subr.mxu0 0.0
    %7537 = vmatpush1.msra.mxu0 0.0
    %7538 = vmatprep.subr.mxu0 0.0
    %7539 = vmatpush1.msra.mxu0 0.0
    %7540 = vmatprep.subr.mxu0 0.0
    %7541 = vmatpush1.msra.mxu0 0.0
    %7542 = vmatprep.subr.mxu0 0.0
    %7543 = vmatpush1.msra.mxu0 0.0
    %7544 = vmatprep.subr.mxu0 0.0
    %7545 = vmatpush1.msra.mxu0 0.0
    %7546 = vmatprep.subr.mxu0 0.0
    %7547 = vmatpush1.msra.mxu0 0.0
    %7548 = vmatprep.subr.mxu0 0.0
    %7549 = vmatpush1.msra.mxu0 0.0
    %7550 = vmatprep.subr.mxu0 0.0
    %7551 = vmatpush1.msra.mxu0 0.0
    %7552 = vmatprep.subr.mxu0 0.0
    %7553 = vmatpush1.msra.mxu0 0.0
    %7554 = vmatprep.mubr.f32.mxu0 0.0
    %7555 = vmatmul.mubr.f32.gmra.mrb[0].mxu0 %v7488
    %v7556 = vpop.f32.mrb[0].mxu0
    %v7557 = vadd.f32 0.0, %v7556
    %v7558 = vpop.f32.mrb[0].mxu0
    %7559 = vdwg.mxu0
    %v7560 = vadd.f32 %v7483, %v7557
    %v7561 = vld [vmem:[%s6076] sm:$0xff]
    %v7562 = vld [vmem:[%s6076 + $0x8] sm:$0xff]
    %v7563 = vrot.slane %v5297, 2
    %v7564 = vsel %vm2250, %v7563, 0
    %7566 = vmatprep.subr.mxu0 0.0
    %7567 = vmatpush1.msra.mxu0 %v7561
    %7568 = vmatprep.subr.mxu0 0.0
    %7569 = vmatpush1.msra.mxu0 %v7562
    %7570 = vmatprep.subr.mxu0 0.0
    %7571 = vmatpush1.msra.mxu0 0.0
    %7572 = vmatprep.subr.mxu0 0.0
    %7573 = vmatpush1.msra.mxu0 0.0
    %7574 = vmatprep.subr.mxu0 0.0
    %7575 = vmatpush1.msra.mxu0 0.0
    %7576 = vmatprep.subr.mxu0 0.0
    %7577 = vmatpush1.msra.mxu0 0.0
    %7578 = vmatprep.subr.mxu0 0.0
    %7579 = vmatpush1.msra.mxu0 0.0
    %7580 = vmatprep.subr.mxu0 0.0
    %7581 = vmatpush1.msra.mxu0 0.0
    %7582 = vmatprep.subr.mxu0 0.0
    %7583 = vmatpush1.msra.mxu0 0.0
    %7584 = vmatprep.subr.mxu0 0.0
    %7585 = vmatpush1.msra.mxu0 0.0
    %7586 = vmatprep.subr.mxu0 0.0
    %7587 = vmatpush1.msra.mxu0 0.0
    %7588 = vmatprep.subr.mxu0 0.0
    %7589 = vmatpush1.msra.mxu0 0.0
    %7590 = vmatprep.subr.mxu0 0.0
    %7591 = vmatpush1.msra.mxu0 0.0
    %7592 = vmatprep.subr.mxu0 0.0
    %7593 = vmatpush1.msra.mxu0 0.0
    %7594 = vmatprep.subr.mxu0 0.0
    %7595 = vmatpush1.msra.mxu0 0.0
    %7596 = vmatprep.subr.mxu0 0.0
    %7597 = vmatpush1.msra.mxu0 0.0
    %7598 = vmatprep.subr.mxu0 0.0
    %7599 = vmatpush1.msra.mxu0 0.0
    %7600 = vmatprep.subr.mxu0 0.0
    %7601 = vmatpush1.msra.mxu0 0.0
    %7602 = vmatprep.subr.mxu0 0.0
    %7603 = vmatpush1.msra.mxu0 0.0
    %7604 = vmatprep.subr.mxu0 0.0
    %7605 = vmatpush1.msra.mxu0 0.0
    %7606 = vmatprep.subr.mxu0 0.0
    %7607 = vmatpush1.msra.mxu0 0.0
    %7608 = vmatprep.subr.mxu0 0.0
    %7609 = vmatpush1.msra.mxu0 0.0
    %7610 = vmatprep.subr.mxu0 0.0
    %7611 = vmatpush1.msra.mxu0 0.0
    %7612 = vmatprep.subr.mxu0 0.0
    %7613 = vmatpush1.msra.mxu0 0.0
    %7614 = vmatprep.subr.mxu0 0.0
    %7615 = vmatpush1.msra.mxu0 0.0
    %7616 = vmatprep.subr.mxu0 0.0
    %7617 = vmatpush1.msra.mxu0 0.0
    %7618 = vmatprep.subr.mxu0 0.0
    %7619 = vmatpush1.msra.mxu0 0.0
    %7620 = vmatprep.subr.mxu0 0.0
    %7621 = vmatpush1.msra.mxu0 0.0
    %7622 = vmatprep.subr.mxu0 0.0
    %7623 = vmatpush1.msra.mxu0 0.0
    %7624 = vmatprep.subr.mxu0 0.0
    %7625 = vmatpush1.msra.mxu0 0.0
    %7626 = vmatprep.subr.mxu0 0.0
    %7627 = vmatpush1.msra.mxu0 0.0
    %7628 = vmatprep.subr.mxu0 0.0
    %7629 = vmatpush1.msra.mxu0 0.0
    %7630 = vmatprep.mubr.f32.mxu0 0.0
    %7631 = vmatmul.mubr.f32.gmra.mrb[0].mxu0 %v7564
    %v7632 = vpop.f32.mrb[0].mxu0
    %v7633 = vadd.f32 0.0, %v7632
    %v7634 = vpop.f32.mrb[0].mxu0
    %7635 = vdwg.mxu0
    %v7636 = vadd.f32 %v7560, %v7633
    %v7637 = vld [vmem:[%s6153] sm:$0xff]
    %v7638 = vld [vmem:[%s6153 + $0x8] sm:$0xff]
    %7639 = vrot.lane.b32.xlu0 %v7563, 120
    %v7640 = vpop.permute.xlu0 %7639
    %v7641 = vsel %vm2250, %v7640, 0
    %7643 = vmatprep.subr.mxu0 0.0
    %7644 = vmatpush1.msra.mxu0 %v7637
    %7645 = vmatprep.subr.mxu0 0.0
    %7646 = vmatpush1.msra.mxu0 %v7638
    %7647 = vmatprep.subr.mxu0 0.0
    %7648 = vmatpush1.msra.mxu0 0.0
    %7649 = vmatprep.subr.mxu0 0.0
    %7650 = vmatpush1.msra.mxu0 0.0
    %7651 = vmatprep.subr.mxu0 0.0
    %7652 = vmatpush1.msra.mxu0 0.0
    %7653 = vmatprep.subr.mxu0 0.0
    %7654 = vmatpush1.msra.mxu0 0.0
    %7655 = vmatprep.subr.mxu0 0.0
    %7656 = vmatpush1.msra.mxu0 0.0
    %7657 = vmatprep.subr.mxu0 0.0
    %7658 = vmatpush1.msra.mxu0 0.0
    %7659 = vmatprep.subr.mxu0 0.0
    %7660 = vmatpush1.msra.mxu0 0.0
    %7661 = vmatprep.subr.mxu0 0.0
    %7662 = vmatpush1.msra.mxu0 0.0
    %7663 = vmatprep.subr.mxu0 0.0
    %7664 = vmatpush1.msra.mxu0 0.0
    %7665 = vmatprep.subr.mxu0 0.0
    %7666 = vmatpush1.msra.mxu0 0.0
    %7667 = vmatprep.subr.mxu0 0.0
    %7668 = vmatpush1.msra.mxu0 0.0
    %7669 = vmatprep.subr.mxu0 0.0
    %7670 = vmatpush1.msra.mxu0 0.0
    %7671 = vmatprep.subr.mxu0 0.0
    %7672 = vmatpush1.msra.mxu0 0.0
    %7673 = vmatprep.subr.mxu0 0.0
    %7674 = vmatpush1.msra.mxu0 0.0
    %7675 = vmatprep.subr.mxu0 0.0
    %7676 = vmatpush1.msra.mxu0 0.0
    %7677 = vmatprep.subr.mxu0 0.0
    %7678 = vmatpush1.msra.mxu0 0.0
    %7679 = vmatprep.subr.mxu0 0.0
    %7680 = vmatpush1.msra.mxu0 0.0
    %7681 = vmatprep.subr.mxu0 0.0
    %7682 = vmatpush1.msra.mxu0 0.0
    %7683 = vmatprep.subr.mxu0 0.0
    %7684 = vmatpush1.msra.mxu0 0.0
    %7685 = vmatprep.subr.mxu0 0.0
    %7686 = vmatpush1.msra.mxu0 0.0
    %7687 = vmatprep.subr.mxu0 0.0
    %7688 = vmatpush1.msra.mxu0 0.0
    %7689 = vmatprep.subr.mxu0 0.0
    %7690 = vmatpush1.msra.mxu0 0.0
    %7691 = vmatprep.subr.mxu0 0.0
    %7692 = vmatpush1.msra.mxu0 0.0
    %7693 = vmatprep.subr.mxu0 0.0
    %7694 = vmatpush1.msra.mxu0 0.0
    %7695 = vmatprep.subr.mxu0 0.0
    %7696 = vmatpush1.msra.mxu0 0.0
    %7697 = vmatprep.subr.mxu0 0.0
    %7698 = vmatpush1.msra.mxu0 0.0
    %7699 = vmatprep.subr.mxu0 0.0
    %7700 = vmatpush1.msra.mxu0 0.0
    %7701 = vmatprep.subr.mxu0 0.0
    %7702 = vmatpush1.msra.mxu0 0.0
    %7703 = vmatprep.subr.mxu0 0.0
    %7704 = vmatpush1.msra.mxu0 0.0
    %7705 = vmatprep.subr.mxu0 0.0
    %7706 = vmatpush1.msra.mxu0 0.0
    %7707 = vmatprep.mubr.f32.mxu0 0.0
    %7708 = vmatmul.mubr.f32.gmra.mrb[0].mxu0 %v7641
    %v7709 = vpop.f32.mrb[0].mxu0
    %v7710 = vadd.f32 0.0, %v7709
    %v7711 = vpop.f32.mrb[0].mxu0
    %7712 = vdwg.mxu0
    %v7713 = vadd.f32 %v7636, %v7710
    %v7714 = vld [vmem:[%s6231] sm:$0xff]
    %v7715 = vld [vmem:[%s6231 + $0x8] sm:$0xff]
    %7716 = vrot.lane.b32.xlu0 %v7563, 112
    %v7717 = vpop.permute.xlu0 %7716
    %v7718 = vsel %vm2250, %v7717, 0
    %7720 = vmatprep.subr.mxu0 0.0
    %7721 = vmatpush1.msra.mxu0 %v7714
    %7722 = vmatprep.subr.mxu0 0.0
    %7723 = vmatpush1.msra.mxu0 %v7715
    %7724 = vmatprep.subr.mxu0 0.0
    %7725 = vmatpush1.msra.mxu0 0.0
    %7726 = vmatprep.subr.mxu0 0.0
    %7727 = vmatpush1.msra.mxu0 0.0
    %7728 = vmatprep.subr.mxu0 0.0
    %7729 = vmatpush1.msra.mxu0 0.0
    %7730 = vmatprep.subr.mxu0 0.0
    %7731 = vmatpush1.msra.mxu0 0.0
    %7732 = vmatprep.subr.mxu0 0.0
    %7733 = vmatpush1.msra.mxu0 0.0
    %7734 = vmatprep.subr.mxu0 0.0
    %7735 = vmatpush1.msra.mxu0 0.0
    %7736 = vmatprep.subr.mxu0 0.0
    %7737 = vmatpush1.msra.mxu0 0.0
    %7738 = vmatprep.subr.mxu0 0.0
    %7739 = vmatpush1.msra.mxu0 0.0
    %7740 = vmatprep.subr.mxu0 0.0
    %7741 = vmatpush1.msra.mxu0 0.0
    %7742 = vmatprep.subr.mxu0 0.0
    %7743 = vmatpush1.msra.mxu0 0.0
    %7744 = vmatprep.subr.mxu0 0.0
    %7745 = vmatpush1.msra.mxu0 0.0
    %7746 = vmatprep.subr.mxu0 0.0
    %7747 = vmatpush1.msra.mxu0 0.0
    %7748 = vmatprep.subr.mxu0 0.0
    %7749 = vmatpush1.msra.mxu0 0.0
    %7750 = vmatprep.subr.mxu0 0.0
    %7751 = vmatpush1.msra.mxu0 0.0
    %7752 = vmatprep.subr.mxu0 0.0
    %7753 = vmatpush1.msra.mxu0 0.0
    %7754 = vmatprep.subr.mxu0 0.0
    %7755 = vmatpush1.msra.mxu0 0.0
    %7756 = vmatprep.subr.mxu0 0.0
    %7757 = vmatpush1.msra.mxu0 0.0
    %7758 = vmatprep.subr.mxu0 0.0
    %7759 = vmatpush1.msra.mxu0 0.0
    %7760 = vmatprep.subr.mxu0 0.0
    %7761 = vmatpush1.msra.mxu0 0.0
    %7762 = vmatprep.subr.mxu0 0.0
    %7763 = vmatpush1.msra.mxu0 0.0
    %7764 = vmatprep.subr.mxu0 0.0
    %7765 = vmatpush1.msra.mxu0 0.0
    %7766 = vmatprep.subr.mxu0 0.0
    %7767 = vmatpush1.msra.mxu0 0.0
    %7768 = vmatprep.subr.mxu0 0.0
    %7769 = vmatpush1.msra.mxu0 0.0
    %7770 = vmatprep.subr.mxu0 0.0
    %7771 = vmatpush1.msra.mxu0 0.0
    %7772 = vmatprep.subr.mxu0 0.0
    %7773 = vmatpush1.msra.mxu0 0.0
    %7774 = vmatprep.subr.mxu0 0.0
    %7775 = vmatpush1.msra.mxu0 0.0
    %7776 = vmatprep.subr.mxu0 0.0
    %7777 = vmatpush1.msra.mxu0 0.0
    %7778 = vmatprep.subr.mxu0 0.0
    %7779 = vmatpush1.msra.mxu0 0.0
    %7780 = vmatprep.subr.mxu0 0.0
    %7781 = vmatpush1.msra.mxu0 0.0
    %7782 = vmatprep.subr.mxu0 0.0
    %7783 = vmatpush1.msra.mxu0 0.0
    %7784 = vmatprep.mubr.f32.mxu0 0.0
    %7785 = vmatmul.mubr.f32.gmra.mrb[0].mxu0 %v7718
    %v7786 = vpop.f32.mrb[0].mxu0
    %v7787 = vadd.f32 0.0, %v7786
    %v7788 = vpop.f32.mrb[0].mxu0
    %7789 = vdwg.mxu0
    %v7790 = vadd.f32 %v7713, %v7787
    %v7791 = vld [vmem:[#allocation18] sm:$0x1]
    %v7793 = vlaneseq
    %v7794 = vshrl.u32 %v7793, 7
    %v7795 = vsub.s32 0, %v7794
    %v7796 = vrot.slane %v7791, %v7795
    %v7798 = vadd.f32 %v7790, %v7796
    %v7799 = vmax.f32 %v7798, 0.0
    %7801 = vrot.lane.b32.xlu0 %v7799, 120
    %v7802 = vpop.permute.xlu0 %7801
    %v7804 = vmax.f32 %v7799, %v7802
    %v7806 = vrot.slane %v7804, 1
    %v7808 = vmax.f32 %v7804, %v7806
    %v7809 = vld [vmem:[#allocation19] sm:$0xff]
    %v7810 = vld [vmem:[%s20] sm:$0x1]
    %v7812 = vrot.slane %v7108, 1
    %7813 = vrot.lane.b32.xlu0 %v7812, 120
    %v7814 = vpop.permute.xlu0 %7813
    %v7815 = vsel %vm2082, %v7814, 0
    %7817 = vmatprep.subr.mxu0 0.0
    %7818 = vmatpush1.msra.mxu0 %v7809
    %7819 = vmatprep.subr.mxu0 0.0
    %7820 = vmatpush1.msra.mxu0 0.0
    %7821 = vmatprep.subr.mxu0 0.0
    %7822 = vmatpush1.msra.mxu0 0.0
    %7823 = vmatprep.subr.mxu0 0.0
    %7824 = vmatpush1.msra.mxu0 0.0
    %7825 = vmatprep.subr.mxu0 0.0
    %7826 = vmatpush1.msra.mxu0 0.0
    %7827 = vmatprep.subr.mxu0 0.0
    %7828 = vmatpush1.msra.mxu0 0.0
    %7829 = vmatprep.subr.mxu0 0.0
    %7830 = vmatpush1.msra.mxu0 0.0
    %7831 = vmatprep.subr.mxu0 0.0
    %7832 = vmatpush1.msra.mxu0 0.0
    %7833 = vmatprep.subr.mxu0 0.0
    %7834 = vmatpush1.msra.mxu0 0.0
    %7835 = vmatprep.subr.mxu0 0.0
    %7836 = vmatpush1.msra.mxu0 0.0
    %7837 = vmatprep.subr.mxu0 0.0
    %7838 = vmatpush1.msra.mxu0 0.0
    %7839 = vmatprep.subr.mxu0 0.0
    %7840 = vmatpush1.msra.mxu0 0.0
    %7841 = vmatprep.subr.mxu0 0.0
    %7842 = vmatpush1.msra.mxu0 0.0
    %7843 = vmatprep.subr.mxu0 0.0
    %7844 = vmatpush1.msra.mxu0 0.0
    %7845 = vmatprep.subr.mxu0 0.0
    %7846 = vmatpush1.msra.mxu0 0.0
    %7847 = vmatprep.subr.mxu0 0.0
    %7848 = vmatpush1.msra.mxu0 0.0
    %7849 = vmatprep.subr.mxu0 0.0
    %7850 = vmatpush1.msra.mxu0 0.0
    %7851 = vmatprep.subr.mxu0 0.0
    %7852 = vmatpush1.msra.mxu0 0.0
    %7853 = vmatprep.subr.mxu0 0.0
    %7854 = vmatpush1.msra.mxu0 0.0
    %7855 = vmatprep.subr.mxu0 0.0
    %7856 = vmatpush1.msra.mxu0 0.0
    %7857 = vmatprep.subr.mxu0 0.0
    %7858 = vmatpush1.msra.mxu0 0.0
    %7859 = vmatprep.subr.mxu0 0.0
    %7860 = vmatpush1.msra.mxu0 0.0
    %7861 = vmatprep.subr.mxu0 0.0
    %7862 = vmatpush1.msra.mxu0 0.0
    %7863 = vmatprep.subr.mxu0 0.0
    %7864 = vmatpush1.msra.mxu0 0.0
    %7865 = vmatprep.subr.mxu0 0.0
    %7866 = vmatpush1.msra.mxu0 0.0
    %7867 = vmatprep.subr.mxu0 0.0
    %7868 = vmatpush1.msra.mxu0 0.0
    %7869 = vmatprep.subr.mxu0 0.0
    %7870 = vmatpush1.msra.mxu0 0.0
    %7871 = vmatprep.subr.mxu0 0.0
    %7872 = vmatpush1.msra.mxu0 0.0
    %7873 = vmatprep.subr.mxu0 0.0
    %7874 = vmatpush1.msra.mxu0 0.0
    %7875 = vmatprep.subr.mxu0 0.0
    %7876 = vmatpush1.msra.mxu0 0.0
    %7877 = vmatprep.subr.mxu0 0.0
    %7878 = vmatpush1.msra.mxu0 0.0
    %7879 = vmatprep.subr.mxu0 0.0
    %7880 = vmatpush1.msra.mxu0 0.0
    %7881 = vmatprep.mubr.f32.mxu0 0.0
    %7882 = vmatmul.mubr.f32.gmra.mrb[0].mxu0 %v7815
    %v7883 = vpop.f32.mrb[0].mxu0
    %v7884 = vadd.f32 %v7810, %v7883
    %v7885 = vpop.f32.mrb[0].mxu0
    %7886 = vdwg.mxu0
    %v7887 = vmax.f32 %v7884, 0.0
    %v7888 = vld [vmem:[%s6406] sm:$0xff]
    %v7889 = vld [vmem:[%s6408] sm:$0x1]
    %v7891 = vsel %vm2082, %v7808, 0
    %7893 = vmatprep.subr.mxu0 0.0
    %7894 = vmatpush1.msra.mxu0 %v7888
    %7895 = vmatprep.subr.mxu0 0.0
    %7896 = vmatpush1.msra.mxu0 0.0
    %7897 = vmatprep.subr.mxu0 0.0
    %7898 = vmatpush1.msra.mxu0 0.0
    %7899 = vmatprep.subr.mxu0 0.0
    %7900 = vmatpush1.msra.mxu0 0.0
    %7901 = vmatprep.subr.mxu0 0.0
    %7902 = vmatpush1.msra.mxu0 0.0
    %7903 = vmatprep.subr.mxu0 0.0
    %7904 = vmatpush1.msra.mxu0 0.0
    %7905 = vmatprep.subr.mxu0 0.0
    %7906 = vmatpush1.msra.mxu0 0.0
    %7907 = vmatprep.subr.mxu0 0.0
    %7908 = vmatpush1.msra.mxu0 0.0
    %7909 = vmatprep.subr.mxu0 0.0
    %7910 = vmatpush1.msra.mxu0 0.0
    %7911 = vmatprep.subr.mxu0 0.0
    %7912 = vmatpush1.msra.mxu0 0.0
    %7913 = vmatprep.subr.mxu0 0.0
    %7914 = vmatpush1.msra.mxu0 0.0
    %7915 = vmatprep.subr.mxu0 0.0
    %7916 = vmatpush1.msra.mxu0 0.0
    %7917 = vmatprep.subr.mxu0 0.0
    %7918 = vmatpush1.msra.mxu0 0.0
    %7919 = vmatprep.subr.mxu0 0.0
    %7920 = vmatpush1.msra.mxu0 0.0
    %7921 = vmatprep.subr.mxu0 0.0
    %7922 = vmatpush1.msra.mxu0 0.0
    %7923 = vmatprep.subr.mxu0 0.0
    %7924 = vmatpush1.msra.mxu0 0.0
    %7925 = vmatprep.subr.mxu0 0.0
    %7926 = vmatpush1.msra.mxu0 0.0
    %7927 = vmatprep.subr.mxu0 0.0
    %7928 = vmatpush1.msra.mxu0 0.0
    %7929 = vmatprep.subr.mxu0 0.0
    %7930 = vmatpush1.msra.mxu0 0.0
    %7931 = vmatprep.subr.mxu0 0.0
    %7932 = vmatpush1.msra.mxu0 0.0
    %7933 = vmatprep.subr.mxu0 0.0
    %7934 = vmatpush1.msra.mxu0 0.0
    %7935 = vmatprep.subr.mxu0 0.0
    %7936 = vmatpush1.msra.mxu0 0.0
    %7937 = vmatprep.subr.mxu0 0.0
    %7938 = vmatpush1.msra.mxu0 0.0
    %7939 = vmatprep.subr.mxu0 0.0
    %7940 = vmatpush1.msra.mxu0 0.0
    %7941 = vmatprep.subr.mxu0 0.0
    %7942 = vmatpush1.msra.mxu0 0.0
    %7943 = vmatprep.subr.mxu0 0.0
    %7944 = vmatpush1.msra.mxu0 0.0
    %7945 = vmatprep.subr.mxu0 0.0
    %7946 = vmatpush1.msra.mxu0 0.0
    %7947 = vmatprep.subr.mxu0 0.0
    %7948 = vmatpush1.msra.mxu0 0.0
    %7949 = vmatprep.subr.mxu0 0.0
    %7950 = vmatpush1.msra.mxu0 0.0
    %7951 = vmatprep.subr.mxu0 0.0
    %7952 = vmatpush1.msra.mxu0 0.0
    %7953 = vmatprep.subr.mxu0 0.0
    %7954 = vmatpush1.msra.mxu0 0.0
    %7955 = vmatprep.subr.mxu0 0.0
    %7956 = vmatpush1.msra.mxu0 0.0
    %7957 = vmatprep.mubr.f32.mxu0 0.0
    %7958 = vmatmul.mubr.f32.gmra.mrb[0].mxu0 %v7891
    %v7959 = vpop.f32.mrb[0].mxu0
    %v7960 = vadd.f32 %v7889, %v7959
    %v7961 = vpop.f32.mrb[0].mxu0
    %7962 = vdwg.mxu0
    %v7963 = vmax.f32 %v7960, 0.0
    %v7964 = vld [vmem:[%s6484] sm:$0xff]
    %v7965 = vld [vmem:[%s6486] sm:$0x1]
    %v7967 = vsel %vm2082, %v7887, 0
    %7969 = vmatprep.subr.mxu0 0.0
    %7970 = vmatpush1.msra.mxu0 %v7964
    %7971 = vmatprep.subr.mxu0 0.0
    %7972 = vmatpush1.msra.mxu0 0.0
    %7973 = vmatprep.subr.mxu0 0.0
    %7974 = vmatpush1.msra.mxu0 0.0
    %7975 = vmatprep.subr.mxu0 0.0
    %7976 = vmatpush1.msra.mxu0 0.0
    %7977 = vmatprep.subr.mxu0 0.0
    %7978 = vmatpush1.msra.mxu0 0.0
    %7979 = vmatprep.subr.mxu0 0.0
    %7980 = vmatpush1.msra.mxu0 0.0
    %7981 = vmatprep.subr.mxu0 0.0
    %7982 = vmatpush1.msra.mxu0 0.0
    %7983 = vmatprep.subr.mxu0 0.0
    %7984 = vmatpush1.msra.mxu0 0.0
    %7985 = vmatprep.subr.mxu0 0.0
    %7986 = vmatpush1.msra.mxu0 0.0
    %7987 = vmatprep.subr.mxu0 0.0
    %7988 = vmatpush1.msra.mxu0 0.0
    %7989 = vmatprep.subr.mxu0 0.0
    %7990 = vmatpush1.msra.mxu0 0.0
    %7991 = vmatprep.subr.mxu0 0.0
    %7992 = vmatpush1.msra.mxu0 0.0
    %7993 = vmatprep.subr.mxu0 0.0
    %7994 = vmatpush1.msra.mxu0 0.0
    %7995 = vmatprep.subr.mxu0 0.0
    %7996 = vmatpush1.msra.mxu0 0.0
    %7997 = vmatprep.subr.mxu0 0.0
    %7998 = vmatpush1.msra.mxu0 0.0
    %7999 = vmatprep.subr.mxu0 0.0
    %8000 = vmatpush1.msra.mxu0 0.0
    %8001 = vmatprep.subr.mxu0 0.0
    %8002 = vmatpush1.msra.mxu0 0.0
    %8003 = vmatprep.subr.mxu0 0.0
    %8004 = vmatpush1.msra.mxu0 0.0
    %8005 = vmatprep.subr.mxu0 0.0
    %8006 = vmatpush1.msra.mxu0 0.0
    %8007 = vmatprep.subr.mxu0 0.0
    %8008 = vmatpush1.msra.mxu0 0.0
    %8009 = vmatprep.subr.mxu0 0.0
    %8010 = vmatpush1.msra.mxu0 0.0
    %8011 = vmatprep.subr.mxu0 0.0
    %8012 = vmatpush1.msra.mxu0 0.0
    %8013 = vmatprep.subr.mxu0 0.0
    %8014 = vmatpush1.msra.mxu0 0.0
    %8015 = vmatprep.subr.mxu0 0.0
    %8016 = vmatpush1.msra.mxu0 0.0
    %8017 = vmatprep.subr.mxu0 0.0
    %8018 = vmatpush1.msra.mxu0 0.0
    %8019 = vmatprep.subr.mxu0 0.0
    %8020 = vmatpush1.msra.mxu0 0.0
    %8021 = vmatprep.subr.mxu0 0.0
    %8022 = vmatpush1.msra.mxu0 0.0
    %8023 = vmatprep.subr.mxu0 0.0
    %8024 = vmatpush1.msra.mxu0 0.0
    %8025 = vmatprep.subr.mxu0 0.0
    %8026 = vmatpush1.msra.mxu0 0.0
    %8027 = vmatprep.subr.mxu0 0.0
    %8028 = vmatpush1.msra.mxu0 0.0
    %8029 = vmatprep.subr.mxu0 0.0
    %8030 = vmatpush1.msra.mxu0 0.0
    %8031 = vmatprep.subr.mxu0 0.0
    %8032 = vmatpush1.msra.mxu0 0.0
    %8033 = vmatprep.mubr.f32.mxu0 0.0
    %8034 = vmatmul.mubr.f32.gmra.mrb[0].mxu0 %v7967
    %v8035 = vpop.f32.mrb[0].mxu0
    %v8036 = vadd.f32 %v7965, %v8035
    %v8037 = vpop.f32.mrb[0].mxu0
    %8038 = vdwg.mxu0
    %v8039 = vmax.f32 %v8036, 0.0
    %v8040 = vld [vmem:[%s6562] sm:$0xff]
    %v8041 = vld [vmem:[%s6564] sm:$0x1]
    %v8043 = vsel %vm2082, %v7963, 0
    %8045 = vmatprep.subr.mxu0 0.0
    %8046 = vmatpush1.msra.mxu0 %v8040
    %8047 = vmatprep.subr.mxu0 0.0
    %8048 = vmatpush1.msra.mxu0 0.0
    %8049 = vmatprep.subr.mxu0 0.0
    %8050 = vmatpush1.msra.mxu0 0.0
    %8051 = vmatprep.subr.mxu0 0.0
    %8052 = vmatpush1.msra.mxu0 0.0
    %8053 = vmatprep.subr.mxu0 0.0
    %8054 = vmatpush1.msra.mxu0 0.0
    %8055 = vmatprep.subr.mxu0 0.0
    %8056 = vmatpush1.msra.mxu0 0.0
    %8057 = vmatprep.subr.mxu0 0.0
    %8058 = vmatpush1.msra.mxu0 0.0
    %8059 = vmatprep.subr.mxu0 0.0
    %8060 = vmatpush1.msra.mxu0 0.0
    %8061 = vmatprep.subr.mxu0 0.0
    %8062 = vmatpush1.msra.mxu0 0.0
    %8063 = vmatprep.subr.mxu0 0.0
    %8064 = vmatpush1.msra.mxu0 0.0
    %8065 = vmatprep.subr.mxu0 0.0
    %8066 = vmatpush1.msra.mxu0 0.0
    %8067 = vmatprep.subr.mxu0 0.0
    %8068 = vmatpush1.msra.mxu0 0.0
    %8069 = vmatprep.subr.mxu0 0.0
    %8070 = vmatpush1.msra.mxu0 0.0
    %8071 = vmatprep.subr.mxu0 0.0
    %8072 = vmatpush1.msra.mxu0 0.0
    %8073 = vmatprep.subr.mxu0 0.0
    %8074 = vmatpush1.msra.mxu0 0.0
    %8075 = vmatprep.subr.mxu0 0.0
    %8076 = vmatpush1.msra.mxu0 0.0
    %8077 = vmatprep.subr.mxu0 0.0
    %8078 = vmatpush1.msra.mxu0 0.0
    %8079 = vmatprep.subr.mxu0 0.0
    %8080 = vmatpush1.msra.mxu0 0.0
    %8081 = vmatprep.subr.mxu0 0.0
    %8082 = vmatpush1.msra.mxu0 0.0
    %8083 = vmatprep.subr.mxu0 0.0
    %8084 = vmatpush1.msra.mxu0 0.0
    %8085 = vmatprep.subr.mxu0 0.0
    %8086 = vmatpush1.msra.mxu0 0.0
    %8087 = vmatprep.subr.mxu0 0.0
    %8088 = vmatpush1.msra.mxu0 0.0
    %8089 = vmatprep.subr.mxu0 0.0
    %8090 = vmatpush1.msra.mxu0 0.0
    %8091 = vmatprep.subr.mxu0 0.0
    %8092 = vmatpush1.msra.mxu0 0.0
    %8093 = vmatprep.subr.mxu0 0.0
    %8094 = vmatpush1.msra.mxu0 0.0
    %8095 = vmatprep.subr.mxu0 0.0
    %8096 = vmatpush1.msra.mxu0 0.0
    %8097 = vmatprep.subr.mxu0 0.0
    %8098 = vmatpush1.msra.mxu0 0.0
    %8099 = vmatprep.subr.mxu0 0.0
    %8100 = vmatpush1.msra.mxu0 0.0
    %8101 = vmatprep.subr.mxu0 0.0
    %8102 = vmatpush1.msra.mxu0 0.0
    %8103 = vmatprep.subr.mxu0 0.0
    %8104 = vmatpush1.msra.mxu0 0.0
    %8105 = vmatprep.subr.mxu0 0.0
    %8106 = vmatpush1.msra.mxu0 0.0
    %8107 = vmatprep.subr.mxu0 0.0
    %8108 = vmatpush1.msra.mxu0 0.0
    %8109 = vmatprep.mubr.f32.mxu0 0.0
    %8110 = vmatmul.mubr.f32.gmra.mrb[0].mxu0 %v8043
    %v8111 = vpop.f32.mrb[0].mxu0
    %v8112 = vadd.f32 %v8041, %v8111
    %v8113 = vpop.f32.mrb[0].mxu0
    %8114 = vdwg.mxu0
    %v8115 = vmax.f32 %v8112, 0.0
    %v8116 = vld [vmem:[#allocation21] sm:$0xff]
    %v8117 = vld [vmem:[#allocation22] sm:$0xff]
    %v8119 = vsel %vm2082, %v8115, 0
    %8121 = vmatprep.subr.mxu0 0.0
    %8122 = vmatpush1.msra.mxu0 %v8117
    %8123 = vmatprep.subr.mxu0 0.0
    %8124 = vmatpush1.msra.mxu0 0.0
    %8125 = vmatprep.subr.mxu0 0.0
    %8126 = vmatpush1.msra.mxu0 0.0
    %8127 = vmatprep.subr.mxu0 0.0
    %8128 = vmatpush1.msra.mxu0 0.0
    %8129 = vmatprep.subr.mxu0 0.0
    %8130 = vmatpush1.msra.mxu0 0.0
    %8131 = vmatprep.subr.mxu0 0.0
    %8132 = vmatpush1.msra.mxu0 0.0
    %8133 = vmatprep.subr.mxu0 0.0
    %8134 = vmatpush1.msra.mxu0 0.0
    %8135 = vmatprep.subr.mxu0 0.0
    %8136 = vmatpush1.msra.mxu0 0.0
    %8137 = vmatprep.subr.mxu0 0.0
    %8138 = vmatpush1.msra.mxu0 0.0
    %8139 = vmatprep.subr.mxu0 0.0
    %8140 = vmatpush1.msra.mxu0 0.0
    %8141 = vmatprep.subr.mxu0 0.0
    %8142 = vmatpush1.msra.mxu0 0.0
    %8143 = vmatprep.subr.mxu0 0.0
    %8144 = vmatpush1.msra.mxu0 0.0
    %8145 = vmatprep.subr.mxu0 0.0
    %8146 = vmatpush1.msra.mxu0 0.0
    %8147 = vmatprep.subr.mxu0 0.0
    %8148 = vmatpush1.msra.mxu0 0.0
    %8149 = vmatprep.subr.mxu0 0.0
    %8150 = vmatpush1.msra.mxu0 0.0
    %8151 = vmatprep.subr.mxu0 0.0
    %8152 = vmatpush1.msra.mxu0 0.0
    %8153 = vmatprep.subr.mxu0 0.0
    %8154 = vmatpush1.msra.mxu0 0.0
    %8155 = vmatprep.subr.mxu0 0.0
    %8156 = vmatpush1.msra.mxu0 0.0
    %8157 = vmatprep.subr.mxu0 0.0
    %8158 = vmatpush1.msra.mxu0 0.0
    %8159 = vmatprep.subr.mxu0 0.0
    %8160 = vmatpush1.msra.mxu0 0.0
    %8161 = vmatprep.subr.mxu0 0.0
    %8162 = vmatpush1.msra.mxu0 0.0
    %8163 = vmatprep.subr.mxu0 0.0
    %8164 = vmatpush1.msra.mxu0 0.0
    %8165 = vmatprep.subr.mxu0 0.0
    %8166 = vmatpush1.msra.mxu0 0.0
    %8167 = vmatprep.subr.mxu0 0.0
    %8168 = vmatpush1.msra.mxu0 0.0
    %8169 = vmatprep.subr.mxu0 0.0
    %8170 = vmatpush1.msra.mxu0 0.0
    %8171 = vmatprep.subr.mxu0 0.0
    %8172 = vmatpush1.msra.mxu0 0.0
    %8173 = vmatprep.subr.mxu0 0.0
    %8174 = vmatpush1.msra.mxu0 0.0
    %8175 = vmatprep.subr.mxu0 0.0
    %8176 = vmatpush1.msra.mxu0 0.0
    %8177 = vmatprep.subr.mxu0 0.0
    %8178 = vmatpush1.msra.mxu0 0.0
    %8179 = vmatprep.subr.mxu0 0.0
    %8180 = vmatpush1.msra.mxu0 0.0
    %8181 = vmatprep.subr.mxu0 0.0
    %8182 = vmatpush1.msra.mxu0 0.0
    %8183 = vmatprep.subr.mxu0 0.0
    %8184 = vmatpush1.msra.mxu0 0.0
    %8185 = vmatprep.mubr.f32.mxu0 0.0
    %8186 = vmatmul.mubr.f32.gmra.mrb[0].mxu0 %v8119
    %v8187 = vpop.f32.mrb[0].mxu0
    %v8188 = vadd.f32 0.0, %v8187
    %v8189 = vpop.f32.mrb[0].mxu0
    %8190 = vdwg.mxu0
    %v8192 = vsel %vm2082, %v8039, 0
    %8194 = vmatprep.subr.mxu0 0.0
    %8195 = vmatpush1.msra.mxu0 %v8116
    %8196 = vmatprep.subr.mxu0 0.0
    %8197 = vmatpush1.msra.mxu0 0.0
    %8198 = vmatprep.subr.mxu0 0.0
    %8199 = vmatpush1.msra.mxu0 0.0
    %8200 = vmatprep.subr.mxu0 0.0
    %8201 = vmatpush1.msra.mxu0 0.0
    %8202 = vmatprep.subr.mxu0 0.0
    %8203 = vmatpush1.msra.mxu0 0.0
    %8204 = vmatprep.subr.mxu0 0.0
    %8205 = vmatpush1.msra.mxu0 0.0
    %8206 = vmatprep.subr.mxu0 0.0
    %8207 = vmatpush1.msra.mxu0 0.0
    %8208 = vmatprep.subr.mxu0 0.0
    %8209 = vmatpush1.msra.mxu0 0.0
    %8210 = vmatprep.subr.mxu0 0.0
    %8211 = vmatpush1.msra.mxu0 0.0
    %8212 = vmatprep.subr.mxu0 0.0
    %8213 = vmatpush1.msra.mxu0 0.0
    %8214 = vmatprep.subr.mxu0 0.0
    %8215 = vmatpush1.msra.mxu0 0.0
    %8216 = vmatprep.subr.mxu0 0.0
    %8217 = vmatpush1.msra.mxu0 0.0
    %8218 = vmatprep.subr.mxu0 0.0
    %8219 = vmatpush1.msra.mxu0 0.0
    %8220 = vmatprep.subr.mxu0 0.0
    %8221 = vmatpush1.msra.mxu0 0.0
    %8222 = vmatprep.subr.mxu0 0.0
    %8223 = vmatpush1.msra.mxu0 0.0
    %8224 = vmatprep.subr.mxu0 0.0
    %8225 = vmatpush1.msra.mxu0 0.0
    %8226 = vmatprep.subr.mxu0 0.0
    %8227 = vmatpush1.msra.mxu0 0.0
    %8228 = vmatprep.subr.mxu0 0.0
    %8229 = vmatpush1.msra.mxu0 0.0
    %8230 = vmatprep.subr.mxu0 0.0
    %8231 = vmatpush1.msra.mxu0 0.0
    %8232 = vmatprep.subr.mxu0 0.0
    %8233 = vmatpush1.msra.mxu0 0.0
    %8234 = vmatprep.subr.mxu0 0.0
    %8235 = vmatpush1.msra.mxu0 0.0
    %8236 = vmatprep.subr.mxu0 0.0
    %8237 = vmatpush1.msra.mxu0 0.0
    %8238 = vmatprep.subr.mxu0 0.0
    %8239 = vmatpush1.msra.mxu0 0.0
    %8240 = vmatprep.subr.mxu0 0.0
    %8241 = vmatpush1.msra.mxu0 0.0
    %8242 = vmatprep.subr.mxu0 0.0
    %8243 = vmatpush1.msra.mxu0 0.0
    %8244 = vmatprep.subr.mxu0 0.0
    %8245 = vmatpush1.msra.mxu0 0.0
    %8246 = vmatprep.subr.mxu0 0.0
    %8247 = vmatpush1.msra.mxu0 0.0
    %8248 = vmatprep.subr.mxu0 0.0
    %8249 = vmatpush1.msra.mxu0 0.0
    %8250 = vmatprep.subr.mxu0 0.0
    %8251 = vmatpush1.msra.mxu0 0.0
    %8252 = vmatprep.subr.mxu0 0.0
    %8253 = vmatpush1.msra.mxu0 0.0
    %8254 = vmatprep.subr.mxu0 0.0
    %8255 = vmatpush1.msra.mxu0 0.0
    %8256 = vmatprep.subr.mxu0 0.0
    %8257 = vmatpush1.msra.mxu0 0.0
    %8258 = vmatprep.mubr.f32.mxu0 0.0
    %8259 = vmatmul.mubr.f32.gmra.mrb[0].mxu0 %v8192
    %v8260 = vpop.f32.mrb[0].mxu0
    %v8261 = vadd.f32 %v8188, %v8260
    %v8262 = vpop.f32.mrb[0].mxu0
    %8263 = vdwg.mxu0
    %v8264 = vld [vmem:[#allocation24] sm:$0x1]
    %v8265 = vadd.f32 %v8261, %v8264
    %8266 = vst.msk [vmem:[#allocation25 + $0x1] sm:$0x1] %vm6790, %v8265
    // Predicated region
    $region150: #{forward.1} parent=1 // pred_check
      _
    $region151: #{forward.1} parent=1 // pred_check_branch
      %8268 = sbr.rel (0) target = $region153
    $region152: #{forward.1} parent=1 // pred_region
      %s8270 = ssub.s32 32, 32
      %8271 = vsyncadd [#allocation6], %s8270
      %s8273 = sshll.u32 [#allocation25], 4
      %s8274 = int_to_ptr.vmem [resolvable:$true] %s8273
      %8276 = dma.vmem_to_hbm [thread:$0]  %s8274, 32, %s24, [#allocation6]
    $region153: #{forward.1} parent=1 // pred_fallthru
      _
    // Predicated region
    $region154: #{forward.1} parent=1 // pred_check
      _
    $region155: #{forward.1} parent=1 // pred_check_branch
      %8278 = sbr.rel (0) target = $region157
    $region156: #{forward.1} parent=1 // pred_region
      %8279 = dma.done [#allocation6], 32
    $region157: #{forward.1} parent=1 // pred_fallthru
      _
    %8280 = vsyncpa [#allocation5], 1
    %8281 = vsyncpa [#allocation8], 1
    %8282 = vsyncpa [#allocation11], 1
    %8283 = vsyncpa [#allocation14], 1
    %8284 = vsyncpa [#allocation17], 1
    %8285 = vsyncpa [#allocation20], 1
    %8286 = vsyncpa [#allocation23], 1
    %8287 = vsyncpa [#allocation6], 1

</llo_original>
